<compile_context>
chip_gen: v7x
topology: tpu7x:2x2x1
jax: 0.10.0
libtpu: 0.0.40
codegen_flags: <defaults>
</compile_context>

<pallas_src>
import jax
import jax.numpy as jnp
from jax.experimental import pallas as pl
from jax.experimental.pallas import tpu as pltpu


_LRELU_SLOPE = 0.01


def _vmem_limit_bytes():
    # Derive the scoped-VMEM request from the device instead of hard-coding
    # (v5e/v6e: 128 MiB physical, v7x: 64 MiB); leave ~25% headroom.
    try:
        cap = int(pltpu.get_tpu_info().vmem_capacity_bytes)
        return max(32 * 1024 * 1024, (cap * 3) // 4)
    except Exception:  # conservative fallback, safe on every generation
        return 48 * 1024 * 1024


def _pick_tile_h(H, W, target_px=1024):
    # Smallest divisor of H whose strip holds >= ~1024 pixels (output block
    # ~256 KB) so per-grid-step overhead is amortized; whole image if small.
    for th in range(1, H + 1):
        if H % th == 0 and th * W >= target_px:
            return th
    return H


# -----------------------------------------------------------------------------
# Fused kernel:  out = conv3x3( relu( fea * scale(cond) + shift(cond) ) ) [+res]
# One grid step = one (batch, row-strip) tile.
# -----------------------------------------------------------------------------
def _make_sft_conv3x3_kernel(add_residual):
    def kernel(fea_ref, cond_ref, w0_ref, b0_ref, w1_ref, b1_ref,
               wc_ref, bc_ref, *rest):
        if add_residual:
            res_ref, o_ref, act_ref = rest
        else:
            o_ref, act_ref = rest

        _, H, W, Cf = fea_ref.shape
        Cc = cond_ref.shape[3]
        TH = o_ref.shape[1]
        s = pl.program_id(1)
        n_strips = pl.num_programs(1)
        h0 = pl.multiple_of(s * TH, TH)

        def sft_relu(f, c):
            # Packed SFT: one (Cc, 64) first-stage matmul ([scale0 | shift0])
            # and one block-diagonal (64, 2*Cf) second-stage matmul, then
            # relu(f * scale + shift).  f: (M, Cf), c: (M, Cc), float32.
            h = jnp.dot(c, w0_ref[...], preferred_element_type=jnp.float32)
            h = h + b0_ref[...]
            h = jnp.where(h >= 0.0, h, _LRELU_SLOPE * h)
            ss = jnp.dot(h, w1_ref[...], preferred_element_type=jnp.float32)
            ss = ss + b1_ref[...]
            return jnp.maximum(f * ss[:, :Cf] + ss[:, Cf:], 0.0)

        # ---- SFT + ReLU for this strip's own rows ---------------------------
        fea_m = fea_ref[:, pl.ds(h0, TH), :, :].reshape(TH * W, Cf)
        cond_m = cond_ref[:, pl.ds(h0, TH), :, :].reshape(TH * W, Cc)
        act_m = sft_relu(fea_m.astype(jnp.float32),
                         cond_m.astype(jnp.float32)).reshape(TH, W, Cf)

        # ---- SFT + ReLU for the 1-row halos (recomputed, ~2/TH overhead) ----
        ti = jnp.maximum(h0 - 1, 0)
        bi = jnp.minimum(h0 + TH, H - 1)
        fea_h = jnp.concatenate([fea_ref[:, pl.ds(ti, 1), :, :],
                                 fea_ref[:, pl.ds(bi, 1), :, :]], axis=1)
        cond_h = jnp.concatenate([cond_ref[:, pl.ds(ti, 1), :, :],
                                  cond_ref[:, pl.ds(bi, 1), :, :]], axis=1)
        act_h = sft_relu(fea_h.reshape(2 * W, Cf).astype(jnp.float32),
                         cond_h.reshape(2 * W, Cc).astype(jnp.float32))
        act_h = act_h.reshape(2, W, Cf)
        # At the image top/bottom the conv halo is zero padding, not SFT(.).
        top = act_h[0:1] * (s > 0).astype(jnp.float32)
        bot = act_h[1:2] * (s < n_strips - 1).astype(jnp.float32)

        # ---- zero-padded activation tile in VMEM (conv operand dtype) -------
        dt = act_ref.dtype
        act_ref[:, 0:1, :] = jnp.zeros((TH + 2, 1, Cf), dt)          # left col
        act_ref[:, W + 1:W + 2, :] = jnp.zeros((TH + 2, 1, Cf), dt)  # right col
        act_ref[0:1, 1:W + 1, :] = top.astype(dt)
        act_ref[TH + 1:TH + 2, 1:W + 1, :] = bot.astype(dt)
        act_ref[1:TH + 1, 1:W + 1, :] = act_m.astype(dt)

        # ---- 3x3 conv as ONE K = 9*Cf im2col matmul over the strip ----------
        cols = [act_ref[dh:dh + TH, dw:dw + W, :]
                for dh in range(3) for dw in range(3)]
        x = jnp.concatenate(cols, axis=-1).reshape(TH * W, 9 * Cf)
        acc = jnp.dot(x, wc_ref[...], preferred_element_type=jnp.float32)
        acc = acc + bc_ref[...]
        if add_residual:
            acc = acc + res_ref[...].reshape(TH * W, Cf).astype(jnp.float32)

        # TODO(synk): a lane-dense (1, TH, W*Cf) output block (full-width vst
        # instead of masked 64-lane stores) needs a (TH*W,64)->(TH,W*64)
        # sublane->lane fold whose Mosaic lowering is not guaranteed for all W;
        # kept channel-minor NHWC stores for lowering robustness.
        o_ref[...] = acc.reshape(1, TH, W, Cf).astype(o_ref.dtype)

    return kernel


def sft_conv3x3(fea, cond, sft_packed, conv_w, conv_b, residual=None, *,
                conv_dtype=jnp.float32, tile_h=None):
    """Fused SFT + ReLU + 3x3 'same' conv (+ residual add) over NHWC tensors.

    fea: (N, H, W, 64), cond: (N, H, W, 32)
    sft_packed = (w0p (32,64), b0p (1,64), w1p (64,128), b1p (1,128))
    conv_w: (576, 64) im2col weights, rows ordered (dh*3+dw)*64 + cin.
    conv_b: (1, 64).  residual: optional (N, H, W, 64) added to the output.
    conv_dtype: dtype of the 3x3-conv operands (activation tile + weights);
    accumulation is always float32.
    """
    N, H, W, Cf = fea.shape
    Cc = cond.shape[-1]
    w0p, b0p, w1p, b1p = sft_packed
    wc = conv_w.astype(conv_dtype)

    if tile_h is None:
        tile_h = _pick_tile_h(H, W)
    assert H % tile_h == 0
    n_strips = H // tile_h

    def const_spec(shape):
        nd = len(shape)
        return pl.BlockSpec(shape, lambda n, s, _nd=nd: (0,) * _nd)

    in_specs = [
        # Full image per batch element; block index is constant along the
        # strip axis, so Pallas DMAs each image once and keeps it in VMEM.
        # TODO(synk): for very large H,W (v7x, 64 MiB VMEM) switch these to
        # per-strip manual halo DMA (memory_space=pl.ANY + make_async_copy).
        pl.BlockSpec((1, H, W, Cf), lambda n, s: (n, 0, 0, 0)),
        pl.BlockSpec((1, H, W, Cc), lambda n, s: (n, 0, 0, 0)),
        const_spec(w0p.shape), const_spec(b0p.shape),
        const_spec(w1p.shape), const_spec(b1p.shape),
        const_spec(wc.shape), const_spec(conv_b.shape),
    ]
    args = [fea, cond, w0p, b0p, w1p, b1p, wc, conv_b]
    if residual is not None:
        in_specs.append(
            pl.BlockSpec((1, tile_h, W, Cf), lambda n, s: (n, s, 0, 0)))
        args.append(residual)

    grid_spec = pltpu.PrefetchScalarGridSpec(
        num_scalar_prefetch=0,
        grid=(N, n_strips),
        in_specs=in_specs,
        out_specs=pl.BlockSpec((1, tile_h, W, Cf), lambda n, s: (n, s, 0, 0)),
        scratch_shapes=[pltpu.VMEM((tile_h + 2, W + 2, Cf), conv_dtype)],
    )
    return pl.pallas_call(
        _make_sft_conv3x3_kernel(residual is not None),
        out_shape=jax.ShapeDtypeStruct((N, H, W, Cf), fea.dtype),
        grid_spec=grid_spec,
        compiler_params=pltpu.CompilerParams(
            dimension_semantics=("parallel", "parallel"),
            vmem_limit_bytes=_vmem_limit_bytes()),
    )(*args)


# -----------------------------------------------------------------------------
# ResBlock_SFT forward (wrapper).  Two fused pallas_calls total.
# -----------------------------------------------------------------------------
def resblock_sft_forward(fea_nchw, cond_nchw, packed, conv_dtype=jnp.float32):
    # TODO(synk): in a full network keep activations NHWC end-to-end so these
    # boundary transposes (full HBM round trips) disappear.
    fea = jnp.transpose(fea_nchw, (0, 2, 3, 1))     # (N, H, W, 64)
    cond = jnp.transpose(cond_nchw, (0, 2, 3, 1))   # (N, H, W, 32)

    # conv0( relu( sft0(fea, cond) ) )
    c0 = sft_conv3x3(fea, cond, packed["sft0"],
                     packed["conv0_w"], packed["conv0_b"],
                     conv_dtype=conv_dtype)
    # fea + conv1( relu( sft1(c0, cond) ) )
    out = sft_conv3x3(c0, cond, packed["sft1"],
                      packed["conv1_w"], packed["conv1_b"],
                      residual=fea, conv_dtype=conv_dtype)

    return jnp.transpose(out, (0, 3, 1, 2)), cond_nchw


# -----------------------------------------------------------------------------
# Parameter handling.
#   raw params mirror the PyTorch module (matmul form of the 1x1 convs, HWIO
#   form of the 3x3 convs); pack_params builds the kernel-friendly packing.
# -----------------------------------------------------------------------------
def make_params(key):
    ks = iter(jax.random.split(key, 24))

    def nrm(shape, scale):
        return (scale * jax.random.normal(next(ks), shape)).astype(jnp.float32)

    def sft_raw():
        # (ws0, bs0, ws1, bs1, wt0, bt0, wt1, bt1): Conv2d(32,32,1)/(32,64,1)
        # stored as (Cin, Cout) matmul weights and (Cout,) biases.
        return (nrm((32, 32), 0.1), nrm((32,), 0.05),
                nrm((32, 64), 0.1), nrm((64,), 0.05),
                nrm((32, 32), 0.1), nrm((32,), 0.05),
                nrm((32, 64), 0.1), nrm((64,), 0.05))

    return {
        "sft0": sft_raw(),
        "sft1": sft_raw(),
        "conv0_w": nrm((3, 3, 64, 64), 0.05),   # HWIO
        "conv0_b": nrm((64,), 0.05),
        "conv1_w": nrm((3, 3, 64, 64), 0.05),
        "conv1_b": nrm((64,), 0.05),
    }


def pack_params(raw):
    def pack_sft(p):
        ws0, bs0, ws1, bs1, wt0, bt0, wt1, bt1 = p
        w0p = jnp.concatenate([ws0, wt0], axis=1)                # (32, 64)
        b0p = jnp.concatenate([bs0, bt0]).reshape(1, 64)
        z = jnp.zeros((32, 64), ws1.dtype)
        w1p = jnp.concatenate(
            [jnp.concatenate([ws1, z], axis=1),
             jnp.concatenate([z, wt1], axis=1)], axis=0)         # (64, 128)
        b1p = jnp.concatenate([bs1, bt1]).reshape(1, 128)
        return (w0p, b0p, w1p, b1p)

    def pack_conv(w_hwio):
        # (3,3,Cin,Cout) -> (9*Cin, Cout) im2col weights; row order
        # (dh*3+dw)*Cin + cin matches the in-kernel lane-concat order.
        kh, kw, cin, cout = w_hwio.shape
        return w_hwio.reshape(kh * kw * cin, cout)

    return {
        "sft0": pack_sft(raw["sft0"]),
        "sft1": pack_sft(raw["sft1"]),
        "conv0_w": pack_conv(raw["conv0_w"]),
        "conv0_b": raw["conv0_b"].reshape(1, -1),
        "conv1_w": pack_conv(raw["conv1_w"]),
        "conv1_b": raw["conv1_b"].reshape(1, -1),
    }


# -----------------------------------------------------------------------------
# Pure-JAX reference (same math, from the raw params) for correctness checking.
# -----------------------------------------------------------------------------
def _ref_forward(fea_nchw, cond_nchw, raw):
    fea = jnp.transpose(fea_nchw, (0, 2, 3, 1))
    cond = jnp.transpose(cond_nchw, (0, 2, 3, 1))
    N, H, W, Cf = fea.shape
    Cc = cond.shape[-1]
    M = N * H * W

    def sft_relu(f, p):
        ws0, bs0, ws1, bs1, wt0, bt0, wt1, bt1 = p
        lr = lambda x: jnp.where(x >= 0, x, _LRELU_SLOPE * x)
        c = cond.reshape(M, Cc)
        scale = lr(c @ ws0 + bs0) @ ws1 + bs1
        shift = lr(c @ wt0 + bt0) @ wt1 + bt1
        out = jnp.maximum(f.reshape(M, Cf) * scale + shift, 0.0)
        return out.reshape(N, H, W, Cf)

    def conv(x, w, b):
        out = jax.lax.conv_general_dilated(
            x, w, window_strides=(1, 1), padding="SAME",
            dimension_numbers=("NHWC", "HWIO", "NHWC"))
        return out + b

    f0 = sft_relu(fea, raw["sft0"])
    c0 = conv(f0, raw["conv0_w"], raw["conv0_b"])
    f1 = sft_relu(c0, raw["sft1"])
    c1 = conv(f1, raw["conv1_w"], raw["conv1_b"])
    out = fea + c1
    return jnp.transpose(out, (0, 3, 1, 2)), cond_nchw


if __name__ == "__main__":
    key = jax.random.PRNGKey(0)
    k_fea, k_cond, k_par = jax.random.split(key, 3)

    N, H, W = 2, 16, 16
    fea = jax.random.normal(k_fea, (N, 64, H, W), dtype=jnp.float32)    # x[0]
    cond = jax.random.normal(k_cond, (N, 32, H, W), dtype=jnp.float32)  # x[1]

    raw = make_params(k_par)
    packed = pack_params(raw)
    ref_fea, ref_cond = _ref_forward(fea, cond, raw)

    # float32 conv operands: faithful to the PyTorch module numerics.
    fwd_f32 = jax.jit(
        lambda f, c, p: resblock_sft_forward(f, c, p, conv_dtype=jnp.float32))
    out_fea, out_cond = fwd_f32(fea, cond, packed)
    out_fea = jax.block_until_ready(out_fea)
    out_cond = jax.block_until_ready(out_cond)

    assert out_fea.shape == (N, 64, H, W) and out_cond.shape == (N, 32, H, W)
    err = float(jnp.max(jnp.abs(out_fea - ref_fea)))
    assert jnp.allclose(out_fea, ref_fea, atol=2e-4, rtol=2e-4), (
        "f32 max abs err = %f" % err)
    assert jnp.allclose(out_cond, ref_cond)

    # bf16 conv operands (MXU-native fast path), f32 accumulation.
    fwd_bf16 = jax.jit(
        lambda f, c, p: resblock_sft_forward(f, c, p, conv_dtype=jnp.bfloat16))
    out_fea16, _ = fwd_bf16(fea, cond, packed)
    out_fea16 = jax.block_until_ready(out_fea16)
    err16 = float(jnp.max(jnp.abs(out_fea16 - ref_fea)))
    assert jnp.allclose(out_fea16, ref_fea, atol=3e-2, rtol=3e-2), (
        "bf16 max abs err = %f" % err16)

    print("KERNEL_OK")
</pallas_src>

<mosaic_0001>
module attributes {stable_mosaic.version = 11 : i64} {
  func.func @kernel(%arg0: i32, %arg1: i32, %arg2: memref<1x16x16x64xf32, #tpu.memory_space<vmem>>, %arg3: memref<1x16x16x32xf32, #tpu.memory_space<vmem>>, %arg4: memref<32x64xf32, #tpu.memory_space<vmem>>, %arg5: memref<1x64xf32, #tpu.memory_space<vmem>>, %arg6: memref<64x128xf32, #tpu.memory_space<vmem>>, %arg7: memref<1x128xf32, #tpu.memory_space<vmem>>, %arg8: memref<576x64xf32, #tpu.memory_space<vmem>>, %arg9: memref<1x64xf32, #tpu.memory_space<vmem>>, %arg10: memref<1x16x16x64xf32, #tpu.memory_space<vmem>>, %arg11: memref<1x16x16x64xf32, #tpu.memory_space<vmem>>, %arg12: memref<18x18x64xf32, #tpu.memory_space<vmem>>) attributes {dimension_semantics = [#tpu.dimension_semantics<parallel>, #tpu.dimension_semantics<parallel>], iteration_bounds = array<i64: 2, 1>, scalar_prefetch = 0 : i64, scratch_operands = 1 : i64, tpu.core_type = #tpu.core_type<tc>, window_params = [{transform_indices = @transform_0, window_bounds = array<i64: 1, 16, 16, 64>}, {transform_indices = @transform_1, window_bounds = array<i64: 1, 16, 16, 32>}, {pipeline_mode = #tpu.pipeline_mode<synchronous>, transform_indices = @transform_2, window_bounds = array<i64: 32, 64>}, {pipeline_mode = #tpu.pipeline_mode<synchronous>, transform_indices = @transform_3, window_bounds = array<i64: 1, 64>}, {pipeline_mode = #tpu.pipeline_mode<synchronous>, transform_indices = @transform_4, window_bounds = array<i64: 64, 128>}, {pipeline_mode = #tpu.pipeline_mode<synchronous>, transform_indices = @transform_5, window_bounds = array<i64: 1, 128>}, {pipeline_mode = #tpu.pipeline_mode<synchronous>, transform_indices = @transform_6, window_bounds = array<i64: 576, 64>}, {pipeline_mode = #tpu.pipeline_mode<synchronous>, transform_indices = @transform_7, window_bounds = array<i64: 1, 64>}, {transform_indices = @transform_8, window_bounds = array<i64: 1, 16, 16, 64>}, {transform_indices = @transform_9, window_bounds = array<i64: 1, 16, 16, 64>}]} {
    %c16_i32 = arith.constant 16 : i32
    %0 = arith.muli %arg1, %c16_i32 : i32
    %1 = tpu.assume_multiple %0, 16 : i32
    %c0 = arith.constant 0 : index
    %2 = arith.index_cast %1 : i32 to index
    %c0_0 = arith.constant 0 : index
    %c0_1 = arith.constant 0 : index
    %3 = vector.load %arg2[%c0, %2, %c0_0, %c0_1] : memref<1x16x16x64xf32, #tpu.memory_space<vmem>>, vector<1x16x16x64xf32>
    %4 = vector.shape_cast %3 : vector<1x16x16x64xf32> to vector<256x64xf32>
    %c0_2 = arith.constant 0 : index
    %5 = arith.index_cast %1 : i32 to index
    %c0_3 = arith.constant 0 : index
    %c0_4 = arith.constant 0 : index
    %6 = vector.load %arg3[%c0_2, %5, %c0_3, %c0_4] : memref<1x16x16x32xf32, #tpu.memory_space<vmem>>, vector<1x16x16x32xf32>
    %7 = vector.shape_cast %6 : vector<1x16x16x32xf32> to vector<256x32xf32>
    %c0_5 = arith.constant 0 : index
    %c0_6 = arith.constant 0 : index
    %8 = vector.load %arg4[%c0_5, %c0_6] : memref<32x64xf32, #tpu.memory_space<vmem>>, vector<32x64xf32>
    %cst = arith.constant dense<0.000000e+00> : vector<256x64xf32>
    %9 = tpu.matmul %7, %8, %cst {dimension_numbers = #tpu.dot_dimension_numbers<[1], [0], [0], [1], [0, 0, 1, 1], [], []>} : vector<256x32xf32>, vector<32x64xf32>, vector<256x64xf32> -> vector<256x64xf32>
    %c0_7 = arith.constant 0 : index
    %c0_8 = arith.constant 0 : index
    %10 = vector.load %arg5[%c0_7, %c0_8] : memref<1x64xf32, #tpu.memory_space<vmem>>, vector<1x64xf32>
    %11 = vector.broadcast %10 : vector<1x64xf32> to vector<256x64xf32>
    %12 = arith.addf %9, %11 : vector<256x64xf32>
    %cst_9 = arith.constant 0.000000e+00 : f32
    %13 = vector.broadcast %cst_9 : f32 to vector<256x64xf32>
    %14 = arith.cmpf oge, %12, %13 : vector<256x64xf32>
    %cst_10 = arith.constant 0.00999999977 : f32
    %15 = vector.broadcast %cst_10 : f32 to vector<256x64xf32>
    %16 = arith.mulf %15, %12 : vector<256x64xf32>
    %17 = arith.select %14, %12, %16 : vector<256x64xi1>, vector<256x64xf32>
    %c0_11 = arith.constant 0 : index
    %c0_12 = arith.constant 0 : index
    %18 = vector.load %arg6[%c0_11, %c0_12] : memref<64x128xf32, #tpu.memory_space<vmem>>, vector<64x128xf32>
    %cst_13 = arith.constant dense<0.000000e+00> : vector<256x128xf32>
    %19 = tpu.matmul %17, %18, %cst_13 {dimension_numbers = #tpu.dot_dimension_numbers<[1], [0], [0], [1], [0, 0, 1, 1], [], []>} : vector<256x64xf32>, vector<64x128xf32>, vector<256x128xf32> -> vector<256x128xf32>
    %c0_14 = arith.constant 0 : index
    %c0_15 = arith.constant 0 : index
    %20 = vector.load %arg7[%c0_14, %c0_15] : memref<1x128xf32, #tpu.memory_space<vmem>>, vector<1x128xf32>
    %21 = vector.broadcast %20 : vector<1x128xf32> to vector<256x128xf32>
    %22 = arith.addf %19, %21 : vector<256x128xf32>
    %23 = vector.extract_strided_slice %22 {offsets = [0, 0], sizes = [256, 64], strides = [1, 1]} : vector<256x128xf32> to vector<256x64xf32>
    %24 = arith.mulf %4, %23 : vector<256x64xf32>
    %25 = vector.extract_strided_slice %22 {offsets = [0, 64], sizes = [256, 64], strides = [1, 1]} : vector<256x128xf32> to vector<256x64xf32>
    %26 = arith.addf %24, %25 : vector<256x64xf32>
    %cst_16 = arith.constant 0.000000e+00 : f32
    %27 = vector.broadcast %cst_16 : f32 to vector<256x64xf32>
    %28 = arith.maximumf %26, %27 : vector<256x64xf32>
    %29 = vector.shape_cast %28 : vector<256x64xf32> to vector<16x16x64xf32>
    %c1_i32 = arith.constant 1 : i32
    %30 = arith.subi %1, %c1_i32 : i32
    %c0_i32 = arith.constant 0 : i32
    %31 = arith.maxsi %30, %c0_i32 : i32
    %c16_i32_17 = arith.constant 16 : i32
    %32 = arith.addi %1, %c16_i32_17 : i32
    %c15_i32 = arith.constant 15 : i32
    %33 = arith.minsi %32, %c15_i32 : i32
    %c0_18 = arith.constant 0 : index
    %34 = arith.index_cast %31 : i32 to index
    %c0_19 = arith.constant 0 : index
    %c0_20 = arith.constant 0 : index
    %35 = vector.load %arg2[%c0_18, %34, %c0_19, %c0_20] : memref<1x16x16x64xf32, #tpu.memory_space<vmem>>, vector<1x1x16x64xf32>
    %c0_21 = arith.constant 0 : index
    %36 = arith.index_cast %33 : i32 to index
    %c0_22 = arith.constant 0 : index
    %c0_23 = arith.constant 0 : index
    %37 = vector.load %arg2[%c0_21, %36, %c0_22, %c0_23] : memref<1x16x16x64xf32, #tpu.memory_space<vmem>>, vector<1x1x16x64xf32>
    %38 = tpu.concatenate %35, %37 in 1 : vector<1x1x16x64xf32>, vector<1x1x16x64xf32> -> vector<1x2x16x64xf32>
    %c0_24 = arith.constant 0 : index
    %39 = arith.index_cast %31 : i32 to index
    %c0_25 = arith.constant 0 : index
    %c0_26 = arith.constant 0 : index
    %40 = vector.load %arg3[%c0_24, %39, %c0_25, %c0_26] : memref<1x16x16x32xf32, #tpu.memory_space<vmem>>, vector<1x1x16x32xf32>
    %c0_27 = arith.constant 0 : index
    %41 = arith.index_cast %33 : i32 to index
    %c0_28 = arith.constant 0 : index
    %c0_29 = arith.constant 0 : index
    %42 = vector.load %arg3[%c0_27, %41, %c0_28, %c0_29] : memref<1x16x16x32xf32, #tpu.memory_space<vmem>>, vector<1x1x16x32xf32>
    %43 = tpu.concatenate %40, %42 in 1 : vector<1x1x16x32xf32>, vector<1x1x16x32xf32> -> vector<1x2x16x32xf32>
    %44 = vector.shape_cast %38 : vector<1x2x16x64xf32> to vector<32x64xf32>
    %45 = vector.shape_cast %43 : vector<1x2x16x32xf32> to vector<32x32xf32>
    %c0_30 = arith.constant 0 : index
    %c0_31 = arith.constant 0 : index
    %46 = vector.load %arg4[%c0_30, %c0_31] : memref<32x64xf32, #tpu.memory_space<vmem>>, vector<32x64xf32>
    %cst_32 = arith.constant dense<0.000000e+00> : vector<32x64xf32>
    %47 = tpu.matmul %45, %46, %cst_32 {dimension_numbers = #tpu.dot_dimension_numbers<[1], [0], [0], [1], [0, 0, 1, 1], [], []>} : vector<32x32xf32>, vector<32x64xf32>, vector<32x64xf32> -> vector<32x64xf32>
    %c0_33 = arith.constant 0 : index
    %c0_34 = arith.constant 0 : index
    %48 = vector.load %arg5[%c0_33, %c0_34] : memref<1x64xf32, #tpu.memory_space<vmem>>, vector<1x64xf32>
    %49 = vector.broadcast %48 : vector<1x64xf32> to vector<32x64xf32>
    %50 = arith.addf %47, %49 : vector<32x64xf32>
    %cst_35 = arith.constant 0.000000e+00 : f32
    %51 = vector.broadcast %cst_35 : f32 to vector<32x64xf32>
    %52 = arith.cmpf oge, %50, %51 : vector<32x64xf32>
    %cst_36 = arith.constant 0.00999999977 : f32
    %53 = vector.broadcast %cst_36 : f32 to vector<32x64xf32>
    %54 = arith.mulf %53, %50 : vector<32x64xf32>
    %55 = arith.select %52, %50, %54 : vector<32x64xi1>, vector<32x64xf32>
    %c0_37 = arith.constant 0 : index
    %c0_38 = arith.constant 0 : index
    %56 = vector.load %arg6[%c0_37, %c0_38] : memref<64x128xf32, #tpu.memory_space<vmem>>, vector<64x128xf32>
    %cst_39 = arith.constant dense<0.000000e+00> : vector<32x128xf32>
    %57 = tpu.matmul %55, %56, %cst_39 {dimension_numbers = #tpu.dot_dimension_numbers<[1], [0], [0], [1], [0, 0, 1, 1], [], []>} : vector<32x64xf32>, vector<64x128xf32>, vector<32x128xf32> -> vector<32x128xf32>
    %c0_40 = arith.constant 0 : index
    %c0_41 = arith.constant 0 : index
    %58 = vector.load %arg7[%c0_40, %c0_41] : memref<1x128xf32, #tpu.memory_space<vmem>>, vector<1x128xf32>
    %59 = vector.broadcast %58 : vector<1x128xf32> to vector<32x128xf32>
    %60 = arith.addf %57, %59 : vector<32x128xf32>
    %61 = vector.extract_strided_slice %60 {offsets = [0, 0], sizes = [32, 64], strides = [1, 1]} : vector<32x128xf32> to vector<32x64xf32>
    %62 = arith.mulf %44, %61 : vector<32x64xf32>
    %63 = vector.extract_strided_slice %60 {offsets = [0, 64], sizes = [32, 64], strides = [1, 1]} : vector<32x128xf32> to vector<32x64xf32>
    %64 = arith.addf %62, %63 : vector<32x64xf32>
    %cst_42 = arith.constant 0.000000e+00 : f32
    %65 = vector.broadcast %cst_42 : f32 to vector<32x64xf32>
    %66 = arith.maximumf %64, %65 : vector<32x64xf32>
    %67 = vector.shape_cast %66 : vector<32x64xf32> to vector<2x16x64xf32>
    %68 = vector.extract_strided_slice %67 {offsets = [0, 0, 0], sizes = [1, 16, 64], strides = [1, 1, 1]} : vector<2x16x64xf32> to vector<1x16x64xf32>
    %c0_i32_43 = arith.constant 0 : i32
    %69 = arith.cmpi sgt, %arg1, %c0_i32_43 : i32
    %70 = arith.extui %69 : i1 to i32
    %71 = arith.sitofp %70 : i32 to f32
    %72 = vector.broadcast %71 : f32 to vector<1x16x64xf32>
    %73 = arith.mulf %68, %72 : vector<1x16x64xf32>
    %74 = vector.extract_strided_slice %67 {offsets = [1, 0, 0], sizes = [1, 16, 64], strides = [1, 1, 1]} : vector<2x16x64xf32> to vector<1x16x64xf32>
    %c0_i32_44 = arith.constant 0 : i32
    %75 = arith.cmpi slt, %arg1, %c0_i32_44 : i32
    %76 = arith.extui %75 : i1 to i32
    %77 = arith.sitofp %76 : i32 to f32
    %78 = vector.broadcast %77 : f32 to vector<1x16x64xf32>
    %79 = arith.mulf %74, %78 : vector<1x16x64xf32>
    %cst_45 = arith.constant 0.000000e+00 : f32
    %80 = vector.broadcast %cst_45 : f32 to vector<18x1x64xf32>
    %c0_46 = arith.constant 0 : index
    %c0_47 = arith.constant 0 : index
    %c0_48 = arith.constant 0 : index
    %81 = vector.load %arg12[%c0_46, %c0_47, %c0_48] : memref<18x18x64xf32, #tpu.memory_space<vmem>>, vector<18x1x64xf32>
    tpu.vector_store %arg12[%c0_46, %c0_47, %c0_48], %80 {strides = array<i32>} : memref<18x18x64xf32, #tpu.memory_space<vmem>>, vector<18x1x64xf32>,
    %cst_49 = arith.constant 0.000000e+00 : f32
    %82 = vector.broadcast %cst_49 : f32 to vector<18x1x64xf32>
    %c0_50 = arith.constant 0 : index
    %c17 = arith.constant 17 : index
    %c0_51 = arith.constant 0 : index
    %83 = vector.load %arg12[%c0_50, %c17, %c0_51] : memref<18x18x64xf32, #tpu.memory_space<vmem>>, vector<18x1x64xf32>
    tpu.vector_store %arg12[%c0_50, %c17, %c0_51], %82 {strides = array<i32>} : memref<18x18x64xf32, #tpu.memory_space<vmem>>, vector<18x1x64xf32>,
    %c0_52 = arith.constant 0 : index
    %c1 = arith.constant 1 : index
    %c0_53 = arith.constant 0 : index
    %84 = vector.load %arg12[%c0_52, %c1, %c0_53] : memref<18x18x64xf32, #tpu.memory_space<vmem>>, vector<1x16x64xf32>
    tpu.vector_store %arg12[%c0_52, %c1, %c0_53], %73 {strides = array<i32>} : memref<18x18x64xf32, #tpu.memory_space<vmem>>, vector<1x16x64xf32>,
    %c17_54 = arith.constant 17 : index
    %c1_55 = arith.constant 1 : index
    %c0_56 = arith.constant 0 : index
    %85 = vector.load %arg12[%c17_54, %c1_55, %c0_56] : memref<18x18x64xf32, #tpu.memory_space<vmem>>, vector<1x16x64xf32>
    tpu.vector_store %arg12[%c17_54, %c1_55, %c0_56], %79 {strides = array<i32>} : memref<18x18x64xf32, #tpu.memory_space<vmem>>, vector<1x16x64xf32>,
    %c1_57 = arith.constant 1 : index
    %c1_58 = arith.constant 1 : index
    %c0_59 = arith.constant 0 : index
    %86 = vector.load %arg12[%c1_57, %c1_58, %c0_59] : memref<18x18x64xf32, #tpu.memory_space<vmem>>, vector<16x16x64xf32>
    tpu.vector_store %arg12[%c1_57, %c1_58, %c0_59], %29 {strides = array<i32>} : memref<18x18x64xf32, #tpu.memory_space<vmem>>, vector<16x16x64xf32>,
    %c0_60 = arith.constant 0 : index
    %c0_61 = arith.constant 0 : index
    %c0_62 = arith.constant 0 : index
    %87 = vector.load %arg12[%c0_60, %c0_61, %c0_62] : memref<18x18x64xf32, #tpu.memory_space<vmem>>, vector<16x16x64xf32>
    %c0_63 = arith.constant 0 : index
    %c1_64 = arith.constant 1 : index
    %c0_65 = arith.constant 0 : index
    %88 = vector.load %arg12[%c0_63, %c1_64, %c0_65] : memref<18x18x64xf32, #tpu.memory_space<vmem>>, vector<16x16x64xf32>
    %c0_66 = arith.constant 0 : index
    %c2 = arith.constant 2 : index
    %c0_67 = arith.constant 0 : index
    %89 = vector.load %arg12[%c0_66, %c2, %c0_67] : memref<18x18x64xf32, #tpu.memory_space<vmem>>, vector<16x16x64xf32>
    %c1_68 = arith.constant 1 : index
    %c0_69 = arith.constant 0 : index
    %c0_70 = arith.constant 0 : index
    %90 = vector.load %arg12[%c1_68, %c0_69, %c0_70] : memref<18x18x64xf32, #tpu.memory_space<vmem>>, vector<16x16x64xf32>
    %c1_71 = arith.constant 1 : index
    %c1_72 = arith.constant 1 : index
    %c0_73 = arith.constant 0 : index
    %91 = vector.load %arg12[%c1_71, %c1_72, %c0_73] : memref<18x18x64xf32, #tpu.memory_space<vmem>>, vector<16x16x64xf32>
    %c1_74 = arith.constant 1 : index
    %c2_75 = arith.constant 2 : index
    %c0_76 = arith.constant 0 : index
    %92 = vector.load %arg12[%c1_74, %c2_75, %c0_76] : memref<18x18x64xf32, #tpu.memory_space<vmem>>, vector<16x16x64xf32>
    %c2_77 = arith.constant 2 : index
    %c0_78 = arith.constant 0 : index
    %c0_79 = arith.constant 0 : index
    %93 = vector.load %arg12[%c2_77, %c0_78, %c0_79] : memref<18x18x64xf32, #tpu.memory_space<vmem>>, vector<16x16x64xf32>
    %c2_80 = arith.constant 2 : index
    %c1_81 = arith.constant 1 : index
    %c0_82 = arith.constant 0 : index
    %94 = vector.load %arg12[%c2_80, %c1_81, %c0_82] : memref<18x18x64xf32, #tpu.memory_space<vmem>>, vector<16x16x64xf32>
    %c2_83 = arith.constant 2 : index
    %c2_84 = arith.constant 2 : index
    %c0_85 = arith.constant 0 : index
    %95 = vector.load %arg12[%c2_83, %c2_84, %c0_85] : memref<18x18x64xf32, #tpu.memory_space<vmem>>, vector<16x16x64xf32>
    %96 = tpu.concatenate %87, %88, %89, %90, %91, %92, %93, %94, %95 in 2 : vector<16x16x64xf32>, vector<16x16x64xf32>, vector<16x16x64xf32>, vector<16x16x64xf32>, vector<16x16x64xf32>, vector<16x16x64xf32>, vector<16x16x64xf32>, vector<16x16x64xf32>, vector<16x16x64xf32> -> vector<16x16x576xf32>
    %97 = vector.shape_cast %96 : vector<16x16x576xf32> to vector<256x576xf32>
    %c0_86 = arith.constant 0 : index
    %c0_87 = arith.constant 0 : index
    %98 = vector.load %arg8[%c0_86, %c0_87] : memref<576x64xf32, #tpu.memory_space<vmem>>, vector<576x64xf32>
    %cst_88 = arith.constant dense<0.000000e+00> : vector<256x64xf32>
    %99 = tpu.matmul %97, %98, %cst_88 {dimension_numbers = #tpu.dot_dimension_numbers<[1], [0], [0], [1], [0, 0, 1, 1], [], []>} : vector<256x576xf32>, vector<576x64xf32>, vector<256x64xf32> -> vector<256x64xf32>
    %c0_89 = arith.constant 0 : index
    %c0_90 = arith.constant 0 : index
    %100 = vector.load %arg9[%c0_89, %c0_90] : memref<1x64xf32, #tpu.memory_space<vmem>>, vector<1x64xf32>
    %101 = vector.broadcast %100 : vector<1x64xf32> to vector<256x64xf32>
    %102 = arith.addf %99, %101 : vector<256x64xf32>
    %c0_91 = arith.constant 0 : index
    %c0_92 = arith.constant 0 : index
    %c0_93 = arith.constant 0 : index
    %c0_94 = arith.constant 0 : index
    %103 = vector.load %arg10[%c0_91, %c0_92, %c0_93, %c0_94] : memref<1x16x16x64xf32, #tpu.memory_space<vmem>>, vector<1x16x16x64xf32>
    %104 = vector.shape_cast %103 : vector<1x16x16x64xf32> to vector<256x64xf32>
    %105 = arith.addf %102, %104 : vector<256x64xf32>
    %106 = vector.shape_cast %105 : vector<256x64xf32> to vector<1x16x16x64xf32>
    %c0_95 = arith.constant 0 : index
    %c0_96 = arith.constant 0 : index
    %c0_97 = arith.constant 0 : index
    %c0_98 = arith.constant 0 : index
    %107 = vector.load %arg11[%c0_95, %c0_96, %c0_97, %c0_98] : memref<1x16x16x64xf32, #tpu.memory_space<vmem>>, vector<1x16x16x64xf32>
    tpu.vector_store %arg11[%c0_95, %c0_96, %c0_97, %c0_98], %106 {strides = array<i32>} : memref<1x16x16x64xf32, #tpu.memory_space<vmem>>, vector<1x16x16x64xf32>,
    return
  }
  func.func @transform_0(%arg0: i32, %arg1: i32) -> (i32, i32, i32, i32) {
    %c0_i32 = arith.constant 0 : i32
    %c0_i32_0 = arith.constant 0 : i32
    %c0_i32_1 = arith.constant 0 : i32
    %c0_i32_2 = arith.constant 0 : i32
    return %arg0, %c0_i32, %c0_i32_0, %c0_i32_1 : i32, i32, i32, i32
  }
  func.func @transform_1(%arg0: i32, %arg1: i32) -> (i32, i32, i32, i32) {
    %c0_i32 = arith.constant 0 : i32
    %c0_i32_0 = arith.constant 0 : i32
    %c0_i32_1 = arith.constant 0 : i32
    %c0_i32_2 = arith.constant 0 : i32
    return %arg0, %c0_i32, %c0_i32_0, %c0_i32_1 : i32, i32, i32, i32
  }
  func.func @transform_2(%arg0: i32, %arg1: i32) -> (i32, i32) {
    %c0_i32 = arith.constant 0 : i32
    %c0_i32_0 = arith.constant 0 : i32
    %c0_i32_1 = arith.constant 0 : i32
    return %c0_i32, %c0_i32_0 : i32, i32
  }
  func.func @transform_3(%arg0: i32, %arg1: i32) -> (i32, i32) {
    %c0_i32 = arith.constant 0 : i32
    %c0_i32_0 = arith.constant 0 : i32
    %c0_i32_1 = arith.constant 0 : i32
    return %c0_i32, %c0_i32_0 : i32, i32
  }
  func.func @transform_4(%arg0: i32, %arg1: i32) -> (i32, i32) {
    %c0_i32 = arith.constant 0 : i32
    %c0_i32_0 = arith.constant 0 : i32
    %c0_i32_1 = arith.constant 0 : i32
    return %c0_i32, %c0_i32_0 : i32, i32
  }
  func.func @transform_5(%arg0: i32, %arg1: i32) -> (i32, i32) {
    %c0_i32 = arith.constant 0 : i32
    %c0_i32_0 = arith.constant 0 : i32
    %c0_i32_1 = arith.constant 0 : i32
    return %c0_i32, %c0_i32_0 : i32, i32
  }
  func.func @transform_6(%arg0: i32, %arg1: i32) -> (i32, i32) {
    %c0_i32 = arith.constant 0 : i32
    %c0_i32_0 = arith.constant 0 : i32
    %c0_i32_1 = arith.constant 0 : i32
    return %c0_i32, %c0_i32_0 : i32, i32
  }
  func.func @transform_7(%arg0: i32, %arg1: i32) -> (i32, i32) {
    %c0_i32 = arith.constant 0 : i32
    %c0_i32_0 = arith.constant 0 : i32
    %c0_i32_1 = arith.constant 0 : i32
    return %c0_i32, %c0_i32_0 : i32, i32
  }
  func.func @transform_8(%arg0: i32, %arg1: i32) -> (i32, i32, i32, i32) {
    %c0_i32 = arith.constant 0 : i32
    %c0_i32_0 = arith.constant 0 : i32
    %c0_i32_1 = arith.constant 0 : i32
    return %arg0, %arg1, %c0_i32, %c0_i32_0 : i32, i32, i32, i32
  }
  func.func @transform_9(%arg0: i32, %arg1: i32) -> (i32, i32, i32, i32) {
    %c0_i32 = arith.constant 0 : i32
    %c0_i32_0 = arith.constant 0 : i32
    %c0_i32_1 = arith.constant 0 : i32
    return %arg0, %arg1, %c0_i32, %c0_i32_0 : i32, i32, i32, i32
  }
}

module attributes {stable_mosaic.version = 11 : i64} {
  func.func @kernel(%arg0: i32, %arg1: i32, %arg2: memref<1x16x16x64xf32, #tpu.memory_space<vmem>>, %arg3: memref<1x16x16x32xf32, #tpu.memory_space<vmem>>, %arg4: memref<32x64xf32, #tpu.memory_space<vmem>>, %arg5: memref<1x64xf32, #tpu.memory_space<vmem>>, %arg6: memref<64x128xf32, #tpu.memory_space<vmem>>, %arg7: memref<1x128xf32, #tpu.memory_space<vmem>>, %arg8: memref<576x64xf32, #tpu.memory_space<vmem>>, %arg9: memref<1x64xf32, #tpu.memory_space<vmem>>, %arg10: memref<1x16x16x64xf32, #tpu.memory_space<vmem>>, %arg11: memref<18x18x64xf32, #tpu.memory_space<vmem>>) attributes {dimension_semantics = [#tpu.dimension_semantics<parallel>, #tpu.dimension_semantics<parallel>], iteration_bounds = array<i64: 2, 1>, scalar_prefetch = 0 : i64, scratch_operands = 1 : i64, tpu.core_type = #tpu.core_type<tc>, window_params = [{transform_indices = @transform_0, window_bounds = array<i64: 1, 16, 16, 64>}, {transform_indices = @transform_1, window_bounds = array<i64: 1, 16, 16, 32>}, {pipeline_mode = #tpu.pipeline_mode<synchronous>, transform_indices = @transform_2, window_bounds = array<i64: 32, 64>}, {pipeline_mode = #tpu.pipeline_mode<synchronous>, transform_indices = @transform_3, window_bounds = array<i64: 1, 64>}, {pipeline_mode = #tpu.pipeline_mode<synchronous>, transform_indices = @transform_4, window_bounds = array<i64: 64, 128>}, {pipeline_mode = #tpu.pipeline_mode<synchronous>, transform_indices = @transform_5, window_bounds = array<i64: 1, 128>}, {pipeline_mode = #tpu.pipeline_mode<synchronous>, transform_indices = @transform_6, window_bounds = array<i64: 576, 64>}, {pipeline_mode = #tpu.pipeline_mode<synchronous>, transform_indices = @transform_7, window_bounds = array<i64: 1, 64>}, {transform_indices = @transform_8, window_bounds = array<i64: 1, 16, 16, 64>}]} {
    %c16_i32 = arith.constant 16 : i32
    %0 = arith.muli %arg1, %c16_i32 : i32
    %1 = tpu.assume_multiple %0, 16 : i32
    %c0 = arith.constant 0 : index
    %2 = arith.index_cast %1 : i32 to index
    %c0_0 = arith.constant 0 : index
    %c0_1 = arith.constant 0 : index
    %3 = vector.load %arg2[%c0, %2, %c0_0, %c0_1] : memref<1x16x16x64xf32, #tpu.memory_space<vmem>>, vector<1x16x16x64xf32>
    %4 = vector.shape_cast %3 : vector<1x16x16x64xf32> to vector<256x64xf32>
    %c0_2 = arith.constant 0 : index
    %5 = arith.index_cast %1 : i32 to index
    %c0_3 = arith.constant 0 : index
    %c0_4 = arith.constant 0 : index
    %6 = vector.load %arg3[%c0_2, %5, %c0_3, %c0_4] : memref<1x16x16x32xf32, #tpu.memory_space<vmem>>, vector<1x16x16x32xf32>
    %7 = vector.shape_cast %6 : vector<1x16x16x32xf32> to vector<256x32xf32>
    %c0_5 = arith.constant 0 : index
    %c0_6 = arith.constant 0 : index
    %8 = vector.load %arg4[%c0_5, %c0_6] : memref<32x64xf32, #tpu.memory_space<vmem>>, vector<32x64xf32>
    %cst = arith.constant dense<0.000000e+00> : vector<256x64xf32>
    %9 = tpu.matmul %7, %8, %cst {dimension_numbers = #tpu.dot_dimension_numbers<[1], [0], [0], [1], [0, 0, 1, 1], [], []>} : vector<256x32xf32>, vector<32x64xf32>, vector<256x64xf32> -> vector<256x64xf32>
    %c0_7 = arith.constant 0 : index
    %c0_8 = arith.constant 0 : index
    %10 = vector.load %arg5[%c0_7, %c0_8] : memref<1x64xf32, #tpu.memory_space<vmem>>, vector<1x64xf32>
    %11 = vector.broadcast %10 : vector<1x64xf32> to vector<256x64xf32>
    %12 = arith.addf %9, %11 : vector<256x64xf32>
    %cst_9 = arith.constant 0.000000e+00 : f32
    %13 = vector.broadcast %cst_9 : f32 to vector<256x64xf32>
    %14 = arith.cmpf oge, %12, %13 : vector<256x64xf32>
    %cst_10 = arith.constant 0.00999999977 : f32
    %15 = vector.broadcast %cst_10 : f32 to vector<256x64xf32>
    %16 = arith.mulf %15, %12 : vector<256x64xf32>
    %17 = arith.select %14, %12, %16 : vector<256x64xi1>, vector<256x64xf32>
    %c0_11 = arith.constant 0 : index
    %c0_12 = arith.constant 0 : index
    %18 = vector.load %arg6[%c0_11, %c0_12] : memref<64x128xf32, #tpu.memory_space<vmem>>, vector<64x128xf32>
    %cst_13 = arith.constant dense<0.000000e+00> : vector<256x128xf32>
    %19 = tpu.matmul %17, %18, %cst_13 {dimension_numbers = #tpu.dot_dimension_numbers<[1], [0], [0], [1], [0, 0, 1, 1], [], []>} : vector<256x64xf32>, vector<64x128xf32>, vector<256x128xf32> -> vector<256x128xf32>
    %c0_14 = arith.constant 0 : index
    %c0_15 = arith.constant 0 : index
    %20 = vector.load %arg7[%c0_14, %c0_15] : memref<1x128xf32, #tpu.memory_space<vmem>>, vector<1x128xf32>
    %21 = vector.broadcast %20 : vector<1x128xf32> to vector<256x128xf32>
    %22 = arith.addf %19, %21 : vector<256x128xf32>
    %23 = vector.extract_strided_slice %22 {offsets = [0, 0], sizes = [256, 64], strides = [1, 1]} : vector<256x128xf32> to vector<256x64xf32>
    %24 = arith.mulf %4, %23 : vector<256x64xf32>
    %25 = vector.extract_strided_slice %22 {offsets = [0, 64], sizes = [256, 64], strides = [1, 1]} : vector<256x128xf32> to vector<256x64xf32>
    %26 = arith.addf %24, %25 : vector<256x64xf32>
    %cst_16 = arith.constant 0.000000e+00 : f32
    %27 = vector.broadcast %cst_16 : f32 to vector<256x64xf32>
    %28 = arith.maximumf %26, %27 : vector<256x64xf32>
    %29 = vector.shape_cast %28 : vector<256x64xf32> to vector<16x16x64xf32>
    %c1_i32 = arith.constant 1 : i32
    %30 = arith.subi %1, %c1_i32 : i32
    %c0_i32 = arith.constant 0 : i32
    %31 = arith.maxsi %30, %c0_i32 : i32
    %c16_i32_17 = arith.constant 16 : i32
    %32 = arith.addi %1, %c16_i32_17 : i32
    %c15_i32 = arith.constant 15 : i32
    %33 = arith.minsi %32, %c15_i32 : i32
    %c0_18 = arith.constant 0 : index
    %34 = arith.index_cast %31 : i32 to index
    %c0_19 = arith.constant 0 : index
    %c0_20 = arith.constant 0 : index
    %35 = vector.load %arg2[%c0_18, %34, %c0_19, %c0_20] : memref<1x16x16x64xf32, #tpu.memory_space<vmem>>, vector<1x1x16x64xf32>
    %c0_21 = arith.constant 0 : index
    %36 = arith.index_cast %33 : i32 to index
    %c0_22 = arith.constant 0 : index
    %c0_23 = arith.constant 0 : index
    %37 = vector.load %arg2[%c0_21, %36, %c0_22, %c0_23] : memref<1x16x16x64xf32, #tpu.memory_space<vmem>>, vector<1x1x16x64xf32>
    %38 = tpu.concatenate %35, %37 in 1 : vector<1x1x16x64xf32>, vector<1x1x16x64xf32> -> vector<1x2x16x64xf32>
    %c0_24 = arith.constant 0 : index
    %39 = arith.index_cast %31 : i32 to index
    %c0_25 = arith.constant 0 : index
    %c0_26 = arith.constant 0 : index
    %40 = vector.load %arg3[%c0_24, %39, %c0_25, %c0_26] : memref<1x16x16x32xf32, #tpu.memory_space<vmem>>, vector<1x1x16x32xf32>
    %c0_27 = arith.constant 0 : index
    %41 = arith.index_cast %33 : i32 to index
    %c0_28 = arith.constant 0 : index
    %c0_29 = arith.constant 0 : index
    %42 = vector.load %arg3[%c0_27, %41, %c0_28, %c0_29] : memref<1x16x16x32xf32, #tpu.memory_space<vmem>>, vector<1x1x16x32xf32>
    %43 = tpu.concatenate %40, %42 in 1 : vector<1x1x16x32xf32>, vector<1x1x16x32xf32> -> vector<1x2x16x32xf32>
    %44 = vector.shape_cast %38 : vector<1x2x16x64xf32> to vector<32x64xf32>
    %45 = vector.shape_cast %43 : vector<1x2x16x32xf32> to vector<32x32xf32>
    %c0_30 = arith.constant 0 : index
    %c0_31 = arith.constant 0 : index
    %46 = vector.load %arg4[%c0_30, %c0_31] : memref<32x64xf32, #tpu.memory_space<vmem>>, vector<32x64xf32>
    %cst_32 = arith.constant dense<0.000000e+00> : vector<32x64xf32>
    %47 = tpu.matmul %45, %46, %cst_32 {dimension_numbers = #tpu.dot_dimension_numbers<[1], [0], [0], [1], [0, 0, 1, 1], [], []>} : vector<32x32xf32>, vector<32x64xf32>, vector<32x64xf32> -> vector<32x64xf32>
    %c0_33 = arith.constant 0 : index
    %c0_34 = arith.constant 0 : index
    %48 = vector.load %arg5[%c0_33, %c0_34] : memref<1x64xf32, #tpu.memory_space<vmem>>, vector<1x64xf32>
    %49 = vector.broadcast %48 : vector<1x64xf32> to vector<32x64xf32>
    %50 = arith.addf %47, %49 : vector<32x64xf32>
    %cst_35 = arith.constant 0.000000e+00 : f32
    %51 = vector.broadcast %cst_35 : f32 to vector<32x64xf32>
    %52 = arith.cmpf oge, %50, %51 : vector<32x64xf32>
    %cst_36 = arith.constant 0.00999999977 : f32
    %53 = vector.broadcast %cst_36 : f32 to vector<32x64xf32>
    %54 = arith.mulf %53, %50 : vector<32x64xf32>
    %55 = arith.select %52, %50, %54 : vector<32x64xi1>, vector<32x64xf32>
    %c0_37 = arith.constant 0 : index
    %c0_38 = arith.constant 0 : index
    %56 = vector.load %arg6[%c0_37, %c0_38] : memref<64x128xf32, #tpu.memory_space<vmem>>, vector<64x128xf32>
    %cst_39 = arith.constant dense<0.000000e+00> : vector<32x128xf32>
    %57 = tpu.matmul %55, %56, %cst_39 {dimension_numbers = #tpu.dot_dimension_numbers<[1], [0], [0], [1], [0, 0, 1, 1], [], []>} : vector<32x64xf32>, vector<64x128xf32>, vector<32x128xf32> -> vector<32x128xf32>
    %c0_40 = arith.constant 0 : index
    %c0_41 = arith.constant 0 : index
    %58 = vector.load %arg7[%c0_40, %c0_41] : memref<1x128xf32, #tpu.memory_space<vmem>>, vector<1x128xf32>
    %59 = vector.broadcast %58 : vector<1x128xf32> to vector<32x128xf32>
    %60 = arith.addf %57, %59 : vector<32x128xf32>
    %61 = vector.extract_strided_slice %60 {offsets = [0, 0], sizes = [32, 64], strides = [1, 1]} : vector<32x128xf32> to vector<32x64xf32>
    %62 = arith.mulf %44, %61 : vector<32x64xf32>
    %63 = vector.extract_strided_slice %60 {offsets = [0, 64], sizes = [32, 64], strides = [1, 1]} : vector<32x128xf32> to vector<32x64xf32>
    %64 = arith.addf %62, %63 : vector<32x64xf32>
    %cst_42 = arith.constant 0.000000e+00 : f32
    %65 = vector.broadcast %cst_42 : f32 to vector<32x64xf32>
    %66 = arith.maximumf %64, %65 : vector<32x64xf32>
    %67 = vector.shape_cast %66 : vector<32x64xf32> to vector<2x16x64xf32>
    %68 = vector.extract_strided_slice %67 {offsets = [0, 0, 0], sizes = [1, 16, 64], strides = [1, 1, 1]} : vector<2x16x64xf32> to vector<1x16x64xf32>
    %c0_i32_43 = arith.constant 0 : i32
    %69 = arith.cmpi sgt, %arg1, %c0_i32_43 : i32
    %70 = arith.extui %69 : i1 to i32
    %71 = arith.sitofp %70 : i32 to f32
    %72 = vector.broadcast %71 : f32 to vector<1x16x64xf32>
    %73 = arith.mulf %68, %72 : vector<1x16x64xf32>
    %74 = vector.extract_strided_slice %67 {offsets = [1, 0, 0], sizes = [1, 16, 64], strides = [1, 1, 1]} : vector<2x16x64xf32> to vector<1x16x64xf32>
    %c0_i32_44 = arith.constant 0 : i32
    %75 = arith.cmpi slt, %arg1, %c0_i32_44 : i32
    %76 = arith.extui %75 : i1 to i32
    %77 = arith.sitofp %76 : i32 to f32
    %78 = vector.broadcast %77 : f32 to vector<1x16x64xf32>
    %79 = arith.mulf %74, %78 : vector<1x16x64xf32>
    %cst_45 = arith.constant 0.000000e+00 : f32
    %80 = vector.broadcast %cst_45 : f32 to vector<18x1x64xf32>
    %c0_46 = arith.constant 0 : index
    %c0_47 = arith.constant 0 : index
    %c0_48 = arith.constant 0 : index
    %81 = vector.load %arg11[%c0_46, %c0_47, %c0_48] : memref<18x18x64xf32, #tpu.memory_space<vmem>>, vector<18x1x64xf32>
    tpu.vector_store %arg11[%c0_46, %c0_47, %c0_48], %80 {strides = array<i32>} : memref<18x18x64xf32, #tpu.memory_space<vmem>>, vector<18x1x64xf32>,
    %cst_49 = arith.constant 0.000000e+00 : f32
    %82 = vector.broadcast %cst_49 : f32 to vector<18x1x64xf32>
    %c0_50 = arith.constant 0 : index
    %c17 = arith.constant 17 : index
    %c0_51 = arith.constant 0 : index
    %83 = vector.load %arg11[%c0_50, %c17, %c0_51] : memref<18x18x64xf32, #tpu.memory_space<vmem>>, vector<18x1x64xf32>
    tpu.vector_store %arg11[%c0_50, %c17, %c0_51], %82 {strides = array<i32>} : memref<18x18x64xf32, #tpu.memory_space<vmem>>, vector<18x1x64xf32>,
    %c0_52 = arith.constant 0 : index
    %c1 = arith.constant 1 : index
    %c0_53 = arith.constant 0 : index
    %84 = vector.load %arg11[%c0_52, %c1, %c0_53] : memref<18x18x64xf32, #tpu.memory_space<vmem>>, vector<1x16x64xf32>
    tpu.vector_store %arg11[%c0_52, %c1, %c0_53], %73 {strides = array<i32>} : memref<18x18x64xf32, #tpu.memory_space<vmem>>, vector<1x16x64xf32>,
    %c17_54 = arith.constant 17 : index
    %c1_55 = arith.constant 1 : index
    %c0_56 = arith.constant 0 : index
    %85 = vector.load %arg11[%c17_54, %c1_55, %c0_56] : memref<18x18x64xf32, #tpu.memory_space<vmem>>, vector<1x16x64xf32>
    tpu.vector_store %arg11[%c17_54, %c1_55, %c0_56], %79 {strides = array<i32>} : memref<18x18x64xf32, #tpu.memory_space<vmem>>, vector<1x16x64xf32>,
    %c1_57 = arith.constant 1 : index
    %c1_58 = arith.constant 1 : index
    %c0_59 = arith.constant 0 : index
    %86 = vector.load %arg11[%c1_57, %c1_58, %c0_59] : memref<18x18x64xf32, #tpu.memory_space<vmem>>, vector<16x16x64xf32>
    tpu.vector_store %arg11[%c1_57, %c1_58, %c0_59], %29 {strides = array<i32>} : memref<18x18x64xf32, #tpu.memory_space<vmem>>, vector<16x16x64xf32>,
    %c0_60 = arith.constant 0 : index
    %c0_61 = arith.constant 0 : index
    %c0_62 = arith.constant 0 : index
    %87 = vector.load %arg11[%c0_60, %c0_61, %c0_62] : memref<18x18x64xf32, #tpu.memory_space<vmem>>, vector<16x16x64xf32>
    %c0_63 = arith.constant 0 : index
    %c1_64 = arith.constant 1 : index
    %c0_65 = arith.constant 0 : index
    %88 = vector.load %arg11[%c0_63, %c1_64, %c0_65] : memref<18x18x64xf32, #tpu.memory_space<vmem>>, vector<16x16x64xf32>
    %c0_66 = arith.constant 0 : index
    %c2 = arith.constant 2 : index
    %c0_67 = arith.constant 0 : index
    %89 = vector.load %arg11[%c0_66, %c2, %c0_67] : memref<18x18x64xf32, #tpu.memory_space<vmem>>, vector<16x16x64xf32>
    %c1_68 = arith.constant 1 : index
    %c0_69 = arith.constant 0 : index
    %c0_70 = arith.constant 0 : index
    %90 = vector.load %arg11[%c1_68, %c0_69, %c0_70] : memref<18x18x64xf32, #tpu.memory_space<vmem>>, vector<16x16x64xf32>
    %c1_71 = arith.constant 1 : index
    %c1_72 = arith.constant 1 : index
    %c0_73 = arith.constant 0 : index
    %91 = vector.load %arg11[%c1_71, %c1_72, %c0_73] : memref<18x18x64xf32, #tpu.memory_space<vmem>>, vector<16x16x64xf32>
    %c1_74 = arith.constant 1 : index
    %c2_75 = arith.constant 2 : index
    %c0_76 = arith.constant 0 : index
    %92 = vector.load %arg11[%c1_74, %c2_75, %c0_76] : memref<18x18x64xf32, #tpu.memory_space<vmem>>, vector<16x16x64xf32>
    %c2_77 = arith.constant 2 : index
    %c0_78 = arith.constant 0 : index
    %c0_79 = arith.constant 0 : index
    %93 = vector.load %arg11[%c2_77, %c0_78, %c0_79] : memref<18x18x64xf32, #tpu.memory_space<vmem>>, vector<16x16x64xf32>
    %c2_80 = arith.constant 2 : index
    %c1_81 = arith.constant 1 : index
    %c0_82 = arith.constant 0 : index
    %94 = vector.load %arg11[%c2_80, %c1_81, %c0_82] : memref<18x18x64xf32, #tpu.memory_space<vmem>>, vector<16x16x64xf32>
    %c2_83 = arith.constant 2 : index
    %c2_84 = arith.constant 2 : index
    %c0_85 = arith.constant 0 : index
    %95 = vector.load %arg11[%c2_83, %c2_84, %c0_85] : memref<18x18x64xf32, #tpu.memory_space<vmem>>, vector<16x16x64xf32>
    %96 = tpu.concatenate %87, %88, %89, %90, %91, %92, %93, %94, %95 in 2 : vector<16x16x64xf32>, vector<16x16x64xf32>, vector<16x16x64xf32>, vector<16x16x64xf32>, vector<16x16x64xf32>, vector<16x16x64xf32>, vector<16x16x64xf32>, vector<16x16x64xf32>, vector<16x16x64xf32> -> vector<16x16x576xf32>
    %97 = vector.shape_cast %96 : vector<16x16x576xf32> to vector<256x576xf32>
    %c0_86 = arith.constant 0 : index
    %c0_87 = arith.constant 0 : index
    %98 = vector.load %arg8[%c0_86, %c0_87] : memref<576x64xf32, #tpu.memory_space<vmem>>, vector<576x64xf32>
    %cst_88 = arith.constant dense<0.000000e+00> : vector<256x64xf32>
    %99 = tpu.matmul %97, %98, %cst_88 {dimension_numbers = #tpu.dot_dimension_numbers<[1], [0], [0], [1], [0, 0, 1, 1], [], []>} : vector<256x576xf32>, vector<576x64xf32>, vector<256x64xf32> -> vector<256x64xf32>
    %c0_89 = arith.constant 0 : index
    %c0_90 = arith.constant 0 : index
    %100 = vector.load %arg9[%c0_89, %c0_90] : memref<1x64xf32, #tpu.memory_space<vmem>>, vector<1x64xf32>
    %101 = vector.broadcast %100 : vector<1x64xf32> to vector<256x64xf32>
    %102 = arith.addf %99, %101 : vector<256x64xf32>
    %103 = vector.shape_cast %102 : vector<256x64xf32> to vector<1x16x16x64xf32>
    %c0_91 = arith.constant 0 : index
    %c0_92 = arith.constant 0 : index
    %c0_93 = arith.constant 0 : index
    %c0_94 = arith.constant 0 : index
    %104 = vector.load %arg10[%c0_91, %c0_92, %c0_93, %c0_94] : memref<1x16x16x64xf32, #tpu.memory_space<vmem>>, vector<1x16x16x64xf32>
    tpu.vector_store %arg10[%c0_91, %c0_92, %c0_93, %c0_94], %103 {strides = array<i32>} : memref<1x16x16x64xf32, #tpu.memory_space<vmem>>, vector<1x16x16x64xf32>,
    return
  }
  func.func @transform_0(%arg0: i32, %arg1: i32) -> (i32, i32, i32, i32) {
    %c0_i32 = arith.constant 0 : i32
    %c0_i32_0 = arith.constant 0 : i32
    %c0_i32_1 = arith.constant 0 : i32
    %c0_i32_2 = arith.constant 0 : i32
    return %arg0, %c0_i32, %c0_i32_0, %c0_i32_1 : i32, i32, i32, i32
  }
  func.func @transform_1(%arg0: i32, %arg1: i32) -> (i32, i32, i32, i32) {
    %c0_i32 = arith.constant 0 : i32
    %c0_i32_0 = arith.constant 0 : i32
    %c0_i32_1 = arith.constant 0 : i32
    %c0_i32_2 = arith.constant 0 : i32
    return %arg0, %c0_i32, %c0_i32_0, %c0_i32_1 : i32, i32, i32, i32
  }
  func.func @transform_2(%arg0: i32, %arg1: i32) -> (i32, i32) {
    %c0_i32 = arith.constant 0 : i32
    %c0_i32_0 = arith.constant 0 : i32
    %c0_i32_1 = arith.constant 0 : i32
    return %c0_i32, %c0_i32_0 : i32, i32
  }
  func.func @transform_3(%arg0: i32, %arg1: i32) -> (i32, i32) {
    %c0_i32 = arith.constant 0 : i32
    %c0_i32_0 = arith.constant 0 : i32
    %c0_i32_1 = arith.constant 0 : i32
    return %c0_i32, %c0_i32_0 : i32, i32
  }
  func.func @transform_4(%arg0: i32, %arg1: i32) -> (i32, i32) {
    %c0_i32 = arith.constant 0 : i32
    %c0_i32_0 = arith.constant 0 : i32
    %c0_i32_1 = arith.constant 0 : i32
    return %c0_i32, %c0_i32_0 : i32, i32
  }
  func.func @transform_5(%arg0: i32, %arg1: i32) -> (i32, i32) {
    %c0_i32 = arith.constant 0 : i32
    %c0_i32_0 = arith.constant 0 : i32
    %c0_i32_1 = arith.constant 0 : i32
    return %c0_i32, %c0_i32_0 : i32, i32
  }
  func.func @transform_6(%arg0: i32, %arg1: i32) -> (i32, i32) {
    %c0_i32 = arith.constant 0 : i32
    %c0_i32_0 = arith.constant 0 : i32
    %c0_i32_1 = arith.constant 0 : i32
    return %c0_i32, %c0_i32_0 : i32, i32
  }
  func.func @transform_7(%arg0: i32, %arg1: i32) -> (i32, i32) {
    %c0_i32 = arith.constant 0 : i32
    %c0_i32_0 = arith.constant 0 : i32
    %c0_i32_1 = arith.constant 0 : i32
    return %c0_i32, %c0_i32_0 : i32, i32
  }
  func.func @transform_8(%arg0: i32, %arg1: i32) -> (i32, i32, i32, i32) {
    %c0_i32 = arith.constant 0 : i32
    %c0_i32_0 = arith.constant 0 : i32
    %c0_i32_1 = arith.constant 0 : i32
    return %arg0, %arg1, %c0_i32, %c0_i32_0 : i32, i32, i32, i32
  }
}

</mosaic_0001>

<llo_original>
// kernel: _lambda_.3
$region0: #{_lambda_.3}
  #allocation0 [shape = 'u32[]', space=smem, size = 0x4, offset = 0x4, fixed_abs, tag = 'smem constant byte address 0x4 - core index']
  #allocation1 [shape = 'u32[144,128]{1,0:T(1,128)}', space=vmem, size = 0x12000, scoped, tag = 'internal scratch']
  #allocation2 [shape = 'f32[18,18,64]{2,1,0:T(8,128)}', space=vmem, size = 0x36000, scoped, tag = 'scratch operand']
  %s0 = inlined_call_operand.vmem [shape: f32[2,16,16,64], index: 0, kind: input, shape index: {}]
  %s1 = inlined_call_operand.vmem [shape: f32[2,16,16,32], index: 1, kind: input, shape index: {}]
  %s2 = inlined_call_operand.vmem [shape: f32[32,64], index: 2, kind: input, shape index: {}]
  %s3 = inlined_call_operand.vmem [shape: f32[1,64], index: 3, kind: input, shape index: {}]
  %s4 = inlined_call_operand.vmem [shape: f32[64,128], index: 4, kind: input, shape index: {}]
  %s5 = inlined_call_operand.vmem [shape: f32[1,128], index: 5, kind: input, shape index: {}]
  %s6 = inlined_call_operand.vmem [shape: f32[576,64], index: 6, kind: input, shape index: {}]
  %s7 = inlined_call_operand.vmem [shape: f32[1,64], index: 7, kind: input, shape index: {}]
  %s8 = inlined_call_operand.vmem [shape: f32[2,16,16,64], index: 8, kind: input, shape index: {}]
  %s9 = inlined_call_operand.hbm [shape: f32[2,16,16,64], index: 9, kind: output, shape index: {}]
  %s10 = sld [smem:[#allocation0]]
  $region69: #{_lambda_.3} parent=0
    _
  %s12 = ssub.s32 1, %s10
  %s13 = scalar_select 0, %s12, %s10
  $region1: #{_lambda_.3} parent=0
    #allocation3 [shape = 'u8[262144]{0}', space=vmem, size = 0x40000, scoped, tag = 'output window, operand 0']
    #allocation4 [shape = 's32[2]{0}', space=sflag, size = 0x8, scoped, tag = 'scoped memory for _lambda_.3']
    %14 = vsyncpa [#allocation4], 0
    %s15 = scalar_lea.sflag [#allocation4], 1
    %16 = vsyncpa %s15, 0
    loop: start=0, step=1, limit=4
    $region2: #{_lambda_.3} parent=1 // loop_pre_header
      _
    $region3: #{_lambda_.3} parent=1 // loop_header
      %s18 = sphi 0, %s22
      %p19 = scmp.ge.s32.totalorder %s18, 4
      %s25 = sphi 0, %s37
      %s26 = sphi 0, %s33
      %s27 = sphi 0, %s25
      %s28 = sphi 0, %s26
      %s29 = sphi 0, %s27
      %s30 = sphi 0, %s28
      %s40 = sphi 0, %s42
      %s43 = sphi 0, %s40
      %s44 = sphi 0, %s43
      %s60 = sphi 0, %s44
      %s66 = sphi 0, %s68
      %s69 = sphi 0, %s66
      %s70 = sphi 0, %s69
      %s86 = sphi 0, %s70
      %s90 = sphi 0, %s90
      %s92 = sphi 0, %s90
      %s93 = sphi 0, %s92
      %s107 = sphi 0, %s93
      %s111 = sphi 0, %s111
      %s113 = sphi 0, %s111
      %s114 = sphi 0, %s113
      %s128 = sphi 0, %s114
      %s132 = sphi 0, %s132
      %s134 = sphi 0, %s132
      %s135 = sphi 0, %s134
      %s149 = sphi 0, %s135
      %s153 = sphi 0, %s153
      %s155 = sphi 0, %s153
      %s156 = sphi 0, %s155
      %s170 = sphi 0, %s156
      %s174 = sphi 0, %s174
      %s176 = sphi 0, %s174
      %s177 = sphi 0, %s176
      %s191 = sphi 0, %s177
      %s195 = sphi 0, %s195
      %s197 = sphi 0, %s195
      %s198 = sphi 0, %s197
      %s212 = sphi 0, %s198
      %s220 = sphi 0, %s222
      %s223 = sphi 0, %s220
      %s224 = sphi 0, %s223
      %s240 = sphi 0, %s224
      %s248 = sphi 0, %s250
      %s251 = sphi 0, %s248
      %s252 = sphi 0, %s251
      %s268 = sphi 0, %s252
    $region4: #{_lambda_.3} parent=1 // loop_header_branch
      %21 = sbr.rel (%p19) target = $region8
    $region5: #{_lambda_.3} parent=1 // loop_body
      %s23 = ssub.s32 %s18, 1
      %s24 = ssub.s32 %s18, 2
      %s31 = sadd.s32 1, %s26
      %p32 = scmp.ge.s32.totalorder %s31, 1
      %s33 = scalar_select %p32, 0, %s31
      %s34 = sadd.s32 1, %s25
      %s35 = scalar_select %p32, %s34, %s25
      %p36 = scmp.ge.s32.totalorder %s35, 2
      %s37 = scalar_select %p36, 0, %s35
      %s38 = ssub.s32 %s25, %s37
      %p39 = scmp.eq.s32.totalorder %s38, 0
      %s41 = sadd.s32 %s40, 1
      %s42 = scalar_select %p39, %s40, %s41
      %p45 = pneg %p39
      %p46 = scmp.eq.s32.totalorder %s18, 1
      %p47 = por %p45, %p46
      %p48 = scmp.ne.s32.totalorder %s40, %s43
      %p49 = scmp.eq.s32.totalorder %s18, 0
      %p50 = por %p48, %p49
      %p51 = scmp.ne.s32.totalorder %s40, %s43
      %p52 = scmp.eq.s32.totalorder %s23, 1
      %p53 = por %p51, %p52
      %p54 = scmp.ne.s32.totalorder %s43, %s44
      %p55 = scmp.eq.s32.totalorder %s23, 0
      %p56 = por %p54, %p55
      %p57 = scmp.ne.s32.totalorder %s43, %s44
      %p58 = scmp.eq.s32.totalorder %s24, 1
      %p59 = por %p57, %p58
      %p61 = scmp.ne.s32.totalorder %s44, %s60
      %p62 = scmp.eq.s32.totalorder %s24, 0
      %p63 = por %p61, %p62
      %s64 = ssub.s32 %s25, %s37
      %p65 = scmp.eq.s32.totalorder %s64, 0
      %s67 = sadd.s32 %s66, 1
      %s68 = scalar_select %p65, %s66, %s67
      %p71 = pneg %p65
      %p72 = scmp.eq.s32.totalorder %s18, 1
      %p73 = por %p71, %p72
      %p74 = scmp.ne.s32.totalorder %s66, %s69
      %p75 = scmp.eq.s32.totalorder %s18, 0
      %p76 = por %p74, %p75
      %p77 = scmp.ne.s32.totalorder %s66, %s69
      %p78 = scmp.eq.s32.totalorder %s23, 1
      %p79 = por %p77, %p78
      %p80 = scmp.ne.s32.totalorder %s69, %s70
      %p81 = scmp.eq.s32.totalorder %s23, 0
      %p82 = por %p80, %p81
      %p83 = scmp.ne.s32.totalorder %s69, %s70
      %p84 = scmp.eq.s32.totalorder %s24, 1
      %p85 = por %p83, %p84
      %p87 = scmp.ne.s32.totalorder %s70, %s86
      %p88 = scmp.eq.s32.totalorder %s24, 0
      %p89 = por %p87, %p88
      %s91 = sadd.s32 %s90, 1
      %p94 = scmp.eq.s32.totalorder %s18, 1
      %p95 = scmp.ne.s32.totalorder %s90, %s92
      %p96 = scmp.eq.s32.totalorder %s18, 0
      %p97 = por %p95, %p96
      %p98 = scmp.ne.s32.totalorder %s90, %s92
      %p99 = scmp.eq.s32.totalorder %s23, 1
      %p100 = por %p98, %p99
      %p101 = scmp.ne.s32.totalorder %s92, %s93
      %p102 = scmp.eq.s32.totalorder %s23, 0
      %p103 = por %p101, %p102
      %p104 = scmp.ne.s32.totalorder %s92, %s93
      %p105 = scmp.eq.s32.totalorder %s24, 1
      %p106 = por %p104, %p105
      %p108 = scmp.ne.s32.totalorder %s93, %s107
      %p109 = scmp.eq.s32.totalorder %s24, 0
      %p110 = por %p108, %p109
      %s112 = sadd.s32 %s111, 1
      %p115 = scmp.eq.s32.totalorder %s18, 1
      %p116 = scmp.ne.s32.totalorder %s111, %s113
      %p117 = scmp.eq.s32.totalorder %s18, 0
      %p118 = por %p116, %p117
      %p119 = scmp.ne.s32.totalorder %s111, %s113
      %p120 = scmp.eq.s32.totalorder %s23, 1
      %p121 = por %p119, %p120
      %p122 = scmp.ne.s32.totalorder %s113, %s114
      %p123 = scmp.eq.s32.totalorder %s23, 0
      %p124 = por %p122, %p123
      %p125 = scmp.ne.s32.totalorder %s113, %s114
      %p126 = scmp.eq.s32.totalorder %s24, 1
      %p127 = por %p125, %p126
      %p129 = scmp.ne.s32.totalorder %s114, %s128
      %p130 = scmp.eq.s32.totalorder %s24, 0
      %p131 = por %p129, %p130
      %s133 = sadd.s32 %s132, 1
      %p136 = scmp.eq.s32.totalorder %s18, 1
      %p137 = scmp.ne.s32.totalorder %s132, %s134
      %p138 = scmp.eq.s32.totalorder %s18, 0
      %p139 = por %p137, %p138
      %p140 = scmp.ne.s32.totalorder %s132, %s134
      %p141 = scmp.eq.s32.totalorder %s23, 1
      %p142 = por %p140, %p141
      %p143 = scmp.ne.s32.totalorder %s134, %s135
      %p144 = scmp.eq.s32.totalorder %s23, 0
      %p145 = por %p143, %p144
      %p146 = scmp.ne.s32.totalorder %s134, %s135
      %p147 = scmp.eq.s32.totalorder %s24, 1
      %p148 = por %p146, %p147
      %p150 = scmp.ne.s32.totalorder %s135, %s149
      %p151 = scmp.eq.s32.totalorder %s24, 0
      %p152 = por %p150, %p151
      %s154 = sadd.s32 %s153, 1
      %p157 = scmp.eq.s32.totalorder %s18, 1
      %p158 = scmp.ne.s32.totalorder %s153, %s155
      %p159 = scmp.eq.s32.totalorder %s18, 0
      %p160 = por %p158, %p159
      %p161 = scmp.ne.s32.totalorder %s153, %s155
      %p162 = scmp.eq.s32.totalorder %s23, 1
      %p163 = por %p161, %p162
      %p164 = scmp.ne.s32.totalorder %s155, %s156
      %p165 = scmp.eq.s32.totalorder %s23, 0
      %p166 = por %p164, %p165
      %p167 = scmp.ne.s32.totalorder %s155, %s156
      %p168 = scmp.eq.s32.totalorder %s24, 1
      %p169 = por %p167, %p168
      %p171 = scmp.ne.s32.totalorder %s156, %s170
      %p172 = scmp.eq.s32.totalorder %s24, 0
      %p173 = por %p171, %p172
      %s175 = sadd.s32 %s174, 1
      %p178 = scmp.eq.s32.totalorder %s18, 1
      %p179 = scmp.ne.s32.totalorder %s174, %s176
      %p180 = scmp.eq.s32.totalorder %s18, 0
      %p181 = por %p179, %p180
      %p182 = scmp.ne.s32.totalorder %s174, %s176
      %p183 = scmp.eq.s32.totalorder %s23, 1
      %p184 = por %p182, %p183
      %p185 = scmp.ne.s32.totalorder %s176, %s177
      %p186 = scmp.eq.s32.totalorder %s23, 0
      %p187 = por %p185, %p186
      %p188 = scmp.ne.s32.totalorder %s176, %s177
      %p189 = scmp.eq.s32.totalorder %s24, 1
      %p190 = por %p188, %p189
      %p192 = scmp.ne.s32.totalorder %s177, %s191
      %p193 = scmp.eq.s32.totalorder %s24, 0
      %p194 = por %p192, %p193
      %s196 = sadd.s32 %s195, 1
      %p199 = scmp.eq.s32.totalorder %s18, 1
      %p200 = scmp.ne.s32.totalorder %s195, %s197
      %p201 = scmp.eq.s32.totalorder %s18, 0
      %p202 = por %p200, %p201
      %p203 = scmp.ne.s32.totalorder %s195, %s197
      %p204 = scmp.eq.s32.totalorder %s23, 1
      %p205 = por %p203, %p204
      %p206 = scmp.ne.s32.totalorder %s197, %s198
      %p207 = scmp.eq.s32.totalorder %s23, 0
      %p208 = por %p206, %p207
      %p209 = scmp.ne.s32.totalorder %s197, %s198
      %p210 = scmp.eq.s32.totalorder %s24, 1
      %p211 = por %p209, %p210
      %p213 = scmp.ne.s32.totalorder %s198, %s212
      %p214 = scmp.eq.s32.totalorder %s24, 0
      %p215 = por %p213, %p214
      %s216 = ssub.s32 %s25, %s37
      %s217 = ssub.s32 %s26, %s33
      %s218 = sor.u32 %s216, %s217
      %p219 = scmp.eq.s32.totalorder %s218, 0
      %s221 = sadd.s32 %s220, 1
      %s222 = scalar_select %p219, %s220, %s221
      %p225 = pneg %p219
      %p226 = scmp.eq.s32.totalorder %s18, 1
      %p227 = por %p225, %p226
      %p228 = scmp.ne.s32.totalorder %s220, %s223
      %p229 = scmp.eq.s32.totalorder %s18, 0
      %p230 = por %p228, %p229
      %p231 = scmp.ne.s32.totalorder %s220, %s223
      %p232 = scmp.eq.s32.totalorder %s23, 1
      %p233 = por %p231, %p232
      %p234 = scmp.ne.s32.totalorder %s223, %s224
      %p235 = scmp.eq.s32.totalorder %s23, 0
      %p236 = por %p234, %p235
      %p237 = scmp.ne.s32.totalorder %s223, %s224
      %p238 = scmp.eq.s32.totalorder %s24, 1
      %p239 = por %p237, %p238
      %p241 = scmp.ne.s32.totalorder %s224, %s240
      %p242 = scmp.eq.s32.totalorder %s24, 0
      %p243 = por %p241, %p242
      %s244 = ssub.s32 %s25, %s37
      %s245 = ssub.s32 %s26, %s33
      %s246 = sor.u32 %s244, %s245
      %p247 = scmp.eq.s32.totalorder %s246, 0
      %s249 = sadd.s32 %s248, 1
      %s250 = scalar_select %p247, %s248, %s249
      %p253 = pneg %p247
      %p254 = scmp.eq.s32.totalorder %s18, 1
      %p255 = por %p253, %p254
      %p256 = scmp.ne.s32.totalorder %s248, %s251
      %p257 = scmp.eq.s32.totalorder %s18, 0
      %p258 = por %p256, %p257
      %p259 = scmp.ne.s32.totalorder %s248, %s251
      %p260 = scmp.eq.s32.totalorder %s23, 1
      %p261 = por %p259, %p260
      %p262 = scmp.ne.s32.totalorder %s251, %s252
      %p263 = scmp.eq.s32.totalorder %s23, 0
      %p264 = por %p262, %p263
      %p265 = scmp.ne.s32.totalorder %s251, %s252
      %p266 = scmp.eq.s32.totalorder %s24, 1
      %p267 = por %p265, %p266
      %p269 = scmp.ne.s32.totalorder %s252, %s268
      %p270 = scmp.eq.s32.totalorder %s24, 0
      %p271 = por %p269, %p270
      %p272 = scmp.le.s32.totalorder 1, %s18
      %p273 = scmp.lt.s32.totalorder %s18, 3
      %p274 = pnand %p272, %p273
      %p275 = pneg %p274
      // Predicated region
      $region9: #{_lambda_.3} parent=5 // pred_check
        _
      $region10: #{_lambda_.3} parent=5 // pred_check_branch
        %277 = sbr.rel (%p274) target = $region12
      $region11: #{_lambda_.3} parent=5 // pred_region
        %s278 = ssub.s32 %s18, 1
        // Predicated region
        $region13: #{_lambda_.3} parent=11 // pred_check
          %p279 = pneg %p103
        $region14: #{_lambda_.3} parent=11 // pred_check_branch
          %281 = sbr.rel (%p279) target = $region16
        $region15: #{_lambda_.3} parent=11 // pred_region
          _
        $region16: #{_lambda_.3} parent=11 // pred_fallthru
          _
        // Predicated region
        $region17: #{_lambda_.3} parent=11 // pred_check
          %p282 = pneg %p124
        $region18: #{_lambda_.3} parent=11 // pred_check_branch
          %284 = sbr.rel (%p282) target = $region20
        $region19: #{_lambda_.3} parent=11 // pred_region
          _
        $region20: #{_lambda_.3} parent=11 // pred_fallthru
          _
        // Predicated region
        $region21: #{_lambda_.3} parent=11 // pred_check
          %p285 = pneg %p145
        $region22: #{_lambda_.3} parent=11 // pred_check_branch
          %287 = sbr.rel (%p285) target = $region24
        $region23: #{_lambda_.3} parent=11 // pred_region
          _
        $region24: #{_lambda_.3} parent=11 // pred_fallthru
          _
        // Predicated region
        $region25: #{_lambda_.3} parent=11 // pred_check
          %p288 = pneg %p166
        $region26: #{_lambda_.3} parent=11 // pred_check_branch
          %290 = sbr.rel (%p288) target = $region28
        $region27: #{_lambda_.3} parent=11 // pred_region
          _
        $region28: #{_lambda_.3} parent=11 // pred_fallthru
          _
        // Predicated region
        $region29: #{_lambda_.3} parent=11 // pred_check
          %p291 = pneg %p187
        $region30: #{_lambda_.3} parent=11 // pred_check_branch
          %293 = sbr.rel (%p291) target = $region32
        $region31: #{_lambda_.3} parent=11 // pred_region
          _
        $region32: #{_lambda_.3} parent=11 // pred_fallthru
          _
        // Predicated region
        $region33: #{_lambda_.3} parent=11 // pred_check
          %p294 = pneg %p208
        $region34: #{_lambda_.3} parent=11 // pred_check_branch
          %296 = sbr.rel (%p294) target = $region36
        $region35: #{_lambda_.3} parent=11 // pred_region
          _
        $region36: #{_lambda_.3} parent=11 // pred_fallthru
          _
      $region12: #{_lambda_.3} parent=5 // pred_fallthru
        _
      %p297 = scmp.lt.s32.totalorder %s18, 2
      // Predicated region
      $region37: #{_lambda_.3} parent=5 // pred_check
        %p298 = pneg %p297
      $region38: #{_lambda_.3} parent=5 // pred_check_branch
        %300 = sbr.rel (%p298) target = $region40
      $region39: #{_lambda_.3} parent=5 // pred_region
        // Predicated region
        $region41: #{_lambda_.3} parent=39 // pred_check
          %p301 = pneg %p50
        $region42: #{_lambda_.3} parent=39 // pred_check_branch
          %303 = sbr.rel (%p301) target = $region44
        $region43: #{_lambda_.3} parent=39 // pred_region
          %p304 = scmp.lt.s32.totalorder %s25, 1
          %s305 = scalar_select %p304, %s25, 1
          %s306 = smul.addr %s305, 32
          %s307 = smul.addr %s306, 8
          %s308 = scalar_lea.vmem %s0, %s307
        $region44: #{_lambda_.3} parent=39 // pred_fallthru
          _
        // Predicated region
        $region45: #{_lambda_.3} parent=39 // pred_check
          %p309 = pneg %p76
        $region46: #{_lambda_.3} parent=39 // pred_check_branch
          %311 = sbr.rel (%p309) target = $region48
        $region47: #{_lambda_.3} parent=39 // pred_region
          %p312 = scmp.lt.s32.totalorder %s25, 1
          %s313 = scalar_select %p312, %s25, 1
          %s314 = smul.addr %s313, 32
          %s315 = smul.addr %s314, 8
          %s316 = scalar_lea.vmem %s1, %s315
        $region48: #{_lambda_.3} parent=39 // pred_fallthru
          _
        // Predicated region
        $region49: #{_lambda_.3} parent=39 // pred_check
          %p317 = pneg %p230
        $region50: #{_lambda_.3} parent=39 // pred_check_branch
          %319 = sbr.rel (%p317) target = $region52
        $region51: #{_lambda_.3} parent=39 // pred_region
          %s320 = smul.u32 16, %s26
          %p321 = scmp.lt.s32.totalorder %s25, 1
          %s322 = scalar_select %p321, %s25, 1
          %p323 = scmp.lt.s32.totalorder %s320, 15
          %s324 = scalar_select %p323, %s320, 15
          %s325 = smul.addr %s324, 2
          %s326 = smul.addr %s322, 32
          %s327 = sadd.s32 %s325, %s326
          %s328 = smul.addr %s327, 8
          %s329 = scalar_lea.vmem %s8, %s328
          %s330 = smul.u32 16, %s26
        $region52: #{_lambda_.3} parent=39 // pred_fallthru
          _
      $region40: #{_lambda_.3} parent=5 // pred_fallthru
        _
      %p331 = scmp.le.s32.totalorder 1, %s18
      %p332 = scmp.lt.s32.totalorder %s18, 3
      %p333 = pnand %p331, %p332
      %p334 = pneg %p333
      // Predicated region
      $region53: #{_lambda_.3} parent=5 // pred_check
        _
      $region54: #{_lambda_.3} parent=5 // pred_check_branch
        %336 = sbr.rel (%p333) target = $region56
      $region55: #{_lambda_.3} parent=5 // pred_region
        %s337 = ssub.s32 %s18, 1
        %p338 = scmp.lt.s32.totalorder %s27, 1
        %s339 = scalar_select %p338, %s27, 1
        %s340 = smul.addr %s339, 32
        %s341 = smul.addr %s340, 8
        %s342 = scalar_lea.vmem %s0, %s341
        %p343 = pneg %p56
        %p344 = pneg %p53
        %p345 = scmp.lt.s32.totalorder %s27, 1
        %s346 = scalar_select %p345, %s27, 1
        %s347 = smul.addr %s346, 32
        %s348 = smul.addr %s347, 8
        %s349 = scalar_lea.vmem %s1, %s348
        %p350 = pneg %p82
        %p351 = pneg %p79
        %p352 = pneg %p103
        %p353 = pneg %p100
        %p354 = pneg %p124
        %p355 = pneg %p121
        %p356 = pneg %p145
        %p357 = pneg %p142
        %p358 = pneg %p166
        %p359 = pneg %p163
        %p360 = pneg %p187
        %p361 = pneg %p184
        %p362 = pneg %p208
        %p363 = pneg %p205
        %s364 = smul.u32 16, %s28
        %p365 = scmp.lt.s32.totalorder %s27, 1
        %s366 = scalar_select %p365, %s27, 1
        %p367 = scmp.lt.s32.totalorder %s364, 15
        %s368 = scalar_select %p367, %s364, 15
        %s369 = smul.addr %s368, 2
        %s370 = smul.addr %s366, 32
        %s371 = sadd.s32 %s369, %s370
        %s372 = smul.addr %s371, 8
        %s373 = scalar_lea.vmem %s8, %s372
        %p374 = pneg %p236
        %p375 = pneg %p233
        %p376 = pneg %p264
        %p377 = pneg %p261
        %s378 = sand.u32 %s251, 1
        %s379 = scalar_lea.sflag [#allocation4], %s378
        %s380 = sand.u32 %s251, 1
        %s381 = smul.addr %s380, 256
        %s382 = scalar_lea.vmem [#allocation3], %s381
        %p383 = scmp.lt.s32.totalorder %s27, 1
        %s384 = scalar_select %p383, %s27, 1
        %s385 = smul.addr %s384, 32
        %s386 = smul.addr %s385, 8
        %s387 = scalar_lea.vmem %s0, %s386
        %p388 = scmp.lt.s32.totalorder %s27, 1
        %s389 = scalar_select %p388, %s27, 1
        %s390 = smul.addr %s389, 32
        %s391 = smul.addr %s390, 8
        %s392 = scalar_lea.vmem %s1, %s391
        %s393 = smul.u32 16, %s28
        %p394 = scmp.lt.s32.totalorder %s27, 1
        %s395 = scalar_select %p394, %s27, 1
        %p396 = scmp.lt.s32.totalorder %s393, 15
        %s397 = scalar_select %p396, %s393, 15
        %s398 = smul.addr %s397, 2
        %s399 = smul.addr %s395, 32
        %s400 = sadd.s32 %s398, %s399
        %s401 = smul.addr %s400, 8
        %s402 = scalar_lea.vmem %s8, %s401
        %s403 = smul.u32 16, %s28
        %s404 = smul.u32 16, %s28
        %s405 = smul.u32 %s28, 16
        %s406 = smul.u32 %s405, 16
        %s407 = scalar_lea.vmem %s387, %s406
        %v408 = vld [vmem:[%s407] sm:$0xff]
        %v409 = vld [vmem:[%s407 + $0x8] sm:$0xff]
        %v410 = vld [vmem:[%s407 + $0x10] sm:$0xff]
        %v411 = vld [vmem:[%s407 + $0x18] sm:$0xff]
        %v412 = vld [vmem:[%s407 + $0x20] sm:$0xff]
        %v413 = vld [vmem:[%s407 + $0x28] sm:$0xff]
        %v414 = vld [vmem:[%s407 + $0x30] sm:$0xff]
        %v415 = vld [vmem:[%s407 + $0x38] sm:$0xff]
        %v416 = vld [vmem:[%s407 + $0x40] sm:$0xff]
        %v417 = vld [vmem:[%s407 + $0x48] sm:$0xff]
        %v418 = vld [vmem:[%s407 + $0x50] sm:$0xff]
        %v419 = vld [vmem:[%s407 + $0x58] sm:$0xff]
        %v420 = vld [vmem:[%s407 + $0x60] sm:$0xff]
        %v421 = vld [vmem:[%s407 + $0x68] sm:$0xff]
        %v422 = vld [vmem:[%s407 + $0x70] sm:$0xff]
        %v423 = vld [vmem:[%s407 + $0x78] sm:$0xff]
        %v424 = vld [vmem:[%s407 + $0x80] sm:$0xff]
        %v425 = vld [vmem:[%s407 + $0x88] sm:$0xff]
        %v426 = vld [vmem:[%s407 + $0x90] sm:$0xff]
        %v427 = vld [vmem:[%s407 + $0x98] sm:$0xff]
        %v428 = vld [vmem:[%s407 + $0xa0] sm:$0xff]
        %v429 = vld [vmem:[%s407 + $0xa8] sm:$0xff]
        %v430 = vld [vmem:[%s407 + $0xb0] sm:$0xff]
        %v431 = vld [vmem:[%s407 + $0xb8] sm:$0xff]
        %v432 = vld [vmem:[%s407 + $0xc0] sm:$0xff]
        %v433 = vld [vmem:[%s407 + $0xc8] sm:$0xff]
        %v434 = vld [vmem:[%s407 + $0xd0] sm:$0xff]
        %v435 = vld [vmem:[%s407 + $0xd8] sm:$0xff]
        %v436 = vld [vmem:[%s407 + $0xe0] sm:$0xff]
        %v437 = vld [vmem:[%s407 + $0xe8] sm:$0xff]
        %v438 = vld [vmem:[%s407 + $0xf0] sm:$0xff]
        %v439 = vld [vmem:[%s407 + $0xf8] sm:$0xff]
        %s440 = scalar_lea.vmem %s392, %s406
        %v441 = vld [vmem:[%s440] sm:$0xff]
        %v442 = vld [vmem:[%s440 + $0x8] sm:$0xff]
        %v443 = vld [vmem:[%s440 + $0x10] sm:$0xff]
        %v444 = vld [vmem:[%s440 + $0x18] sm:$0xff]
        %v445 = vld [vmem:[%s440 + $0x20] sm:$0xff]
        %v446 = vld [vmem:[%s440 + $0x28] sm:$0xff]
        %v447 = vld [vmem:[%s440 + $0x30] sm:$0xff]
        %v448 = vld [vmem:[%s440 + $0x38] sm:$0xff]
        %v449 = vld [vmem:[%s440 + $0x40] sm:$0xff]
        %v450 = vld [vmem:[%s440 + $0x48] sm:$0xff]
        %v451 = vld [vmem:[%s440 + $0x50] sm:$0xff]
        %v452 = vld [vmem:[%s440 + $0x58] sm:$0xff]
        %v453 = vld [vmem:[%s440 + $0x60] sm:$0xff]
        %v454 = vld [vmem:[%s440 + $0x68] sm:$0xff]
        %v455 = vld [vmem:[%s440 + $0x70] sm:$0xff]
        %v456 = vld [vmem:[%s440 + $0x78] sm:$0xff]
        %v457 = vld [vmem:[%s440 + $0x80] sm:$0xff]
        %v458 = vld [vmem:[%s440 + $0x88] sm:$0xff]
        %v459 = vld [vmem:[%s440 + $0x90] sm:$0xff]
        %v460 = vld [vmem:[%s440 + $0x98] sm:$0xff]
        %v461 = vld [vmem:[%s440 + $0xa0] sm:$0xff]
        %v462 = vld [vmem:[%s440 + $0xa8] sm:$0xff]
        %v463 = vld [vmem:[%s440 + $0xb0] sm:$0xff]
        %v464 = vld [vmem:[%s440 + $0xb8] sm:$0xff]
        %v465 = vld [vmem:[%s440 + $0xc0] sm:$0xff]
        %v466 = vld [vmem:[%s440 + $0xc8] sm:$0xff]
        %v467 = vld [vmem:[%s440 + $0xd0] sm:$0xff]
        %v468 = vld [vmem:[%s440 + $0xd8] sm:$0xff]
        %v469 = vld [vmem:[%s440 + $0xe0] sm:$0xff]
        %v470 = vld [vmem:[%s440 + $0xe8] sm:$0xff]
        %v471 = vld [vmem:[%s440 + $0xf0] sm:$0xff]
        %v472 = vld [vmem:[%s440 + $0xf8] sm:$0xff]
        %v473 = vld [vmem:[%s2] sm:$0xff]
        %v474 = vld [vmem:[%s2 + $0x8] sm:$0xff]
        %v475 = vld [vmem:[%s2 + $0x10] sm:$0xff]
        %v476 = vld [vmem:[%s2 + $0x18] sm:$0xff]
        %v477 = vld [vmem:[%s3] sm:$0x1]
        %v479 = vlaneseq
        %v480 = vshrl.u32 %v479, 7
        %v481 = vsub.s32 0, %v480
        %v482 = vrot.slane %v477, %v481
        %vm484 = vcmask 261120
        %v486 = vsel %vm484, %v441, 0
        %v489 = vsel %vm484, %v442, 0
        %v492 = vsel %vm484, %v443, 0
        %v495 = vsel %vm484, %v444, 0
        %v498 = vsel %vm484, %v445, 0
        %v501 = vsel %vm484, %v446, 0
        %v504 = vsel %vm484, %v447, 0
        %v507 = vsel %vm484, %v448, 0
        %v510 = vsel %vm484, %v449, 0
        %v513 = vsel %vm484, %v450, 0
        %v516 = vsel %vm484, %v451, 0
        %v519 = vsel %vm484, %v452, 0
        %v522 = vsel %vm484, %v453, 0
        %v525 = vsel %vm484, %v454, 0
        %v528 = vsel %vm484, %v455, 0
        %v531 = vsel %vm484, %v456, 0
        %v534 = vsel %vm484, %v457, 0
        %v537 = vsel %vm484, %v458, 0
        %v540 = vsel %vm484, %v459, 0
        %v543 = vsel %vm484, %v460, 0
        %v546 = vsel %vm484, %v461, 0
        %v549 = vsel %vm484, %v462, 0
        %v552 = vsel %vm484, %v463, 0
        %v555 = vsel %vm484, %v464, 0
        %v558 = vsel %vm484, %v465, 0
        %v561 = vsel %vm484, %v466, 0
        %v564 = vsel %vm484, %v467, 0
        %v567 = vsel %vm484, %v468, 0
        %v570 = vsel %vm484, %v469, 0
        %v573 = vsel %vm484, %v470, 0
        %v576 = vsel %vm484, %v471, 0
        %v579 = vsel %vm484, %v472, 0
        %581 = vmatprep.subr.mxu0 0.0
        %582 = vmatpush1.msra.mxu0 %v473
        %583 = vmatprep.subr.mxu0 0.0
        %584 = vmatpush1.msra.mxu0 %v474
        %585 = vmatprep.subr.mxu0 0.0
        %586 = vmatpush1.msra.mxu0 %v475
        %587 = vmatprep.subr.mxu0 0.0
        %588 = vmatpush1.msra.mxu0 %v476
        %589 = vmatprep.subr.mxu0 0.0
        %590 = vmatpush1.msra.mxu0 0.0
        %591 = vmatprep.subr.mxu0 0.0
        %592 = vmatpush1.msra.mxu0 0.0
        %593 = vmatprep.subr.mxu0 0.0
        %594 = vmatpush1.msra.mxu0 0.0
        %595 = vmatprep.subr.mxu0 0.0
        %596 = vmatpush1.msra.mxu0 0.0
        %597 = vmatprep.subr.mxu0 0.0
        %598 = vmatpush1.msra.mxu0 0.0
        %599 = vmatprep.subr.mxu0 0.0
        %600 = vmatpush1.msra.mxu0 0.0
        %601 = vmatprep.subr.mxu0 0.0
        %602 = vmatpush1.msra.mxu0 0.0
        %603 = vmatprep.subr.mxu0 0.0
        %604 = vmatpush1.msra.mxu0 0.0
        %605 = vmatprep.subr.mxu0 0.0
        %606 = vmatpush1.msra.mxu0 0.0
        %607 = vmatprep.subr.mxu0 0.0
        %608 = vmatpush1.msra.mxu0 0.0
        %609 = vmatprep.subr.mxu0 0.0
        %610 = vmatpush1.msra.mxu0 0.0
        %611 = vmatprep.subr.mxu0 0.0
        %612 = vmatpush1.msra.mxu0 0.0
        %613 = vmatprep.subr.mxu0 0.0
        %614 = vmatpush1.msra.mxu0 0.0
        %615 = vmatprep.subr.mxu0 0.0
        %616 = vmatpush1.msra.mxu0 0.0
        %617 = vmatprep.subr.mxu0 0.0
        %618 = vmatpush1.msra.mxu0 0.0
        %619 = vmatprep.subr.mxu0 0.0
        %620 = vmatpush1.msra.mxu0 0.0
        %621 = vmatprep.subr.mxu0 0.0
        %622 = vmatpush1.msra.mxu0 0.0
        %623 = vmatprep.subr.mxu0 0.0
        %624 = vmatpush1.msra.mxu0 0.0
        %625 = vmatprep.subr.mxu0 0.0
        %626 = vmatpush1.msra.mxu0 0.0
        %627 = vmatprep.subr.mxu0 0.0
        %628 = vmatpush1.msra.mxu0 0.0
        %629 = vmatprep.subr.mxu0 0.0
        %630 = vmatpush1.msra.mxu0 0.0
        %631 = vmatprep.subr.mxu0 0.0
        %632 = vmatpush1.msra.mxu0 0.0
        %633 = vmatprep.subr.mxu0 0.0
        %634 = vmatpush1.msra.mxu0 0.0
        %635 = vmatprep.subr.mxu0 0.0
        %636 = vmatpush1.msra.mxu0 0.0
        %637 = vmatprep.subr.mxu0 0.0
        %638 = vmatpush1.msra.mxu0 0.0
        %639 = vmatprep.subr.mxu0 0.0
        %640 = vmatpush1.msra.mxu0 0.0
        %641 = vmatprep.subr.mxu0 0.0
        %642 = vmatpush1.msra.mxu0 0.0
        %643 = vmatprep.subr.mxu0 0.0
        %644 = vmatpush1.msra.mxu0 0.0
        %645 = vmatprep.mubr.f32.mxu0 0.0
        %646 = vmatmul.mubr.f32.gmra.mrb[0].mxu0 %v486
        %v647 = vpop.f32.mrb[0].mxu0
        %v648 = vadd.f32 %v482, %v647
        %v649 = vpop.f32.mrb[0].mxu0
        %650 = vmatprep.mubr.f32.mxu0 0.0
        %651 = vmatmul.mubr.f32.gmra.mrb[0].mxu0 %v489
        %v652 = vpop.f32.mrb[0].mxu0
        %v653 = vadd.f32 %v482, %v652
        %v654 = vpop.f32.mrb[0].mxu0
        %655 = vmatprep.mubr.f32.mxu0 0.0
        %656 = vmatmul.mubr.f32.gmra.mrb[0].mxu0 %v492
        %v657 = vpop.f32.mrb[0].mxu0
        %v658 = vadd.f32 %v482, %v657
        %v659 = vpop.f32.mrb[0].mxu0
        %660 = vmatprep.mubr.f32.mxu0 0.0
        %661 = vmatmul.mubr.f32.gmra.mrb[0].mxu0 %v495
        %v662 = vpop.f32.mrb[0].mxu0
        %v663 = vadd.f32 %v482, %v662
        %v664 = vpop.f32.mrb[0].mxu0
        %665 = vmatprep.mubr.f32.mxu0 0.0
        %666 = vmatmul.mubr.f32.gmra.mrb[0].mxu0 %v498
        %v667 = vpop.f32.mrb[0].mxu0
        %v668 = vadd.f32 %v482, %v667
        %v669 = vpop.f32.mrb[0].mxu0
        %670 = vmatprep.mubr.f32.mxu0 0.0
        %671 = vmatmul.mubr.f32.gmra.mrb[0].mxu0 %v501
        %v672 = vpop.f32.mrb[0].mxu0
        %v673 = vadd.f32 %v482, %v672
        %v674 = vpop.f32.mrb[0].mxu0
        %675 = vmatprep.mubr.f32.mxu0 0.0
        %676 = vmatmul.mubr.f32.gmra.mrb[0].mxu0 %v504
        %v677 = vpop.f32.mrb[0].mxu0
        %v678 = vadd.f32 %v482, %v677
        %v679 = vpop.f32.mrb[0].mxu0
        %680 = vmatprep.mubr.f32.mxu0 0.0
        %681 = vmatmul.mubr.f32.gmra.mrb[0].mxu0 %v507
        %v682 = vpop.f32.mrb[0].mxu0
        %v683 = vadd.f32 %v482, %v682
        %v684 = vpop.f32.mrb[0].mxu0
        %685 = vmatprep.mubr.f32.mxu0 0.0
        %686 = vmatmul.mubr.f32.gmra.mrb[0].mxu0 %v510
        %v687 = vpop.f32.mrb[0].mxu0
        %v688 = vadd.f32 %v482, %v687
        %v689 = vpop.f32.mrb[0].mxu0
        %690 = vmatprep.mubr.f32.mxu0 0.0
        %691 = vmatmul.mubr.f32.gmra.mrb[0].mxu0 %v513
        %v692 = vpop.f32.mrb[0].mxu0
        %v693 = vadd.f32 %v482, %v692
        %v694 = vpop.f32.mrb[0].mxu0
        %695 = vmatprep.mubr.f32.mxu0 0.0
        %696 = vmatmul.mubr.f32.gmra.mrb[0].mxu0 %v516
        %v697 = vpop.f32.mrb[0].mxu0
        %v698 = vadd.f32 %v482, %v697
        %v699 = vpop.f32.mrb[0].mxu0
        %700 = vmatprep.mubr.f32.mxu0 0.0
        %701 = vmatmul.mubr.f32.gmra.mrb[0].mxu0 %v519
        %v702 = vpop.f32.mrb[0].mxu0
        %v703 = vadd.f32 %v482, %v702
        %v704 = vpop.f32.mrb[0].mxu0
        %705 = vmatprep.mubr.f32.mxu0 0.0
        %706 = vmatmul.mubr.f32.gmra.mrb[0].mxu0 %v522
        %v707 = vpop.f32.mrb[0].mxu0
        %v708 = vadd.f32 %v482, %v707
        %v709 = vpop.f32.mrb[0].mxu0
        %710 = vmatprep.mubr.f32.mxu0 0.0
        %711 = vmatmul.mubr.f32.gmra.mrb[0].mxu0 %v525
        %v712 = vpop.f32.mrb[0].mxu0
        %v713 = vadd.f32 %v482, %v712
        %v714 = vpop.f32.mrb[0].mxu0
        %715 = vmatprep.mubr.f32.mxu0 0.0
        %716 = vmatmul.mubr.f32.gmra.mrb[0].mxu0 %v528
        %v717 = vpop.f32.mrb[0].mxu0
        %v718 = vadd.f32 %v482, %v717
        %v719 = vpop.f32.mrb[0].mxu0
        %720 = vmatprep.mubr.f32.mxu0 0.0
        %721 = vmatmul.mubr.f32.gmra.mrb[0].mxu0 %v531
        %v722 = vpop.f32.mrb[0].mxu0
        %v723 = vadd.f32 %v482, %v722
        %v724 = vpop.f32.mrb[0].mxu0
        %725 = vmatprep.mubr.f32.mxu0 0.0
        %726 = vmatmul.mubr.f32.gmra.mrb[0].mxu0 %v534
        %v727 = vpop.f32.mrb[0].mxu0
        %v728 = vadd.f32 %v482, %v727
        %v729 = vpop.f32.mrb[0].mxu0
        %730 = vmatprep.mubr.f32.mxu0 0.0
        %731 = vmatmul.mubr.f32.gmra.mrb[0].mxu0 %v537
        %v732 = vpop.f32.mrb[0].mxu0
        %v733 = vadd.f32 %v482, %v732
        %v734 = vpop.f32.mrb[0].mxu0
        %735 = vmatprep.mubr.f32.mxu0 0.0
        %736 = vmatmul.mubr.f32.gmra.mrb[0].mxu0 %v540
        %v737 = vpop.f32.mrb[0].mxu0
        %v738 = vadd.f32 %v482, %v737
        %v739 = vpop.f32.mrb[0].mxu0
        %740 = vmatprep.mubr.f32.mxu0 0.0
        %741 = vmatmul.mubr.f32.gmra.mrb[0].mxu0 %v543
        %v742 = vpop.f32.mrb[0].mxu0
        %v743 = vadd.f32 %v482, %v742
        %v744 = vpop.f32.mrb[0].mxu0
        %745 = vmatprep.mubr.f32.mxu0 0.0
        %746 = vmatmul.mubr.f32.gmra.mrb[0].mxu0 %v546
        %v747 = vpop.f32.mrb[0].mxu0
        %v748 = vadd.f32 %v482, %v747
        %v749 = vpop.f32.mrb[0].mxu0
        %750 = vmatprep.mubr.f32.mxu0 0.0
        %751 = vmatmul.mubr.f32.gmra.mrb[0].mxu0 %v549
        %v752 = vpop.f32.mrb[0].mxu0
        %v753 = vadd.f32 %v482, %v752
        %v754 = vpop.f32.mrb[0].mxu0
        %755 = vmatprep.mubr.f32.mxu0 0.0
        %756 = vmatmul.mubr.f32.gmra.mrb[0].mxu0 %v552
        %v757 = vpop.f32.mrb[0].mxu0
        %v758 = vadd.f32 %v482, %v757
        %v759 = vpop.f32.mrb[0].mxu0
        %760 = vmatprep.mubr.f32.mxu0 0.0
        %761 = vmatmul.mubr.f32.gmra.mrb[0].mxu0 %v555
        %v762 = vpop.f32.mrb[0].mxu0
        %v763 = vadd.f32 %v482, %v762
        %v764 = vpop.f32.mrb[0].mxu0
        %765 = vmatprep.mubr.f32.mxu0 0.0
        %766 = vmatmul.mubr.f32.gmra.mrb[0].mxu0 %v558
        %v767 = vpop.f32.mrb[0].mxu0
        %v768 = vadd.f32 %v482, %v767
        %v769 = vpop.f32.mrb[0].mxu0
        %770 = vmatprep.mubr.f32.mxu0 0.0
        %771 = vmatmul.mubr.f32.gmra.mrb[0].mxu0 %v561
        %v772 = vpop.f32.mrb[0].mxu0
        %v773 = vadd.f32 %v482, %v772
        %v774 = vpop.f32.mrb[0].mxu0
        %775 = vmatprep.mubr.f32.mxu0 0.0
        %776 = vmatmul.mubr.f32.gmra.mrb[0].mxu0 %v564
        %v777 = vpop.f32.mrb[0].mxu0
        %v778 = vadd.f32 %v482, %v777
        %v779 = vpop.f32.mrb[0].mxu0
        %780 = vmatprep.mubr.f32.mxu0 0.0
        %781 = vmatmul.mubr.f32.gmra.mrb[0].mxu0 %v567
        %v782 = vpop.f32.mrb[0].mxu0
        %v783 = vadd.f32 %v482, %v782
        %v784 = vpop.f32.mrb[0].mxu0
        %785 = vmatprep.mubr.f32.mxu0 0.0
        %786 = vmatmul.mubr.f32.gmra.mrb[0].mxu0 %v570
        %v787 = vpop.f32.mrb[0].mxu0
        %v788 = vadd.f32 %v482, %v787
        %v789 = vpop.f32.mrb[0].mxu0
        %790 = vmatprep.mubr.f32.mxu0 0.0
        %791 = vmatmul.mubr.f32.gmra.mrb[0].mxu0 %v573
        %v792 = vpop.f32.mrb[0].mxu0
        %v793 = vadd.f32 %v482, %v792
        %v794 = vpop.f32.mrb[0].mxu0
        %795 = vmatprep.mubr.f32.mxu0 0.0
        %796 = vmatmul.mubr.f32.gmra.mrb[0].mxu0 %v576
        %v797 = vpop.f32.mrb[0].mxu0
        %v798 = vadd.f32 %v482, %v797
        %v799 = vpop.f32.mrb[0].mxu0
        %800 = vmatprep.mubr.f32.mxu0 0.0
        %801 = vmatmul.mubr.f32.gmra.mrb[0].mxu0 %v579
        %v802 = vpop.f32.mrb[0].mxu0
        %v803 = vadd.f32 %v482, %v802
        %v804 = vpop.f32.mrb[0].mxu0
        %805 = vdwg.mxu0
        %vm806 = vcmp.ge.f32.partialorder %v648, 0.0
        %vm807 = vcmp.ge.f32.partialorder %v653, 0.0
        %vm808 = vcmp.ge.f32.partialorder %v658, 0.0
        %vm809 = vcmp.ge.f32.partialorder %v663, 0.0
        %vm810 = vcmp.ge.f32.partialorder %v668, 0.0
        %vm811 = vcmp.ge.f32.partialorder %v673, 0.0
        %vm812 = vcmp.ge.f32.partialorder %v678, 0.0
        %vm813 = vcmp.ge.f32.partialorder %v683, 0.0
        %vm814 = vcmp.ge.f32.partialorder %v688, 0.0
        %vm815 = vcmp.ge.f32.partialorder %v693, 0.0
        %vm816 = vcmp.ge.f32.partialorder %v698, 0.0
        %vm817 = vcmp.ge.f32.partialorder %v703, 0.0
        %vm818 = vcmp.ge.f32.partialorder %v708, 0.0
        %vm819 = vcmp.ge.f32.partialorder %v713, 0.0
        %vm820 = vcmp.ge.f32.partialorder %v718, 0.0
        %vm821 = vcmp.ge.f32.partialorder %v723, 0.0
        %vm822 = vcmp.ge.f32.partialorder %v728, 0.0
        %vm823 = vcmp.ge.f32.partialorder %v733, 0.0
        %vm824 = vcmp.ge.f32.partialorder %v738, 0.0
        %vm825 = vcmp.ge.f32.partialorder %v743, 0.0
        %vm826 = vcmp.ge.f32.partialorder %v748, 0.0
        %vm827 = vcmp.ge.f32.partialorder %v753, 0.0
        %vm828 = vcmp.ge.f32.partialorder %v758, 0.0
        %vm829 = vcmp.ge.f32.partialorder %v763, 0.0
        %vm830 = vcmp.ge.f32.partialorder %v768, 0.0
        %vm831 = vcmp.ge.f32.partialorder %v773, 0.0
        %vm832 = vcmp.ge.f32.partialorder %v778, 0.0
        %vm833 = vcmp.ge.f32.partialorder %v783, 0.0
        %vm834 = vcmp.ge.f32.partialorder %v788, 0.0
        %vm835 = vcmp.ge.f32.partialorder %v793, 0.0
        %vm836 = vcmp.ge.f32.partialorder %v798, 0.0
        %vm837 = vcmp.ge.f32.partialorder %v803, 0.0
        %v838 = vmul.f32 %v648, 0.01
        %v839 = vmul.f32 %v653, 0.01
        %v840 = vmul.f32 %v658, 0.01
        %v841 = vmul.f32 %v663, 0.01
        %v842 = vmul.f32 %v668, 0.01
        %v843 = vmul.f32 %v673, 0.01
        %v844 = vmul.f32 %v678, 0.01
        %v845 = vmul.f32 %v683, 0.01
        %v846 = vmul.f32 %v688, 0.01
        %v847 = vmul.f32 %v693, 0.01
        %v848 = vmul.f32 %v698, 0.01
        %v849 = vmul.f32 %v703, 0.01
        %v850 = vmul.f32 %v708, 0.01
        %v851 = vmul.f32 %v713, 0.01
        %v852 = vmul.f32 %v718, 0.01
        %v853 = vmul.f32 %v723, 0.01
        %v854 = vmul.f32 %v728, 0.01
        %v855 = vmul.f32 %v733, 0.01
        %v856 = vmul.f32 %v738, 0.01
        %v857 = vmul.f32 %v743, 0.01
        %v858 = vmul.f32 %v748, 0.01
        %v859 = vmul.f32 %v753, 0.01
        %v860 = vmul.f32 %v758, 0.01
        %v861 = vmul.f32 %v763, 0.01
        %v862 = vmul.f32 %v768, 0.01
        %v863 = vmul.f32 %v773, 0.01
        %v864 = vmul.f32 %v778, 0.01
        %v865 = vmul.f32 %v783, 0.01
        %v866 = vmul.f32 %v788, 0.01
        %v867 = vmul.f32 %v793, 0.01
        %v868 = vmul.f32 %v798, 0.01
        %v869 = vmul.f32 %v803, 0.01
        %v870 = vsel %vm806, %v648, %v838
        %v871 = vsel %vm807, %v653, %v839
        %v872 = vsel %vm808, %v658, %v840
        %v873 = vsel %vm809, %v663, %v841
        %v874 = vsel %vm810, %v668, %v842
        %v875 = vsel %vm811, %v673, %v843
        %v876 = vsel %vm812, %v678, %v844
        %v877 = vsel %vm813, %v683, %v845
        %v878 = vsel %vm814, %v688, %v846
        %v879 = vsel %vm815, %v693, %v847
        %v880 = vsel %vm816, %v698, %v848
        %v881 = vsel %vm817, %v703, %v849
        %v882 = vsel %vm818, %v708, %v850
        %v883 = vsel %vm819, %v713, %v851
        %v884 = vsel %vm820, %v718, %v852
        %v885 = vsel %vm821, %v723, %v853
        %v886 = vsel %vm822, %v728, %v854
        %v887 = vsel %vm823, %v733, %v855
        %v888 = vsel %vm824, %v738, %v856
        %v889 = vsel %vm825, %v743, %v857
        %v890 = vsel %vm826, %v748, %v858
        %v891 = vsel %vm827, %v753, %v859
        %v892 = vsel %vm828, %v758, %v860
        %v893 = vsel %vm829, %v763, %v861
        %v894 = vsel %vm830, %v768, %v862
        %v895 = vsel %vm831, %v773, %v863
        %v896 = vsel %vm832, %v778, %v864
        %v897 = vsel %vm833, %v783, %v865
        %v898 = vsel %vm834, %v788, %v866
        %v899 = vsel %vm835, %v793, %v867
        %v900 = vsel %vm836, %v798, %v868
        %v901 = vsel %vm837, %v803, %v869
        %v902 = vld [vmem:[%s4] sm:$0xff]
        %v903 = vld [vmem:[%s4 + $0x8] sm:$0xff]
        %v904 = vld [vmem:[%s4 + $0x10] sm:$0xff]
        %v905 = vld [vmem:[%s4 + $0x18] sm:$0xff]
        %v906 = vld [vmem:[%s4 + $0x20] sm:$0xff]
        %v907 = vld [vmem:[%s4 + $0x28] sm:$0xff]
        %v908 = vld [vmem:[%s4 + $0x30] sm:$0xff]
        %v909 = vld [vmem:[%s4 + $0x38] sm:$0xff]
        %v910 = vld [vmem:[%s5] sm:$0x1]
        %v912 = vlaneseq
        %v913 = vshrl.u32 %v912, 7
        %v914 = vsub.s32 0, %v913
        %v915 = vrot.slane %v910, %v914
        %vm917 = vcmask 523264
        %v919 = vsel %vm917, %v870, 0
        %v922 = vsel %vm917, %v871, 0
        %v925 = vsel %vm917, %v872, 0
        %v928 = vsel %vm917, %v873, 0
        %v931 = vsel %vm917, %v874, 0
        %v934 = vsel %vm917, %v875, 0
        %v937 = vsel %vm917, %v876, 0
        %v940 = vsel %vm917, %v877, 0
        %v943 = vsel %vm917, %v878, 0
        %v946 = vsel %vm917, %v879, 0
        %v949 = vsel %vm917, %v880, 0
        %v952 = vsel %vm917, %v881, 0
        %v955 = vsel %vm917, %v882, 0
        %v958 = vsel %vm917, %v883, 0
        %v961 = vsel %vm917, %v884, 0
        %v964 = vsel %vm917, %v885, 0
        %v967 = vsel %vm917, %v886, 0
        %v970 = vsel %vm917, %v887, 0
        %v973 = vsel %vm917, %v888, 0
        %v976 = vsel %vm917, %v889, 0
        %v979 = vsel %vm917, %v890, 0
        %v982 = vsel %vm917, %v891, 0
        %v985 = vsel %vm917, %v892, 0
        %v988 = vsel %vm917, %v893, 0
        %v991 = vsel %vm917, %v894, 0
        %v994 = vsel %vm917, %v895, 0
        %v997 = vsel %vm917, %v896, 0
        %v1000 = vsel %vm917, %v897, 0
        %v1003 = vsel %vm917, %v898, 0
        %v1006 = vsel %vm917, %v899, 0
        %v1009 = vsel %vm917, %v900, 0
        %v1012 = vsel %vm917, %v901, 0
        %1014 = vmatprep.subr.mxu0 0.0
        %1015 = vmatpush1.msra.mxu0 %v902
        %1016 = vmatprep.subr.mxu0 0.0
        %1017 = vmatpush1.msra.mxu0 %v903
        %1018 = vmatprep.subr.mxu0 0.0
        %1019 = vmatpush1.msra.mxu0 %v904
        %1020 = vmatprep.subr.mxu0 0.0
        %1021 = vmatpush1.msra.mxu0 %v905
        %1022 = vmatprep.subr.mxu0 0.0
        %1023 = vmatpush1.msra.mxu0 %v906
        %1024 = vmatprep.subr.mxu0 0.0
        %1025 = vmatpush1.msra.mxu0 %v907
        %1026 = vmatprep.subr.mxu0 0.0
        %1027 = vmatpush1.msra.mxu0 %v908
        %1028 = vmatprep.subr.mxu0 0.0
        %1029 = vmatpush1.msra.mxu0 %v909
        %1030 = vmatprep.subr.mxu0 0.0
        %1031 = vmatpush1.msra.mxu0 0.0
        %1032 = vmatprep.subr.mxu0 0.0
        %1033 = vmatpush1.msra.mxu0 0.0
        %1034 = vmatprep.subr.mxu0 0.0
        %1035 = vmatpush1.msra.mxu0 0.0
        %1036 = vmatprep.subr.mxu0 0.0
        %1037 = vmatpush1.msra.mxu0 0.0
        %1038 = vmatprep.subr.mxu0 0.0
        %1039 = vmatpush1.msra.mxu0 0.0
        %1040 = vmatprep.subr.mxu0 0.0
        %1041 = vmatpush1.msra.mxu0 0.0
        %1042 = vmatprep.subr.mxu0 0.0
        %1043 = vmatpush1.msra.mxu0 0.0
        %1044 = vmatprep.subr.mxu0 0.0
        %1045 = vmatpush1.msra.mxu0 0.0
        %1046 = vmatprep.subr.mxu0 0.0
        %1047 = vmatpush1.msra.mxu0 0.0
        %1048 = vmatprep.subr.mxu0 0.0
        %1049 = vmatpush1.msra.mxu0 0.0
        %1050 = vmatprep.subr.mxu0 0.0
        %1051 = vmatpush1.msra.mxu0 0.0
        %1052 = vmatprep.subr.mxu0 0.0
        %1053 = vmatpush1.msra.mxu0 0.0
        %1054 = vmatprep.subr.mxu0 0.0
        %1055 = vmatpush1.msra.mxu0 0.0
        %1056 = vmatprep.subr.mxu0 0.0
        %1057 = vmatpush1.msra.mxu0 0.0
        %1058 = vmatprep.subr.mxu0 0.0
        %1059 = vmatpush1.msra.mxu0 0.0
        %1060 = vmatprep.subr.mxu0 0.0
        %1061 = vmatpush1.msra.mxu0 0.0
        %1062 = vmatprep.subr.mxu0 0.0
        %1063 = vmatpush1.msra.mxu0 0.0
        %1064 = vmatprep.subr.mxu0 0.0
        %1065 = vmatpush1.msra.mxu0 0.0
        %1066 = vmatprep.subr.mxu0 0.0
        %1067 = vmatpush1.msra.mxu0 0.0
        %1068 = vmatprep.subr.mxu0 0.0
        %1069 = vmatpush1.msra.mxu0 0.0
        %1070 = vmatprep.subr.mxu0 0.0
        %1071 = vmatpush1.msra.mxu0 0.0
        %1072 = vmatprep.subr.mxu0 0.0
        %1073 = vmatpush1.msra.mxu0 0.0
        %1074 = vmatprep.subr.mxu0 0.0
        %1075 = vmatpush1.msra.mxu0 0.0
        %1076 = vmatprep.subr.mxu0 0.0
        %1077 = vmatpush1.msra.mxu0 0.0
        %1078 = vmatprep.mubr.f32.mxu0 0.0
        %1079 = vmatmul.mubr.f32.gmra.mrb[0].mxu0 %v919
        %v1080 = vpop.f32.mrb[0].mxu0
        %v1081 = vadd.f32 %v915, %v1080
        %v1082 = vpop.f32.mrb[0].mxu0
        %1083 = vmatprep.mubr.f32.mxu0 0.0
        %1084 = vmatmul.mubr.f32.gmra.mrb[0].mxu0 %v922
        %v1085 = vpop.f32.mrb[0].mxu0
        %v1086 = vadd.f32 %v915, %v1085
        %v1087 = vpop.f32.mrb[0].mxu0
        %1088 = vmatprep.mubr.f32.mxu0 0.0
        %1089 = vmatmul.mubr.f32.gmra.mrb[0].mxu0 %v925
        %v1090 = vpop.f32.mrb[0].mxu0
        %v1091 = vadd.f32 %v915, %v1090
        %v1092 = vpop.f32.mrb[0].mxu0
        %1093 = vmatprep.mubr.f32.mxu0 0.0
        %1094 = vmatmul.mubr.f32.gmra.mrb[0].mxu0 %v928
        %v1095 = vpop.f32.mrb[0].mxu0
        %v1096 = vadd.f32 %v915, %v1095
        %v1097 = vpop.f32.mrb[0].mxu0
        %1098 = vmatprep.mubr.f32.mxu0 0.0
        %1099 = vmatmul.mubr.f32.gmra.mrb[0].mxu0 %v931
        %v1100 = vpop.f32.mrb[0].mxu0
        %v1101 = vadd.f32 %v915, %v1100
        %v1102 = vpop.f32.mrb[0].mxu0
        %1103 = vmatprep.mubr.f32.mxu0 0.0
        %1104 = vmatmul.mubr.f32.gmra.mrb[0].mxu0 %v934
        %v1105 = vpop.f32.mrb[0].mxu0
        %v1106 = vadd.f32 %v915, %v1105
        %v1107 = vpop.f32.mrb[0].mxu0
        %1108 = vmatprep.mubr.f32.mxu0 0.0
        %1109 = vmatmul.mubr.f32.gmra.mrb[0].mxu0 %v937
        %v1110 = vpop.f32.mrb[0].mxu0
        %v1111 = vadd.f32 %v915, %v1110
        %v1112 = vpop.f32.mrb[0].mxu0
        %1113 = vmatprep.mubr.f32.mxu0 0.0
        %1114 = vmatmul.mubr.f32.gmra.mrb[0].mxu0 %v940
        %v1115 = vpop.f32.mrb[0].mxu0
        %v1116 = vadd.f32 %v915, %v1115
        %v1117 = vpop.f32.mrb[0].mxu0
        %1118 = vmatprep.mubr.f32.mxu0 0.0
        %1119 = vmatmul.mubr.f32.gmra.mrb[0].mxu0 %v943
        %v1120 = vpop.f32.mrb[0].mxu0
        %v1121 = vadd.f32 %v915, %v1120
        %v1122 = vpop.f32.mrb[0].mxu0
        %1123 = vmatprep.mubr.f32.mxu0 0.0
        %1124 = vmatmul.mubr.f32.gmra.mrb[0].mxu0 %v946
        %v1125 = vpop.f32.mrb[0].mxu0
        %v1126 = vadd.f32 %v915, %v1125
        %v1127 = vpop.f32.mrb[0].mxu0
        %1128 = vmatprep.mubr.f32.mxu0 0.0
        %1129 = vmatmul.mubr.f32.gmra.mrb[0].mxu0 %v949
        %v1130 = vpop.f32.mrb[0].mxu0
        %v1131 = vadd.f32 %v915, %v1130
        %v1132 = vpop.f32.mrb[0].mxu0
        %1133 = vmatprep.mubr.f32.mxu0 0.0
        %1134 = vmatmul.mubr.f32.gmra.mrb[0].mxu0 %v952
        %v1135 = vpop.f32.mrb[0].mxu0
        %v1136 = vadd.f32 %v915, %v1135
        %v1137 = vpop.f32.mrb[0].mxu0
        %1138 = vmatprep.mubr.f32.mxu0 0.0
        %1139 = vmatmul.mubr.f32.gmra.mrb[0].mxu0 %v955
        %v1140 = vpop.f32.mrb[0].mxu0
        %v1141 = vadd.f32 %v915, %v1140
        %v1142 = vpop.f32.mrb[0].mxu0
        %1143 = vmatprep.mubr.f32.mxu0 0.0
        %1144 = vmatmul.mubr.f32.gmra.mrb[0].mxu0 %v958
        %v1145 = vpop.f32.mrb[0].mxu0
        %v1146 = vadd.f32 %v915, %v1145
        %v1147 = vpop.f32.mrb[0].mxu0
        %1148 = vmatprep.mubr.f32.mxu0 0.0
        %1149 = vmatmul.mubr.f32.gmra.mrb[0].mxu0 %v961
        %v1150 = vpop.f32.mrb[0].mxu0
        %v1151 = vadd.f32 %v915, %v1150
        %v1152 = vpop.f32.mrb[0].mxu0
        %1153 = vmatprep.mubr.f32.mxu0 0.0
        %1154 = vmatmul.mubr.f32.gmra.mrb[0].mxu0 %v964
        %v1155 = vpop.f32.mrb[0].mxu0
        %v1156 = vadd.f32 %v915, %v1155
        %v1157 = vpop.f32.mrb[0].mxu0
        %1158 = vmatprep.mubr.f32.mxu0 0.0
        %1159 = vmatmul.mubr.f32.gmra.mrb[0].mxu0 %v967
        %v1160 = vpop.f32.mrb[0].mxu0
        %v1161 = vadd.f32 %v915, %v1160
        %v1162 = vpop.f32.mrb[0].mxu0
        %1163 = vmatprep.mubr.f32.mxu0 0.0
        %1164 = vmatmul.mubr.f32.gmra.mrb[0].mxu0 %v970
        %v1165 = vpop.f32.mrb[0].mxu0
        %v1166 = vadd.f32 %v915, %v1165
        %v1167 = vpop.f32.mrb[0].mxu0
        %1168 = vmatprep.mubr.f32.mxu0 0.0
        %1169 = vmatmul.mubr.f32.gmra.mrb[0].mxu0 %v973
        %v1170 = vpop.f32.mrb[0].mxu0
        %v1171 = vadd.f32 %v915, %v1170
        %v1172 = vpop.f32.mrb[0].mxu0
        %1173 = vmatprep.mubr.f32.mxu0 0.0
        %1174 = vmatmul.mubr.f32.gmra.mrb[0].mxu0 %v976
        %v1175 = vpop.f32.mrb[0].mxu0
        %v1176 = vadd.f32 %v915, %v1175
        %v1177 = vpop.f32.mrb[0].mxu0
        %1178 = vmatprep.mubr.f32.mxu0 0.0
        %1179 = vmatmul.mubr.f32.gmra.mrb[0].mxu0 %v979
        %v1180 = vpop.f32.mrb[0].mxu0
        %v1181 = vadd.f32 %v915, %v1180
        %v1182 = vpop.f32.mrb[0].mxu0
        %1183 = vmatprep.mubr.f32.mxu0 0.0
        %1184 = vmatmul.mubr.f32.gmra.mrb[0].mxu0 %v982
        %v1185 = vpop.f32.mrb[0].mxu0
        %v1186 = vadd.f32 %v915, %v1185
        %v1187 = vpop.f32.mrb[0].mxu0
        %1188 = vmatprep.mubr.f32.mxu0 0.0
        %1189 = vmatmul.mubr.f32.gmra.mrb[0].mxu0 %v985
        %v1190 = vpop.f32.mrb[0].mxu0
        %v1191 = vadd.f32 %v915, %v1190
        %v1192 = vpop.f32.mrb[0].mxu0
        %1193 = vmatprep.mubr.f32.mxu0 0.0
        %1194 = vmatmul.mubr.f32.gmra.mrb[0].mxu0 %v988
        %v1195 = vpop.f32.mrb[0].mxu0
        %v1196 = vadd.f32 %v915, %v1195
        %v1197 = vpop.f32.mrb[0].mxu0
        %1198 = vmatprep.mubr.f32.mxu0 0.0
        %1199 = vmatmul.mubr.f32.gmra.mrb[0].mxu0 %v991
        %v1200 = vpop.f32.mrb[0].mxu0
        %v1201 = vadd.f32 %v915, %v1200
        %v1202 = vpop.f32.mrb[0].mxu0
        %1203 = vmatprep.mubr.f32.mxu0 0.0
        %1204 = vmatmul.mubr.f32.gmra.mrb[0].mxu0 %v994
        %v1205 = vpop.f32.mrb[0].mxu0
        %v1206 = vadd.f32 %v915, %v1205
        %v1207 = vpop.f32.mrb[0].mxu0
        %1208 = vmatprep.mubr.f32.mxu0 0.0
        %1209 = vmatmul.mubr.f32.gmra.mrb[0].mxu0 %v997
        %v1210 = vpop.f32.mrb[0].mxu0
        %v1211 = vadd.f32 %v915, %v1210
        %v1212 = vpop.f32.mrb[0].mxu0
        %1213 = vmatprep.mubr.f32.mxu0 0.0
        %1214 = vmatmul.mubr.f32.gmra.mrb[0].mxu0 %v1000
        %v1215 = vpop.f32.mrb[0].mxu0
        %v1216 = vadd.f32 %v915, %v1215
        %v1217 = vpop.f32.mrb[0].mxu0
        %1218 = vmatprep.mubr.f32.mxu0 0.0
        %1219 = vmatmul.mubr.f32.gmra.mrb[0].mxu0 %v1003
        %v1220 = vpop.f32.mrb[0].mxu0
        %v1221 = vadd.f32 %v915, %v1220
        %v1222 = vpop.f32.mrb[0].mxu0
        %1223 = vmatprep.mubr.f32.mxu0 0.0
        %1224 = vmatmul.mubr.f32.gmra.mrb[0].mxu0 %v1006
        %v1225 = vpop.f32.mrb[0].mxu0
        %v1226 = vadd.f32 %v915, %v1225
        %v1227 = vpop.f32.mrb[0].mxu0
        %1228 = vmatprep.mubr.f32.mxu0 0.0
        %1229 = vmatmul.mubr.f32.gmra.mrb[0].mxu0 %v1009
        %v1230 = vpop.f32.mrb[0].mxu0
        %v1231 = vadd.f32 %v915, %v1230
        %v1232 = vpop.f32.mrb[0].mxu0
        %1233 = vmatprep.mubr.f32.mxu0 0.0
        %1234 = vmatmul.mubr.f32.gmra.mrb[0].mxu0 %v1012
        %v1235 = vpop.f32.mrb[0].mxu0
        %v1236 = vadd.f32 %v915, %v1235
        %v1237 = vpop.f32.mrb[0].mxu0
        %1238 = vdwg.mxu0
        %v1239 = vmul.f32 %v408, %v1081
        %v1240 = vmul.f32 %v409, %v1086
        %v1241 = vmul.f32 %v410, %v1091
        %v1242 = vmul.f32 %v411, %v1096
        %v1243 = vmul.f32 %v412, %v1101
        %v1244 = vmul.f32 %v413, %v1106
        %v1245 = vmul.f32 %v414, %v1111
        %v1246 = vmul.f32 %v415, %v1116
        %v1247 = vmul.f32 %v416, %v1121
        %v1248 = vmul.f32 %v417, %v1126
        %v1249 = vmul.f32 %v418, %v1131
        %v1250 = vmul.f32 %v419, %v1136
        %v1251 = vmul.f32 %v420, %v1141
        %v1252 = vmul.f32 %v421, %v1146
        %v1253 = vmul.f32 %v422, %v1151
        %v1254 = vmul.f32 %v423, %v1156
        %v1255 = vmul.f32 %v424, %v1161
        %v1256 = vmul.f32 %v425, %v1166
        %v1257 = vmul.f32 %v426, %v1171
        %v1258 = vmul.f32 %v427, %v1176
        %v1259 = vmul.f32 %v428, %v1181
        %v1260 = vmul.f32 %v429, %v1186
        %v1261 = vmul.f32 %v430, %v1191
        %v1262 = vmul.f32 %v431, %v1196
        %v1263 = vmul.f32 %v432, %v1201
        %v1264 = vmul.f32 %v433, %v1206
        %v1265 = vmul.f32 %v434, %v1211
        %v1266 = vmul.f32 %v435, %v1216
        %v1267 = vmul.f32 %v436, %v1221
        %v1268 = vmul.f32 %v437, %v1226
        %v1269 = vmul.f32 %v438, %v1231
        %v1270 = vmul.f32 %v439, %v1236
        %1303 = vrot.lane.b32.xlu0 %v1081, 64
        %v1304 = vpop.permute.xlu0 %1303
        %1305 = vrot.lane.b32.xlu0 %v1086, 64
        %v1306 = vpop.permute.xlu0 %1305
        %1307 = vrot.lane.b32.xlu0 %v1091, 64
        %v1308 = vpop.permute.xlu0 %1307
        %1309 = vrot.lane.b32.xlu0 %v1096, 64
        %v1310 = vpop.permute.xlu0 %1309
        %1311 = vrot.lane.b32.xlu0 %v1101, 64
        %v1312 = vpop.permute.xlu0 %1311
        %1313 = vrot.lane.b32.xlu0 %v1106, 64
        %v1314 = vpop.permute.xlu0 %1313
        %1315 = vrot.lane.b32.xlu0 %v1111, 64
        %v1316 = vpop.permute.xlu0 %1315
        %1317 = vrot.lane.b32.xlu0 %v1116, 64
        %v1318 = vpop.permute.xlu0 %1317
        %1319 = vrot.lane.b32.xlu0 %v1121, 64
        %v1320 = vpop.permute.xlu0 %1319
        %1321 = vrot.lane.b32.xlu0 %v1126, 64
        %v1322 = vpop.permute.xlu0 %1321
        %1323 = vrot.lane.b32.xlu0 %v1131, 64
        %v1324 = vpop.permute.xlu0 %1323
        %1325 = vrot.lane.b32.xlu0 %v1136, 64
        %v1326 = vpop.permute.xlu0 %1325
        %1327 = vrot.lane.b32.xlu0 %v1141, 64
        %v1328 = vpop.permute.xlu0 %1327
        %1329 = vrot.lane.b32.xlu0 %v1146, 64
        %v1330 = vpop.permute.xlu0 %1329
        %1331 = vrot.lane.b32.xlu0 %v1151, 64
        %v1332 = vpop.permute.xlu0 %1331
        %1333 = vrot.lane.b32.xlu0 %v1156, 64
        %v1334 = vpop.permute.xlu0 %1333
        %1335 = vrot.lane.b32.xlu0 %v1161, 64
        %v1336 = vpop.permute.xlu0 %1335
        %1337 = vrot.lane.b32.xlu0 %v1166, 64
        %v1338 = vpop.permute.xlu0 %1337
        %1339 = vrot.lane.b32.xlu0 %v1171, 64
        %v1340 = vpop.permute.xlu0 %1339
        %1341 = vrot.lane.b32.xlu0 %v1176, 64
        %v1342 = vpop.permute.xlu0 %1341
        %1343 = vrot.lane.b32.xlu0 %v1181, 64
        %v1344 = vpop.permute.xlu0 %1343
        %1345 = vrot.lane.b32.xlu0 %v1186, 64
        %v1346 = vpop.permute.xlu0 %1345
        %1347 = vrot.lane.b32.xlu0 %v1191, 64
        %v1348 = vpop.permute.xlu0 %1347
        %1349 = vrot.lane.b32.xlu0 %v1196, 64
        %v1350 = vpop.permute.xlu0 %1349
        %1351 = vrot.lane.b32.xlu0 %v1201, 64
        %v1352 = vpop.permute.xlu0 %1351
        %1353 = vrot.lane.b32.xlu0 %v1206, 64
        %v1354 = vpop.permute.xlu0 %1353
        %1355 = vrot.lane.b32.xlu0 %v1211, 64
        %v1356 = vpop.permute.xlu0 %1355
        %1357 = vrot.lane.b32.xlu0 %v1216, 64
        %v1358 = vpop.permute.xlu0 %1357
        %1359 = vrot.lane.b32.xlu0 %v1221, 64
        %v1360 = vpop.permute.xlu0 %1359
        %1361 = vrot.lane.b32.xlu0 %v1226, 64
        %v1362 = vpop.permute.xlu0 %1361
        %1363 = vrot.lane.b32.xlu0 %v1231, 64
        %v1364 = vpop.permute.xlu0 %1363
        %1365 = vrot.lane.b32.xlu0 %v1236, 64
        %v1366 = vpop.permute.xlu0 %1365
        %v1399 = vadd.f32 %v1239, %v1304
        %v1400 = vadd.f32 %v1240, %v1306
        %v1401 = vadd.f32 %v1241, %v1308
        %v1402 = vadd.f32 %v1242, %v1310
        %v1403 = vadd.f32 %v1243, %v1312
        %v1404 = vadd.f32 %v1244, %v1314
        %v1405 = vadd.f32 %v1245, %v1316
        %v1406 = vadd.f32 %v1246, %v1318
        %v1407 = vadd.f32 %v1247, %v1320
        %v1408 = vadd.f32 %v1248, %v1322
        %v1409 = vadd.f32 %v1249, %v1324
        %v1410 = vadd.f32 %v1250, %v1326
        %v1411 = vadd.f32 %v1251, %v1328
        %v1412 = vadd.f32 %v1252, %v1330
        %v1413 = vadd.f32 %v1253, %v1332
        %v1414 = vadd.f32 %v1254, %v1334
        %v1415 = vadd.f32 %v1255, %v1336
        %v1416 = vadd.f32 %v1256, %v1338
        %v1417 = vadd.f32 %v1257, %v1340
        %v1418 = vadd.f32 %v1258, %v1342
        %v1419 = vadd.f32 %v1259, %v1344
        %v1420 = vadd.f32 %v1260, %v1346
        %v1421 = vadd.f32 %v1261, %v1348
        %v1422 = vadd.f32 %v1262, %v1350
        %v1423 = vadd.f32 %v1263, %v1352
        %v1424 = vadd.f32 %v1264, %v1354
        %v1425 = vadd.f32 %v1265, %v1356
        %v1426 = vadd.f32 %v1266, %v1358
        %v1427 = vadd.f32 %v1267, %v1360
        %v1428 = vadd.f32 %v1268, %v1362
        %v1429 = vadd.f32 %v1269, %v1364
        %v1430 = vadd.f32 %v1270, %v1366
        %v1431 = vmax.f32 %v1399, 0.0
        %v1432 = vmax.f32 %v1400, 0.0
        %v1433 = vmax.f32 %v1401, 0.0
        %v1434 = vmax.f32 %v1402, 0.0
        %v1435 = vmax.f32 %v1403, 0.0
        %v1436 = vmax.f32 %v1404, 0.0
        %v1437 = vmax.f32 %v1405, 0.0
        %v1438 = vmax.f32 %v1406, 0.0
        %v1439 = vmax.f32 %v1407, 0.0
        %v1440 = vmax.f32 %v1408, 0.0
        %v1441 = vmax.f32 %v1409, 0.0
        %v1442 = vmax.f32 %v1410, 0.0
        %v1443 = vmax.f32 %v1411, 0.0
        %v1444 = vmax.f32 %v1412, 0.0
        %v1445 = vmax.f32 %v1413, 0.0
        %v1446 = vmax.f32 %v1414, 0.0
        %v1447 = vmax.f32 %v1415, 0.0
        %v1448 = vmax.f32 %v1416, 0.0
        %v1449 = vmax.f32 %v1417, 0.0
        %v1450 = vmax.f32 %v1418, 0.0
        %v1451 = vmax.f32 %v1419, 0.0
        %v1452 = vmax.f32 %v1420, 0.0
        %v1453 = vmax.f32 %v1421, 0.0
        %v1454 = vmax.f32 %v1422, 0.0
        %v1455 = vmax.f32 %v1423, 0.0
        %v1456 = vmax.f32 %v1424, 0.0
        %v1457 = vmax.f32 %v1425, 0.0
        %v1458 = vmax.f32 %v1426, 0.0
        %v1459 = vmax.f32 %v1427, 0.0
        %v1460 = vmax.f32 %v1428, 0.0
        %v1461 = vmax.f32 %v1429, 0.0
        %v1462 = vmax.f32 %v1430, 0.0
        %s1463 = ssub.s32 %s405, 1
        %p1464 = scmp.gt.s32.totalorder %s1463, 0
        %s1465 = scalar_select %p1464, %s1463, 0
        %s1466 = sadd.s32 %s405, 16
        %p1467 = scmp.lt.s32.totalorder %s1466, 15
        %s1468 = scalar_select %p1467, %s1466, 15
        %s1469 = smul.u32 %s1465, 16
        %s1470 = scalar_lea.vmem %s387, %s1469
        %v1471 = vld [vmem:[%s1470] sm:$0xff]
        %v1472 = vld [vmem:[%s1470 + $0x8] sm:$0xff]
        %s1473 = smul.u32 %s1468, 16
        %s1474 = scalar_lea.vmem %s387, %s1473
        %v1475 = vld [vmem:[%s1474] sm:$0xff]
        %v1476 = vld [vmem:[%s1474 + $0x8] sm:$0xff]
        %s1477 = scalar_lea.vmem %s392, %s1469
        %v1478 = vld [vmem:[%s1477] sm:$0xff]
        %v1479 = vld [vmem:[%s1477 + $0x8] sm:$0xff]
        %s1480 = scalar_lea.vmem %s392, %s1473
        %v1481 = vld [vmem:[%s1480] sm:$0xff]
        %v1482 = vld [vmem:[%s1480 + $0x8] sm:$0xff]
        %v1484 = vsel %vm484, %v1478, 0
        %v1487 = vsel %vm484, %v1479, 0
        %v1490 = vsel %vm484, %v1481, 0
        %v1493 = vsel %vm484, %v1482, 0
        %1495 = vmatprep.subr.mxu0 0.0
        %1496 = vmatpush1.msra.mxu0 %v473
        %1497 = vmatprep.subr.mxu0 0.0
        %1498 = vmatpush1.msra.mxu0 %v474
        %1499 = vmatprep.subr.mxu0 0.0
        %1500 = vmatpush1.msra.mxu0 %v475
        %1501 = vmatprep.subr.mxu0 0.0
        %1502 = vmatpush1.msra.mxu0 %v476
        %1503 = vmatprep.subr.mxu0 0.0
        %1504 = vmatpush1.msra.mxu0 0.0
        %1505 = vmatprep.subr.mxu0 0.0
        %1506 = vmatpush1.msra.mxu0 0.0
        %1507 = vmatprep.subr.mxu0 0.0
        %1508 = vmatpush1.msra.mxu0 0.0
        %1509 = vmatprep.subr.mxu0 0.0
        %1510 = vmatpush1.msra.mxu0 0.0
        %1511 = vmatprep.subr.mxu0 0.0
        %1512 = vmatpush1.msra.mxu0 0.0
        %1513 = vmatprep.subr.mxu0 0.0
        %1514 = vmatpush1.msra.mxu0 0.0
        %1515 = vmatprep.subr.mxu0 0.0
        %1516 = vmatpush1.msra.mxu0 0.0
        %1517 = vmatprep.subr.mxu0 0.0
        %1518 = vmatpush1.msra.mxu0 0.0
        %1519 = vmatprep.subr.mxu0 0.0
        %1520 = vmatpush1.msra.mxu0 0.0
        %1521 = vmatprep.subr.mxu0 0.0
        %1522 = vmatpush1.msra.mxu0 0.0
        %1523 = vmatprep.subr.mxu0 0.0
        %1524 = vmatpush1.msra.mxu0 0.0
        %1525 = vmatprep.subr.mxu0 0.0
        %1526 = vmatpush1.msra.mxu0 0.0
        %1527 = vmatprep.subr.mxu0 0.0
        %1528 = vmatpush1.msra.mxu0 0.0
        %1529 = vmatprep.subr.mxu0 0.0
        %1530 = vmatpush1.msra.mxu0 0.0
        %1531 = vmatprep.subr.mxu0 0.0
        %1532 = vmatpush1.msra.mxu0 0.0
        %1533 = vmatprep.subr.mxu0 0.0
        %1534 = vmatpush1.msra.mxu0 0.0
        %1535 = vmatprep.subr.mxu0 0.0
        %1536 = vmatpush1.msra.mxu0 0.0
        %1537 = vmatprep.subr.mxu0 0.0
        %1538 = vmatpush1.msra.mxu0 0.0
        %1539 = vmatprep.subr.mxu0 0.0
        %1540 = vmatpush1.msra.mxu0 0.0
        %1541 = vmatprep.subr.mxu0 0.0
        %1542 = vmatpush1.msra.mxu0 0.0
        %1543 = vmatprep.subr.mxu0 0.0
        %1544 = vmatpush1.msra.mxu0 0.0
        %1545 = vmatprep.subr.mxu0 0.0
        %1546 = vmatpush1.msra.mxu0 0.0
        %1547 = vmatprep.subr.mxu0 0.0
        %1548 = vmatpush1.msra.mxu0 0.0
        %1549 = vmatprep.subr.mxu0 0.0
        %1550 = vmatpush1.msra.mxu0 0.0
        %1551 = vmatprep.subr.mxu0 0.0
        %1552 = vmatpush1.msra.mxu0 0.0
        %1553 = vmatprep.subr.mxu0 0.0
        %1554 = vmatpush1.msra.mxu0 0.0
        %1555 = vmatprep.subr.mxu0 0.0
        %1556 = vmatpush1.msra.mxu0 0.0
        %1557 = vmatprep.subr.mxu0 0.0
        %1558 = vmatpush1.msra.mxu0 0.0
        %1559 = vmatprep.mubr.f32.mxu0 0.0
        %1560 = vmatmul.mubr.f32.gmra.mrb[0].mxu0 %v1484
        %v1561 = vpop.f32.mrb[0].mxu0
        %v1562 = vadd.f32 %v482, %v1561
        %v1563 = vpop.f32.mrb[0].mxu0
        %1564 = vmatprep.mubr.f32.mxu0 0.0
        %1565 = vmatmul.mubr.f32.gmra.mrb[0].mxu0 %v1487
        %v1566 = vpop.f32.mrb[0].mxu0
        %v1567 = vadd.f32 %v482, %v1566
        %v1568 = vpop.f32.mrb[0].mxu0
        %1569 = vmatprep.mubr.f32.mxu0 0.0
        %1570 = vmatmul.mubr.f32.gmra.mrb[0].mxu0 %v1490
        %v1571 = vpop.f32.mrb[0].mxu0
        %v1572 = vadd.f32 %v482, %v1571
        %v1573 = vpop.f32.mrb[0].mxu0
        %1574 = vmatprep.mubr.f32.mxu0 0.0
        %1575 = vmatmul.mubr.f32.gmra.mrb[0].mxu0 %v1493
        %v1576 = vpop.f32.mrb[0].mxu0
        %v1577 = vadd.f32 %v482, %v1576
        %v1578 = vpop.f32.mrb[0].mxu0
        %1579 = vdwg.mxu0
        %vm1580 = vcmp.ge.f32.partialorder %v1562, 0.0
        %vm1581 = vcmp.ge.f32.partialorder %v1567, 0.0
        %vm1582 = vcmp.ge.f32.partialorder %v1572, 0.0
        %vm1583 = vcmp.ge.f32.partialorder %v1577, 0.0
        %v1584 = vmul.f32 %v1562, 0.01
        %v1585 = vmul.f32 %v1567, 0.01
        %v1586 = vmul.f32 %v1572, 0.01
        %v1587 = vmul.f32 %v1577, 0.01
        %v1588 = vsel %vm1580, %v1562, %v1584
        %v1589 = vsel %vm1581, %v1567, %v1585
        %v1590 = vsel %vm1582, %v1572, %v1586
        %v1591 = vsel %vm1583, %v1577, %v1587
        %v1593 = vsel %vm917, %v1588, 0
        %v1596 = vsel %vm917, %v1589, 0
        %v1599 = vsel %vm917, %v1590, 0
        %v1602 = vsel %vm917, %v1591, 0
        %1604 = vmatprep.subr.mxu0 0.0
        %1605 = vmatpush1.msra.mxu0 %v902
        %1606 = vmatprep.subr.mxu0 0.0
        %1607 = vmatpush1.msra.mxu0 %v903
        %1608 = vmatprep.subr.mxu0 0.0
        %1609 = vmatpush1.msra.mxu0 %v904
        %1610 = vmatprep.subr.mxu0 0.0
        %1611 = vmatpush1.msra.mxu0 %v905
        %1612 = vmatprep.subr.mxu0 0.0
        %1613 = vmatpush1.msra.mxu0 %v906
        %1614 = vmatprep.subr.mxu0 0.0
        %1615 = vmatpush1.msra.mxu0 %v907
        %1616 = vmatprep.subr.mxu0 0.0
        %1617 = vmatpush1.msra.mxu0 %v908
        %1618 = vmatprep.subr.mxu0 0.0
        %1619 = vmatpush1.msra.mxu0 %v909
        %1620 = vmatprep.subr.mxu0 0.0
        %1621 = vmatpush1.msra.mxu0 0.0
        %1622 = vmatprep.subr.mxu0 0.0
        %1623 = vmatpush1.msra.mxu0 0.0
        %1624 = vmatprep.subr.mxu0 0.0
        %1625 = vmatpush1.msra.mxu0 0.0
        %1626 = vmatprep.subr.mxu0 0.0
        %1627 = vmatpush1.msra.mxu0 0.0
        %1628 = vmatprep.subr.mxu0 0.0
        %1629 = vmatpush1.msra.mxu0 0.0
        %1630 = vmatprep.subr.mxu0 0.0
        %1631 = vmatpush1.msra.mxu0 0.0
        %1632 = vmatprep.subr.mxu0 0.0
        %1633 = vmatpush1.msra.mxu0 0.0
        %1634 = vmatprep.subr.mxu0 0.0
        %1635 = vmatpush1.msra.mxu0 0.0
        %1636 = vmatprep.subr.mxu0 0.0
        %1637 = vmatpush1.msra.mxu0 0.0
        %1638 = vmatprep.subr.mxu0 0.0
        %1639 = vmatpush1.msra.mxu0 0.0
        %1640 = vmatprep.subr.mxu0 0.0
        %1641 = vmatpush1.msra.mxu0 0.0
        %1642 = vmatprep.subr.mxu0 0.0
        %1643 = vmatpush1.msra.mxu0 0.0
        %1644 = vmatprep.subr.mxu0 0.0
        %1645 = vmatpush1.msra.mxu0 0.0
        %1646 = vmatprep.subr.mxu0 0.0
        %1647 = vmatpush1.msra.mxu0 0.0
        %1648 = vmatprep.subr.mxu0 0.0
        %1649 = vmatpush1.msra.mxu0 0.0
        %1650 = vmatprep.subr.mxu0 0.0
        %1651 = vmatpush1.msra.mxu0 0.0
        %1652 = vmatprep.subr.mxu0 0.0
        %1653 = vmatpush1.msra.mxu0 0.0
        %1654 = vmatprep.subr.mxu0 0.0
        %1655 = vmatpush1.msra.mxu0 0.0
        %1656 = vmatprep.subr.mxu0 0.0
        %1657 = vmatpush1.msra.mxu0 0.0
        %1658 = vmatprep.subr.mxu0 0.0
        %1659 = vmatpush1.msra.mxu0 0.0
        %1660 = vmatprep.subr.mxu0 0.0
        %1661 = vmatpush1.msra.mxu0 0.0
        %1662 = vmatprep.subr.mxu0 0.0
        %1663 = vmatpush1.msra.mxu0 0.0
        %1664 = vmatprep.subr.mxu0 0.0
        %1665 = vmatpush1.msra.mxu0 0.0
        %1666 = vmatprep.subr.mxu0 0.0
        %1667 = vmatpush1.msra.mxu0 0.0
        %1668 = vmatprep.mubr.f32.mxu0 0.0
        %1669 = vmatmul.mubr.f32.gmra.mrb[0].mxu0 %v1593
        %v1670 = vpop.f32.mrb[0].mxu0
        %v1671 = vadd.f32 %v915, %v1670
        %v1672 = vpop.f32.mrb[0].mxu0
        %1673 = vmatprep.mubr.f32.mxu0 0.0
        %1674 = vmatmul.mubr.f32.gmra.mrb[0].mxu0 %v1596
        %v1675 = vpop.f32.mrb[0].mxu0
        %v1676 = vadd.f32 %v915, %v1675
        %v1677 = vpop.f32.mrb[0].mxu0
        %1678 = vmatprep.mubr.f32.mxu0 0.0
        %1679 = vmatmul.mubr.f32.gmra.mrb[0].mxu0 %v1599
        %v1680 = vpop.f32.mrb[0].mxu0
        %v1681 = vadd.f32 %v915, %v1680
        %v1682 = vpop.f32.mrb[0].mxu0
        %1683 = vmatprep.mubr.f32.mxu0 0.0
        %1684 = vmatmul.mubr.f32.gmra.mrb[0].mxu0 %v1602
        %v1685 = vpop.f32.mrb[0].mxu0
        %v1686 = vadd.f32 %v915, %v1685
        %v1687 = vpop.f32.mrb[0].mxu0
        %1688 = vdwg.mxu0
        %v1689 = vmul.f32 %v1471, %v1671
        %v1690 = vmul.f32 %v1472, %v1676
        %v1691 = vmul.f32 %v1475, %v1681
        %v1692 = vmul.f32 %v1476, %v1686
        %1697 = vrot.lane.b32.xlu0 %v1671, 64
        %v1698 = vpop.permute.xlu0 %1697
        %1699 = vrot.lane.b32.xlu0 %v1676, 64
        %v1700 = vpop.permute.xlu0 %1699
        %1701 = vrot.lane.b32.xlu0 %v1681, 64
        %v1702 = vpop.permute.xlu0 %1701
        %1703 = vrot.lane.b32.xlu0 %v1686, 64
        %v1704 = vpop.permute.xlu0 %1703
        %v1709 = vadd.f32 %v1689, %v1698
        %v1710 = vadd.f32 %v1690, %v1700
        %v1711 = vadd.f32 %v1691, %v1702
        %v1712 = vadd.f32 %v1692, %v1704
        %v1713 = vmax.f32 %v1709, 0.0
        %v1714 = vmax.f32 %v1710, 0.0
        %v1715 = vmax.f32 %v1711, 0.0
        %v1716 = vmax.f32 %v1712, 0.0
        %p1717 = scmp.gt.s32.totalorder %s28, 0
        %s1718 = scalar_select %p1717, 1, 0
        %s1719 = scvt.s32.f32 %s1718
        %v1720 = vstv %s1719
        %v1721 = vmul.f32 %v1713, %v1720
        %v1722 = vmul.f32 %v1714, %v1720
        %p1723 = scmp.lt.s32.totalorder %s28, 0
        %s1724 = scalar_select %p1723, 1, 0
        %s1725 = scvt.s32.f32 %s1724
        %v1726 = vstv %s1725
        %v1727 = vmul.f32 %v1715, %v1726
        %v1728 = vmul.f32 %v1716, %v1726
        %vm1729 = vcmask 516096
        %1730 = vst.msk [vmem:[#allocation2] sm:$0x1] %vm1729, 0.0
        %1731 = vst.msk [vmem:[#allocation2 + $0x18] sm:$0x1] %vm1729, 0.0
        %1732 = vst.msk [vmem:[#allocation2 + $0x30] sm:$0x1] %vm1729, 0.0
        %1733 = vst.msk [vmem:[#allocation2 + $0x48] sm:$0x1] %vm1729, 0.0
        %1734 = vst.msk [vmem:[#allocation2 + $0x60] sm:$0x1] %vm1729, 0.0
        %1735 = vst.msk [vmem:[#allocation2 + $0x78] sm:$0x1] %vm1729, 0.0
        %1736 = vst.msk [vmem:[#allocation2 + $0x90] sm:$0x1] %vm1729, 0.0
        %1737 = vst.msk [vmem:[#allocation2 + $0xa8] sm:$0x1] %vm1729, 0.0
        %1738 = vst.msk [vmem:[#allocation2 + $0xc0] sm:$0x1] %vm1729, 0.0
        %1739 = vst.msk [vmem:[#allocation2 + $0xd8] sm:$0x1] %vm1729, 0.0
        %1740 = vst.msk [vmem:[#allocation2 + $0xf0] sm:$0x1] %vm1729, 0.0
        %1741 = vst.msk [vmem:[#allocation2 + $0x108] sm:$0x1] %vm1729, 0.0
        %1742 = vst.msk [vmem:[#allocation2 + $0x120] sm:$0x1] %vm1729, 0.0
        %1743 = vst.msk [vmem:[#allocation2 + $0x138] sm:$0x1] %vm1729, 0.0
        %1744 = vst.msk [vmem:[#allocation2 + $0x150] sm:$0x1] %vm1729, 0.0
        %1745 = vst.msk [vmem:[#allocation2 + $0x168] sm:$0x1] %vm1729, 0.0
        %1746 = vst.msk [vmem:[#allocation2 + $0x180] sm:$0x1] %vm1729, 0.0
        %1747 = vst.msk [vmem:[#allocation2 + $0x198] sm:$0x1] %vm1729, 0.0
        %1748 = vst.msk [vmem:[#allocation2 + $0x11] sm:$0x1] %vm1729, 0.0
        %1749 = vst.msk [vmem:[#allocation2 + $0x29] sm:$0x1] %vm1729, 0.0
        %1750 = vst.msk [vmem:[#allocation2 + $0x41] sm:$0x1] %vm1729, 0.0
        %1751 = vst.msk [vmem:[#allocation2 + $0x59] sm:$0x1] %vm1729, 0.0
        %1752 = vst.msk [vmem:[#allocation2 + $0x71] sm:$0x1] %vm1729, 0.0
        %1753 = vst.msk [vmem:[#allocation2 + $0x89] sm:$0x1] %vm1729, 0.0
        %1754 = vst.msk [vmem:[#allocation2 + $0xa1] sm:$0x1] %vm1729, 0.0
        %1755 = vst.msk [vmem:[#allocation2 + $0xb9] sm:$0x1] %vm1729, 0.0
        %1756 = vst.msk [vmem:[#allocation2 + $0xd1] sm:$0x1] %vm1729, 0.0
        %1757 = vst.msk [vmem:[#allocation2 + $0xe9] sm:$0x1] %vm1729, 0.0
        %1758 = vst.msk [vmem:[#allocation2 + $0x101] sm:$0x1] %vm1729, 0.0
        %1759 = vst.msk [vmem:[#allocation2 + $0x119] sm:$0x1] %vm1729, 0.0
        %1760 = vst.msk [vmem:[#allocation2 + $0x131] sm:$0x1] %vm1729, 0.0
        %1761 = vst.msk [vmem:[#allocation2 + $0x149] sm:$0x1] %vm1729, 0.0
        %1762 = vst.msk [vmem:[#allocation2 + $0x161] sm:$0x1] %vm1729, 0.0
        %1763 = vst.msk [vmem:[#allocation2 + $0x179] sm:$0x1] %vm1729, 0.0
        %1764 = vst.msk [vmem:[#allocation2 + $0x191] sm:$0x1] %vm1729, 0.0
        %1765 = vst.msk [vmem:[#allocation2 + $0x1a9] sm:$0x1] %vm1729, 0.0
        %1766 = vst.msk [vmem:[#allocation2 + $0x1] sm:$0xff] %vm917, %v1721
        %1767 = vst.msk [vmem:[#allocation2 + $0x9] sm:$0xff] %vm917, %v1722
        %s1768 = scalar_lea.vmem [#allocation2], 408
        %1769 = vst.msk [vmem:[%s1768 + $0x1] sm:$0xff] %vm917, %v1727
        %1770 = vst.msk [vmem:[%s1768 + $0x9] sm:$0xff] %vm917, %v1728
        %s1771 = scalar_lea.vmem [#allocation2], 24
        %1772 = vst.msk [vmem:[%s1771 + $0x1] sm:$0xff] %vm917, %v1431
        %1773 = vst.msk [vmem:[%s1771 + $0x9] sm:$0xff] %vm917, %v1432
        %1774 = vst.msk [vmem:[%s1771 + $0x19] sm:$0xff] %vm917, %v1433
        %1775 = vst.msk [vmem:[%s1771 + $0x21] sm:$0xff] %vm917, %v1434
        %1776 = vst.msk [vmem:[%s1771 + $0x31] sm:$0xff] %vm917, %v1435
        %1777 = vst.msk [vmem:[%s1771 + $0x39] sm:$0xff] %vm917, %v1436
        %1778 = vst.msk [vmem:[%s1771 + $0x49] sm:$0xff] %vm917, %v1437
        %1779 = vst.msk [vmem:[%s1771 + $0x51] sm:$0xff] %vm917, %v1438
        %1780 = vst.msk [vmem:[%s1771 + $0x61] sm:$0xff] %vm917, %v1439
        %1781 = vst.msk [vmem:[%s1771 + $0x69] sm:$0xff] %vm917, %v1440
        %1782 = vst.msk [vmem:[%s1771 + $0x79] sm:$0xff] %vm917, %v1441
        %1783 = vst.msk [vmem:[%s1771 + $0x81] sm:$0xff] %vm917, %v1442
        %1784 = vst.msk [vmem:[%s1771 + $0x91] sm:$0xff] %vm917, %v1443
        %1785 = vst.msk [vmem:[%s1771 + $0x99] sm:$0xff] %vm917, %v1444
        %1786 = vst.msk [vmem:[%s1771 + $0xa9] sm:$0xff] %vm917, %v1445
        %1787 = vst.msk [vmem:[%s1771 + $0xb1] sm:$0xff] %vm917, %v1446
        %1788 = vst.msk [vmem:[%s1771 + $0xc1] sm:$0xff] %vm917, %v1447
        %1789 = vst.msk [vmem:[%s1771 + $0xc9] sm:$0xff] %vm917, %v1448
        %1790 = vst.msk [vmem:[%s1771 + $0xd9] sm:$0xff] %vm917, %v1449
        %1791 = vst.msk [vmem:[%s1771 + $0xe1] sm:$0xff] %vm917, %v1450
        %1792 = vst.msk [vmem:[%s1771 + $0xf1] sm:$0xff] %vm917, %v1451
        %1793 = vst.msk [vmem:[%s1771 + $0xf9] sm:$0xff] %vm917, %v1452
        %1794 = vst.msk [vmem:[%s1771 + $0x109] sm:$0xff] %vm917, %v1453
        %1795 = vst.msk [vmem:[%s1771 + $0x111] sm:$0xff] %vm917, %v1454
        %1796 = vst.msk [vmem:[%s1771 + $0x121] sm:$0xff] %vm917, %v1455
        %1797 = vst.msk [vmem:[%s1771 + $0x129] sm:$0xff] %vm917, %v1456
        %1798 = vst.msk [vmem:[%s1771 + $0x139] sm:$0xff] %vm917, %v1457
        %1799 = vst.msk [vmem:[%s1771 + $0x141] sm:$0xff] %vm917, %v1458
        %1800 = vst.msk [vmem:[%s1771 + $0x151] sm:$0xff] %vm917, %v1459
        %1801 = vst.msk [vmem:[%s1771 + $0x159] sm:$0xff] %vm917, %v1460
        %1802 = vst.msk [vmem:[%s1771 + $0x169] sm:$0xff] %vm917, %v1461
        %1803 = vst.msk [vmem:[%s1771 + $0x171] sm:$0xff] %vm917, %v1462
        %v1804 = vld [vmem:[#allocation2] sm:$0xff]
        %v1805 = vld [vmem:[#allocation2 + $0x8] sm:$0xff]
        %v1806 = vld [vmem:[#allocation2 + $0x18] sm:$0xff]
        %v1807 = vld [vmem:[#allocation2 + $0x20] sm:$0xff]
        %v1808 = vld [vmem:[#allocation2 + $0x30] sm:$0xff]
        %v1809 = vld [vmem:[#allocation2 + $0x38] sm:$0xff]
        %v1810 = vld [vmem:[#allocation2 + $0x48] sm:$0xff]
        %v1811 = vld [vmem:[#allocation2 + $0x50] sm:$0xff]
        %v1812 = vld [vmem:[#allocation2 + $0x60] sm:$0xff]
        %v1813 = vld [vmem:[#allocation2 + $0x68] sm:$0xff]
        %v1814 = vld [vmem:[#allocation2 + $0x78] sm:$0xff]
        %v1815 = vld [vmem:[#allocation2 + $0x80] sm:$0xff]
        %v1816 = vld [vmem:[#allocation2 + $0x90] sm:$0xff]
        %v1817 = vld [vmem:[#allocation2 + $0x98] sm:$0xff]
        %v1818 = vld [vmem:[#allocation2 + $0xa8] sm:$0xff]
        %v1819 = vld [vmem:[#allocation2 + $0xb0] sm:$0xff]
        %v1820 = vld [vmem:[#allocation2 + $0xc0] sm:$0xff]
        %v1821 = vld [vmem:[#allocation2 + $0xc8] sm:$0xff]
        %v1822 = vld [vmem:[#allocation2 + $0xd8] sm:$0xff]
        %v1823 = vld [vmem:[#allocation2 + $0xe0] sm:$0xff]
        %v1824 = vld [vmem:[#allocation2 + $0xf0] sm:$0xff]
        %v1825 = vld [vmem:[#allocation2 + $0xf8] sm:$0xff]
        %v1826 = vld [vmem:[#allocation2 + $0x108] sm:$0xff]
        %v1827 = vld [vmem:[#allocation2 + $0x110] sm:$0xff]
        %v1828 = vld [vmem:[#allocation2 + $0x120] sm:$0xff]
        %v1829 = vld [vmem:[#allocation2 + $0x128] sm:$0xff]
        %v1830 = vld [vmem:[#allocation2 + $0x138] sm:$0xff]
        %v1831 = vld [vmem:[#allocation2 + $0x140] sm:$0xff]
        %v1832 = vld [vmem:[#allocation2 + $0x150] sm:$0xff]
        %v1833 = vld [vmem:[#allocation2 + $0x158] sm:$0xff]
        %v1834 = vld [vmem:[#allocation2 + $0x168] sm:$0xff]
        %v1835 = vld [vmem:[#allocation2 + $0x170] sm:$0xff]
        %v1836 = vld [vmem:[#allocation2 + $0x1] sm:$0xff]
        %v1837 = vld [vmem:[#allocation2 + $0x9] sm:$0xff]
        %v1838 = vld [vmem:[#allocation2 + $0x19] sm:$0xff]
        %v1839 = vld [vmem:[#allocation2 + $0x21] sm:$0xff]
        %v1840 = vld [vmem:[#allocation2 + $0x31] sm:$0xff]
        %v1841 = vld [vmem:[#allocation2 + $0x39] sm:$0xff]
        %v1842 = vld [vmem:[#allocation2 + $0x49] sm:$0xff]
        %v1843 = vld [vmem:[#allocation2 + $0x51] sm:$0xff]
        %v1844 = vld [vmem:[#allocation2 + $0x61] sm:$0xff]
        %v1845 = vld [vmem:[#allocation2 + $0x69] sm:$0xff]
        %v1846 = vld [vmem:[#allocation2 + $0x79] sm:$0xff]
        %v1847 = vld [vmem:[#allocation2 + $0x81] sm:$0xff]
        %v1848 = vld [vmem:[#allocation2 + $0x91] sm:$0xff]
        %v1849 = vld [vmem:[#allocation2 + $0x99] sm:$0xff]
        %v1850 = vld [vmem:[#allocation2 + $0xa9] sm:$0xff]
        %v1851 = vld [vmem:[#allocation2 + $0xb1] sm:$0xff]
        %v1852 = vld [vmem:[#allocation2 + $0xc1] sm:$0xff]
        %v1853 = vld [vmem:[#allocation2 + $0xc9] sm:$0xff]
        %v1854 = vld [vmem:[#allocation2 + $0xd9] sm:$0xff]
        %v1855 = vld [vmem:[#allocation2 + $0xe1] sm:$0xff]
        %v1856 = vld [vmem:[#allocation2 + $0xf1] sm:$0xff]
        %v1857 = vld [vmem:[#allocation2 + $0xf9] sm:$0xff]
        %v1858 = vld [vmem:[#allocation2 + $0x109] sm:$0xff]
        %v1859 = vld [vmem:[#allocation2 + $0x111] sm:$0xff]
        %v1860 = vld [vmem:[#allocation2 + $0x121] sm:$0xff]
        %v1861 = vld [vmem:[#allocation2 + $0x129] sm:$0xff]
        %v1862 = vld [vmem:[#allocation2 + $0x139] sm:$0xff]
        %v1863 = vld [vmem:[#allocation2 + $0x141] sm:$0xff]
        %v1864 = vld [vmem:[#allocation2 + $0x151] sm:$0xff]
        %v1865 = vld [vmem:[#allocation2 + $0x159] sm:$0xff]
        %v1866 = vld [vmem:[#allocation2 + $0x169] sm:$0xff]
        %v1867 = vld [vmem:[#allocation2 + $0x171] sm:$0xff]
        %v1868 = vld [vmem:[#allocation2 + $0x2] sm:$0xff]
        %v1869 = vld [vmem:[#allocation2 + $0xa] sm:$0xff]
        %v1870 = vld [vmem:[#allocation2 + $0x1a] sm:$0xff]
        %v1871 = vld [vmem:[#allocation2 + $0x22] sm:$0xff]
        %v1872 = vld [vmem:[#allocation2 + $0x32] sm:$0xff]
        %v1873 = vld [vmem:[#allocation2 + $0x3a] sm:$0xff]
        %v1874 = vld [vmem:[#allocation2 + $0x4a] sm:$0xff]
        %v1875 = vld [vmem:[#allocation2 + $0x52] sm:$0xff]
        %v1876 = vld [vmem:[#allocation2 + $0x62] sm:$0xff]
        %v1877 = vld [vmem:[#allocation2 + $0x6a] sm:$0xff]
        %v1878 = vld [vmem:[#allocation2 + $0x7a] sm:$0xff]
        %v1879 = vld [vmem:[#allocation2 + $0x82] sm:$0xff]
        %v1880 = vld [vmem:[#allocation2 + $0x92] sm:$0xff]
        %v1881 = vld [vmem:[#allocation2 + $0x9a] sm:$0xff]
        %v1882 = vld [vmem:[#allocation2 + $0xaa] sm:$0xff]
        %v1883 = vld [vmem:[#allocation2 + $0xb2] sm:$0xff]
        %v1884 = vld [vmem:[#allocation2 + $0xc2] sm:$0xff]
        %v1885 = vld [vmem:[#allocation2 + $0xca] sm:$0xff]
        %v1886 = vld [vmem:[#allocation2 + $0xda] sm:$0xff]
        %v1887 = vld [vmem:[#allocation2 + $0xe2] sm:$0xff]
        %v1888 = vld [vmem:[#allocation2 + $0xf2] sm:$0xff]
        %v1889 = vld [vmem:[#allocation2 + $0xfa] sm:$0xff]
        %v1890 = vld [vmem:[#allocation2 + $0x10a] sm:$0xff]
        %v1891 = vld [vmem:[#allocation2 + $0x112] sm:$0xff]
        %v1892 = vld [vmem:[#allocation2 + $0x122] sm:$0xff]
        %v1893 = vld [vmem:[#allocation2 + $0x12a] sm:$0xff]
        %v1894 = vld [vmem:[#allocation2 + $0x13a] sm:$0xff]
        %v1895 = vld [vmem:[#allocation2 + $0x142] sm:$0xff]
        %v1896 = vld [vmem:[#allocation2 + $0x152] sm:$0xff]
        %v1897 = vld [vmem:[#allocation2 + $0x15a] sm:$0xff]
        %v1898 = vld [vmem:[#allocation2 + $0x16a] sm:$0xff]
        %v1899 = vld [vmem:[#allocation2 + $0x172] sm:$0xff]
        %v1900 = vld [vmem:[%s1771] sm:$0xff]
        %v1901 = vld [vmem:[%s1771 + $0x8] sm:$0xff]
        %v1902 = vld [vmem:[%s1771 + $0x18] sm:$0xff]
        %v1903 = vld [vmem:[%s1771 + $0x20] sm:$0xff]
        %v1904 = vld [vmem:[%s1771 + $0x30] sm:$0xff]
        %v1905 = vld [vmem:[%s1771 + $0x38] sm:$0xff]
        %v1906 = vld [vmem:[%s1771 + $0x48] sm:$0xff]
        %v1907 = vld [vmem:[%s1771 + $0x50] sm:$0xff]
        %v1908 = vld [vmem:[%s1771 + $0x60] sm:$0xff]
        %v1909 = vld [vmem:[%s1771 + $0x68] sm:$0xff]
        %v1910 = vld [vmem:[%s1771 + $0x78] sm:$0xff]
        %v1911 = vld [vmem:[%s1771 + $0x80] sm:$0xff]
        %v1912 = vld [vmem:[%s1771 + $0x90] sm:$0xff]
        %v1913 = vld [vmem:[%s1771 + $0x98] sm:$0xff]
        %v1914 = vld [vmem:[%s1771 + $0xa8] sm:$0xff]
        %v1915 = vld [vmem:[%s1771 + $0xb0] sm:$0xff]
        %v1916 = vld [vmem:[%s1771 + $0xc0] sm:$0xff]
        %v1917 = vld [vmem:[%s1771 + $0xc8] sm:$0xff]
        %v1918 = vld [vmem:[%s1771 + $0xd8] sm:$0xff]
        %v1919 = vld [vmem:[%s1771 + $0xe0] sm:$0xff]
        %v1920 = vld [vmem:[%s1771 + $0xf0] sm:$0xff]
        %v1921 = vld [vmem:[%s1771 + $0xf8] sm:$0xff]
        %v1922 = vld [vmem:[%s1771 + $0x108] sm:$0xff]
        %v1923 = vld [vmem:[%s1771 + $0x110] sm:$0xff]
        %v1924 = vld [vmem:[%s1771 + $0x120] sm:$0xff]
        %v1925 = vld [vmem:[%s1771 + $0x128] sm:$0xff]
        %v1926 = vld [vmem:[%s1771 + $0x138] sm:$0xff]
        %v1927 = vld [vmem:[%s1771 + $0x140] sm:$0xff]
        %v1928 = vld [vmem:[%s1771 + $0x150] sm:$0xff]
        %v1929 = vld [vmem:[%s1771 + $0x158] sm:$0xff]
        %v1930 = vld [vmem:[%s1771 + $0x168] sm:$0xff]
        %v1931 = vld [vmem:[%s1771 + $0x170] sm:$0xff]
        %v1932 = vld [vmem:[%s1771 + $0x1] sm:$0xff]
        %v1933 = vld [vmem:[%s1771 + $0x9] sm:$0xff]
        %v1934 = vld [vmem:[%s1771 + $0x19] sm:$0xff]
        %v1935 = vld [vmem:[%s1771 + $0x21] sm:$0xff]
        %v1936 = vld [vmem:[%s1771 + $0x31] sm:$0xff]
        %v1937 = vld [vmem:[%s1771 + $0x39] sm:$0xff]
        %v1938 = vld [vmem:[%s1771 + $0x49] sm:$0xff]
        %v1939 = vld [vmem:[%s1771 + $0x51] sm:$0xff]
        %v1940 = vld [vmem:[%s1771 + $0x61] sm:$0xff]
        %v1941 = vld [vmem:[%s1771 + $0x69] sm:$0xff]
        %v1942 = vld [vmem:[%s1771 + $0x79] sm:$0xff]
        %v1943 = vld [vmem:[%s1771 + $0x81] sm:$0xff]
        %v1944 = vld [vmem:[%s1771 + $0x91] sm:$0xff]
        %v1945 = vld [vmem:[%s1771 + $0x99] sm:$0xff]
        %v1946 = vld [vmem:[%s1771 + $0xa9] sm:$0xff]
        %v1947 = vld [vmem:[%s1771 + $0xb1] sm:$0xff]
        %v1948 = vld [vmem:[%s1771 + $0xc1] sm:$0xff]
        %v1949 = vld [vmem:[%s1771 + $0xc9] sm:$0xff]
        %v1950 = vld [vmem:[%s1771 + $0xd9] sm:$0xff]
        %v1951 = vld [vmem:[%s1771 + $0xe1] sm:$0xff]
        %v1952 = vld [vmem:[%s1771 + $0xf1] sm:$0xff]
        %v1953 = vld [vmem:[%s1771 + $0xf9] sm:$0xff]
        %v1954 = vld [vmem:[%s1771 + $0x109] sm:$0xff]
        %v1955 = vld [vmem:[%s1771 + $0x111] sm:$0xff]
        %v1956 = vld [vmem:[%s1771 + $0x121] sm:$0xff]
        %v1957 = vld [vmem:[%s1771 + $0x129] sm:$0xff]
        %v1958 = vld [vmem:[%s1771 + $0x139] sm:$0xff]
        %v1959 = vld [vmem:[%s1771 + $0x141] sm:$0xff]
        %v1960 = vld [vmem:[%s1771 + $0x151] sm:$0xff]
        %v1961 = vld [vmem:[%s1771 + $0x159] sm:$0xff]
        %v1962 = vld [vmem:[%s1771 + $0x169] sm:$0xff]
        %v1963 = vld [vmem:[%s1771 + $0x171] sm:$0xff]
        %v1964 = vld [vmem:[%s1771 + $0x2] sm:$0xff]
        %v1965 = vld [vmem:[%s1771 + $0xa] sm:$0xff]
        %v1966 = vld [vmem:[%s1771 + $0x1a] sm:$0xff]
        %v1967 = vld [vmem:[%s1771 + $0x22] sm:$0xff]
        %v1968 = vld [vmem:[%s1771 + $0x32] sm:$0xff]
        %v1969 = vld [vmem:[%s1771 + $0x3a] sm:$0xff]
        %v1970 = vld [vmem:[%s1771 + $0x4a] sm:$0xff]
        %v1971 = vld [vmem:[%s1771 + $0x52] sm:$0xff]
        %v1972 = vld [vmem:[%s1771 + $0x62] sm:$0xff]
        %v1973 = vld [vmem:[%s1771 + $0x6a] sm:$0xff]
        %v1974 = vld [vmem:[%s1771 + $0x7a] sm:$0xff]
        %v1975 = vld [vmem:[%s1771 + $0x82] sm:$0xff]
        %v1976 = vld [vmem:[%s1771 + $0x92] sm:$0xff]
        %v1977 = vld [vmem:[%s1771 + $0x9a] sm:$0xff]
        %v1978 = vld [vmem:[%s1771 + $0xaa] sm:$0xff]
        %v1979 = vld [vmem:[%s1771 + $0xb2] sm:$0xff]
        %v1980 = vld [vmem:[%s1771 + $0xc2] sm:$0xff]
        %v1981 = vld [vmem:[%s1771 + $0xca] sm:$0xff]
        %v1982 = vld [vmem:[%s1771 + $0xda] sm:$0xff]
        %v1983 = vld [vmem:[%s1771 + $0xe2] sm:$0xff]
        %v1984 = vld [vmem:[%s1771 + $0xf2] sm:$0xff]
        %v1985 = vld [vmem:[%s1771 + $0xfa] sm:$0xff]
        %v1986 = vld [vmem:[%s1771 + $0x10a] sm:$0xff]
        %v1987 = vld [vmem:[%s1771 + $0x112] sm:$0xff]
        %v1988 = vld [vmem:[%s1771 + $0x122] sm:$0xff]
        %v1989 = vld [vmem:[%s1771 + $0x12a] sm:$0xff]
        %v1990 = vld [vmem:[%s1771 + $0x13a] sm:$0xff]
        %v1991 = vld [vmem:[%s1771 + $0x142] sm:$0xff]
        %v1992 = vld [vmem:[%s1771 + $0x152] sm:$0xff]
        %v1993 = vld [vmem:[%s1771 + $0x15a] sm:$0xff]
        %v1994 = vld [vmem:[%s1771 + $0x16a] sm:$0xff]
        %v1995 = vld [vmem:[%s1771 + $0x172] sm:$0xff]
        %s1996 = scalar_lea.vmem [#allocation2], 48
        %v1997 = vld [vmem:[%s1996] sm:$0xff]
        %v1998 = vld [vmem:[%s1996 + $0x8] sm:$0xff]
        %v1999 = vld [vmem:[%s1996 + $0x18] sm:$0xff]
        %v2000 = vld [vmem:[%s1996 + $0x20] sm:$0xff]
        %v2001 = vld [vmem:[%s1996 + $0x30] sm:$0xff]
        %v2002 = vld [vmem:[%s1996 + $0x38] sm:$0xff]
        %v2003 = vld [vmem:[%s1996 + $0x48] sm:$0xff]
        %v2004 = vld [vmem:[%s1996 + $0x50] sm:$0xff]
        %v2005 = vld [vmem:[%s1996 + $0x60] sm:$0xff]
        %v2006 = vld [vmem:[%s1996 + $0x68] sm:$0xff]
        %v2007 = vld [vmem:[%s1996 + $0x78] sm:$0xff]
        %v2008 = vld [vmem:[%s1996 + $0x80] sm:$0xff]
        %v2009 = vld [vmem:[%s1996 + $0x90] sm:$0xff]
        %v2010 = vld [vmem:[%s1996 + $0x98] sm:$0xff]
        %v2011 = vld [vmem:[%s1996 + $0xa8] sm:$0xff]
        %v2012 = vld [vmem:[%s1996 + $0xb0] sm:$0xff]
        %v2013 = vld [vmem:[%s1996 + $0xc0] sm:$0xff]
        %v2014 = vld [vmem:[%s1996 + $0xc8] sm:$0xff]
        %v2015 = vld [vmem:[%s1996 + $0xd8] sm:$0xff]
        %v2016 = vld [vmem:[%s1996 + $0xe0] sm:$0xff]
        %v2017 = vld [vmem:[%s1996 + $0xf0] sm:$0xff]
        %v2018 = vld [vmem:[%s1996 + $0xf8] sm:$0xff]
        %v2019 = vld [vmem:[%s1996 + $0x108] sm:$0xff]
        %v2020 = vld [vmem:[%s1996 + $0x110] sm:$0xff]
        %v2021 = vld [vmem:[%s1996 + $0x120] sm:$0xff]
        %v2022 = vld [vmem:[%s1996 + $0x128] sm:$0xff]
        %v2023 = vld [vmem:[%s1996 + $0x138] sm:$0xff]
        %v2024 = vld [vmem:[%s1996 + $0x140] sm:$0xff]
        %v2025 = vld [vmem:[%s1996 + $0x150] sm:$0xff]
        %v2026 = vld [vmem:[%s1996 + $0x158] sm:$0xff]
        %v2027 = vld [vmem:[%s1996 + $0x168] sm:$0xff]
        %v2028 = vld [vmem:[%s1996 + $0x170] sm:$0xff]
        %v2029 = vld [vmem:[%s1996 + $0x1] sm:$0xff]
        %v2030 = vld [vmem:[%s1996 + $0x9] sm:$0xff]
        %v2031 = vld [vmem:[%s1996 + $0x19] sm:$0xff]
        %v2032 = vld [vmem:[%s1996 + $0x21] sm:$0xff]
        %v2033 = vld [vmem:[%s1996 + $0x31] sm:$0xff]
        %v2034 = vld [vmem:[%s1996 + $0x39] sm:$0xff]
        %v2035 = vld [vmem:[%s1996 + $0x49] sm:$0xff]
        %v2036 = vld [vmem:[%s1996 + $0x51] sm:$0xff]
        %v2037 = vld [vmem:[%s1996 + $0x61] sm:$0xff]
        %v2038 = vld [vmem:[%s1996 + $0x69] sm:$0xff]
        %v2039 = vld [vmem:[%s1996 + $0x79] sm:$0xff]
        %v2040 = vld [vmem:[%s1996 + $0x81] sm:$0xff]
        %v2041 = vld [vmem:[%s1996 + $0x91] sm:$0xff]
        %v2042 = vld [vmem:[%s1996 + $0x99] sm:$0xff]
        %v2043 = vld [vmem:[%s1996 + $0xa9] sm:$0xff]
        %v2044 = vld [vmem:[%s1996 + $0xb1] sm:$0xff]
        %v2045 = vld [vmem:[%s1996 + $0xc1] sm:$0xff]
        %v2046 = vld [vmem:[%s1996 + $0xc9] sm:$0xff]
        %v2047 = vld [vmem:[%s1996 + $0xd9] sm:$0xff]
        %v2048 = vld [vmem:[%s1996 + $0xe1] sm:$0xff]
        %v2049 = vld [vmem:[%s1996 + $0xf1] sm:$0xff]
        %v2050 = vld [vmem:[%s1996 + $0xf9] sm:$0xff]
        %v2051 = vld [vmem:[%s1996 + $0x109] sm:$0xff]
        %v2052 = vld [vmem:[%s1996 + $0x111] sm:$0xff]
        %v2053 = vld [vmem:[%s1996 + $0x121] sm:$0xff]
        %v2054 = vld [vmem:[%s1996 + $0x129] sm:$0xff]
        %v2055 = vld [vmem:[%s1996 + $0x139] sm:$0xff]
        %v2056 = vld [vmem:[%s1996 + $0x141] sm:$0xff]
        %v2057 = vld [vmem:[%s1996 + $0x151] sm:$0xff]
        %v2058 = vld [vmem:[%s1996 + $0x159] sm:$0xff]
        %v2059 = vld [vmem:[%s1996 + $0x169] sm:$0xff]
        %v2060 = vld [vmem:[%s1996 + $0x171] sm:$0xff]
        %v2061 = vld [vmem:[%s1996 + $0x2] sm:$0xff]
        %v2062 = vld [vmem:[%s1996 + $0xa] sm:$0xff]
        %v2063 = vld [vmem:[%s1996 + $0x1a] sm:$0xff]
        %v2064 = vld [vmem:[%s1996 + $0x22] sm:$0xff]
        %v2065 = vld [vmem:[%s1996 + $0x32] sm:$0xff]
        %v2066 = vld [vmem:[%s1996 + $0x3a] sm:$0xff]
        %v2067 = vld [vmem:[%s1996 + $0x4a] sm:$0xff]
        %v2068 = vld [vmem:[%s1996 + $0x52] sm:$0xff]
        %v2069 = vld [vmem:[%s1996 + $0x62] sm:$0xff]
        %v2070 = vld [vmem:[%s1996 + $0x6a] sm:$0xff]
        %v2071 = vld [vmem:[%s1996 + $0x7a] sm:$0xff]
        %v2072 = vld [vmem:[%s1996 + $0x82] sm:$0xff]
        %v2073 = vld [vmem:[%s1996 + $0x92] sm:$0xff]
        %v2074 = vld [vmem:[%s1996 + $0x9a] sm:$0xff]
        %v2075 = vld [vmem:[%s1996 + $0xaa] sm:$0xff]
        %v2076 = vld [vmem:[%s1996 + $0xb2] sm:$0xff]
        %v2077 = vld [vmem:[%s1996 + $0xc2] sm:$0xff]
        %v2078 = vld [vmem:[%s1996 + $0xca] sm:$0xff]
        %v2079 = vld [vmem:[%s1996 + $0xda] sm:$0xff]
        %v2080 = vld [vmem:[%s1996 + $0xe2] sm:$0xff]
        %v2081 = vld [vmem:[%s1996 + $0xf2] sm:$0xff]
        %v2082 = vld [vmem:[%s1996 + $0xfa] sm:$0xff]
        %v2083 = vld [vmem:[%s1996 + $0x10a] sm:$0xff]
        %v2084 = vld [vmem:[%s1996 + $0x112] sm:$0xff]
        %v2085 = vld [vmem:[%s1996 + $0x122] sm:$0xff]
        %v2086 = vld [vmem:[%s1996 + $0x12a] sm:$0xff]
        %v2087 = vld [vmem:[%s1996 + $0x13a] sm:$0xff]
        %v2088 = vld [vmem:[%s1996 + $0x142] sm:$0xff]
        %v2089 = vld [vmem:[%s1996 + $0x152] sm:$0xff]
        %v2090 = vld [vmem:[%s1996 + $0x15a] sm:$0xff]
        %v2091 = vld [vmem:[%s1996 + $0x16a] sm:$0xff]
        %v2092 = vld [vmem:[%s1996 + $0x172] sm:$0xff]
        %2125 = vrot.lane.b32.xlu0 %v1836, 64
        %v2126 = vpop.permute.xlu0 %2125
        %2127 = vrot.lane.b32.xlu0 %v1837, 64
        %v2128 = vpop.permute.xlu0 %2127
        %2129 = vrot.lane.b32.xlu0 %v1838, 64
        %v2130 = vpop.permute.xlu0 %2129
        %2131 = vrot.lane.b32.xlu0 %v1839, 64
        %v2132 = vpop.permute.xlu0 %2131
        %2133 = vrot.lane.b32.xlu0 %v1840, 64
        %v2134 = vpop.permute.xlu0 %2133
        %2135 = vrot.lane.b32.xlu0 %v1841, 64
        %v2136 = vpop.permute.xlu0 %2135
        %2137 = vrot.lane.b32.xlu0 %v1842, 64
        %v2138 = vpop.permute.xlu0 %2137
        %2139 = vrot.lane.b32.xlu0 %v1843, 64
        %v2140 = vpop.permute.xlu0 %2139
        %2141 = vrot.lane.b32.xlu0 %v1844, 64
        %v2142 = vpop.permute.xlu0 %2141
        %2143 = vrot.lane.b32.xlu0 %v1845, 64
        %v2144 = vpop.permute.xlu0 %2143
        %2145 = vrot.lane.b32.xlu0 %v1846, 64
        %v2146 = vpop.permute.xlu0 %2145
        %2147 = vrot.lane.b32.xlu0 %v1847, 64
        %v2148 = vpop.permute.xlu0 %2147
        %2149 = vrot.lane.b32.xlu0 %v1848, 64
        %v2150 = vpop.permute.xlu0 %2149
        %2151 = vrot.lane.b32.xlu0 %v1849, 64
        %v2152 = vpop.permute.xlu0 %2151
        %2153 = vrot.lane.b32.xlu0 %v1850, 64
        %v2154 = vpop.permute.xlu0 %2153
        %2155 = vrot.lane.b32.xlu0 %v1851, 64
        %v2156 = vpop.permute.xlu0 %2155
        %2157 = vrot.lane.b32.xlu0 %v1852, 64
        %v2158 = vpop.permute.xlu0 %2157
        %2159 = vrot.lane.b32.xlu0 %v1853, 64
        %v2160 = vpop.permute.xlu0 %2159
        %2161 = vrot.lane.b32.xlu0 %v1854, 64
        %v2162 = vpop.permute.xlu0 %2161
        %2163 = vrot.lane.b32.xlu0 %v1855, 64
        %v2164 = vpop.permute.xlu0 %2163
        %2165 = vrot.lane.b32.xlu0 %v1856, 64
        %v2166 = vpop.permute.xlu0 %2165
        %2167 = vrot.lane.b32.xlu0 %v1857, 64
        %v2168 = vpop.permute.xlu0 %2167
        %2169 = vrot.lane.b32.xlu0 %v1858, 64
        %v2170 = vpop.permute.xlu0 %2169
        %2171 = vrot.lane.b32.xlu0 %v1859, 64
        %v2172 = vpop.permute.xlu0 %2171
        %2173 = vrot.lane.b32.xlu0 %v1860, 64
        %v2174 = vpop.permute.xlu0 %2173
        %2175 = vrot.lane.b32.xlu0 %v1861, 64
        %v2176 = vpop.permute.xlu0 %2175
        %2177 = vrot.lane.b32.xlu0 %v1862, 64
        %v2178 = vpop.permute.xlu0 %2177
        %2179 = vrot.lane.b32.xlu0 %v1863, 64
        %v2180 = vpop.permute.xlu0 %2179
        %2181 = vrot.lane.b32.xlu0 %v1864, 64
        %v2182 = vpop.permute.xlu0 %2181
        %2183 = vrot.lane.b32.xlu0 %v1865, 64
        %v2184 = vpop.permute.xlu0 %2183
        %2185 = vrot.lane.b32.xlu0 %v1866, 64
        %v2186 = vpop.permute.xlu0 %2185
        %2187 = vrot.lane.b32.xlu0 %v1867, 64
        %v2188 = vpop.permute.xlu0 %2187
        %2253 = vrot.lane.b32.xlu0 %v1900, 64
        %v2254 = vpop.permute.xlu0 %2253
        %2255 = vrot.lane.b32.xlu0 %v1901, 64
        %v2256 = vpop.permute.xlu0 %2255
        %2257 = vrot.lane.b32.xlu0 %v1902, 64
        %v2258 = vpop.permute.xlu0 %2257
        %2259 = vrot.lane.b32.xlu0 %v1903, 64
        %v2260 = vpop.permute.xlu0 %2259
        %2261 = vrot.lane.b32.xlu0 %v1904, 64
        %v2262 = vpop.permute.xlu0 %2261
        %2263 = vrot.lane.b32.xlu0 %v1905, 64
        %v2264 = vpop.permute.xlu0 %2263
        %2265 = vrot.lane.b32.xlu0 %v1906, 64
        %v2266 = vpop.permute.xlu0 %2265
        %2267 = vrot.lane.b32.xlu0 %v1907, 64
        %v2268 = vpop.permute.xlu0 %2267
        %2269 = vrot.lane.b32.xlu0 %v1908, 64
        %v2270 = vpop.permute.xlu0 %2269
        %2271 = vrot.lane.b32.xlu0 %v1909, 64
        %v2272 = vpop.permute.xlu0 %2271
        %2273 = vrot.lane.b32.xlu0 %v1910, 64
        %v2274 = vpop.permute.xlu0 %2273
        %2275 = vrot.lane.b32.xlu0 %v1911, 64
        %v2276 = vpop.permute.xlu0 %2275
        %2277 = vrot.lane.b32.xlu0 %v1912, 64
        %v2278 = vpop.permute.xlu0 %2277
        %2279 = vrot.lane.b32.xlu0 %v1913, 64
        %v2280 = vpop.permute.xlu0 %2279
        %2281 = vrot.lane.b32.xlu0 %v1914, 64
        %v2282 = vpop.permute.xlu0 %2281
        %2283 = vrot.lane.b32.xlu0 %v1915, 64
        %v2284 = vpop.permute.xlu0 %2283
        %2285 = vrot.lane.b32.xlu0 %v1916, 64
        %v2286 = vpop.permute.xlu0 %2285
        %2287 = vrot.lane.b32.xlu0 %v1917, 64
        %v2288 = vpop.permute.xlu0 %2287
        %2289 = vrot.lane.b32.xlu0 %v1918, 64
        %v2290 = vpop.permute.xlu0 %2289
        %2291 = vrot.lane.b32.xlu0 %v1919, 64
        %v2292 = vpop.permute.xlu0 %2291
        %2293 = vrot.lane.b32.xlu0 %v1920, 64
        %v2294 = vpop.permute.xlu0 %2293
        %2295 = vrot.lane.b32.xlu0 %v1921, 64
        %v2296 = vpop.permute.xlu0 %2295
        %2297 = vrot.lane.b32.xlu0 %v1922, 64
        %v2298 = vpop.permute.xlu0 %2297
        %2299 = vrot.lane.b32.xlu0 %v1923, 64
        %v2300 = vpop.permute.xlu0 %2299
        %2301 = vrot.lane.b32.xlu0 %v1924, 64
        %v2302 = vpop.permute.xlu0 %2301
        %2303 = vrot.lane.b32.xlu0 %v1925, 64
        %v2304 = vpop.permute.xlu0 %2303
        %2305 = vrot.lane.b32.xlu0 %v1926, 64
        %v2306 = vpop.permute.xlu0 %2305
        %2307 = vrot.lane.b32.xlu0 %v1927, 64
        %v2308 = vpop.permute.xlu0 %2307
        %2309 = vrot.lane.b32.xlu0 %v1928, 64
        %v2310 = vpop.permute.xlu0 %2309
        %2311 = vrot.lane.b32.xlu0 %v1929, 64
        %v2312 = vpop.permute.xlu0 %2311
        %2313 = vrot.lane.b32.xlu0 %v1930, 64
        %v2314 = vpop.permute.xlu0 %2313
        %2315 = vrot.lane.b32.xlu0 %v1931, 64
        %v2316 = vpop.permute.xlu0 %2315
        %2381 = vrot.lane.b32.xlu0 %v1964, 64
        %v2382 = vpop.permute.xlu0 %2381
        %2383 = vrot.lane.b32.xlu0 %v1965, 64
        %v2384 = vpop.permute.xlu0 %2383
        %2385 = vrot.lane.b32.xlu0 %v1966, 64
        %v2386 = vpop.permute.xlu0 %2385
        %2387 = vrot.lane.b32.xlu0 %v1967, 64
        %v2388 = vpop.permute.xlu0 %2387
        %2389 = vrot.lane.b32.xlu0 %v1968, 64
        %v2390 = vpop.permute.xlu0 %2389
        %2391 = vrot.lane.b32.xlu0 %v1969, 64
        %v2392 = vpop.permute.xlu0 %2391
        %2393 = vrot.lane.b32.xlu0 %v1970, 64
        %v2394 = vpop.permute.xlu0 %2393
        %2395 = vrot.lane.b32.xlu0 %v1971, 64
        %v2396 = vpop.permute.xlu0 %2395
        %2397 = vrot.lane.b32.xlu0 %v1972, 64
        %v2398 = vpop.permute.xlu0 %2397
        %2399 = vrot.lane.b32.xlu0 %v1973, 64
        %v2400 = vpop.permute.xlu0 %2399
        %2401 = vrot.lane.b32.xlu0 %v1974, 64
        %v2402 = vpop.permute.xlu0 %2401
        %2403 = vrot.lane.b32.xlu0 %v1975, 64
        %v2404 = vpop.permute.xlu0 %2403
        %2405 = vrot.lane.b32.xlu0 %v1976, 64
        %v2406 = vpop.permute.xlu0 %2405
        %2407 = vrot.lane.b32.xlu0 %v1977, 64
        %v2408 = vpop.permute.xlu0 %2407
        %2409 = vrot.lane.b32.xlu0 %v1978, 64
        %v2410 = vpop.permute.xlu0 %2409
        %2411 = vrot.lane.b32.xlu0 %v1979, 64
        %v2412 = vpop.permute.xlu0 %2411
        %2413 = vrot.lane.b32.xlu0 %v1980, 64
        %v2414 = vpop.permute.xlu0 %2413
        %2415 = vrot.lane.b32.xlu0 %v1981, 64
        %v2416 = vpop.permute.xlu0 %2415
        %2417 = vrot.lane.b32.xlu0 %v1982, 64
        %v2418 = vpop.permute.xlu0 %2417
        %2419 = vrot.lane.b32.xlu0 %v1983, 64
        %v2420 = vpop.permute.xlu0 %2419
        %2421 = vrot.lane.b32.xlu0 %v1984, 64
        %v2422 = vpop.permute.xlu0 %2421
        %2423 = vrot.lane.b32.xlu0 %v1985, 64
        %v2424 = vpop.permute.xlu0 %2423
        %2425 = vrot.lane.b32.xlu0 %v1986, 64
        %v2426 = vpop.permute.xlu0 %2425
        %2427 = vrot.lane.b32.xlu0 %v1987, 64
        %v2428 = vpop.permute.xlu0 %2427
        %2429 = vrot.lane.b32.xlu0 %v1988, 64
        %v2430 = vpop.permute.xlu0 %2429
        %2431 = vrot.lane.b32.xlu0 %v1989, 64
        %v2432 = vpop.permute.xlu0 %2431
        %2433 = vrot.lane.b32.xlu0 %v1990, 64
        %v2434 = vpop.permute.xlu0 %2433
        %2435 = vrot.lane.b32.xlu0 %v1991, 64
        %v2436 = vpop.permute.xlu0 %2435
        %2437 = vrot.lane.b32.xlu0 %v1992, 64
        %v2438 = vpop.permute.xlu0 %2437
        %2439 = vrot.lane.b32.xlu0 %v1993, 64
        %v2440 = vpop.permute.xlu0 %2439
        %2441 = vrot.lane.b32.xlu0 %v1994, 64
        %v2442 = vpop.permute.xlu0 %2441
        %2443 = vrot.lane.b32.xlu0 %v1995, 64
        %v2444 = vpop.permute.xlu0 %2443
        %2509 = vrot.lane.b32.xlu0 %v2029, 64
        %v2510 = vpop.permute.xlu0 %2509
        %2511 = vrot.lane.b32.xlu0 %v2030, 64
        %v2512 = vpop.permute.xlu0 %2511
        %2513 = vrot.lane.b32.xlu0 %v2031, 64
        %v2514 = vpop.permute.xlu0 %2513
        %2515 = vrot.lane.b32.xlu0 %v2032, 64
        %v2516 = vpop.permute.xlu0 %2515
        %2517 = vrot.lane.b32.xlu0 %v2033, 64
        %v2518 = vpop.permute.xlu0 %2517
        %2519 = vrot.lane.b32.xlu0 %v2034, 64
        %v2520 = vpop.permute.xlu0 %2519
        %2521 = vrot.lane.b32.xlu0 %v2035, 64
        %v2522 = vpop.permute.xlu0 %2521
        %2523 = vrot.lane.b32.xlu0 %v2036, 64
        %v2524 = vpop.permute.xlu0 %2523
        %2525 = vrot.lane.b32.xlu0 %v2037, 64
        %v2526 = vpop.permute.xlu0 %2525
        %2527 = vrot.lane.b32.xlu0 %v2038, 64
        %v2528 = vpop.permute.xlu0 %2527
        %2529 = vrot.lane.b32.xlu0 %v2039, 64
        %v2530 = vpop.permute.xlu0 %2529
        %2531 = vrot.lane.b32.xlu0 %v2040, 64
        %v2532 = vpop.permute.xlu0 %2531
        %2533 = vrot.lane.b32.xlu0 %v2041, 64
        %v2534 = vpop.permute.xlu0 %2533
        %2535 = vrot.lane.b32.xlu0 %v2042, 64
        %v2536 = vpop.permute.xlu0 %2535
        %2537 = vrot.lane.b32.xlu0 %v2043, 64
        %v2538 = vpop.permute.xlu0 %2537
        %2539 = vrot.lane.b32.xlu0 %v2044, 64
        %v2540 = vpop.permute.xlu0 %2539
        %2541 = vrot.lane.b32.xlu0 %v2045, 64
        %v2542 = vpop.permute.xlu0 %2541
        %2543 = vrot.lane.b32.xlu0 %v2046, 64
        %v2544 = vpop.permute.xlu0 %2543
        %2545 = vrot.lane.b32.xlu0 %v2047, 64
        %v2546 = vpop.permute.xlu0 %2545
        %2547 = vrot.lane.b32.xlu0 %v2048, 64
        %v2548 = vpop.permute.xlu0 %2547
        %2549 = vrot.lane.b32.xlu0 %v2049, 64
        %v2550 = vpop.permute.xlu0 %2549
        %2551 = vrot.lane.b32.xlu0 %v2050, 64
        %v2552 = vpop.permute.xlu0 %2551
        %2553 = vrot.lane.b32.xlu0 %v2051, 64
        %v2554 = vpop.permute.xlu0 %2553
        %2555 = vrot.lane.b32.xlu0 %v2052, 64
        %v2556 = vpop.permute.xlu0 %2555
        %2557 = vrot.lane.b32.xlu0 %v2053, 64
        %v2558 = vpop.permute.xlu0 %2557
        %2559 = vrot.lane.b32.xlu0 %v2054, 64
        %v2560 = vpop.permute.xlu0 %2559
        %2561 = vrot.lane.b32.xlu0 %v2055, 64
        %v2562 = vpop.permute.xlu0 %2561
        %2563 = vrot.lane.b32.xlu0 %v2056, 64
        %v2564 = vpop.permute.xlu0 %2563
        %2565 = vrot.lane.b32.xlu0 %v2057, 64
        %v2566 = vpop.permute.xlu0 %2565
        %2567 = vrot.lane.b32.xlu0 %v2058, 64
        %v2568 = vpop.permute.xlu0 %2567
        %2569 = vrot.lane.b32.xlu0 %v2059, 64
        %v2570 = vpop.permute.xlu0 %2569
        %2571 = vrot.lane.b32.xlu0 %v2060, 64
        %v2572 = vpop.permute.xlu0 %2571
        %v2605 = vsel %vm917, %v1804, %v2126
        %v2606 = vsel %vm917, %v1805, %v2128
        %v2607 = vsel %vm917, %v1806, %v2130
        %v2608 = vsel %vm917, %v1807, %v2132
        %v2609 = vsel %vm917, %v1808, %v2134
        %v2610 = vsel %vm917, %v1809, %v2136
        %v2611 = vsel %vm917, %v1810, %v2138
        %v2612 = vsel %vm917, %v1811, %v2140
        %v2613 = vsel %vm917, %v1812, %v2142
        %v2614 = vsel %vm917, %v1813, %v2144
        %v2615 = vsel %vm917, %v1814, %v2146
        %v2616 = vsel %vm917, %v1815, %v2148
        %v2617 = vsel %vm917, %v1816, %v2150
        %v2618 = vsel %vm917, %v1817, %v2152
        %v2619 = vsel %vm917, %v1818, %v2154
        %v2620 = vsel %vm917, %v1819, %v2156
        %v2621 = vsel %vm917, %v1820, %v2158
        %v2622 = vsel %vm917, %v1821, %v2160
        %v2623 = vsel %vm917, %v1822, %v2162
        %v2624 = vsel %vm917, %v1823, %v2164
        %v2625 = vsel %vm917, %v1824, %v2166
        %v2626 = vsel %vm917, %v1825, %v2168
        %v2627 = vsel %vm917, %v1826, %v2170
        %v2628 = vsel %vm917, %v1827, %v2172
        %v2629 = vsel %vm917, %v1828, %v2174
        %v2630 = vsel %vm917, %v1829, %v2176
        %v2631 = vsel %vm917, %v1830, %v2178
        %v2632 = vsel %vm917, %v1831, %v2180
        %v2633 = vsel %vm917, %v1832, %v2182
        %v2634 = vsel %vm917, %v1833, %v2184
        %v2635 = vsel %vm917, %v1834, %v2186
        %v2636 = vsel %vm917, %v1835, %v2188
        %v2637 = vsel %vm917, %v1868, %v2254
        %v2638 = vsel %vm917, %v1869, %v2256
        %v2639 = vsel %vm917, %v1870, %v2258
        %v2640 = vsel %vm917, %v1871, %v2260
        %v2641 = vsel %vm917, %v1872, %v2262
        %v2642 = vsel %vm917, %v1873, %v2264
        %v2643 = vsel %vm917, %v1874, %v2266
        %v2644 = vsel %vm917, %v1875, %v2268
        %v2645 = vsel %vm917, %v1876, %v2270
        %v2646 = vsel %vm917, %v1877, %v2272
        %v2647 = vsel %vm917, %v1878, %v2274
        %v2648 = vsel %vm917, %v1879, %v2276
        %v2649 = vsel %vm917, %v1880, %v2278
        %v2650 = vsel %vm917, %v1881, %v2280
        %v2651 = vsel %vm917, %v1882, %v2282
        %v2652 = vsel %vm917, %v1883, %v2284
        %v2653 = vsel %vm917, %v1884, %v2286
        %v2654 = vsel %vm917, %v1885, %v2288
        %v2655 = vsel %vm917, %v1886, %v2290
        %v2656 = vsel %vm917, %v1887, %v2292
        %v2657 = vsel %vm917, %v1888, %v2294
        %v2658 = vsel %vm917, %v1889, %v2296
        %v2659 = vsel %vm917, %v1890, %v2298
        %v2660 = vsel %vm917, %v1891, %v2300
        %v2661 = vsel %vm917, %v1892, %v2302
        %v2662 = vsel %vm917, %v1893, %v2304
        %v2663 = vsel %vm917, %v1894, %v2306
        %v2664 = vsel %vm917, %v1895, %v2308
        %v2665 = vsel %vm917, %v1896, %v2310
        %v2666 = vsel %vm917, %v1897, %v2312
        %v2667 = vsel %vm917, %v1898, %v2314
        %v2668 = vsel %vm917, %v1899, %v2316
        %v2669 = vsel %vm917, %v1932, %v2382
        %v2670 = vsel %vm917, %v1933, %v2384
        %v2671 = vsel %vm917, %v1934, %v2386
        %v2672 = vsel %vm917, %v1935, %v2388
        %v2673 = vsel %vm917, %v1936, %v2390
        %v2674 = vsel %vm917, %v1937, %v2392
        %v2675 = vsel %vm917, %v1938, %v2394
        %v2676 = vsel %vm917, %v1939, %v2396
        %v2677 = vsel %vm917, %v1940, %v2398
        %v2678 = vsel %vm917, %v1941, %v2400
        %v2679 = vsel %vm917, %v1942, %v2402
        %v2680 = vsel %vm917, %v1943, %v2404
        %v2681 = vsel %vm917, %v1944, %v2406
        %v2682 = vsel %vm917, %v1945, %v2408
        %v2683 = vsel %vm917, %v1946, %v2410
        %v2684 = vsel %vm917, %v1947, %v2412
        %v2685 = vsel %vm917, %v1948, %v2414
        %v2686 = vsel %vm917, %v1949, %v2416
        %v2687 = vsel %vm917, %v1950, %v2418
        %v2688 = vsel %vm917, %v1951, %v2420
        %v2689 = vsel %vm917, %v1952, %v2422
        %v2690 = vsel %vm917, %v1953, %v2424
        %v2691 = vsel %vm917, %v1954, %v2426
        %v2692 = vsel %vm917, %v1955, %v2428
        %v2693 = vsel %vm917, %v1956, %v2430
        %v2694 = vsel %vm917, %v1957, %v2432
        %v2695 = vsel %vm917, %v1958, %v2434
        %v2696 = vsel %vm917, %v1959, %v2436
        %v2697 = vsel %vm917, %v1960, %v2438
        %v2698 = vsel %vm917, %v1961, %v2440
        %v2699 = vsel %vm917, %v1962, %v2442
        %v2700 = vsel %vm917, %v1963, %v2444
        %v2701 = vsel %vm917, %v1997, %v2510
        %v2702 = vsel %vm917, %v1998, %v2512
        %v2703 = vsel %vm917, %v1999, %v2514
        %v2704 = vsel %vm917, %v2000, %v2516
        %v2705 = vsel %vm917, %v2001, %v2518
        %v2706 = vsel %vm917, %v2002, %v2520
        %v2707 = vsel %vm917, %v2003, %v2522
        %v2708 = vsel %vm917, %v2004, %v2524
        %v2709 = vsel %vm917, %v2005, %v2526
        %v2710 = vsel %vm917, %v2006, %v2528
        %v2711 = vsel %vm917, %v2007, %v2530
        %v2712 = vsel %vm917, %v2008, %v2532
        %v2713 = vsel %vm917, %v2009, %v2534
        %v2714 = vsel %vm917, %v2010, %v2536
        %v2715 = vsel %vm917, %v2011, %v2538
        %v2716 = vsel %vm917, %v2012, %v2540
        %v2717 = vsel %vm917, %v2013, %v2542
        %v2718 = vsel %vm917, %v2014, %v2544
        %v2719 = vsel %vm917, %v2015, %v2546
        %v2720 = vsel %vm917, %v2016, %v2548
        %v2721 = vsel %vm917, %v2017, %v2550
        %v2722 = vsel %vm917, %v2018, %v2552
        %v2723 = vsel %vm917, %v2019, %v2554
        %v2724 = vsel %vm917, %v2020, %v2556
        %v2725 = vsel %vm917, %v2021, %v2558
        %v2726 = vsel %vm917, %v2022, %v2560
        %v2727 = vsel %vm917, %v2023, %v2562
        %v2728 = vsel %vm917, %v2024, %v2564
        %v2729 = vsel %vm917, %v2025, %v2566
        %v2730 = vsel %vm917, %v2026, %v2568
        %v2731 = vsel %vm917, %v2027, %v2570
        %v2732 = vsel %vm917, %v2028, %v2572
        %v2733 = vld [vmem:[%s6] sm:$0xff]
        %v2734 = vld [vmem:[%s6 + $0x8] sm:$0xff]
        %v2735 = vld [vmem:[%s6 + $0x10] sm:$0xff]
        %v2736 = vld [vmem:[%s6 + $0x18] sm:$0xff]
        %v2737 = vld [vmem:[%s6 + $0x20] sm:$0xff]
        %v2738 = vld [vmem:[%s6 + $0x28] sm:$0xff]
        %v2739 = vld [vmem:[%s6 + $0x30] sm:$0xff]
        %v2740 = vld [vmem:[%s6 + $0x38] sm:$0xff]
        %v2741 = vld [vmem:[%s6 + $0x40] sm:$0xff]
        %v2742 = vld [vmem:[%s6 + $0x48] sm:$0xff]
        %v2743 = vld [vmem:[%s6 + $0x50] sm:$0xff]
        %v2744 = vld [vmem:[%s6 + $0x58] sm:$0xff]
        %v2745 = vld [vmem:[%s6 + $0x60] sm:$0xff]
        %v2746 = vld [vmem:[%s6 + $0x68] sm:$0xff]
        %v2747 = vld [vmem:[%s6 + $0x70] sm:$0xff]
        %v2748 = vld [vmem:[%s6 + $0x78] sm:$0xff]
        %v2749 = vld [vmem:[%s6 + $0x80] sm:$0xff]
        %v2750 = vld [vmem:[%s6 + $0x88] sm:$0xff]
        %v2751 = vld [vmem:[%s6 + $0x90] sm:$0xff]
        %v2752 = vld [vmem:[%s6 + $0x98] sm:$0xff]
        %v2753 = vld [vmem:[%s6 + $0xa0] sm:$0xff]
        %v2754 = vld [vmem:[%s6 + $0xa8] sm:$0xff]
        %v2755 = vld [vmem:[%s6 + $0xb0] sm:$0xff]
        %v2756 = vld [vmem:[%s6 + $0xb8] sm:$0xff]
        %v2757 = vld [vmem:[%s6 + $0xc0] sm:$0xff]
        %v2758 = vld [vmem:[%s6 + $0xc8] sm:$0xff]
        %v2759 = vld [vmem:[%s6 + $0xd0] sm:$0xff]
        %v2760 = vld [vmem:[%s6 + $0xd8] sm:$0xff]
        %v2761 = vld [vmem:[%s6 + $0xe0] sm:$0xff]
        %v2762 = vld [vmem:[%s6 + $0xe8] sm:$0xff]
        %v2763 = vld [vmem:[%s6 + $0xf0] sm:$0xff]
        %v2764 = vld [vmem:[%s6 + $0xf8] sm:$0xff]
        %v2765 = vld [vmem:[%s6 + $0x100] sm:$0xff]
        %v2766 = vld [vmem:[%s6 + $0x108] sm:$0xff]
        %v2767 = vld [vmem:[%s6 + $0x110] sm:$0xff]
        %v2768 = vld [vmem:[%s6 + $0x118] sm:$0xff]
        %v2769 = vld [vmem:[%s6 + $0x120] sm:$0xff]
        %v2770 = vld [vmem:[%s6 + $0x128] sm:$0xff]
        %v2771 = vld [vmem:[%s6 + $0x130] sm:$0xff]
        %v2772 = vld [vmem:[%s6 + $0x138] sm:$0xff]
        %v2773 = vld [vmem:[%s6 + $0x140] sm:$0xff]
        %v2774 = vld [vmem:[%s6 + $0x148] sm:$0xff]
        %v2775 = vld [vmem:[%s6 + $0x150] sm:$0xff]
        %v2776 = vld [vmem:[%s6 + $0x158] sm:$0xff]
        %v2777 = vld [vmem:[%s6 + $0x160] sm:$0xff]
        %v2778 = vld [vmem:[%s6 + $0x168] sm:$0xff]
        %v2779 = vld [vmem:[%s6 + $0x170] sm:$0xff]
        %v2780 = vld [vmem:[%s6 + $0x178] sm:$0xff]
        %v2781 = vld [vmem:[%s6 + $0x180] sm:$0xff]
        %v2782 = vld [vmem:[%s6 + $0x188] sm:$0xff]
        %v2783 = vld [vmem:[%s6 + $0x190] sm:$0xff]
        %v2784 = vld [vmem:[%s6 + $0x198] sm:$0xff]
        %v2785 = vld [vmem:[%s6 + $0x1a0] sm:$0xff]
        %v2786 = vld [vmem:[%s6 + $0x1a8] sm:$0xff]
        %v2787 = vld [vmem:[%s6 + $0x1b0] sm:$0xff]
        %v2788 = vld [vmem:[%s6 + $0x1b8] sm:$0xff]
        %v2789 = vld [vmem:[%s6 + $0x1c0] sm:$0xff]
        %v2790 = vld [vmem:[%s6 + $0x1c8] sm:$0xff]
        %v2791 = vld [vmem:[%s6 + $0x1d0] sm:$0xff]
        %v2792 = vld [vmem:[%s6 + $0x1d8] sm:$0xff]
        %v2793 = vld [vmem:[%s6 + $0x1e0] sm:$0xff]
        %v2794 = vld [vmem:[%s6 + $0x1e8] sm:$0xff]
        %v2795 = vld [vmem:[%s6 + $0x1f0] sm:$0xff]
        %v2796 = vld [vmem:[%s6 + $0x1f8] sm:$0xff]
        %v2797 = vld [vmem:[%s6 + $0x200] sm:$0xff]
        %v2798 = vld [vmem:[%s6 + $0x208] sm:$0xff]
        %v2799 = vld [vmem:[%s6 + $0x210] sm:$0xff]
        %v2800 = vld [vmem:[%s6 + $0x218] sm:$0xff]
        %v2801 = vld [vmem:[%s6 + $0x220] sm:$0xff]
        %v2802 = vld [vmem:[%s6 + $0x228] sm:$0xff]
        %v2803 = vld [vmem:[%s6 + $0x230] sm:$0xff]
        %v2804 = vld [vmem:[%s6 + $0x238] sm:$0xff]
        %v2805 = vld [vmem:[%s7] sm:$0x1]
        %v2807 = vlaneseq
        %v2808 = vshrl.u32 %v2807, 7
        %v2809 = vsub.s32 0, %v2808
        %v2810 = vrot.slane %v2805, %v2809
        %v2813 = vsel %vm917, %v2061, 0
        %v2816 = vsel %vm917, %v2062, 0
        %v2819 = vsel %vm917, %v2063, 0
        %v2822 = vsel %vm917, %v2064, 0
        %v2825 = vsel %vm917, %v2065, 0
        %v2828 = vsel %vm917, %v2066, 0
        %v2831 = vsel %vm917, %v2067, 0
        %v2834 = vsel %vm917, %v2068, 0
        %v2837 = vsel %vm917, %v2069, 0
        %v2840 = vsel %vm917, %v2070, 0
        %v2843 = vsel %vm917, %v2071, 0
        %v2846 = vsel %vm917, %v2072, 0
        %v2849 = vsel %vm917, %v2073, 0
        %v2852 = vsel %vm917, %v2074, 0
        %v2855 = vsel %vm917, %v2075, 0
        %v2858 = vsel %vm917, %v2076, 0
        %v2861 = vsel %vm917, %v2077, 0
        %v2864 = vsel %vm917, %v2078, 0
        %v2867 = vsel %vm917, %v2079, 0
        %v2870 = vsel %vm917, %v2080, 0
        %v2873 = vsel %vm917, %v2081, 0
        %v2876 = vsel %vm917, %v2082, 0
        %v2879 = vsel %vm917, %v2083, 0
        %v2882 = vsel %vm917, %v2084, 0
        %v2885 = vsel %vm917, %v2085, 0
        %v2888 = vsel %vm917, %v2086, 0
        %v2891 = vsel %vm917, %v2087, 0
        %v2894 = vsel %vm917, %v2088, 0
        %v2897 = vsel %vm917, %v2089, 0
        %v2900 = vsel %vm917, %v2090, 0
        %v2903 = vsel %vm917, %v2091, 0
        %v2906 = vsel %vm917, %v2092, 0
        %2908 = vmatprep.subr.mxu0 0.0
        %2909 = vmatpush1.msra.mxu0 %v2733
        %2910 = vmatprep.subr.mxu0 0.0
        %2911 = vmatpush1.msra.mxu0 %v2734
        %2912 = vmatprep.subr.mxu0 0.0
        %2913 = vmatpush1.msra.mxu0 %v2735
        %2914 = vmatprep.subr.mxu0 0.0
        %2915 = vmatpush1.msra.mxu0 %v2736
        %2916 = vmatprep.subr.mxu0 0.0
        %2917 = vmatpush1.msra.mxu0 %v2737
        %2918 = vmatprep.subr.mxu0 0.0
        %2919 = vmatpush1.msra.mxu0 %v2738
        %2920 = vmatprep.subr.mxu0 0.0
        %2921 = vmatpush1.msra.mxu0 %v2739
        %2922 = vmatprep.subr.mxu0 0.0
        %2923 = vmatpush1.msra.mxu0 %v2740
        %2924 = vmatprep.subr.mxu0 0.0
        %2925 = vmatpush1.msra.mxu0 %v2741
        %2926 = vmatprep.subr.mxu0 0.0
        %2927 = vmatpush1.msra.mxu0 %v2742
        %2928 = vmatprep.subr.mxu0 0.0
        %2929 = vmatpush1.msra.mxu0 %v2743
        %2930 = vmatprep.subr.mxu0 0.0
        %2931 = vmatpush1.msra.mxu0 %v2744
        %2932 = vmatprep.subr.mxu0 0.0
        %2933 = vmatpush1.msra.mxu0 %v2745
        %2934 = vmatprep.subr.mxu0 0.0
        %2935 = vmatpush1.msra.mxu0 %v2746
        %2936 = vmatprep.subr.mxu0 0.0
        %2937 = vmatpush1.msra.mxu0 %v2747
        %2938 = vmatprep.subr.mxu0 0.0
        %2939 = vmatpush1.msra.mxu0 %v2748
        %2940 = vmatprep.subr.mxu0 0.0
        %2941 = vmatpush1.msra.mxu0 %v2749
        %2942 = vmatprep.subr.mxu0 0.0
        %2943 = vmatpush1.msra.mxu0 %v2750
        %2944 = vmatprep.subr.mxu0 0.0
        %2945 = vmatpush1.msra.mxu0 %v2751
        %2946 = vmatprep.subr.mxu0 0.0
        %2947 = vmatpush1.msra.mxu0 %v2752
        %2948 = vmatprep.subr.mxu0 0.0
        %2949 = vmatpush1.msra.mxu0 %v2753
        %2950 = vmatprep.subr.mxu0 0.0
        %2951 = vmatpush1.msra.mxu0 %v2754
        %2952 = vmatprep.subr.mxu0 0.0
        %2953 = vmatpush1.msra.mxu0 %v2755
        %2954 = vmatprep.subr.mxu0 0.0
        %2955 = vmatpush1.msra.mxu0 %v2756
        %2956 = vmatprep.subr.mxu0 0.0
        %2957 = vmatpush1.msra.mxu0 %v2757
        %2958 = vmatprep.subr.mxu0 0.0
        %2959 = vmatpush1.msra.mxu0 %v2758
        %2960 = vmatprep.subr.mxu0 0.0
        %2961 = vmatpush1.msra.mxu0 %v2759
        %2962 = vmatprep.subr.mxu0 0.0
        %2963 = vmatpush1.msra.mxu0 %v2760
        %2964 = vmatprep.subr.mxu0 0.0
        %2965 = vmatpush1.msra.mxu0 %v2761
        %2966 = vmatprep.subr.mxu0 0.0
        %2967 = vmatpush1.msra.mxu0 %v2762
        %2968 = vmatprep.subr.mxu0 0.0
        %2969 = vmatpush1.msra.mxu0 %v2763
        %2970 = vmatprep.subr.mxu0 0.0
        %2971 = vmatpush1.msra.mxu0 %v2764
        %2972 = vmatprep.mubr.f32.mxu0 %v2637
        %2973 = vmatmul.mubr.f32.gmra.mrb[0].mxu0 %v2605
        %v2974 = vpop.f32.mrb[0].mxu0
        %v2975 = vadd.f32 %v2810, %v2974
        %v2976 = vpop.f32.mrb[0].mxu0
        %2977 = vmatprep.mubr.f32.mxu0 %v2638
        %2978 = vmatmul.mubr.f32.gmra.mrb[0].mxu0 %v2606
        %v2979 = vpop.f32.mrb[0].mxu0
        %v2980 = vadd.f32 %v2810, %v2979
        %v2981 = vpop.f32.mrb[0].mxu0
        %2982 = vmatprep.mubr.f32.mxu0 %v2639
        %2983 = vmatmul.mubr.f32.gmra.mrb[0].mxu0 %v2607
        %v2984 = vpop.f32.mrb[0].mxu0
        %v2985 = vadd.f32 %v2810, %v2984
        %v2986 = vpop.f32.mrb[0].mxu0
        %2987 = vmatprep.mubr.f32.mxu0 %v2640
        %2988 = vmatmul.mubr.f32.gmra.mrb[0].mxu0 %v2608
        %v2989 = vpop.f32.mrb[0].mxu0
        %v2990 = vadd.f32 %v2810, %v2989
        %v2991 = vpop.f32.mrb[0].mxu0
        %2992 = vmatprep.mubr.f32.mxu0 %v2641
        %2993 = vmatmul.mubr.f32.gmra.mrb[0].mxu0 %v2609
        %v2994 = vpop.f32.mrb[0].mxu0
        %v2995 = vadd.f32 %v2810, %v2994
        %v2996 = vpop.f32.mrb[0].mxu0
        %2997 = vmatprep.mubr.f32.mxu0 %v2642
        %2998 = vmatmul.mubr.f32.gmra.mrb[0].mxu0 %v2610
        %v2999 = vpop.f32.mrb[0].mxu0
        %v3000 = vadd.f32 %v2810, %v2999
        %v3001 = vpop.f32.mrb[0].mxu0
        %3002 = vmatprep.mubr.f32.mxu0 %v2643
        %3003 = vmatmul.mubr.f32.gmra.mrb[0].mxu0 %v2611
        %v3004 = vpop.f32.mrb[0].mxu0
        %v3005 = vadd.f32 %v2810, %v3004
        %v3006 = vpop.f32.mrb[0].mxu0
        %3007 = vmatprep.mubr.f32.mxu0 %v2644
        %3008 = vmatmul.mubr.f32.gmra.mrb[0].mxu0 %v2612
        %v3009 = vpop.f32.mrb[0].mxu0
        %v3010 = vadd.f32 %v2810, %v3009
        %v3011 = vpop.f32.mrb[0].mxu0
        %3012 = vmatprep.mubr.f32.mxu0 %v2645
        %3013 = vmatmul.mubr.f32.gmra.mrb[0].mxu0 %v2613
        %v3014 = vpop.f32.mrb[0].mxu0
        %v3015 = vadd.f32 %v2810, %v3014
        %v3016 = vpop.f32.mrb[0].mxu0
        %3017 = vmatprep.mubr.f32.mxu0 %v2646
        %3018 = vmatmul.mubr.f32.gmra.mrb[0].mxu0 %v2614
        %v3019 = vpop.f32.mrb[0].mxu0
        %v3020 = vadd.f32 %v2810, %v3019
        %v3021 = vpop.f32.mrb[0].mxu0
        %3022 = vmatprep.mubr.f32.mxu0 %v2647
        %3023 = vmatmul.mubr.f32.gmra.mrb[0].mxu0 %v2615
        %v3024 = vpop.f32.mrb[0].mxu0
        %v3025 = vadd.f32 %v2810, %v3024
        %v3026 = vpop.f32.mrb[0].mxu0
        %3027 = vmatprep.mubr.f32.mxu0 %v2648
        %3028 = vmatmul.mubr.f32.gmra.mrb[0].mxu0 %v2616
        %v3029 = vpop.f32.mrb[0].mxu0
        %v3030 = vadd.f32 %v2810, %v3029
        %v3031 = vpop.f32.mrb[0].mxu0
        %3032 = vmatprep.mubr.f32.mxu0 %v2649
        %3033 = vmatmul.mubr.f32.gmra.mrb[0].mxu0 %v2617
        %v3034 = vpop.f32.mrb[0].mxu0
        %v3035 = vadd.f32 %v2810, %v3034
        %v3036 = vpop.f32.mrb[0].mxu0
        %3037 = vmatprep.mubr.f32.mxu0 %v2650
        %3038 = vmatmul.mubr.f32.gmra.mrb[0].mxu0 %v2618
        %v3039 = vpop.f32.mrb[0].mxu0
        %v3040 = vadd.f32 %v2810, %v3039
        %v3041 = vpop.f32.mrb[0].mxu0
        %3042 = vmatprep.mubr.f32.mxu0 %v2651
        %3043 = vmatmul.mubr.f32.gmra.mrb[0].mxu0 %v2619
        %v3044 = vpop.f32.mrb[0].mxu0
        %v3045 = vadd.f32 %v2810, %v3044
        %v3046 = vpop.f32.mrb[0].mxu0
        %3047 = vmatprep.mubr.f32.mxu0 %v2652
        %3048 = vmatmul.mubr.f32.gmra.mrb[0].mxu0 %v2620
        %v3049 = vpop.f32.mrb[0].mxu0
        %v3050 = vadd.f32 %v2810, %v3049
        %v3051 = vpop.f32.mrb[0].mxu0
        %3052 = vmatprep.mubr.f32.mxu0 %v2653
        %3053 = vmatmul.mubr.f32.gmra.mrb[0].mxu0 %v2621
        %v3054 = vpop.f32.mrb[0].mxu0
        %v3055 = vadd.f32 %v2810, %v3054
        %v3056 = vpop.f32.mrb[0].mxu0
        %3057 = vmatprep.mubr.f32.mxu0 %v2654
        %3058 = vmatmul.mubr.f32.gmra.mrb[0].mxu0 %v2622
        %v3059 = vpop.f32.mrb[0].mxu0
        %v3060 = vadd.f32 %v2810, %v3059
        %v3061 = vpop.f32.mrb[0].mxu0
        %3062 = vmatprep.mubr.f32.mxu0 %v2655
        %3063 = vmatmul.mubr.f32.gmra.mrb[0].mxu0 %v2623
        %v3064 = vpop.f32.mrb[0].mxu0
        %v3065 = vadd.f32 %v2810, %v3064
        %v3066 = vpop.f32.mrb[0].mxu0
        %3067 = vmatprep.mubr.f32.mxu0 %v2656
        %3068 = vmatmul.mubr.f32.gmra.mrb[0].mxu0 %v2624
        %v3069 = vpop.f32.mrb[0].mxu0
        %v3070 = vadd.f32 %v2810, %v3069
        %v3071 = vpop.f32.mrb[0].mxu0
        %3072 = vmatprep.mubr.f32.mxu0 %v2657
        %3073 = vmatmul.mubr.f32.gmra.mrb[0].mxu0 %v2625
        %v3074 = vpop.f32.mrb[0].mxu0
        %v3075 = vadd.f32 %v2810, %v3074
        %v3076 = vpop.f32.mrb[0].mxu0
        %3077 = vmatprep.mubr.f32.mxu0 %v2658
        %3078 = vmatmul.mubr.f32.gmra.mrb[0].mxu0 %v2626
        %v3079 = vpop.f32.mrb[0].mxu0
        %v3080 = vadd.f32 %v2810, %v3079
        %v3081 = vpop.f32.mrb[0].mxu0
        %3082 = vmatprep.mubr.f32.mxu0 %v2659
        %3083 = vmatmul.mubr.f32.gmra.mrb[0].mxu0 %v2627
        %v3084 = vpop.f32.mrb[0].mxu0
        %v3085 = vadd.f32 %v2810, %v3084
        %v3086 = vpop.f32.mrb[0].mxu0
        %3087 = vmatprep.mubr.f32.mxu0 %v2660
        %3088 = vmatmul.mubr.f32.gmra.mrb[0].mxu0 %v2628
        %v3089 = vpop.f32.mrb[0].mxu0
        %v3090 = vadd.f32 %v2810, %v3089
        %v3091 = vpop.f32.mrb[0].mxu0
        %3092 = vmatprep.mubr.f32.mxu0 %v2661
        %3093 = vmatmul.mubr.f32.gmra.mrb[0].mxu0 %v2629
        %v3094 = vpop.f32.mrb[0].mxu0
        %v3095 = vadd.f32 %v2810, %v3094
        %v3096 = vpop.f32.mrb[0].mxu0
        %3097 = vmatprep.mubr.f32.mxu0 %v2662
        %3098 = vmatmul.mubr.f32.gmra.mrb[0].mxu0 %v2630
        %v3099 = vpop.f32.mrb[0].mxu0
        %v3100 = vadd.f32 %v2810, %v3099
        %v3101 = vpop.f32.mrb[0].mxu0
        %3102 = vmatprep.mubr.f32.mxu0 %v2663
        %3103 = vmatmul.mubr.f32.gmra.mrb[0].mxu0 %v2631
        %v3104 = vpop.f32.mrb[0].mxu0
        %v3105 = vadd.f32 %v2810, %v3104
        %v3106 = vpop.f32.mrb[0].mxu0
        %3107 = vmatprep.mubr.f32.mxu0 %v2664
        %3108 = vmatmul.mubr.f32.gmra.mrb[0].mxu0 %v2632
        %v3109 = vpop.f32.mrb[0].mxu0
        %v3110 = vadd.f32 %v2810, %v3109
        %v3111 = vpop.f32.mrb[0].mxu0
        %3112 = vmatprep.mubr.f32.mxu0 %v2665
        %3113 = vmatmul.mubr.f32.gmra.mrb[0].mxu0 %v2633
        %v3114 = vpop.f32.mrb[0].mxu0
        %v3115 = vadd.f32 %v2810, %v3114
        %v3116 = vpop.f32.mrb[0].mxu0
        %3117 = vmatprep.mubr.f32.mxu0 %v2666
        %3118 = vmatmul.mubr.f32.gmra.mrb[0].mxu0 %v2634
        %v3119 = vpop.f32.mrb[0].mxu0
        %v3120 = vadd.f32 %v2810, %v3119
        %v3121 = vpop.f32.mrb[0].mxu0
        %3122 = vmatprep.mubr.f32.mxu0 %v2667
        %3123 = vmatmul.mubr.f32.gmra.mrb[0].mxu0 %v2635
        %v3124 = vpop.f32.mrb[0].mxu0
        %v3125 = vadd.f32 %v2810, %v3124
        %v3126 = vpop.f32.mrb[0].mxu0
        %3127 = vmatprep.mubr.f32.mxu0 %v2668
        %3128 = vmatmul.mubr.f32.gmra.mrb[0].mxu0 %v2636
        %v3129 = vpop.f32.mrb[0].mxu0
        %v3130 = vadd.f32 %v2810, %v3129
        %v3131 = vpop.f32.mrb[0].mxu0
        %3132 = vdwg.mxu0
        %3133 = vmatprep.subr.mxu0 0.0
        %3134 = vmatpush1.msra.mxu0 %v2765
        %3135 = vmatprep.subr.mxu0 0.0
        %3136 = vmatpush1.msra.mxu0 %v2766
        %3137 = vmatprep.subr.mxu0 0.0
        %3138 = vmatpush1.msra.mxu0 %v2767
        %3139 = vmatprep.subr.mxu0 0.0
        %3140 = vmatpush1.msra.mxu0 %v2768
        %3141 = vmatprep.subr.mxu0 0.0
        %3142 = vmatpush1.msra.mxu0 %v2769
        %3143 = vmatprep.subr.mxu0 0.0
        %3144 = vmatpush1.msra.mxu0 %v2770
        %3145 = vmatprep.subr.mxu0 0.0
        %3146 = vmatpush1.msra.mxu0 %v2771
        %3147 = vmatprep.subr.mxu0 0.0
        %3148 = vmatpush1.msra.mxu0 %v2772
        %3149 = vmatprep.subr.mxu0 0.0
        %3150 = vmatpush1.msra.mxu0 %v2773
        %3151 = vmatprep.subr.mxu0 0.0
        %3152 = vmatpush1.msra.mxu0 %v2774
        %3153 = vmatprep.subr.mxu0 0.0
        %3154 = vmatpush1.msra.mxu0 %v2775
        %3155 = vmatprep.subr.mxu0 0.0
        %3156 = vmatpush1.msra.mxu0 %v2776
        %3157 = vmatprep.subr.mxu0 0.0
        %3158 = vmatpush1.msra.mxu0 %v2777
        %3159 = vmatprep.subr.mxu0 0.0
        %3160 = vmatpush1.msra.mxu0 %v2778
        %3161 = vmatprep.subr.mxu0 0.0
        %3162 = vmatpush1.msra.mxu0 %v2779
        %3163 = vmatprep.subr.mxu0 0.0
        %3164 = vmatpush1.msra.mxu0 %v2780
        %3165 = vmatprep.subr.mxu0 0.0
        %3166 = vmatpush1.msra.mxu0 %v2781
        %3167 = vmatprep.subr.mxu0 0.0
        %3168 = vmatpush1.msra.mxu0 %v2782
        %3169 = vmatprep.subr.mxu0 0.0
        %3170 = vmatpush1.msra.mxu0 %v2783
        %3171 = vmatprep.subr.mxu0 0.0
        %3172 = vmatpush1.msra.mxu0 %v2784
        %3173 = vmatprep.subr.mxu0 0.0
        %3174 = vmatpush1.msra.mxu0 %v2785
        %3175 = vmatprep.subr.mxu0 0.0
        %3176 = vmatpush1.msra.mxu0 %v2786
        %3177 = vmatprep.subr.mxu0 0.0
        %3178 = vmatpush1.msra.mxu0 %v2787
        %3179 = vmatprep.subr.mxu0 0.0
        %3180 = vmatpush1.msra.mxu0 %v2788
        %3181 = vmatprep.subr.mxu0 0.0
        %3182 = vmatpush1.msra.mxu0 %v2789
        %3183 = vmatprep.subr.mxu0 0.0
        %3184 = vmatpush1.msra.mxu0 %v2790
        %3185 = vmatprep.subr.mxu0 0.0
        %3186 = vmatpush1.msra.mxu0 %v2791
        %3187 = vmatprep.subr.mxu0 0.0
        %3188 = vmatpush1.msra.mxu0 %v2792
        %3189 = vmatprep.subr.mxu0 0.0
        %3190 = vmatpush1.msra.mxu0 %v2793
        %3191 = vmatprep.subr.mxu0 0.0
        %3192 = vmatpush1.msra.mxu0 %v2794
        %3193 = vmatprep.subr.mxu0 0.0
        %3194 = vmatpush1.msra.mxu0 %v2795
        %3195 = vmatprep.subr.mxu0 0.0
        %3196 = vmatpush1.msra.mxu0 %v2796
        %3197 = vmatprep.mubr.f32.mxu0 %v2701
        %3198 = vmatmul.mubr.f32.gmra.mrb[0].mxu0 %v2669
        %v3199 = vpop.f32.mrb[0].mxu0
        %v3200 = vadd.f32 %v2975, %v3199
        %v3201 = vpop.f32.mrb[0].mxu0
        %3202 = vmatprep.mubr.f32.mxu0 %v2702
        %3203 = vmatmul.mubr.f32.gmra.mrb[0].mxu0 %v2670
        %v3204 = vpop.f32.mrb[0].mxu0
        %v3205 = vadd.f32 %v2980, %v3204
        %v3206 = vpop.f32.mrb[0].mxu0
        %3207 = vmatprep.mubr.f32.mxu0 %v2703
        %3208 = vmatmul.mubr.f32.gmra.mrb[0].mxu0 %v2671
        %v3209 = vpop.f32.mrb[0].mxu0
        %v3210 = vadd.f32 %v2985, %v3209
        %v3211 = vpop.f32.mrb[0].mxu0
        %3212 = vmatprep.mubr.f32.mxu0 %v2704
        %3213 = vmatmul.mubr.f32.gmra.mrb[0].mxu0 %v2672
        %v3214 = vpop.f32.mrb[0].mxu0
        %v3215 = vadd.f32 %v2990, %v3214
        %v3216 = vpop.f32.mrb[0].mxu0
        %3217 = vmatprep.mubr.f32.mxu0 %v2705
        %3218 = vmatmul.mubr.f32.gmra.mrb[0].mxu0 %v2673
        %v3219 = vpop.f32.mrb[0].mxu0
        %v3220 = vadd.f32 %v2995, %v3219
        %v3221 = vpop.f32.mrb[0].mxu0
        %3222 = vmatprep.mubr.f32.mxu0 %v2706
        %3223 = vmatmul.mubr.f32.gmra.mrb[0].mxu0 %v2674
        %v3224 = vpop.f32.mrb[0].mxu0
        %v3225 = vadd.f32 %v3000, %v3224
        %v3226 = vpop.f32.mrb[0].mxu0
        %3227 = vmatprep.mubr.f32.mxu0 %v2707
        %3228 = vmatmul.mubr.f32.gmra.mrb[0].mxu0 %v2675
        %v3229 = vpop.f32.mrb[0].mxu0
        %v3230 = vadd.f32 %v3005, %v3229
        %v3231 = vpop.f32.mrb[0].mxu0
        %3232 = vmatprep.mubr.f32.mxu0 %v2708
        %3233 = vmatmul.mubr.f32.gmra.mrb[0].mxu0 %v2676
        %v3234 = vpop.f32.mrb[0].mxu0
        %v3235 = vadd.f32 %v3010, %v3234
        %v3236 = vpop.f32.mrb[0].mxu0
        %3237 = vmatprep.mubr.f32.mxu0 %v2709
        %3238 = vmatmul.mubr.f32.gmra.mrb[0].mxu0 %v2677
        %v3239 = vpop.f32.mrb[0].mxu0
        %v3240 = vadd.f32 %v3015, %v3239
        %v3241 = vpop.f32.mrb[0].mxu0
        %3242 = vmatprep.mubr.f32.mxu0 %v2710
        %3243 = vmatmul.mubr.f32.gmra.mrb[0].mxu0 %v2678
        %v3244 = vpop.f32.mrb[0].mxu0
        %v3245 = vadd.f32 %v3020, %v3244
        %v3246 = vpop.f32.mrb[0].mxu0
        %3247 = vmatprep.mubr.f32.mxu0 %v2711
        %3248 = vmatmul.mubr.f32.gmra.mrb[0].mxu0 %v2679
        %v3249 = vpop.f32.mrb[0].mxu0
        %v3250 = vadd.f32 %v3025, %v3249
        %v3251 = vpop.f32.mrb[0].mxu0
        %3252 = vmatprep.mubr.f32.mxu0 %v2712
        %3253 = vmatmul.mubr.f32.gmra.mrb[0].mxu0 %v2680
        %v3254 = vpop.f32.mrb[0].mxu0
        %v3255 = vadd.f32 %v3030, %v3254
        %v3256 = vpop.f32.mrb[0].mxu0
        %3257 = vmatprep.mubr.f32.mxu0 %v2713
        %3258 = vmatmul.mubr.f32.gmra.mrb[0].mxu0 %v2681
        %v3259 = vpop.f32.mrb[0].mxu0
        %v3260 = vadd.f32 %v3035, %v3259
        %v3261 = vpop.f32.mrb[0].mxu0
        %3262 = vmatprep.mubr.f32.mxu0 %v2714
        %3263 = vmatmul.mubr.f32.gmra.mrb[0].mxu0 %v2682
        %v3264 = vpop.f32.mrb[0].mxu0
        %v3265 = vadd.f32 %v3040, %v3264
        %v3266 = vpop.f32.mrb[0].mxu0
        %3267 = vmatprep.mubr.f32.mxu0 %v2715
        %3268 = vmatmul.mubr.f32.gmra.mrb[0].mxu0 %v2683
        %v3269 = vpop.f32.mrb[0].mxu0
        %v3270 = vadd.f32 %v3045, %v3269
        %v3271 = vpop.f32.mrb[0].mxu0
        %3272 = vmatprep.mubr.f32.mxu0 %v2716
        %3273 = vmatmul.mubr.f32.gmra.mrb[0].mxu0 %v2684
        %v3274 = vpop.f32.mrb[0].mxu0
        %v3275 = vadd.f32 %v3050, %v3274
        %v3276 = vpop.f32.mrb[0].mxu0
        %3277 = vmatprep.mubr.f32.mxu0 %v2717
        %3278 = vmatmul.mubr.f32.gmra.mrb[0].mxu0 %v2685
        %v3279 = vpop.f32.mrb[0].mxu0
        %v3280 = vadd.f32 %v3055, %v3279
        %v3281 = vpop.f32.mrb[0].mxu0
        %3282 = vmatprep.mubr.f32.mxu0 %v2718
        %3283 = vmatmul.mubr.f32.gmra.mrb[0].mxu0 %v2686
        %v3284 = vpop.f32.mrb[0].mxu0
        %v3285 = vadd.f32 %v3060, %v3284
        %v3286 = vpop.f32.mrb[0].mxu0
        %3287 = vmatprep.mubr.f32.mxu0 %v2719
        %3288 = vmatmul.mubr.f32.gmra.mrb[0].mxu0 %v2687
        %v3289 = vpop.f32.mrb[0].mxu0
        %v3290 = vadd.f32 %v3065, %v3289
        %v3291 = vpop.f32.mrb[0].mxu0
        %3292 = vmatprep.mubr.f32.mxu0 %v2720
        %3293 = vmatmul.mubr.f32.gmra.mrb[0].mxu0 %v2688
        %v3294 = vpop.f32.mrb[0].mxu0
        %v3295 = vadd.f32 %v3070, %v3294
        %v3296 = vpop.f32.mrb[0].mxu0
        %3297 = vmatprep.mubr.f32.mxu0 %v2721
        %3298 = vmatmul.mubr.f32.gmra.mrb[0].mxu0 %v2689
        %v3299 = vpop.f32.mrb[0].mxu0
        %v3300 = vadd.f32 %v3075, %v3299
        %v3301 = vpop.f32.mrb[0].mxu0
        %3302 = vmatprep.mubr.f32.mxu0 %v2722
        %3303 = vmatmul.mubr.f32.gmra.mrb[0].mxu0 %v2690
        %v3304 = vpop.f32.mrb[0].mxu0
        %v3305 = vadd.f32 %v3080, %v3304
        %v3306 = vpop.f32.mrb[0].mxu0
        %3307 = vmatprep.mubr.f32.mxu0 %v2723
        %3308 = vmatmul.mubr.f32.gmra.mrb[0].mxu0 %v2691
        %v3309 = vpop.f32.mrb[0].mxu0
        %v3310 = vadd.f32 %v3085, %v3309
        %v3311 = vpop.f32.mrb[0].mxu0
        %3312 = vmatprep.mubr.f32.mxu0 %v2724
        %3313 = vmatmul.mubr.f32.gmra.mrb[0].mxu0 %v2692
        %v3314 = vpop.f32.mrb[0].mxu0
        %v3315 = vadd.f32 %v3090, %v3314
        %v3316 = vpop.f32.mrb[0].mxu0
        %3317 = vmatprep.mubr.f32.mxu0 %v2725
        %3318 = vmatmul.mubr.f32.gmra.mrb[0].mxu0 %v2693
        %v3319 = vpop.f32.mrb[0].mxu0
        %v3320 = vadd.f32 %v3095, %v3319
        %v3321 = vpop.f32.mrb[0].mxu0
        %3322 = vmatprep.mubr.f32.mxu0 %v2726
        %3323 = vmatmul.mubr.f32.gmra.mrb[0].mxu0 %v2694
        %v3324 = vpop.f32.mrb[0].mxu0
        %v3325 = vadd.f32 %v3100, %v3324
        %v3326 = vpop.f32.mrb[0].mxu0
        %3327 = vmatprep.mubr.f32.mxu0 %v2727
        %3328 = vmatmul.mubr.f32.gmra.mrb[0].mxu0 %v2695
        %v3329 = vpop.f32.mrb[0].mxu0
        %v3330 = vadd.f32 %v3105, %v3329
        %v3331 = vpop.f32.mrb[0].mxu0
        %3332 = vmatprep.mubr.f32.mxu0 %v2728
        %3333 = vmatmul.mubr.f32.gmra.mrb[0].mxu0 %v2696
        %v3334 = vpop.f32.mrb[0].mxu0
        %v3335 = vadd.f32 %v3110, %v3334
        %v3336 = vpop.f32.mrb[0].mxu0
        %3337 = vmatprep.mubr.f32.mxu0 %v2729
        %3338 = vmatmul.mubr.f32.gmra.mrb[0].mxu0 %v2697
        %v3339 = vpop.f32.mrb[0].mxu0
        %v3340 = vadd.f32 %v3115, %v3339
        %v3341 = vpop.f32.mrb[0].mxu0
        %3342 = vmatprep.mubr.f32.mxu0 %v2730
        %3343 = vmatmul.mubr.f32.gmra.mrb[0].mxu0 %v2698
        %v3344 = vpop.f32.mrb[0].mxu0
        %v3345 = vadd.f32 %v3120, %v3344
        %v3346 = vpop.f32.mrb[0].mxu0
        %3347 = vmatprep.mubr.f32.mxu0 %v2731
        %3348 = vmatmul.mubr.f32.gmra.mrb[0].mxu0 %v2699
        %v3349 = vpop.f32.mrb[0].mxu0
        %v3350 = vadd.f32 %v3125, %v3349
        %v3351 = vpop.f32.mrb[0].mxu0
        %3352 = vmatprep.mubr.f32.mxu0 %v2732
        %3353 = vmatmul.mubr.f32.gmra.mrb[0].mxu0 %v2700
        %v3354 = vpop.f32.mrb[0].mxu0
        %v3355 = vadd.f32 %v3130, %v3354
        %v3356 = vpop.f32.mrb[0].mxu0
        %3357 = vdwg.mxu0
        %3358 = vmatprep.subr.mxu0 0.0
        %3359 = vmatpush1.msra.mxu0 %v2797
        %3360 = vmatprep.subr.mxu0 0.0
        %3361 = vmatpush1.msra.mxu0 %v2798
        %3362 = vmatprep.subr.mxu0 0.0
        %3363 = vmatpush1.msra.mxu0 %v2799
        %3364 = vmatprep.subr.mxu0 0.0
        %3365 = vmatpush1.msra.mxu0 %v2800
        %3366 = vmatprep.subr.mxu0 0.0
        %3367 = vmatpush1.msra.mxu0 %v2801
        %3368 = vmatprep.subr.mxu0 0.0
        %3369 = vmatpush1.msra.mxu0 %v2802
        %3370 = vmatprep.subr.mxu0 0.0
        %3371 = vmatpush1.msra.mxu0 %v2803
        %3372 = vmatprep.subr.mxu0 0.0
        %3373 = vmatpush1.msra.mxu0 %v2804
        %3374 = vmatprep.subr.mxu0 0.0
        %3375 = vmatpush1.msra.mxu0 0.0
        %3376 = vmatprep.subr.mxu0 0.0
        %3377 = vmatpush1.msra.mxu0 0.0
        %3378 = vmatprep.subr.mxu0 0.0
        %3379 = vmatpush1.msra.mxu0 0.0
        %3380 = vmatprep.subr.mxu0 0.0
        %3381 = vmatpush1.msra.mxu0 0.0
        %3382 = vmatprep.subr.mxu0 0.0
        %3383 = vmatpush1.msra.mxu0 0.0
        %3384 = vmatprep.subr.mxu0 0.0
        %3385 = vmatpush1.msra.mxu0 0.0
        %3386 = vmatprep.subr.mxu0 0.0
        %3387 = vmatpush1.msra.mxu0 0.0
        %3388 = vmatprep.subr.mxu0 0.0
        %3389 = vmatpush1.msra.mxu0 0.0
        %3390 = vmatprep.subr.mxu0 0.0
        %3391 = vmatpush1.msra.mxu0 0.0
        %3392 = vmatprep.subr.mxu0 0.0
        %3393 = vmatpush1.msra.mxu0 0.0
        %3394 = vmatprep.subr.mxu0 0.0
        %3395 = vmatpush1.msra.mxu0 0.0
        %3396 = vmatprep.subr.mxu0 0.0
        %3397 = vmatpush1.msra.mxu0 0.0
        %3398 = vmatprep.subr.mxu0 0.0
        %3399 = vmatpush1.msra.mxu0 0.0
        %3400 = vmatprep.subr.mxu0 0.0
        %3401 = vmatpush1.msra.mxu0 0.0
        %3402 = vmatprep.subr.mxu0 0.0
        %3403 = vmatpush1.msra.mxu0 0.0
        %3404 = vmatprep.subr.mxu0 0.0
        %3405 = vmatpush1.msra.mxu0 0.0
        %3406 = vmatprep.subr.mxu0 0.0
        %3407 = vmatpush1.msra.mxu0 0.0
        %3408 = vmatprep.subr.mxu0 0.0
        %3409 = vmatpush1.msra.mxu0 0.0
        %3410 = vmatprep.subr.mxu0 0.0
        %3411 = vmatpush1.msra.mxu0 0.0
        %3412 = vmatprep.subr.mxu0 0.0
        %3413 = vmatpush1.msra.mxu0 0.0
        %3414 = vmatprep.subr.mxu0 0.0
        %3415 = vmatpush1.msra.mxu0 0.0
        %3416 = vmatprep.subr.mxu0 0.0
        %3417 = vmatpush1.msra.mxu0 0.0
        %3418 = vmatprep.subr.mxu0 0.0
        %3419 = vmatpush1.msra.mxu0 0.0
        %3420 = vmatprep.subr.mxu0 0.0
        %3421 = vmatpush1.msra.mxu0 0.0
        %3422 = vmatprep.mubr.f32.mxu0 0.0
        %3423 = vmatmul.mubr.f32.gmra.mrb[0].mxu0 %v2813
        %v3424 = vpop.f32.mrb[0].mxu0
        %v3425 = vadd.f32 %v3200, %v3424
        %v3426 = vpop.f32.mrb[0].mxu0
        %3427 = vmatprep.mubr.f32.mxu0 0.0
        %3428 = vmatmul.mubr.f32.gmra.mrb[0].mxu0 %v2816
        %v3429 = vpop.f32.mrb[0].mxu0
        %v3430 = vadd.f32 %v3205, %v3429
        %v3431 = vpop.f32.mrb[0].mxu0
        %3432 = vmatprep.mubr.f32.mxu0 0.0
        %3433 = vmatmul.mubr.f32.gmra.mrb[0].mxu0 %v2819
        %v3434 = vpop.f32.mrb[0].mxu0
        %v3435 = vadd.f32 %v3210, %v3434
        %v3436 = vpop.f32.mrb[0].mxu0
        %3437 = vmatprep.mubr.f32.mxu0 0.0
        %3438 = vmatmul.mubr.f32.gmra.mrb[0].mxu0 %v2822
        %v3439 = vpop.f32.mrb[0].mxu0
        %v3440 = vadd.f32 %v3215, %v3439
        %v3441 = vpop.f32.mrb[0].mxu0
        %3442 = vmatprep.mubr.f32.mxu0 0.0
        %3443 = vmatmul.mubr.f32.gmra.mrb[0].mxu0 %v2825
        %v3444 = vpop.f32.mrb[0].mxu0
        %v3445 = vadd.f32 %v3220, %v3444
        %v3446 = vpop.f32.mrb[0].mxu0
        %3447 = vmatprep.mubr.f32.mxu0 0.0
        %3448 = vmatmul.mubr.f32.gmra.mrb[0].mxu0 %v2828
        %v3449 = vpop.f32.mrb[0].mxu0
        %v3450 = vadd.f32 %v3225, %v3449
        %v3451 = vpop.f32.mrb[0].mxu0
        %3452 = vmatprep.mubr.f32.mxu0 0.0
        %3453 = vmatmul.mubr.f32.gmra.mrb[0].mxu0 %v2831
        %v3454 = vpop.f32.mrb[0].mxu0
        %v3455 = vadd.f32 %v3230, %v3454
        %v3456 = vpop.f32.mrb[0].mxu0
        %3457 = vmatprep.mubr.f32.mxu0 0.0
        %3458 = vmatmul.mubr.f32.gmra.mrb[0].mxu0 %v2834
        %v3459 = vpop.f32.mrb[0].mxu0
        %v3460 = vadd.f32 %v3235, %v3459
        %v3461 = vpop.f32.mrb[0].mxu0
        %3462 = vmatprep.mubr.f32.mxu0 0.0
        %3463 = vmatmul.mubr.f32.gmra.mrb[0].mxu0 %v2837
        %v3464 = vpop.f32.mrb[0].mxu0
        %v3465 = vadd.f32 %v3240, %v3464
        %v3466 = vpop.f32.mrb[0].mxu0
        %3467 = vmatprep.mubr.f32.mxu0 0.0
        %3468 = vmatmul.mubr.f32.gmra.mrb[0].mxu0 %v2840
        %v3469 = vpop.f32.mrb[0].mxu0
        %v3470 = vadd.f32 %v3245, %v3469
        %v3471 = vpop.f32.mrb[0].mxu0
        %3472 = vmatprep.mubr.f32.mxu0 0.0
        %3473 = vmatmul.mubr.f32.gmra.mrb[0].mxu0 %v2843
        %v3474 = vpop.f32.mrb[0].mxu0
        %v3475 = vadd.f32 %v3250, %v3474
        %v3476 = vpop.f32.mrb[0].mxu0
        %3477 = vmatprep.mubr.f32.mxu0 0.0
        %3478 = vmatmul.mubr.f32.gmra.mrb[0].mxu0 %v2846
        %v3479 = vpop.f32.mrb[0].mxu0
        %v3480 = vadd.f32 %v3255, %v3479
        %v3481 = vpop.f32.mrb[0].mxu0
        %3482 = vmatprep.mubr.f32.mxu0 0.0
        %3483 = vmatmul.mubr.f32.gmra.mrb[0].mxu0 %v2849
        %v3484 = vpop.f32.mrb[0].mxu0
        %v3485 = vadd.f32 %v3260, %v3484
        %v3486 = vpop.f32.mrb[0].mxu0
        %3487 = vmatprep.mubr.f32.mxu0 0.0
        %3488 = vmatmul.mubr.f32.gmra.mrb[0].mxu0 %v2852
        %v3489 = vpop.f32.mrb[0].mxu0
        %v3490 = vadd.f32 %v3265, %v3489
        %v3491 = vpop.f32.mrb[0].mxu0
        %3492 = vmatprep.mubr.f32.mxu0 0.0
        %3493 = vmatmul.mubr.f32.gmra.mrb[0].mxu0 %v2855
        %v3494 = vpop.f32.mrb[0].mxu0
        %v3495 = vadd.f32 %v3270, %v3494
        %v3496 = vpop.f32.mrb[0].mxu0
        %3497 = vmatprep.mubr.f32.mxu0 0.0
        %3498 = vmatmul.mubr.f32.gmra.mrb[0].mxu0 %v2858
        %v3499 = vpop.f32.mrb[0].mxu0
        %v3500 = vadd.f32 %v3275, %v3499
        %v3501 = vpop.f32.mrb[0].mxu0
        %3502 = vmatprep.mubr.f32.mxu0 0.0
        %3503 = vmatmul.mubr.f32.gmra.mrb[0].mxu0 %v2861
        %v3504 = vpop.f32.mrb[0].mxu0
        %v3505 = vadd.f32 %v3280, %v3504
        %v3506 = vpop.f32.mrb[0].mxu0
        %3507 = vmatprep.mubr.f32.mxu0 0.0
        %3508 = vmatmul.mubr.f32.gmra.mrb[0].mxu0 %v2864
        %v3509 = vpop.f32.mrb[0].mxu0
        %v3510 = vadd.f32 %v3285, %v3509
        %v3511 = vpop.f32.mrb[0].mxu0
        %3512 = vmatprep.mubr.f32.mxu0 0.0
        %3513 = vmatmul.mubr.f32.gmra.mrb[0].mxu0 %v2867
        %v3514 = vpop.f32.mrb[0].mxu0
        %v3515 = vadd.f32 %v3290, %v3514
        %v3516 = vpop.f32.mrb[0].mxu0
        %3517 = vmatprep.mubr.f32.mxu0 0.0
        %3518 = vmatmul.mubr.f32.gmra.mrb[0].mxu0 %v2870
        %v3519 = vpop.f32.mrb[0].mxu0
        %v3520 = vadd.f32 %v3295, %v3519
        %v3521 = vpop.f32.mrb[0].mxu0
        %3522 = vmatprep.mubr.f32.mxu0 0.0
        %3523 = vmatmul.mubr.f32.gmra.mrb[0].mxu0 %v2873
        %v3524 = vpop.f32.mrb[0].mxu0
        %v3525 = vadd.f32 %v3300, %v3524
        %v3526 = vpop.f32.mrb[0].mxu0
        %3527 = vmatprep.mubr.f32.mxu0 0.0
        %3528 = vmatmul.mubr.f32.gmra.mrb[0].mxu0 %v2876
        %v3529 = vpop.f32.mrb[0].mxu0
        %v3530 = vadd.f32 %v3305, %v3529
        %v3531 = vpop.f32.mrb[0].mxu0
        %3532 = vmatprep.mubr.f32.mxu0 0.0
        %3533 = vmatmul.mubr.f32.gmra.mrb[0].mxu0 %v2879
        %v3534 = vpop.f32.mrb[0].mxu0
        %v3535 = vadd.f32 %v3310, %v3534
        %v3536 = vpop.f32.mrb[0].mxu0
        %3537 = vmatprep.mubr.f32.mxu0 0.0
        %3538 = vmatmul.mubr.f32.gmra.mrb[0].mxu0 %v2882
        %v3539 = vpop.f32.mrb[0].mxu0
        %v3540 = vadd.f32 %v3315, %v3539
        %v3541 = vpop.f32.mrb[0].mxu0
        %3542 = vmatprep.mubr.f32.mxu0 0.0
        %3543 = vmatmul.mubr.f32.gmra.mrb[0].mxu0 %v2885
        %v3544 = vpop.f32.mrb[0].mxu0
        %v3545 = vadd.f32 %v3320, %v3544
        %v3546 = vpop.f32.mrb[0].mxu0
        %3547 = vmatprep.mubr.f32.mxu0 0.0
        %3548 = vmatmul.mubr.f32.gmra.mrb[0].mxu0 %v2888
        %v3549 = vpop.f32.mrb[0].mxu0
        %v3550 = vadd.f32 %v3325, %v3549
        %v3551 = vpop.f32.mrb[0].mxu0
        %3552 = vmatprep.mubr.f32.mxu0 0.0
        %3553 = vmatmul.mubr.f32.gmra.mrb[0].mxu0 %v2891
        %v3554 = vpop.f32.mrb[0].mxu0
        %v3555 = vadd.f32 %v3330, %v3554
        %v3556 = vpop.f32.mrb[0].mxu0
        %3557 = vmatprep.mubr.f32.mxu0 0.0
        %3558 = vmatmul.mubr.f32.gmra.mrb[0].mxu0 %v2894
        %v3559 = vpop.f32.mrb[0].mxu0
        %v3560 = vadd.f32 %v3335, %v3559
        %v3561 = vpop.f32.mrb[0].mxu0
        %3562 = vmatprep.mubr.f32.mxu0 0.0
        %3563 = vmatmul.mubr.f32.gmra.mrb[0].mxu0 %v2897
        %v3564 = vpop.f32.mrb[0].mxu0
        %v3565 = vadd.f32 %v3340, %v3564
        %v3566 = vpop.f32.mrb[0].mxu0
        %3567 = vmatprep.mubr.f32.mxu0 0.0
        %3568 = vmatmul.mubr.f32.gmra.mrb[0].mxu0 %v2900
        %v3569 = vpop.f32.mrb[0].mxu0
        %v3570 = vadd.f32 %v3345, %v3569
        %v3571 = vpop.f32.mrb[0].mxu0
        %3572 = vmatprep.mubr.f32.mxu0 0.0
        %3573 = vmatmul.mubr.f32.gmra.mrb[0].mxu0 %v2903
        %v3574 = vpop.f32.mrb[0].mxu0
        %v3575 = vadd.f32 %v3350, %v3574
        %v3576 = vpop.f32.mrb[0].mxu0
        %3577 = vmatprep.mubr.f32.mxu0 0.0
        %3578 = vmatmul.mubr.f32.gmra.mrb[0].mxu0 %v2906
        %v3579 = vpop.f32.mrb[0].mxu0
        %v3580 = vadd.f32 %v3355, %v3579
        %v3581 = vpop.f32.mrb[0].mxu0
        %3582 = vdwg.mxu0
        %v3583 = vld [vmem:[%s402] sm:$0xff]
        %v3584 = vld [vmem:[%s402 + $0x8] sm:$0xff]
        %v3585 = vld [vmem:[%s402 + $0x10] sm:$0xff]
        %v3586 = vld [vmem:[%s402 + $0x18] sm:$0xff]
        %v3587 = vld [vmem:[%s402 + $0x20] sm:$0xff]
        %v3588 = vld [vmem:[%s402 + $0x28] sm:$0xff]
        %v3589 = vld [vmem:[%s402 + $0x30] sm:$0xff]
        %v3590 = vld [vmem:[%s402 + $0x38] sm:$0xff]
        %v3591 = vld [vmem:[%s402 + $0x40] sm:$0xff]
        %v3592 = vld [vmem:[%s402 + $0x48] sm:$0xff]
        %v3593 = vld [vmem:[%s402 + $0x50] sm:$0xff]
        %v3594 = vld [vmem:[%s402 + $0x58] sm:$0xff]
        %v3595 = vld [vmem:[%s402 + $0x60] sm:$0xff]
        %v3596 = vld [vmem:[%s402 + $0x68] sm:$0xff]
        %v3597 = vld [vmem:[%s402 + $0x70] sm:$0xff]
        %v3598 = vld [vmem:[%s402 + $0x78] sm:$0xff]
        %v3599 = vld [vmem:[%s402 + $0x80] sm:$0xff]
        %v3600 = vld [vmem:[%s402 + $0x88] sm:$0xff]
        %v3601 = vld [vmem:[%s402 + $0x90] sm:$0xff]
        %v3602 = vld [vmem:[%s402 + $0x98] sm:$0xff]
        %v3603 = vld [vmem:[%s402 + $0xa0] sm:$0xff]
        %v3604 = vld [vmem:[%s402 + $0xa8] sm:$0xff]
        %v3605 = vld [vmem:[%s402 + $0xb0] sm:$0xff]
        %v3606 = vld [vmem:[%s402 + $0xb8] sm:$0xff]
        %v3607 = vld [vmem:[%s402 + $0xc0] sm:$0xff]
        %v3608 = vld [vmem:[%s402 + $0xc8] sm:$0xff]
        %v3609 = vld [vmem:[%s402 + $0xd0] sm:$0xff]
        %v3610 = vld [vmem:[%s402 + $0xd8] sm:$0xff]
        %v3611 = vld [vmem:[%s402 + $0xe0] sm:$0xff]
        %v3612 = vld [vmem:[%s402 + $0xe8] sm:$0xff]
        %v3613 = vld [vmem:[%s402 + $0xf0] sm:$0xff]
        %v3614 = vld [vmem:[%s402 + $0xf8] sm:$0xff]
        %v3615 = vadd.f32 %v3425, %v3583
        %v3616 = vadd.f32 %v3430, %v3584
        %v3617 = vadd.f32 %v3435, %v3585
        %v3618 = vadd.f32 %v3440, %v3586
        %v3619 = vadd.f32 %v3445, %v3587
        %v3620 = vadd.f32 %v3450, %v3588
        %v3621 = vadd.f32 %v3455, %v3589
        %v3622 = vadd.f32 %v3460, %v3590
        %v3623 = vadd.f32 %v3465, %v3591
        %v3624 = vadd.f32 %v3470, %v3592
        %v3625 = vadd.f32 %v3475, %v3593
        %v3626 = vadd.f32 %v3480, %v3594
        %v3627 = vadd.f32 %v3485, %v3595
        %v3628 = vadd.f32 %v3490, %v3596
        %v3629 = vadd.f32 %v3495, %v3597
        %v3630 = vadd.f32 %v3500, %v3598
        %v3631 = vadd.f32 %v3505, %v3599
        %v3632 = vadd.f32 %v3510, %v3600
        %v3633 = vadd.f32 %v3515, %v3601
        %v3634 = vadd.f32 %v3520, %v3602
        %v3635 = vadd.f32 %v3525, %v3603
        %v3636 = vadd.f32 %v3530, %v3604
        %v3637 = vadd.f32 %v3535, %v3605
        %v3638 = vadd.f32 %v3540, %v3606
        %v3639 = vadd.f32 %v3545, %v3607
        %v3640 = vadd.f32 %v3550, %v3608
        %v3641 = vadd.f32 %v3555, %v3609
        %v3642 = vadd.f32 %v3560, %v3610
        %v3643 = vadd.f32 %v3565, %v3611
        %v3644 = vadd.f32 %v3570, %v3612
        %v3645 = vadd.f32 %v3575, %v3613
        %v3646 = vadd.f32 %v3580, %v3614
        %3647 = vst.msk [vmem:[%s382] sm:$0xff] %vm917, %v3615
        %3648 = vst.msk [vmem:[%s382 + $0x8] sm:$0xff] %vm917, %v3616
        %3649 = vst.msk [vmem:[%s382 + $0x10] sm:$0xff] %vm917, %v3617
        %3650 = vst.msk [vmem:[%s382 + $0x18] sm:$0xff] %vm917, %v3618
        %3651 = vst.msk [vmem:[%s382 + $0x20] sm:$0xff] %vm917, %v3619
        %3652 = vst.msk [vmem:[%s382 + $0x28] sm:$0xff] %vm917, %v3620
        %3653 = vst.msk [vmem:[%s382 + $0x30] sm:$0xff] %vm917, %v3621
        %3654 = vst.msk [vmem:[%s382 + $0x38] sm:$0xff] %vm917, %v3622
        %3655 = vst.msk [vmem:[%s382 + $0x40] sm:$0xff] %vm917, %v3623
        %3656 = vst.msk [vmem:[%s382 + $0x48] sm:$0xff] %vm917, %v3624
        %3657 = vst.msk [vmem:[%s382 + $0x50] sm:$0xff] %vm917, %v3625
        %3658 = vst.msk [vmem:[%s382 + $0x58] sm:$0xff] %vm917, %v3626
        %3659 = vst.msk [vmem:[%s382 + $0x60] sm:$0xff] %vm917, %v3627
        %3660 = vst.msk [vmem:[%s382 + $0x68] sm:$0xff] %vm917, %v3628
        %3661 = vst.msk [vmem:[%s382 + $0x70] sm:$0xff] %vm917, %v3629
        %3662 = vst.msk [vmem:[%s382 + $0x78] sm:$0xff] %vm917, %v3630
        %3663 = vst.msk [vmem:[%s382 + $0x80] sm:$0xff] %vm917, %v3631
        %3664 = vst.msk [vmem:[%s382 + $0x88] sm:$0xff] %vm917, %v3632
        %3665 = vst.msk [vmem:[%s382 + $0x90] sm:$0xff] %vm917, %v3633
        %3666 = vst.msk [vmem:[%s382 + $0x98] sm:$0xff] %vm917, %v3634
        %3667 = vst.msk [vmem:[%s382 + $0xa0] sm:$0xff] %vm917, %v3635
        %3668 = vst.msk [vmem:[%s382 + $0xa8] sm:$0xff] %vm917, %v3636
        %3669 = vst.msk [vmem:[%s382 + $0xb0] sm:$0xff] %vm917, %v3637
        %3670 = vst.msk [vmem:[%s382 + $0xb8] sm:$0xff] %vm917, %v3638
        %3671 = vst.msk [vmem:[%s382 + $0xc0] sm:$0xff] %vm917, %v3639
        %3672 = vst.msk [vmem:[%s382 + $0xc8] sm:$0xff] %vm917, %v3640
        %3673 = vst.msk [vmem:[%s382 + $0xd0] sm:$0xff] %vm917, %v3641
        %3674 = vst.msk [vmem:[%s382 + $0xd8] sm:$0xff] %vm917, %v3642
        %3675 = vst.msk [vmem:[%s382 + $0xe0] sm:$0xff] %vm917, %v3643
        %3676 = vst.msk [vmem:[%s382 + $0xe8] sm:$0xff] %vm917, %v3644
        %3677 = vst.msk [vmem:[%s382 + $0xf0] sm:$0xff] %vm917, %v3645
        %3678 = vst.msk [vmem:[%s382 + $0xf8] sm:$0xff] %vm917, %v3646
        %s3679 = sand.u32 %s251, 1
        %s3680 = scalar_lea.sflag [#allocation4], %s3679
        %s3681 = sand.u32 %s251, 1
        %s3682 = smul.addr %s3681, 256
        %s3683 = scalar_lea.vmem [#allocation3], %s3682
        // Predicated region
        $region57: #{_lambda_.3} parent=55 // pred_check
          %p3684 = pneg %p261
        $region58: #{_lambda_.3} parent=55 // pred_check_branch
          %3686 = sbr.rel (%p3684) target = $region60
        $region59: #{_lambda_.3} parent=55 // pred_region
          %s3687 = smul.u32 16, %s28
          %s3689 = ssub.s32 4096, 4096
          %3690 = vsyncadd %s3680, %s3689
          %s3691 = smul.addr %s3687, 2
          %s3692 = smul.addr %s27, 32
          %s3693 = sadd.s32 %s3691, %s3692
          %s3694 = smul.addr %s3693, 128
          %s3695 = scalar_lea.hbm %s9, %s3694
          %s3696 = sshll.u32 %s3683, 4
          %s3697 = int_to_ptr.vmem [resolvable:$true] %s3696
          %3702 = dma.vmem_to_hbm [thread:$0]  %s3697, 4096, %s3695, %s3680, 128, 128, 8
        $region60: #{_lambda_.3} parent=55 // pred_fallthru
          _
      $region56: #{_lambda_.3} parent=5 // pred_fallthru
        _
      %p3703 = scmp.le.s32.totalorder 2, %s18
      // Predicated region
      $region61: #{_lambda_.3} parent=5 // pred_check
        %p3704 = pneg %p3703
      $region62: #{_lambda_.3} parent=5 // pred_check_branch
        %3706 = sbr.rel (%p3704) target = $region64
      $region63: #{_lambda_.3} parent=5 // pred_region
        %s3707 = ssub.s32 %s18, 2
        // Predicated region
        $region65: #{_lambda_.3} parent=63 // pred_check
          %p3708 = pneg %p267
        $region66: #{_lambda_.3} parent=63 // pred_check_branch
          %3710 = sbr.rel (%p3708) target = $region68
        $region67: #{_lambda_.3} parent=63 // pred_region
          %s3711 = sand.u32 %s252, 1
          %s3712 = scalar_lea.sflag [#allocation4], %s3711
          %s3713 = sand.u32 %s252, 1
          %s3714 = smul.addr %s3713, 256
          %s3715 = scalar_lea.vmem [#allocation3], %s3714
          %3716 = dma.done %s3712, 4096
        $region68: #{_lambda_.3} parent=63 // pred_fallthru
          _
      $region64: #{_lambda_.3} parent=5 // pred_fallthru
        _
    $region6: #{_lambda_.3} parent=1 // loop_footer
      %s22 = sadd.s32 1, %s18
    $region7: #{_lambda_.3} parent=1 // loop_footer_branch
      %17 = sbr.rel target = $region3
    $region8: #{_lambda_.3} parent=1 // loop_exit
      _
    %3717 = vsyncpa [#allocation4], 1
    %s3718 = scalar_lea.sflag [#allocation4], 1
    %3719 = vsyncpa %s3718, 1

// kernel: _lambda_.2
$region0: #{_lambda_.2}
  #allocation0 [shape = 'u32[]', space=smem, size = 0x4, offset = 0x4, fixed_abs, tag = 'smem constant byte address 0x4 - core index']
  #allocation1 [shape = 'u32[144,128]{1,0:T(1,128)}', space=vmem, size = 0x12000, scoped, tag = 'internal scratch']
  #allocation2 [shape = 'f32[18,18,64]{2,1,0:T(8,128)}', space=vmem, size = 0x36000, scoped, tag = 'scratch operand']
  %s0 = inlined_call_operand.hbm [shape: f32[2,16,16,64], index: 0, kind: input, shape index: {}]
  %s1 = inlined_call_operand.vmem [shape: f32[2,16,16,32], index: 1, kind: input, shape index: {}]
  %s2 = inlined_call_operand.vmem [shape: f32[32,64], index: 2, kind: input, shape index: {}]
  %s3 = inlined_call_operand.vmem [shape: f32[1,64], index: 3, kind: input, shape index: {}]
  %s4 = inlined_call_operand.vmem [shape: f32[64,128], index: 4, kind: input, shape index: {}]
  %s5 = inlined_call_operand.vmem [shape: f32[1,128], index: 5, kind: input, shape index: {}]
  %s6 = inlined_call_operand.vmem [shape: f32[576,64], index: 6, kind: input, shape index: {}]
  %s7 = inlined_call_operand.vmem [shape: f32[1,64], index: 7, kind: input, shape index: {}]
  %s8 = inlined_call_operand.vmem [shape: f32[2,16,16,64], index: 8, kind: output, shape index: {}]
  %s9 = sld [smem:[#allocation0]]
  $region69: #{_lambda_.2} parent=0
    _
  %s11 = ssub.s32 1, %s9
  %s12 = scalar_select 0, %s11, %s9
  $region1: #{_lambda_.2} parent=0
    #allocation3 [shape = 'u8[262144]{0}', space=vmem, size = 0x40000, scoped, tag = 'input window, operand 0']
    #allocation4 [shape = 's32[2]{0}', space=sflag, size = 0x8, scoped, tag = 'scoped memory for _lambda_.2']
    %13 = vsyncpa [#allocation4], 0
    %s14 = scalar_lea.sflag [#allocation4], 1
    %15 = vsyncpa %s14, 0
    loop: start=0, step=1, limit=4
    $region2: #{_lambda_.2} parent=1 // loop_pre_header
      _
    $region3: #{_lambda_.2} parent=1 // loop_header
      %s17 = sphi 0, %s21
      %p18 = scmp.ge.s32.totalorder %s17, 4
      %s24 = sphi 0, %s36
      %s25 = sphi 0, %s32
      %s26 = sphi 0, %s24
      %s27 = sphi 0, %s25
      %s28 = sphi 0, %s26
      %s29 = sphi 0, %s27
      %s39 = sphi 0, %s41
      %s42 = sphi 0, %s39
      %s43 = sphi 0, %s42
      %s59 = sphi 0, %s43
      %s65 = sphi 0, %s67
      %s68 = sphi 0, %s65
      %s69 = sphi 0, %s68
      %s85 = sphi 0, %s69
      %s89 = sphi 0, %s89
      %s91 = sphi 0, %s89
      %s92 = sphi 0, %s91
      %s106 = sphi 0, %s92
      %s110 = sphi 0, %s110
      %s112 = sphi 0, %s110
      %s113 = sphi 0, %s112
      %s127 = sphi 0, %s113
      %s131 = sphi 0, %s131
      %s133 = sphi 0, %s131
      %s134 = sphi 0, %s133
      %s148 = sphi 0, %s134
      %s152 = sphi 0, %s152
      %s154 = sphi 0, %s152
      %s155 = sphi 0, %s154
      %s169 = sphi 0, %s155
      %s173 = sphi 0, %s173
      %s175 = sphi 0, %s173
      %s176 = sphi 0, %s175
      %s190 = sphi 0, %s176
      %s194 = sphi 0, %s194
      %s196 = sphi 0, %s194
      %s197 = sphi 0, %s196
      %s211 = sphi 0, %s197
      %s219 = sphi 0, %s221
      %s222 = sphi 0, %s219
      %s223 = sphi 0, %s222
      %s239 = sphi 0, %s223
    $region4: #{_lambda_.2} parent=1 // loop_header_branch
      %20 = sbr.rel (%p18) target = $region8
    $region5: #{_lambda_.2} parent=1 // loop_body
      %s22 = ssub.s32 %s17, 1
      %s23 = ssub.s32 %s17, 2
      %s30 = sadd.s32 1, %s25
      %p31 = scmp.ge.s32.totalorder %s30, 1
      %s32 = scalar_select %p31, 0, %s30
      %s33 = sadd.s32 1, %s24
      %s34 = scalar_select %p31, %s33, %s24
      %p35 = scmp.ge.s32.totalorder %s34, 2
      %s36 = scalar_select %p35, 0, %s34
      %s37 = ssub.s32 %s24, %s36
      %p38 = scmp.eq.s32.totalorder %s37, 0
      %s40 = sadd.s32 %s39, 1
      %s41 = scalar_select %p38, %s39, %s40
      %p44 = pneg %p38
      %p45 = scmp.eq.s32.totalorder %s17, 1
      %p46 = por %p44, %p45
      %p47 = scmp.ne.s32.totalorder %s39, %s42
      %p48 = scmp.eq.s32.totalorder %s17, 0
      %p49 = por %p47, %p48
      %p50 = scmp.ne.s32.totalorder %s39, %s42
      %p51 = scmp.eq.s32.totalorder %s22, 1
      %p52 = por %p50, %p51
      %p53 = scmp.ne.s32.totalorder %s42, %s43
      %p54 = scmp.eq.s32.totalorder %s22, 0
      %p55 = por %p53, %p54
      %p56 = scmp.ne.s32.totalorder %s42, %s43
      %p57 = scmp.eq.s32.totalorder %s23, 1
      %p58 = por %p56, %p57
      %p60 = scmp.ne.s32.totalorder %s43, %s59
      %p61 = scmp.eq.s32.totalorder %s23, 0
      %p62 = por %p60, %p61
      %s63 = ssub.s32 %s24, %s36
      %p64 = scmp.eq.s32.totalorder %s63, 0
      %s66 = sadd.s32 %s65, 1
      %s67 = scalar_select %p64, %s65, %s66
      %p70 = pneg %p64
      %p71 = scmp.eq.s32.totalorder %s17, 1
      %p72 = por %p70, %p71
      %p73 = scmp.ne.s32.totalorder %s65, %s68
      %p74 = scmp.eq.s32.totalorder %s17, 0
      %p75 = por %p73, %p74
      %p76 = scmp.ne.s32.totalorder %s65, %s68
      %p77 = scmp.eq.s32.totalorder %s22, 1
      %p78 = por %p76, %p77
      %p79 = scmp.ne.s32.totalorder %s68, %s69
      %p80 = scmp.eq.s32.totalorder %s22, 0
      %p81 = por %p79, %p80
      %p82 = scmp.ne.s32.totalorder %s68, %s69
      %p83 = scmp.eq.s32.totalorder %s23, 1
      %p84 = por %p82, %p83
      %p86 = scmp.ne.s32.totalorder %s69, %s85
      %p87 = scmp.eq.s32.totalorder %s23, 0
      %p88 = por %p86, %p87
      %s90 = sadd.s32 %s89, 1
      %p93 = scmp.eq.s32.totalorder %s17, 1
      %p94 = scmp.ne.s32.totalorder %s89, %s91
      %p95 = scmp.eq.s32.totalorder %s17, 0
      %p96 = por %p94, %p95
      %p97 = scmp.ne.s32.totalorder %s89, %s91
      %p98 = scmp.eq.s32.totalorder %s22, 1
      %p99 = por %p97, %p98
      %p100 = scmp.ne.s32.totalorder %s91, %s92
      %p101 = scmp.eq.s32.totalorder %s22, 0
      %p102 = por %p100, %p101
      %p103 = scmp.ne.s32.totalorder %s91, %s92
      %p104 = scmp.eq.s32.totalorder %s23, 1
      %p105 = por %p103, %p104
      %p107 = scmp.ne.s32.totalorder %s92, %s106
      %p108 = scmp.eq.s32.totalorder %s23, 0
      %p109 = por %p107, %p108
      %s111 = sadd.s32 %s110, 1
      %p114 = scmp.eq.s32.totalorder %s17, 1
      %p115 = scmp.ne.s32.totalorder %s110, %s112
      %p116 = scmp.eq.s32.totalorder %s17, 0
      %p117 = por %p115, %p116
      %p118 = scmp.ne.s32.totalorder %s110, %s112
      %p119 = scmp.eq.s32.totalorder %s22, 1
      %p120 = por %p118, %p119
      %p121 = scmp.ne.s32.totalorder %s112, %s113
      %p122 = scmp.eq.s32.totalorder %s22, 0
      %p123 = por %p121, %p122
      %p124 = scmp.ne.s32.totalorder %s112, %s113
      %p125 = scmp.eq.s32.totalorder %s23, 1
      %p126 = por %p124, %p125
      %p128 = scmp.ne.s32.totalorder %s113, %s127
      %p129 = scmp.eq.s32.totalorder %s23, 0
      %p130 = por %p128, %p129
      %s132 = sadd.s32 %s131, 1
      %p135 = scmp.eq.s32.totalorder %s17, 1
      %p136 = scmp.ne.s32.totalorder %s131, %s133
      %p137 = scmp.eq.s32.totalorder %s17, 0
      %p138 = por %p136, %p137
      %p139 = scmp.ne.s32.totalorder %s131, %s133
      %p140 = scmp.eq.s32.totalorder %s22, 1
      %p141 = por %p139, %p140
      %p142 = scmp.ne.s32.totalorder %s133, %s134
      %p143 = scmp.eq.s32.totalorder %s22, 0
      %p144 = por %p142, %p143
      %p145 = scmp.ne.s32.totalorder %s133, %s134
      %p146 = scmp.eq.s32.totalorder %s23, 1
      %p147 = por %p145, %p146
      %p149 = scmp.ne.s32.totalorder %s134, %s148
      %p150 = scmp.eq.s32.totalorder %s23, 0
      %p151 = por %p149, %p150
      %s153 = sadd.s32 %s152, 1
      %p156 = scmp.eq.s32.totalorder %s17, 1
      %p157 = scmp.ne.s32.totalorder %s152, %s154
      %p158 = scmp.eq.s32.totalorder %s17, 0
      %p159 = por %p157, %p158
      %p160 = scmp.ne.s32.totalorder %s152, %s154
      %p161 = scmp.eq.s32.totalorder %s22, 1
      %p162 = por %p160, %p161
      %p163 = scmp.ne.s32.totalorder %s154, %s155
      %p164 = scmp.eq.s32.totalorder %s22, 0
      %p165 = por %p163, %p164
      %p166 = scmp.ne.s32.totalorder %s154, %s155
      %p167 = scmp.eq.s32.totalorder %s23, 1
      %p168 = por %p166, %p167
      %p170 = scmp.ne.s32.totalorder %s155, %s169
      %p171 = scmp.eq.s32.totalorder %s23, 0
      %p172 = por %p170, %p171
      %s174 = sadd.s32 %s173, 1
      %p177 = scmp.eq.s32.totalorder %s17, 1
      %p178 = scmp.ne.s32.totalorder %s173, %s175
      %p179 = scmp.eq.s32.totalorder %s17, 0
      %p180 = por %p178, %p179
      %p181 = scmp.ne.s32.totalorder %s173, %s175
      %p182 = scmp.eq.s32.totalorder %s22, 1
      %p183 = por %p181, %p182
      %p184 = scmp.ne.s32.totalorder %s175, %s176
      %p185 = scmp.eq.s32.totalorder %s22, 0
      %p186 = por %p184, %p185
      %p187 = scmp.ne.s32.totalorder %s175, %s176
      %p188 = scmp.eq.s32.totalorder %s23, 1
      %p189 = por %p187, %p188
      %p191 = scmp.ne.s32.totalorder %s176, %s190
      %p192 = scmp.eq.s32.totalorder %s23, 0
      %p193 = por %p191, %p192
      %s195 = sadd.s32 %s194, 1
      %p198 = scmp.eq.s32.totalorder %s17, 1
      %p199 = scmp.ne.s32.totalorder %s194, %s196
      %p200 = scmp.eq.s32.totalorder %s17, 0
      %p201 = por %p199, %p200
      %p202 = scmp.ne.s32.totalorder %s194, %s196
      %p203 = scmp.eq.s32.totalorder %s22, 1
      %p204 = por %p202, %p203
      %p205 = scmp.ne.s32.totalorder %s196, %s197
      %p206 = scmp.eq.s32.totalorder %s22, 0
      %p207 = por %p205, %p206
      %p208 = scmp.ne.s32.totalorder %s196, %s197
      %p209 = scmp.eq.s32.totalorder %s23, 1
      %p210 = por %p208, %p209
      %p212 = scmp.ne.s32.totalorder %s197, %s211
      %p213 = scmp.eq.s32.totalorder %s23, 0
      %p214 = por %p212, %p213
      %s215 = ssub.s32 %s24, %s36
      %s216 = ssub.s32 %s25, %s32
      %s217 = sor.u32 %s215, %s216
      %p218 = scmp.eq.s32.totalorder %s217, 0
      %s220 = sadd.s32 %s219, 1
      %s221 = scalar_select %p218, %s219, %s220
      %p224 = pneg %p218
      %p225 = scmp.eq.s32.totalorder %s17, 1
      %p226 = por %p224, %p225
      %p227 = scmp.ne.s32.totalorder %s219, %s222
      %p228 = scmp.eq.s32.totalorder %s17, 0
      %p229 = por %p227, %p228
      %p230 = scmp.ne.s32.totalorder %s219, %s222
      %p231 = scmp.eq.s32.totalorder %s22, 1
      %p232 = por %p230, %p231
      %p233 = scmp.ne.s32.totalorder %s222, %s223
      %p234 = scmp.eq.s32.totalorder %s22, 0
      %p235 = por %p233, %p234
      %p236 = scmp.ne.s32.totalorder %s222, %s223
      %p237 = scmp.eq.s32.totalorder %s23, 1
      %p238 = por %p236, %p237
      %p240 = scmp.ne.s32.totalorder %s223, %s239
      %p241 = scmp.eq.s32.totalorder %s23, 0
      %p242 = por %p240, %p241
      %p243 = scmp.le.s32.totalorder 1, %s17
      %p244 = scmp.lt.s32.totalorder %s17, 3
      %p245 = pnand %p243, %p244
      %p246 = pneg %p245
      // Predicated region
      $region9: #{_lambda_.2} parent=5 // pred_check
        _
      $region10: #{_lambda_.2} parent=5 // pred_check_branch
        %248 = sbr.rel (%p245) target = $region12
      $region11: #{_lambda_.2} parent=5 // pred_region
        %s249 = ssub.s32 %s17, 1
        // Predicated region
        $region13: #{_lambda_.2} parent=11 // pred_check
          %p250 = pneg %p102
        $region14: #{_lambda_.2} parent=11 // pred_check_branch
          %252 = sbr.rel (%p250) target = $region16
        $region15: #{_lambda_.2} parent=11 // pred_region
          _
        $region16: #{_lambda_.2} parent=11 // pred_fallthru
          _
        // Predicated region
        $region17: #{_lambda_.2} parent=11 // pred_check
          %p253 = pneg %p123
        $region18: #{_lambda_.2} parent=11 // pred_check_branch
          %255 = sbr.rel (%p253) target = $region20
        $region19: #{_lambda_.2} parent=11 // pred_region
          _
        $region20: #{_lambda_.2} parent=11 // pred_fallthru
          _
        // Predicated region
        $region21: #{_lambda_.2} parent=11 // pred_check
          %p256 = pneg %p144
        $region22: #{_lambda_.2} parent=11 // pred_check_branch
          %258 = sbr.rel (%p256) target = $region24
        $region23: #{_lambda_.2} parent=11 // pred_region
          _
        $region24: #{_lambda_.2} parent=11 // pred_fallthru
          _
        // Predicated region
        $region25: #{_lambda_.2} parent=11 // pred_check
          %p259 = pneg %p165
        $region26: #{_lambda_.2} parent=11 // pred_check_branch
          %261 = sbr.rel (%p259) target = $region28
        $region27: #{_lambda_.2} parent=11 // pred_region
          _
        $region28: #{_lambda_.2} parent=11 // pred_fallthru
          _
        // Predicated region
        $region29: #{_lambda_.2} parent=11 // pred_check
          %p262 = pneg %p186
        $region30: #{_lambda_.2} parent=11 // pred_check_branch
          %264 = sbr.rel (%p262) target = $region32
        $region31: #{_lambda_.2} parent=11 // pred_region
          _
        $region32: #{_lambda_.2} parent=11 // pred_fallthru
          _
        // Predicated region
        $region33: #{_lambda_.2} parent=11 // pred_check
          %p265 = pneg %p207
        $region34: #{_lambda_.2} parent=11 // pred_check_branch
          %267 = sbr.rel (%p265) target = $region36
        $region35: #{_lambda_.2} parent=11 // pred_region
          _
        $region36: #{_lambda_.2} parent=11 // pred_fallthru
          _
      $region12: #{_lambda_.2} parent=5 // pred_fallthru
        _
      %p268 = scmp.lt.s32.totalorder %s17, 2
      // Predicated region
      $region37: #{_lambda_.2} parent=5 // pred_check
        %p269 = pneg %p268
      $region38: #{_lambda_.2} parent=5 // pred_check_branch
        %271 = sbr.rel (%p269) target = $region40
      $region39: #{_lambda_.2} parent=5 // pred_region
        // Predicated region
        $region41: #{_lambda_.2} parent=39 // pred_check
          %p272 = pneg %p49
        $region42: #{_lambda_.2} parent=39 // pred_check_branch
          %274 = sbr.rel (%p272) target = $region44
        $region43: #{_lambda_.2} parent=39 // pred_region
          %s275 = sand.u32 %s39, 1
          %s276 = scalar_lea.sflag [#allocation4], %s275
          %s277 = sand.u32 %s39, 1
          %s278 = smul.addr %s277, 256
          %s279 = scalar_lea.vmem [#allocation3], %s278
          %s281 = ssub.s32 4096, 4096
          %282 = vsyncadd %s276, %s281
          %s283 = smul.addr %s24, 32
          %s284 = smul.addr %s283, 128
          %s285 = scalar_lea.hbm %s0, %s284
          %s286 = sshll.u32 %s279, 4
          %s287 = int_to_ptr.vmem [resolvable:$true] %s286
          %292 = dma.hbm_to_vmem [thread:$0]  %s285, 4096, %s287, %s276, 128, 128, 8
        $region44: #{_lambda_.2} parent=39 // pred_fallthru
          _
        // Predicated region
        $region45: #{_lambda_.2} parent=39 // pred_check
          %p293 = pneg %p75
        $region46: #{_lambda_.2} parent=39 // pred_check_branch
          %295 = sbr.rel (%p293) target = $region48
        $region47: #{_lambda_.2} parent=39 // pred_region
          %p296 = scmp.lt.s32.totalorder %s24, 1
          %s297 = scalar_select %p296, %s24, 1
          %s298 = smul.addr %s297, 32
          %s299 = smul.addr %s298, 8
          %s300 = scalar_lea.vmem %s1, %s299
        $region48: #{_lambda_.2} parent=39 // pred_fallthru
          _
      $region40: #{_lambda_.2} parent=5 // pred_fallthru
        _
      %p301 = scmp.le.s32.totalorder 1, %s17
      %p302 = scmp.lt.s32.totalorder %s17, 3
      %p303 = pnand %p301, %p302
      %p304 = pneg %p303
      // Predicated region
      $region49: #{_lambda_.2} parent=5 // pred_check
        _
      $region50: #{_lambda_.2} parent=5 // pred_check_branch
        %306 = sbr.rel (%p303) target = $region52
      $region51: #{_lambda_.2} parent=5 // pred_region
        %s307 = ssub.s32 %s17, 1
        %s308 = sand.u32 %s42, 1
        %s309 = scalar_lea.sflag [#allocation4], %s308
        %s310 = sand.u32 %s42, 1
        %s311 = smul.addr %s310, 256
        %s312 = scalar_lea.vmem [#allocation3], %s311
        // Predicated region
        $region53: #{_lambda_.2} parent=51 // pred_check
          %p313 = pneg %p55
        $region54: #{_lambda_.2} parent=51 // pred_check_branch
          %315 = sbr.rel (%p313) target = $region56
        $region55: #{_lambda_.2} parent=51 // pred_region
          %316 = dma.done %s309, 4096
        $region56: #{_lambda_.2} parent=51 // pred_fallthru
          _
        %s317 = sand.u32 %s42, 1
        %s318 = scalar_lea.sflag [#allocation4], %s317
        %s319 = sand.u32 %s42, 1
        %s320 = smul.addr %s319, 256
        %s321 = scalar_lea.vmem [#allocation3], %s320
        %p322 = pneg %p55
        %p323 = pneg %p52
        %p324 = scmp.lt.s32.totalorder %s26, 1
        %s325 = scalar_select %p324, %s26, 1
        %s326 = smul.addr %s325, 32
        %s327 = smul.addr %s326, 8
        %s328 = scalar_lea.vmem %s1, %s327
        %p329 = pneg %p81
        %p330 = pneg %p78
        %p331 = pneg %p102
        %p332 = pneg %p99
        %p333 = pneg %p123
        %p334 = pneg %p120
        %p335 = pneg %p144
        %p336 = pneg %p141
        %p337 = pneg %p165
        %p338 = pneg %p162
        %p339 = pneg %p186
        %p340 = pneg %p183
        %p341 = pneg %p207
        %p342 = pneg %p204
        %p343 = pneg %p235
        %p344 = pneg %p232
        %s345 = smul.u32 16, %s27
        %p346 = scmp.lt.s32.totalorder %s26, 1
        %s347 = scalar_select %p346, %s26, 1
        %p348 = scmp.lt.s32.totalorder %s345, 15
        %s349 = scalar_select %p348, %s345, 15
        %s350 = smul.addr %s349, 2
        %s351 = smul.addr %s347, 32
        %s352 = sadd.s32 %s350, %s351
        %s353 = smul.addr %s352, 8
        %s354 = scalar_lea.vmem %s8, %s353
        %p355 = scmp.lt.s32.totalorder %s26, 1
        %s356 = scalar_select %p355, %s26, 1
        %s357 = smul.addr %s356, 32
        %s358 = smul.addr %s357, 8
        %s359 = scalar_lea.vmem %s1, %s358
        %s360 = smul.u32 16, %s27
        %p361 = scmp.lt.s32.totalorder %s26, 1
        %s362 = scalar_select %p361, %s26, 1
        %p363 = scmp.lt.s32.totalorder %s360, 15
        %s364 = scalar_select %p363, %s360, 15
        %s365 = smul.addr %s364, 2
        %s366 = smul.addr %s362, 32
        %s367 = sadd.s32 %s365, %s366
        %s368 = smul.addr %s367, 8
        %s369 = scalar_lea.vmem %s8, %s368
        %s370 = smul.u32 16, %s27
        %s371 = smul.u32 %s27, 16
        %s372 = smul.u32 %s371, 16
        %s373 = scalar_lea.vmem %s312, %s372 [#allocation3]
        %v374 = vld [vmem:[%s373] sm:$0xff]
        %v375 = vld [vmem:[%s373 + $0x8] sm:$0xff]
        %v376 = vld [vmem:[%s373 + $0x10] sm:$0xff]
        %v377 = vld [vmem:[%s373 + $0x18] sm:$0xff]
        %v378 = vld [vmem:[%s373 + $0x20] sm:$0xff]
        %v379 = vld [vmem:[%s373 + $0x28] sm:$0xff]
        %v380 = vld [vmem:[%s373 + $0x30] sm:$0xff]
        %v381 = vld [vmem:[%s373 + $0x38] sm:$0xff]
        %v382 = vld [vmem:[%s373 + $0x40] sm:$0xff]
        %v383 = vld [vmem:[%s373 + $0x48] sm:$0xff]
        %v384 = vld [vmem:[%s373 + $0x50] sm:$0xff]
        %v385 = vld [vmem:[%s373 + $0x58] sm:$0xff]
        %v386 = vld [vmem:[%s373 + $0x60] sm:$0xff]
        %v387 = vld [vmem:[%s373 + $0x68] sm:$0xff]
        %v388 = vld [vmem:[%s373 + $0x70] sm:$0xff]
        %v389 = vld [vmem:[%s373 + $0x78] sm:$0xff]
        %v390 = vld [vmem:[%s373 + $0x80] sm:$0xff]
        %v391 = vld [vmem:[%s373 + $0x88] sm:$0xff]
        %v392 = vld [vmem:[%s373 + $0x90] sm:$0xff]
        %v393 = vld [vmem:[%s373 + $0x98] sm:$0xff]
        %v394 = vld [vmem:[%s373 + $0xa0] sm:$0xff]
        %v395 = vld [vmem:[%s373 + $0xa8] sm:$0xff]
        %v396 = vld [vmem:[%s373 + $0xb0] sm:$0xff]
        %v397 = vld [vmem:[%s373 + $0xb8] sm:$0xff]
        %v398 = vld [vmem:[%s373 + $0xc0] sm:$0xff]
        %v399 = vld [vmem:[%s373 + $0xc8] sm:$0xff]
        %v400 = vld [vmem:[%s373 + $0xd0] sm:$0xff]
        %v401 = vld [vmem:[%s373 + $0xd8] sm:$0xff]
        %v402 = vld [vmem:[%s373 + $0xe0] sm:$0xff]
        %v403 = vld [vmem:[%s373 + $0xe8] sm:$0xff]
        %v404 = vld [vmem:[%s373 + $0xf0] sm:$0xff]
        %v405 = vld [vmem:[%s373 + $0xf8] sm:$0xff]
        %s406 = scalar_lea.vmem %s359, %s372
        %v407 = vld [vmem:[%s406] sm:$0xff]
        %v408 = vld [vmem:[%s406 + $0x8] sm:$0xff]
        %v409 = vld [vmem:[%s406 + $0x10] sm:$0xff]
        %v410 = vld [vmem:[%s406 + $0x18] sm:$0xff]
        %v411 = vld [vmem:[%s406 + $0x20] sm:$0xff]
        %v412 = vld [vmem:[%s406 + $0x28] sm:$0xff]
        %v413 = vld [vmem:[%s406 + $0x30] sm:$0xff]
        %v414 = vld [vmem:[%s406 + $0x38] sm:$0xff]
        %v415 = vld [vmem:[%s406 + $0x40] sm:$0xff]
        %v416 = vld [vmem:[%s406 + $0x48] sm:$0xff]
        %v417 = vld [vmem:[%s406 + $0x50] sm:$0xff]
        %v418 = vld [vmem:[%s406 + $0x58] sm:$0xff]
        %v419 = vld [vmem:[%s406 + $0x60] sm:$0xff]
        %v420 = vld [vmem:[%s406 + $0x68] sm:$0xff]
        %v421 = vld [vmem:[%s406 + $0x70] sm:$0xff]
        %v422 = vld [vmem:[%s406 + $0x78] sm:$0xff]
        %v423 = vld [vmem:[%s406 + $0x80] sm:$0xff]
        %v424 = vld [vmem:[%s406 + $0x88] sm:$0xff]
        %v425 = vld [vmem:[%s406 + $0x90] sm:$0xff]
        %v426 = vld [vmem:[%s406 + $0x98] sm:$0xff]
        %v427 = vld [vmem:[%s406 + $0xa0] sm:$0xff]
        %v428 = vld [vmem:[%s406 + $0xa8] sm:$0xff]
        %v429 = vld [vmem:[%s406 + $0xb0] sm:$0xff]
        %v430 = vld [vmem:[%s406 + $0xb8] sm:$0xff]
        %v431 = vld [vmem:[%s406 + $0xc0] sm:$0xff]
        %v432 = vld [vmem:[%s406 + $0xc8] sm:$0xff]
        %v433 = vld [vmem:[%s406 + $0xd0] sm:$0xff]
        %v434 = vld [vmem:[%s406 + $0xd8] sm:$0xff]
        %v435 = vld [vmem:[%s406 + $0xe0] sm:$0xff]
        %v436 = vld [vmem:[%s406 + $0xe8] sm:$0xff]
        %v437 = vld [vmem:[%s406 + $0xf0] sm:$0xff]
        %v438 = vld [vmem:[%s406 + $0xf8] sm:$0xff]
        %v439 = vld [vmem:[%s2] sm:$0xff]
        %v440 = vld [vmem:[%s2 + $0x8] sm:$0xff]
        %v441 = vld [vmem:[%s2 + $0x10] sm:$0xff]
        %v442 = vld [vmem:[%s2 + $0x18] sm:$0xff]
        %v443 = vld [vmem:[%s3] sm:$0x1]
        %v445 = vlaneseq
        %v446 = vshrl.u32 %v445, 7
        %v447 = vsub.s32 0, %v446
        %v448 = vrot.slane %v443, %v447
        %vm450 = vcmask 261120
        %v452 = vsel %vm450, %v407, 0
        %v455 = vsel %vm450, %v408, 0
        %v458 = vsel %vm450, %v409, 0
        %v461 = vsel %vm450, %v410, 0
        %v464 = vsel %vm450, %v411, 0
        %v467 = vsel %vm450, %v412, 0
        %v470 = vsel %vm450, %v413, 0
        %v473 = vsel %vm450, %v414, 0
        %v476 = vsel %vm450, %v415, 0
        %v479 = vsel %vm450, %v416, 0
        %v482 = vsel %vm450, %v417, 0
        %v485 = vsel %vm450, %v418, 0
        %v488 = vsel %vm450, %v419, 0
        %v491 = vsel %vm450, %v420, 0
        %v494 = vsel %vm450, %v421, 0
        %v497 = vsel %vm450, %v422, 0
        %v500 = vsel %vm450, %v423, 0
        %v503 = vsel %vm450, %v424, 0
        %v506 = vsel %vm450, %v425, 0
        %v509 = vsel %vm450, %v426, 0
        %v512 = vsel %vm450, %v427, 0
        %v515 = vsel %vm450, %v428, 0
        %v518 = vsel %vm450, %v429, 0
        %v521 = vsel %vm450, %v430, 0
        %v524 = vsel %vm450, %v431, 0
        %v527 = vsel %vm450, %v432, 0
        %v530 = vsel %vm450, %v433, 0
        %v533 = vsel %vm450, %v434, 0
        %v536 = vsel %vm450, %v435, 0
        %v539 = vsel %vm450, %v436, 0
        %v542 = vsel %vm450, %v437, 0
        %v545 = vsel %vm450, %v438, 0
        %547 = vmatprep.subr.mxu0 0.0
        %548 = vmatpush1.msra.mxu0 %v439
        %549 = vmatprep.subr.mxu0 0.0
        %550 = vmatpush1.msra.mxu0 %v440
        %551 = vmatprep.subr.mxu0 0.0
        %552 = vmatpush1.msra.mxu0 %v441
        %553 = vmatprep.subr.mxu0 0.0
        %554 = vmatpush1.msra.mxu0 %v442
        %555 = vmatprep.subr.mxu0 0.0
        %556 = vmatpush1.msra.mxu0 0.0
        %557 = vmatprep.subr.mxu0 0.0
        %558 = vmatpush1.msra.mxu0 0.0
        %559 = vmatprep.subr.mxu0 0.0
        %560 = vmatpush1.msra.mxu0 0.0
        %561 = vmatprep.subr.mxu0 0.0
        %562 = vmatpush1.msra.mxu0 0.0
        %563 = vmatprep.subr.mxu0 0.0
        %564 = vmatpush1.msra.mxu0 0.0
        %565 = vmatprep.subr.mxu0 0.0
        %566 = vmatpush1.msra.mxu0 0.0
        %567 = vmatprep.subr.mxu0 0.0
        %568 = vmatpush1.msra.mxu0 0.0
        %569 = vmatprep.subr.mxu0 0.0
        %570 = vmatpush1.msra.mxu0 0.0
        %571 = vmatprep.subr.mxu0 0.0
        %572 = vmatpush1.msra.mxu0 0.0
        %573 = vmatprep.subr.mxu0 0.0
        %574 = vmatpush1.msra.mxu0 0.0
        %575 = vmatprep.subr.mxu0 0.0
        %576 = vmatpush1.msra.mxu0 0.0
        %577 = vmatprep.subr.mxu0 0.0
        %578 = vmatpush1.msra.mxu0 0.0
        %579 = vmatprep.subr.mxu0 0.0
        %580 = vmatpush1.msra.mxu0 0.0
        %581 = vmatprep.subr.mxu0 0.0
        %582 = vmatpush1.msra.mxu0 0.0
        %583 = vmatprep.subr.mxu0 0.0
        %584 = vmatpush1.msra.mxu0 0.0
        %585 = vmatprep.subr.mxu0 0.0
        %586 = vmatpush1.msra.mxu0 0.0
        %587 = vmatprep.subr.mxu0 0.0
        %588 = vmatpush1.msra.mxu0 0.0
        %589 = vmatprep.subr.mxu0 0.0
        %590 = vmatpush1.msra.mxu0 0.0
        %591 = vmatprep.subr.mxu0 0.0
        %592 = vmatpush1.msra.mxu0 0.0
        %593 = vmatprep.subr.mxu0 0.0
        %594 = vmatpush1.msra.mxu0 0.0
        %595 = vmatprep.subr.mxu0 0.0
        %596 = vmatpush1.msra.mxu0 0.0
        %597 = vmatprep.subr.mxu0 0.0
        %598 = vmatpush1.msra.mxu0 0.0
        %599 = vmatprep.subr.mxu0 0.0
        %600 = vmatpush1.msra.mxu0 0.0
        %601 = vmatprep.subr.mxu0 0.0
        %602 = vmatpush1.msra.mxu0 0.0
        %603 = vmatprep.subr.mxu0 0.0
        %604 = vmatpush1.msra.mxu0 0.0
        %605 = vmatprep.subr.mxu0 0.0
        %606 = vmatpush1.msra.mxu0 0.0
        %607 = vmatprep.subr.mxu0 0.0
        %608 = vmatpush1.msra.mxu0 0.0
        %609 = vmatprep.subr.mxu0 0.0
        %610 = vmatpush1.msra.mxu0 0.0
        %611 = vmatprep.mubr.f32.mxu0 0.0
        %612 = vmatmul.mubr.f32.gmra.mrb[0].mxu0 %v452
        %v613 = vpop.f32.mrb[0].mxu0
        %v614 = vadd.f32 %v448, %v613
        %v615 = vpop.f32.mrb[0].mxu0
        %616 = vmatprep.mubr.f32.mxu0 0.0
        %617 = vmatmul.mubr.f32.gmra.mrb[0].mxu0 %v455
        %v618 = vpop.f32.mrb[0].mxu0
        %v619 = vadd.f32 %v448, %v618
        %v620 = vpop.f32.mrb[0].mxu0
        %621 = vmatprep.mubr.f32.mxu0 0.0
        %622 = vmatmul.mubr.f32.gmra.mrb[0].mxu0 %v458
        %v623 = vpop.f32.mrb[0].mxu0
        %v624 = vadd.f32 %v448, %v623
        %v625 = vpop.f32.mrb[0].mxu0
        %626 = vmatprep.mubr.f32.mxu0 0.0
        %627 = vmatmul.mubr.f32.gmra.mrb[0].mxu0 %v461
        %v628 = vpop.f32.mrb[0].mxu0
        %v629 = vadd.f32 %v448, %v628
        %v630 = vpop.f32.mrb[0].mxu0
        %631 = vmatprep.mubr.f32.mxu0 0.0
        %632 = vmatmul.mubr.f32.gmra.mrb[0].mxu0 %v464
        %v633 = vpop.f32.mrb[0].mxu0
        %v634 = vadd.f32 %v448, %v633
        %v635 = vpop.f32.mrb[0].mxu0
        %636 = vmatprep.mubr.f32.mxu0 0.0
        %637 = vmatmul.mubr.f32.gmra.mrb[0].mxu0 %v467
        %v638 = vpop.f32.mrb[0].mxu0
        %v639 = vadd.f32 %v448, %v638
        %v640 = vpop.f32.mrb[0].mxu0
        %641 = vmatprep.mubr.f32.mxu0 0.0
        %642 = vmatmul.mubr.f32.gmra.mrb[0].mxu0 %v470
        %v643 = vpop.f32.mrb[0].mxu0
        %v644 = vadd.f32 %v448, %v643
        %v645 = vpop.f32.mrb[0].mxu0
        %646 = vmatprep.mubr.f32.mxu0 0.0
        %647 = vmatmul.mubr.f32.gmra.mrb[0].mxu0 %v473
        %v648 = vpop.f32.mrb[0].mxu0
        %v649 = vadd.f32 %v448, %v648
        %v650 = vpop.f32.mrb[0].mxu0
        %651 = vmatprep.mubr.f32.mxu0 0.0
        %652 = vmatmul.mubr.f32.gmra.mrb[0].mxu0 %v476
        %v653 = vpop.f32.mrb[0].mxu0
        %v654 = vadd.f32 %v448, %v653
        %v655 = vpop.f32.mrb[0].mxu0
        %656 = vmatprep.mubr.f32.mxu0 0.0
        %657 = vmatmul.mubr.f32.gmra.mrb[0].mxu0 %v479
        %v658 = vpop.f32.mrb[0].mxu0
        %v659 = vadd.f32 %v448, %v658
        %v660 = vpop.f32.mrb[0].mxu0
        %661 = vmatprep.mubr.f32.mxu0 0.0
        %662 = vmatmul.mubr.f32.gmra.mrb[0].mxu0 %v482
        %v663 = vpop.f32.mrb[0].mxu0
        %v664 = vadd.f32 %v448, %v663
        %v665 = vpop.f32.mrb[0].mxu0
        %666 = vmatprep.mubr.f32.mxu0 0.0
        %667 = vmatmul.mubr.f32.gmra.mrb[0].mxu0 %v485
        %v668 = vpop.f32.mrb[0].mxu0
        %v669 = vadd.f32 %v448, %v668
        %v670 = vpop.f32.mrb[0].mxu0
        %671 = vmatprep.mubr.f32.mxu0 0.0
        %672 = vmatmul.mubr.f32.gmra.mrb[0].mxu0 %v488
        %v673 = vpop.f32.mrb[0].mxu0
        %v674 = vadd.f32 %v448, %v673
        %v675 = vpop.f32.mrb[0].mxu0
        %676 = vmatprep.mubr.f32.mxu0 0.0
        %677 = vmatmul.mubr.f32.gmra.mrb[0].mxu0 %v491
        %v678 = vpop.f32.mrb[0].mxu0
        %v679 = vadd.f32 %v448, %v678
        %v680 = vpop.f32.mrb[0].mxu0
        %681 = vmatprep.mubr.f32.mxu0 0.0
        %682 = vmatmul.mubr.f32.gmra.mrb[0].mxu0 %v494
        %v683 = vpop.f32.mrb[0].mxu0
        %v684 = vadd.f32 %v448, %v683
        %v685 = vpop.f32.mrb[0].mxu0
        %686 = vmatprep.mubr.f32.mxu0 0.0
        %687 = vmatmul.mubr.f32.gmra.mrb[0].mxu0 %v497
        %v688 = vpop.f32.mrb[0].mxu0
        %v689 = vadd.f32 %v448, %v688
        %v690 = vpop.f32.mrb[0].mxu0
        %691 = vmatprep.mubr.f32.mxu0 0.0
        %692 = vmatmul.mubr.f32.gmra.mrb[0].mxu0 %v500
        %v693 = vpop.f32.mrb[0].mxu0
        %v694 = vadd.f32 %v448, %v693
        %v695 = vpop.f32.mrb[0].mxu0
        %696 = vmatprep.mubr.f32.mxu0 0.0
        %697 = vmatmul.mubr.f32.gmra.mrb[0].mxu0 %v503
        %v698 = vpop.f32.mrb[0].mxu0
        %v699 = vadd.f32 %v448, %v698
        %v700 = vpop.f32.mrb[0].mxu0
        %701 = vmatprep.mubr.f32.mxu0 0.0
        %702 = vmatmul.mubr.f32.gmra.mrb[0].mxu0 %v506
        %v703 = vpop.f32.mrb[0].mxu0
        %v704 = vadd.f32 %v448, %v703
        %v705 = vpop.f32.mrb[0].mxu0
        %706 = vmatprep.mubr.f32.mxu0 0.0
        %707 = vmatmul.mubr.f32.gmra.mrb[0].mxu0 %v509
        %v708 = vpop.f32.mrb[0].mxu0
        %v709 = vadd.f32 %v448, %v708
        %v710 = vpop.f32.mrb[0].mxu0
        %711 = vmatprep.mubr.f32.mxu0 0.0
        %712 = vmatmul.mubr.f32.gmra.mrb[0].mxu0 %v512
        %v713 = vpop.f32.mrb[0].mxu0
        %v714 = vadd.f32 %v448, %v713
        %v715 = vpop.f32.mrb[0].mxu0
        %716 = vmatprep.mubr.f32.mxu0 0.0
        %717 = vmatmul.mubr.f32.gmra.mrb[0].mxu0 %v515
        %v718 = vpop.f32.mrb[0].mxu0
        %v719 = vadd.f32 %v448, %v718
        %v720 = vpop.f32.mrb[0].mxu0
        %721 = vmatprep.mubr.f32.mxu0 0.0
        %722 = vmatmul.mubr.f32.gmra.mrb[0].mxu0 %v518
        %v723 = vpop.f32.mrb[0].mxu0
        %v724 = vadd.f32 %v448, %v723
        %v725 = vpop.f32.mrb[0].mxu0
        %726 = vmatprep.mubr.f32.mxu0 0.0
        %727 = vmatmul.mubr.f32.gmra.mrb[0].mxu0 %v521
        %v728 = vpop.f32.mrb[0].mxu0
        %v729 = vadd.f32 %v448, %v728
        %v730 = vpop.f32.mrb[0].mxu0
        %731 = vmatprep.mubr.f32.mxu0 0.0
        %732 = vmatmul.mubr.f32.gmra.mrb[0].mxu0 %v524
        %v733 = vpop.f32.mrb[0].mxu0
        %v734 = vadd.f32 %v448, %v733
        %v735 = vpop.f32.mrb[0].mxu0
        %736 = vmatprep.mubr.f32.mxu0 0.0
        %737 = vmatmul.mubr.f32.gmra.mrb[0].mxu0 %v527
        %v738 = vpop.f32.mrb[0].mxu0
        %v739 = vadd.f32 %v448, %v738
        %v740 = vpop.f32.mrb[0].mxu0
        %741 = vmatprep.mubr.f32.mxu0 0.0
        %742 = vmatmul.mubr.f32.gmra.mrb[0].mxu0 %v530
        %v743 = vpop.f32.mrb[0].mxu0
        %v744 = vadd.f32 %v448, %v743
        %v745 = vpop.f32.mrb[0].mxu0
        %746 = vmatprep.mubr.f32.mxu0 0.0
        %747 = vmatmul.mubr.f32.gmra.mrb[0].mxu0 %v533
        %v748 = vpop.f32.mrb[0].mxu0
        %v749 = vadd.f32 %v448, %v748
        %v750 = vpop.f32.mrb[0].mxu0
        %751 = vmatprep.mubr.f32.mxu0 0.0
        %752 = vmatmul.mubr.f32.gmra.mrb[0].mxu0 %v536
        %v753 = vpop.f32.mrb[0].mxu0
        %v754 = vadd.f32 %v448, %v753
        %v755 = vpop.f32.mrb[0].mxu0
        %756 = vmatprep.mubr.f32.mxu0 0.0
        %757 = vmatmul.mubr.f32.gmra.mrb[0].mxu0 %v539
        %v758 = vpop.f32.mrb[0].mxu0
        %v759 = vadd.f32 %v448, %v758
        %v760 = vpop.f32.mrb[0].mxu0
        %761 = vmatprep.mubr.f32.mxu0 0.0
        %762 = vmatmul.mubr.f32.gmra.mrb[0].mxu0 %v542
        %v763 = vpop.f32.mrb[0].mxu0
        %v764 = vadd.f32 %v448, %v763
        %v765 = vpop.f32.mrb[0].mxu0
        %766 = vmatprep.mubr.f32.mxu0 0.0
        %767 = vmatmul.mubr.f32.gmra.mrb[0].mxu0 %v545
        %v768 = vpop.f32.mrb[0].mxu0
        %v769 = vadd.f32 %v448, %v768
        %v770 = vpop.f32.mrb[0].mxu0
        %771 = vdwg.mxu0
        %vm772 = vcmp.ge.f32.partialorder %v614, 0.0
        %vm773 = vcmp.ge.f32.partialorder %v619, 0.0
        %vm774 = vcmp.ge.f32.partialorder %v624, 0.0
        %vm775 = vcmp.ge.f32.partialorder %v629, 0.0
        %vm776 = vcmp.ge.f32.partialorder %v634, 0.0
        %vm777 = vcmp.ge.f32.partialorder %v639, 0.0
        %vm778 = vcmp.ge.f32.partialorder %v644, 0.0
        %vm779 = vcmp.ge.f32.partialorder %v649, 0.0
        %vm780 = vcmp.ge.f32.partialorder %v654, 0.0
        %vm781 = vcmp.ge.f32.partialorder %v659, 0.0
        %vm782 = vcmp.ge.f32.partialorder %v664, 0.0
        %vm783 = vcmp.ge.f32.partialorder %v669, 0.0
        %vm784 = vcmp.ge.f32.partialorder %v674, 0.0
        %vm785 = vcmp.ge.f32.partialorder %v679, 0.0
        %vm786 = vcmp.ge.f32.partialorder %v684, 0.0
        %vm787 = vcmp.ge.f32.partialorder %v689, 0.0
        %vm788 = vcmp.ge.f32.partialorder %v694, 0.0
        %vm789 = vcmp.ge.f32.partialorder %v699, 0.0
        %vm790 = vcmp.ge.f32.partialorder %v704, 0.0
        %vm791 = vcmp.ge.f32.partialorder %v709, 0.0
        %vm792 = vcmp.ge.f32.partialorder %v714, 0.0
        %vm793 = vcmp.ge.f32.partialorder %v719, 0.0
        %vm794 = vcmp.ge.f32.partialorder %v724, 0.0
        %vm795 = vcmp.ge.f32.partialorder %v729, 0.0
        %vm796 = vcmp.ge.f32.partialorder %v734, 0.0
        %vm797 = vcmp.ge.f32.partialorder %v739, 0.0
        %vm798 = vcmp.ge.f32.partialorder %v744, 0.0
        %vm799 = vcmp.ge.f32.partialorder %v749, 0.0
        %vm800 = vcmp.ge.f32.partialorder %v754, 0.0
        %vm801 = vcmp.ge.f32.partialorder %v759, 0.0
        %vm802 = vcmp.ge.f32.partialorder %v764, 0.0
        %vm803 = vcmp.ge.f32.partialorder %v769, 0.0
        %v804 = vmul.f32 %v614, 0.01
        %v805 = vmul.f32 %v619, 0.01
        %v806 = vmul.f32 %v624, 0.01
        %v807 = vmul.f32 %v629, 0.01
        %v808 = vmul.f32 %v634, 0.01
        %v809 = vmul.f32 %v639, 0.01
        %v810 = vmul.f32 %v644, 0.01
        %v811 = vmul.f32 %v649, 0.01
        %v812 = vmul.f32 %v654, 0.01
        %v813 = vmul.f32 %v659, 0.01
        %v814 = vmul.f32 %v664, 0.01
        %v815 = vmul.f32 %v669, 0.01
        %v816 = vmul.f32 %v674, 0.01
        %v817 = vmul.f32 %v679, 0.01
        %v818 = vmul.f32 %v684, 0.01
        %v819 = vmul.f32 %v689, 0.01
        %v820 = vmul.f32 %v694, 0.01
        %v821 = vmul.f32 %v699, 0.01
        %v822 = vmul.f32 %v704, 0.01
        %v823 = vmul.f32 %v709, 0.01
        %v824 = vmul.f32 %v714, 0.01
        %v825 = vmul.f32 %v719, 0.01
        %v826 = vmul.f32 %v724, 0.01
        %v827 = vmul.f32 %v729, 0.01
        %v828 = vmul.f32 %v734, 0.01
        %v829 = vmul.f32 %v739, 0.01
        %v830 = vmul.f32 %v744, 0.01
        %v831 = vmul.f32 %v749, 0.01
        %v832 = vmul.f32 %v754, 0.01
        %v833 = vmul.f32 %v759, 0.01
        %v834 = vmul.f32 %v764, 0.01
        %v835 = vmul.f32 %v769, 0.01
        %v836 = vsel %vm772, %v614, %v804
        %v837 = vsel %vm773, %v619, %v805
        %v838 = vsel %vm774, %v624, %v806
        %v839 = vsel %vm775, %v629, %v807
        %v840 = vsel %vm776, %v634, %v808
        %v841 = vsel %vm777, %v639, %v809
        %v842 = vsel %vm778, %v644, %v810
        %v843 = vsel %vm779, %v649, %v811
        %v844 = vsel %vm780, %v654, %v812
        %v845 = vsel %vm781, %v659, %v813
        %v846 = vsel %vm782, %v664, %v814
        %v847 = vsel %vm783, %v669, %v815
        %v848 = vsel %vm784, %v674, %v816
        %v849 = vsel %vm785, %v679, %v817
        %v850 = vsel %vm786, %v684, %v818
        %v851 = vsel %vm787, %v689, %v819
        %v852 = vsel %vm788, %v694, %v820
        %v853 = vsel %vm789, %v699, %v821
        %v854 = vsel %vm790, %v704, %v822
        %v855 = vsel %vm791, %v709, %v823
        %v856 = vsel %vm792, %v714, %v824
        %v857 = vsel %vm793, %v719, %v825
        %v858 = vsel %vm794, %v724, %v826
        %v859 = vsel %vm795, %v729, %v827
        %v860 = vsel %vm796, %v734, %v828
        %v861 = vsel %vm797, %v739, %v829
        %v862 = vsel %vm798, %v744, %v830
        %v863 = vsel %vm799, %v749, %v831
        %v864 = vsel %vm800, %v754, %v832
        %v865 = vsel %vm801, %v759, %v833
        %v866 = vsel %vm802, %v764, %v834
        %v867 = vsel %vm803, %v769, %v835
        %v868 = vld [vmem:[%s4] sm:$0xff]
        %v869 = vld [vmem:[%s4 + $0x8] sm:$0xff]
        %v870 = vld [vmem:[%s4 + $0x10] sm:$0xff]
        %v871 = vld [vmem:[%s4 + $0x18] sm:$0xff]
        %v872 = vld [vmem:[%s4 + $0x20] sm:$0xff]
        %v873 = vld [vmem:[%s4 + $0x28] sm:$0xff]
        %v874 = vld [vmem:[%s4 + $0x30] sm:$0xff]
        %v875 = vld [vmem:[%s4 + $0x38] sm:$0xff]
        %v876 = vld [vmem:[%s5] sm:$0x1]
        %v878 = vlaneseq
        %v879 = vshrl.u32 %v878, 7
        %v880 = vsub.s32 0, %v879
        %v881 = vrot.slane %v876, %v880
        %vm883 = vcmask 523264
        %v885 = vsel %vm883, %v836, 0
        %v888 = vsel %vm883, %v837, 0
        %v891 = vsel %vm883, %v838, 0
        %v894 = vsel %vm883, %v839, 0
        %v897 = vsel %vm883, %v840, 0
        %v900 = vsel %vm883, %v841, 0
        %v903 = vsel %vm883, %v842, 0
        %v906 = vsel %vm883, %v843, 0
        %v909 = vsel %vm883, %v844, 0
        %v912 = vsel %vm883, %v845, 0
        %v915 = vsel %vm883, %v846, 0
        %v918 = vsel %vm883, %v847, 0
        %v921 = vsel %vm883, %v848, 0
        %v924 = vsel %vm883, %v849, 0
        %v927 = vsel %vm883, %v850, 0
        %v930 = vsel %vm883, %v851, 0
        %v933 = vsel %vm883, %v852, 0
        %v936 = vsel %vm883, %v853, 0
        %v939 = vsel %vm883, %v854, 0
        %v942 = vsel %vm883, %v855, 0
        %v945 = vsel %vm883, %v856, 0
        %v948 = vsel %vm883, %v857, 0
        %v951 = vsel %vm883, %v858, 0
        %v954 = vsel %vm883, %v859, 0
        %v957 = vsel %vm883, %v860, 0
        %v960 = vsel %vm883, %v861, 0
        %v963 = vsel %vm883, %v862, 0
        %v966 = vsel %vm883, %v863, 0
        %v969 = vsel %vm883, %v864, 0
        %v972 = vsel %vm883, %v865, 0
        %v975 = vsel %vm883, %v866, 0
        %v978 = vsel %vm883, %v867, 0
        %980 = vmatprep.subr.mxu0 0.0
        %981 = vmatpush1.msra.mxu0 %v868
        %982 = vmatprep.subr.mxu0 0.0
        %983 = vmatpush1.msra.mxu0 %v869
        %984 = vmatprep.subr.mxu0 0.0
        %985 = vmatpush1.msra.mxu0 %v870
        %986 = vmatprep.subr.mxu0 0.0
        %987 = vmatpush1.msra.mxu0 %v871
        %988 = vmatprep.subr.mxu0 0.0
        %989 = vmatpush1.msra.mxu0 %v872
        %990 = vmatprep.subr.mxu0 0.0
        %991 = vmatpush1.msra.mxu0 %v873
        %992 = vmatprep.subr.mxu0 0.0
        %993 = vmatpush1.msra.mxu0 %v874
        %994 = vmatprep.subr.mxu0 0.0
        %995 = vmatpush1.msra.mxu0 %v875
        %996 = vmatprep.subr.mxu0 0.0
        %997 = vmatpush1.msra.mxu0 0.0
        %998 = vmatprep.subr.mxu0 0.0
        %999 = vmatpush1.msra.mxu0 0.0
        %1000 = vmatprep.subr.mxu0 0.0
        %1001 = vmatpush1.msra.mxu0 0.0
        %1002 = vmatprep.subr.mxu0 0.0
        %1003 = vmatpush1.msra.mxu0 0.0
        %1004 = vmatprep.subr.mxu0 0.0
        %1005 = vmatpush1.msra.mxu0 0.0
        %1006 = vmatprep.subr.mxu0 0.0
        %1007 = vmatpush1.msra.mxu0 0.0
        %1008 = vmatprep.subr.mxu0 0.0
        %1009 = vmatpush1.msra.mxu0 0.0
        %1010 = vmatprep.subr.mxu0 0.0
        %1011 = vmatpush1.msra.mxu0 0.0
        %1012 = vmatprep.subr.mxu0 0.0
        %1013 = vmatpush1.msra.mxu0 0.0
        %1014 = vmatprep.subr.mxu0 0.0
        %1015 = vmatpush1.msra.mxu0 0.0
        %1016 = vmatprep.subr.mxu0 0.0
        %1017 = vmatpush1.msra.mxu0 0.0
        %1018 = vmatprep.subr.mxu0 0.0
        %1019 = vmatpush1.msra.mxu0 0.0
        %1020 = vmatprep.subr.mxu0 0.0
        %1021 = vmatpush1.msra.mxu0 0.0
        %1022 = vmatprep.subr.mxu0 0.0
        %1023 = vmatpush1.msra.mxu0 0.0
        %1024 = vmatprep.subr.mxu0 0.0
        %1025 = vmatpush1.msra.mxu0 0.0
        %1026 = vmatprep.subr.mxu0 0.0
        %1027 = vmatpush1.msra.mxu0 0.0
        %1028 = vmatprep.subr.mxu0 0.0
        %1029 = vmatpush1.msra.mxu0 0.0
        %1030 = vmatprep.subr.mxu0 0.0
        %1031 = vmatpush1.msra.mxu0 0.0
        %1032 = vmatprep.subr.mxu0 0.0
        %1033 = vmatpush1.msra.mxu0 0.0
        %1034 = vmatprep.subr.mxu0 0.0
        %1035 = vmatpush1.msra.mxu0 0.0
        %1036 = vmatprep.subr.mxu0 0.0
        %1037 = vmatpush1.msra.mxu0 0.0
        %1038 = vmatprep.subr.mxu0 0.0
        %1039 = vmatpush1.msra.mxu0 0.0
        %1040 = vmatprep.subr.mxu0 0.0
        %1041 = vmatpush1.msra.mxu0 0.0
        %1042 = vmatprep.subr.mxu0 0.0
        %1043 = vmatpush1.msra.mxu0 0.0
        %1044 = vmatprep.mubr.f32.mxu0 0.0
        %1045 = vmatmul.mubr.f32.gmra.mrb[0].mxu0 %v885
        %v1046 = vpop.f32.mrb[0].mxu0
        %v1047 = vadd.f32 %v881, %v1046
        %v1048 = vpop.f32.mrb[0].mxu0
        %1049 = vmatprep.mubr.f32.mxu0 0.0
        %1050 = vmatmul.mubr.f32.gmra.mrb[0].mxu0 %v888
        %v1051 = vpop.f32.mrb[0].mxu0
        %v1052 = vadd.f32 %v881, %v1051
        %v1053 = vpop.f32.mrb[0].mxu0
        %1054 = vmatprep.mubr.f32.mxu0 0.0
        %1055 = vmatmul.mubr.f32.gmra.mrb[0].mxu0 %v891
        %v1056 = vpop.f32.mrb[0].mxu0
        %v1057 = vadd.f32 %v881, %v1056
        %v1058 = vpop.f32.mrb[0].mxu0
        %1059 = vmatprep.mubr.f32.mxu0 0.0
        %1060 = vmatmul.mubr.f32.gmra.mrb[0].mxu0 %v894
        %v1061 = vpop.f32.mrb[0].mxu0
        %v1062 = vadd.f32 %v881, %v1061
        %v1063 = vpop.f32.mrb[0].mxu0
        %1064 = vmatprep.mubr.f32.mxu0 0.0
        %1065 = vmatmul.mubr.f32.gmra.mrb[0].mxu0 %v897
        %v1066 = vpop.f32.mrb[0].mxu0
        %v1067 = vadd.f32 %v881, %v1066
        %v1068 = vpop.f32.mrb[0].mxu0
        %1069 = vmatprep.mubr.f32.mxu0 0.0
        %1070 = vmatmul.mubr.f32.gmra.mrb[0].mxu0 %v900
        %v1071 = vpop.f32.mrb[0].mxu0
        %v1072 = vadd.f32 %v881, %v1071
        %v1073 = vpop.f32.mrb[0].mxu0
        %1074 = vmatprep.mubr.f32.mxu0 0.0
        %1075 = vmatmul.mubr.f32.gmra.mrb[0].mxu0 %v903
        %v1076 = vpop.f32.mrb[0].mxu0
        %v1077 = vadd.f32 %v881, %v1076
        %v1078 = vpop.f32.mrb[0].mxu0
        %1079 = vmatprep.mubr.f32.mxu0 0.0
        %1080 = vmatmul.mubr.f32.gmra.mrb[0].mxu0 %v906
        %v1081 = vpop.f32.mrb[0].mxu0
        %v1082 = vadd.f32 %v881, %v1081
        %v1083 = vpop.f32.mrb[0].mxu0
        %1084 = vmatprep.mubr.f32.mxu0 0.0
        %1085 = vmatmul.mubr.f32.gmra.mrb[0].mxu0 %v909
        %v1086 = vpop.f32.mrb[0].mxu0
        %v1087 = vadd.f32 %v881, %v1086
        %v1088 = vpop.f32.mrb[0].mxu0
        %1089 = vmatprep.mubr.f32.mxu0 0.0
        %1090 = vmatmul.mubr.f32.gmra.mrb[0].mxu0 %v912
        %v1091 = vpop.f32.mrb[0].mxu0
        %v1092 = vadd.f32 %v881, %v1091
        %v1093 = vpop.f32.mrb[0].mxu0
        %1094 = vmatprep.mubr.f32.mxu0 0.0
        %1095 = vmatmul.mubr.f32.gmra.mrb[0].mxu0 %v915
        %v1096 = vpop.f32.mrb[0].mxu0
        %v1097 = vadd.f32 %v881, %v1096
        %v1098 = vpop.f32.mrb[0].mxu0
        %1099 = vmatprep.mubr.f32.mxu0 0.0
        %1100 = vmatmul.mubr.f32.gmra.mrb[0].mxu0 %v918
        %v1101 = vpop.f32.mrb[0].mxu0
        %v1102 = vadd.f32 %v881, %v1101
        %v1103 = vpop.f32.mrb[0].mxu0
        %1104 = vmatprep.mubr.f32.mxu0 0.0
        %1105 = vmatmul.mubr.f32.gmra.mrb[0].mxu0 %v921
        %v1106 = vpop.f32.mrb[0].mxu0
        %v1107 = vadd.f32 %v881, %v1106
        %v1108 = vpop.f32.mrb[0].mxu0
        %1109 = vmatprep.mubr.f32.mxu0 0.0
        %1110 = vmatmul.mubr.f32.gmra.mrb[0].mxu0 %v924
        %v1111 = vpop.f32.mrb[0].mxu0
        %v1112 = vadd.f32 %v881, %v1111
        %v1113 = vpop.f32.mrb[0].mxu0
        %1114 = vmatprep.mubr.f32.mxu0 0.0
        %1115 = vmatmul.mubr.f32.gmra.mrb[0].mxu0 %v927
        %v1116 = vpop.f32.mrb[0].mxu0
        %v1117 = vadd.f32 %v881, %v1116
        %v1118 = vpop.f32.mrb[0].mxu0
        %1119 = vmatprep.mubr.f32.mxu0 0.0
        %1120 = vmatmul.mubr.f32.gmra.mrb[0].mxu0 %v930
        %v1121 = vpop.f32.mrb[0].mxu0
        %v1122 = vadd.f32 %v881, %v1121
        %v1123 = vpop.f32.mrb[0].mxu0
        %1124 = vmatprep.mubr.f32.mxu0 0.0
        %1125 = vmatmul.mubr.f32.gmra.mrb[0].mxu0 %v933
        %v1126 = vpop.f32.mrb[0].mxu0
        %v1127 = vadd.f32 %v881, %v1126
        %v1128 = vpop.f32.mrb[0].mxu0
        %1129 = vmatprep.mubr.f32.mxu0 0.0
        %1130 = vmatmul.mubr.f32.gmra.mrb[0].mxu0 %v936
        %v1131 = vpop.f32.mrb[0].mxu0
        %v1132 = vadd.f32 %v881, %v1131
        %v1133 = vpop.f32.mrb[0].mxu0
        %1134 = vmatprep.mubr.f32.mxu0 0.0
        %1135 = vmatmul.mubr.f32.gmra.mrb[0].mxu0 %v939
        %v1136 = vpop.f32.mrb[0].mxu0
        %v1137 = vadd.f32 %v881, %v1136
        %v1138 = vpop.f32.mrb[0].mxu0
        %1139 = vmatprep.mubr.f32.mxu0 0.0
        %1140 = vmatmul.mubr.f32.gmra.mrb[0].mxu0 %v942
        %v1141 = vpop.f32.mrb[0].mxu0
        %v1142 = vadd.f32 %v881, %v1141
        %v1143 = vpop.f32.mrb[0].mxu0
        %1144 = vmatprep.mubr.f32.mxu0 0.0
        %1145 = vmatmul.mubr.f32.gmra.mrb[0].mxu0 %v945
        %v1146 = vpop.f32.mrb[0].mxu0
        %v1147 = vadd.f32 %v881, %v1146
        %v1148 = vpop.f32.mrb[0].mxu0
        %1149 = vmatprep.mubr.f32.mxu0 0.0
        %1150 = vmatmul.mubr.f32.gmra.mrb[0].mxu0 %v948
        %v1151 = vpop.f32.mrb[0].mxu0
        %v1152 = vadd.f32 %v881, %v1151
        %v1153 = vpop.f32.mrb[0].mxu0
        %1154 = vmatprep.mubr.f32.mxu0 0.0
        %1155 = vmatmul.mubr.f32.gmra.mrb[0].mxu0 %v951
        %v1156 = vpop.f32.mrb[0].mxu0
        %v1157 = vadd.f32 %v881, %v1156
        %v1158 = vpop.f32.mrb[0].mxu0
        %1159 = vmatprep.mubr.f32.mxu0 0.0
        %1160 = vmatmul.mubr.f32.gmra.mrb[0].mxu0 %v954
        %v1161 = vpop.f32.mrb[0].mxu0
        %v1162 = vadd.f32 %v881, %v1161
        %v1163 = vpop.f32.mrb[0].mxu0
        %1164 = vmatprep.mubr.f32.mxu0 0.0
        %1165 = vmatmul.mubr.f32.gmra.mrb[0].mxu0 %v957
        %v1166 = vpop.f32.mrb[0].mxu0
        %v1167 = vadd.f32 %v881, %v1166
        %v1168 = vpop.f32.mrb[0].mxu0
        %1169 = vmatprep.mubr.f32.mxu0 0.0
        %1170 = vmatmul.mubr.f32.gmra.mrb[0].mxu0 %v960
        %v1171 = vpop.f32.mrb[0].mxu0
        %v1172 = vadd.f32 %v881, %v1171
        %v1173 = vpop.f32.mrb[0].mxu0
        %1174 = vmatprep.mubr.f32.mxu0 0.0
        %1175 = vmatmul.mubr.f32.gmra.mrb[0].mxu0 %v963
        %v1176 = vpop.f32.mrb[0].mxu0
        %v1177 = vadd.f32 %v881, %v1176
        %v1178 = vpop.f32.mrb[0].mxu0
        %1179 = vmatprep.mubr.f32.mxu0 0.0
        %1180 = vmatmul.mubr.f32.gmra.mrb[0].mxu0 %v966
        %v1181 = vpop.f32.mrb[0].mxu0
        %v1182 = vadd.f32 %v881, %v1181
        %v1183 = vpop.f32.mrb[0].mxu0
        %1184 = vmatprep.mubr.f32.mxu0 0.0
        %1185 = vmatmul.mubr.f32.gmra.mrb[0].mxu0 %v969
        %v1186 = vpop.f32.mrb[0].mxu0
        %v1187 = vadd.f32 %v881, %v1186
        %v1188 = vpop.f32.mrb[0].mxu0
        %1189 = vmatprep.mubr.f32.mxu0 0.0
        %1190 = vmatmul.mubr.f32.gmra.mrb[0].mxu0 %v972
        %v1191 = vpop.f32.mrb[0].mxu0
        %v1192 = vadd.f32 %v881, %v1191
        %v1193 = vpop.f32.mrb[0].mxu0
        %1194 = vmatprep.mubr.f32.mxu0 0.0
        %1195 = vmatmul.mubr.f32.gmra.mrb[0].mxu0 %v975
        %v1196 = vpop.f32.mrb[0].mxu0
        %v1197 = vadd.f32 %v881, %v1196
        %v1198 = vpop.f32.mrb[0].mxu0
        %1199 = vmatprep.mubr.f32.mxu0 0.0
        %1200 = vmatmul.mubr.f32.gmra.mrb[0].mxu0 %v978
        %v1201 = vpop.f32.mrb[0].mxu0
        %v1202 = vadd.f32 %v881, %v1201
        %v1203 = vpop.f32.mrb[0].mxu0
        %1204 = vdwg.mxu0
        %v1205 = vmul.f32 %v374, %v1047
        %v1206 = vmul.f32 %v375, %v1052
        %v1207 = vmul.f32 %v376, %v1057
        %v1208 = vmul.f32 %v377, %v1062
        %v1209 = vmul.f32 %v378, %v1067
        %v1210 = vmul.f32 %v379, %v1072
        %v1211 = vmul.f32 %v380, %v1077
        %v1212 = vmul.f32 %v381, %v1082
        %v1213 = vmul.f32 %v382, %v1087
        %v1214 = vmul.f32 %v383, %v1092
        %v1215 = vmul.f32 %v384, %v1097
        %v1216 = vmul.f32 %v385, %v1102
        %v1217 = vmul.f32 %v386, %v1107
        %v1218 = vmul.f32 %v387, %v1112
        %v1219 = vmul.f32 %v388, %v1117
        %v1220 = vmul.f32 %v389, %v1122
        %v1221 = vmul.f32 %v390, %v1127
        %v1222 = vmul.f32 %v391, %v1132
        %v1223 = vmul.f32 %v392, %v1137
        %v1224 = vmul.f32 %v393, %v1142
        %v1225 = vmul.f32 %v394, %v1147
        %v1226 = vmul.f32 %v395, %v1152
        %v1227 = vmul.f32 %v396, %v1157
        %v1228 = vmul.f32 %v397, %v1162
        %v1229 = vmul.f32 %v398, %v1167
        %v1230 = vmul.f32 %v399, %v1172
        %v1231 = vmul.f32 %v400, %v1177
        %v1232 = vmul.f32 %v401, %v1182
        %v1233 = vmul.f32 %v402, %v1187
        %v1234 = vmul.f32 %v403, %v1192
        %v1235 = vmul.f32 %v404, %v1197
        %v1236 = vmul.f32 %v405, %v1202
        %1269 = vrot.lane.b32.xlu0 %v1047, 64
        %v1270 = vpop.permute.xlu0 %1269
        %1271 = vrot.lane.b32.xlu0 %v1052, 64
        %v1272 = vpop.permute.xlu0 %1271
        %1273 = vrot.lane.b32.xlu0 %v1057, 64
        %v1274 = vpop.permute.xlu0 %1273
        %1275 = vrot.lane.b32.xlu0 %v1062, 64
        %v1276 = vpop.permute.xlu0 %1275
        %1277 = vrot.lane.b32.xlu0 %v1067, 64
        %v1278 = vpop.permute.xlu0 %1277
        %1279 = vrot.lane.b32.xlu0 %v1072, 64
        %v1280 = vpop.permute.xlu0 %1279
        %1281 = vrot.lane.b32.xlu0 %v1077, 64
        %v1282 = vpop.permute.xlu0 %1281
        %1283 = vrot.lane.b32.xlu0 %v1082, 64
        %v1284 = vpop.permute.xlu0 %1283
        %1285 = vrot.lane.b32.xlu0 %v1087, 64
        %v1286 = vpop.permute.xlu0 %1285
        %1287 = vrot.lane.b32.xlu0 %v1092, 64
        %v1288 = vpop.permute.xlu0 %1287
        %1289 = vrot.lane.b32.xlu0 %v1097, 64
        %v1290 = vpop.permute.xlu0 %1289
        %1291 = vrot.lane.b32.xlu0 %v1102, 64
        %v1292 = vpop.permute.xlu0 %1291
        %1293 = vrot.lane.b32.xlu0 %v1107, 64
        %v1294 = vpop.permute.xlu0 %1293
        %1295 = vrot.lane.b32.xlu0 %v1112, 64
        %v1296 = vpop.permute.xlu0 %1295
        %1297 = vrot.lane.b32.xlu0 %v1117, 64
        %v1298 = vpop.permute.xlu0 %1297
        %1299 = vrot.lane.b32.xlu0 %v1122, 64
        %v1300 = vpop.permute.xlu0 %1299
        %1301 = vrot.lane.b32.xlu0 %v1127, 64
        %v1302 = vpop.permute.xlu0 %1301
        %1303 = vrot.lane.b32.xlu0 %v1132, 64
        %v1304 = vpop.permute.xlu0 %1303
        %1305 = vrot.lane.b32.xlu0 %v1137, 64
        %v1306 = vpop.permute.xlu0 %1305
        %1307 = vrot.lane.b32.xlu0 %v1142, 64
        %v1308 = vpop.permute.xlu0 %1307
        %1309 = vrot.lane.b32.xlu0 %v1147, 64
        %v1310 = vpop.permute.xlu0 %1309
        %1311 = vrot.lane.b32.xlu0 %v1152, 64
        %v1312 = vpop.permute.xlu0 %1311
        %1313 = vrot.lane.b32.xlu0 %v1157, 64
        %v1314 = vpop.permute.xlu0 %1313
        %1315 = vrot.lane.b32.xlu0 %v1162, 64
        %v1316 = vpop.permute.xlu0 %1315
        %1317 = vrot.lane.b32.xlu0 %v1167, 64
        %v1318 = vpop.permute.xlu0 %1317
        %1319 = vrot.lane.b32.xlu0 %v1172, 64
        %v1320 = vpop.permute.xlu0 %1319
        %1321 = vrot.lane.b32.xlu0 %v1177, 64
        %v1322 = vpop.permute.xlu0 %1321
        %1323 = vrot.lane.b32.xlu0 %v1182, 64
        %v1324 = vpop.permute.xlu0 %1323
        %1325 = vrot.lane.b32.xlu0 %v1187, 64
        %v1326 = vpop.permute.xlu0 %1325
        %1327 = vrot.lane.b32.xlu0 %v1192, 64
        %v1328 = vpop.permute.xlu0 %1327
        %1329 = vrot.lane.b32.xlu0 %v1197, 64
        %v1330 = vpop.permute.xlu0 %1329
        %1331 = vrot.lane.b32.xlu0 %v1202, 64
        %v1332 = vpop.permute.xlu0 %1331
        %v1365 = vadd.f32 %v1205, %v1270
        %v1366 = vadd.f32 %v1206, %v1272
        %v1367 = vadd.f32 %v1207, %v1274
        %v1368 = vadd.f32 %v1208, %v1276
        %v1369 = vadd.f32 %v1209, %v1278
        %v1370 = vadd.f32 %v1210, %v1280
        %v1371 = vadd.f32 %v1211, %v1282
        %v1372 = vadd.f32 %v1212, %v1284
        %v1373 = vadd.f32 %v1213, %v1286
        %v1374 = vadd.f32 %v1214, %v1288
        %v1375 = vadd.f32 %v1215, %v1290
        %v1376 = vadd.f32 %v1216, %v1292
        %v1377 = vadd.f32 %v1217, %v1294
        %v1378 = vadd.f32 %v1218, %v1296
        %v1379 = vadd.f32 %v1219, %v1298
        %v1380 = vadd.f32 %v1220, %v1300
        %v1381 = vadd.f32 %v1221, %v1302
        %v1382 = vadd.f32 %v1222, %v1304
        %v1383 = vadd.f32 %v1223, %v1306
        %v1384 = vadd.f32 %v1224, %v1308
        %v1385 = vadd.f32 %v1225, %v1310
        %v1386 = vadd.f32 %v1226, %v1312
        %v1387 = vadd.f32 %v1227, %v1314
        %v1388 = vadd.f32 %v1228, %v1316
        %v1389 = vadd.f32 %v1229, %v1318
        %v1390 = vadd.f32 %v1230, %v1320
        %v1391 = vadd.f32 %v1231, %v1322
        %v1392 = vadd.f32 %v1232, %v1324
        %v1393 = vadd.f32 %v1233, %v1326
        %v1394 = vadd.f32 %v1234, %v1328
        %v1395 = vadd.f32 %v1235, %v1330
        %v1396 = vadd.f32 %v1236, %v1332
        %v1397 = vmax.f32 %v1365, 0.0
        %v1398 = vmax.f32 %v1366, 0.0
        %v1399 = vmax.f32 %v1367, 0.0
        %v1400 = vmax.f32 %v1368, 0.0
        %v1401 = vmax.f32 %v1369, 0.0
        %v1402 = vmax.f32 %v1370, 0.0
        %v1403 = vmax.f32 %v1371, 0.0
        %v1404 = vmax.f32 %v1372, 0.0
        %v1405 = vmax.f32 %v1373, 0.0
        %v1406 = vmax.f32 %v1374, 0.0
        %v1407 = vmax.f32 %v1375, 0.0
        %v1408 = vmax.f32 %v1376, 0.0
        %v1409 = vmax.f32 %v1377, 0.0
        %v1410 = vmax.f32 %v1378, 0.0
        %v1411 = vmax.f32 %v1379, 0.0
        %v1412 = vmax.f32 %v1380, 0.0
        %v1413 = vmax.f32 %v1381, 0.0
        %v1414 = vmax.f32 %v1382, 0.0
        %v1415 = vmax.f32 %v1383, 0.0
        %v1416 = vmax.f32 %v1384, 0.0
        %v1417 = vmax.f32 %v1385, 0.0
        %v1418 = vmax.f32 %v1386, 0.0
        %v1419 = vmax.f32 %v1387, 0.0
        %v1420 = vmax.f32 %v1388, 0.0
        %v1421 = vmax.f32 %v1389, 0.0
        %v1422 = vmax.f32 %v1390, 0.0
        %v1423 = vmax.f32 %v1391, 0.0
        %v1424 = vmax.f32 %v1392, 0.0
        %v1425 = vmax.f32 %v1393, 0.0
        %v1426 = vmax.f32 %v1394, 0.0
        %v1427 = vmax.f32 %v1395, 0.0
        %v1428 = vmax.f32 %v1396, 0.0
        %s1429 = ssub.s32 %s371, 1
        %p1430 = scmp.gt.s32.totalorder %s1429, 0
        %s1431 = scalar_select %p1430, %s1429, 0
        %s1432 = sadd.s32 %s371, 16
        %p1433 = scmp.lt.s32.totalorder %s1432, 15
        %s1434 = scalar_select %p1433, %s1432, 15
        %s1435 = smul.u32 %s1431, 16
        %s1436 = scalar_lea.vmem %s312, %s1435 [#allocation3]
        %v1437 = vld [vmem:[%s1436] sm:$0xff]
        %v1438 = vld [vmem:[%s1436 + $0x8] sm:$0xff]
        %s1439 = smul.u32 %s1434, 16
        %s1440 = scalar_lea.vmem %s312, %s1439 [#allocation3]
        %v1441 = vld [vmem:[%s1440] sm:$0xff]
        %v1442 = vld [vmem:[%s1440 + $0x8] sm:$0xff]
        %s1443 = scalar_lea.vmem %s359, %s1435
        %v1444 = vld [vmem:[%s1443] sm:$0xff]
        %v1445 = vld [vmem:[%s1443 + $0x8] sm:$0xff]
        %s1446 = scalar_lea.vmem %s359, %s1439
        %v1447 = vld [vmem:[%s1446] sm:$0xff]
        %v1448 = vld [vmem:[%s1446 + $0x8] sm:$0xff]
        %v1450 = vsel %vm450, %v1444, 0
        %v1453 = vsel %vm450, %v1445, 0
        %v1456 = vsel %vm450, %v1447, 0
        %v1459 = vsel %vm450, %v1448, 0
        %1461 = vmatprep.subr.mxu0 0.0
        %1462 = vmatpush1.msra.mxu0 %v439
        %1463 = vmatprep.subr.mxu0 0.0
        %1464 = vmatpush1.msra.mxu0 %v440
        %1465 = vmatprep.subr.mxu0 0.0
        %1466 = vmatpush1.msra.mxu0 %v441
        %1467 = vmatprep.subr.mxu0 0.0
        %1468 = vmatpush1.msra.mxu0 %v442
        %1469 = vmatprep.subr.mxu0 0.0
        %1470 = vmatpush1.msra.mxu0 0.0
        %1471 = vmatprep.subr.mxu0 0.0
        %1472 = vmatpush1.msra.mxu0 0.0
        %1473 = vmatprep.subr.mxu0 0.0
        %1474 = vmatpush1.msra.mxu0 0.0
        %1475 = vmatprep.subr.mxu0 0.0
        %1476 = vmatpush1.msra.mxu0 0.0
        %1477 = vmatprep.subr.mxu0 0.0
        %1478 = vmatpush1.msra.mxu0 0.0
        %1479 = vmatprep.subr.mxu0 0.0
        %1480 = vmatpush1.msra.mxu0 0.0
        %1481 = vmatprep.subr.mxu0 0.0
        %1482 = vmatpush1.msra.mxu0 0.0
        %1483 = vmatprep.subr.mxu0 0.0
        %1484 = vmatpush1.msra.mxu0 0.0
        %1485 = vmatprep.subr.mxu0 0.0
        %1486 = vmatpush1.msra.mxu0 0.0
        %1487 = vmatprep.subr.mxu0 0.0
        %1488 = vmatpush1.msra.mxu0 0.0
        %1489 = vmatprep.subr.mxu0 0.0
        %1490 = vmatpush1.msra.mxu0 0.0
        %1491 = vmatprep.subr.mxu0 0.0
        %1492 = vmatpush1.msra.mxu0 0.0
        %1493 = vmatprep.subr.mxu0 0.0
        %1494 = vmatpush1.msra.mxu0 0.0
        %1495 = vmatprep.subr.mxu0 0.0
        %1496 = vmatpush1.msra.mxu0 0.0
        %1497 = vmatprep.subr.mxu0 0.0
        %1498 = vmatpush1.msra.mxu0 0.0
        %1499 = vmatprep.subr.mxu0 0.0
        %1500 = vmatpush1.msra.mxu0 0.0
        %1501 = vmatprep.subr.mxu0 0.0
        %1502 = vmatpush1.msra.mxu0 0.0
        %1503 = vmatprep.subr.mxu0 0.0
        %1504 = vmatpush1.msra.mxu0 0.0
        %1505 = vmatprep.subr.mxu0 0.0
        %1506 = vmatpush1.msra.mxu0 0.0
        %1507 = vmatprep.subr.mxu0 0.0
        %1508 = vmatpush1.msra.mxu0 0.0
        %1509 = vmatprep.subr.mxu0 0.0
        %1510 = vmatpush1.msra.mxu0 0.0
        %1511 = vmatprep.subr.mxu0 0.0
        %1512 = vmatpush1.msra.mxu0 0.0
        %1513 = vmatprep.subr.mxu0 0.0
        %1514 = vmatpush1.msra.mxu0 0.0
        %1515 = vmatprep.subr.mxu0 0.0
        %1516 = vmatpush1.msra.mxu0 0.0
        %1517 = vmatprep.subr.mxu0 0.0
        %1518 = vmatpush1.msra.mxu0 0.0
        %1519 = vmatprep.subr.mxu0 0.0
        %1520 = vmatpush1.msra.mxu0 0.0
        %1521 = vmatprep.subr.mxu0 0.0
        %1522 = vmatpush1.msra.mxu0 0.0
        %1523 = vmatprep.subr.mxu0 0.0
        %1524 = vmatpush1.msra.mxu0 0.0
        %1525 = vmatprep.mubr.f32.mxu0 0.0
        %1526 = vmatmul.mubr.f32.gmra.mrb[0].mxu0 %v1450
        %v1527 = vpop.f32.mrb[0].mxu0
        %v1528 = vadd.f32 %v448, %v1527
        %v1529 = vpop.f32.mrb[0].mxu0
        %1530 = vmatprep.mubr.f32.mxu0 0.0
        %1531 = vmatmul.mubr.f32.gmra.mrb[0].mxu0 %v1453
        %v1532 = vpop.f32.mrb[0].mxu0
        %v1533 = vadd.f32 %v448, %v1532
        %v1534 = vpop.f32.mrb[0].mxu0
        %1535 = vmatprep.mubr.f32.mxu0 0.0
        %1536 = vmatmul.mubr.f32.gmra.mrb[0].mxu0 %v1456
        %v1537 = vpop.f32.mrb[0].mxu0
        %v1538 = vadd.f32 %v448, %v1537
        %v1539 = vpop.f32.mrb[0].mxu0
        %1540 = vmatprep.mubr.f32.mxu0 0.0
        %1541 = vmatmul.mubr.f32.gmra.mrb[0].mxu0 %v1459
        %v1542 = vpop.f32.mrb[0].mxu0
        %v1543 = vadd.f32 %v448, %v1542
        %v1544 = vpop.f32.mrb[0].mxu0
        %1545 = vdwg.mxu0
        %vm1546 = vcmp.ge.f32.partialorder %v1528, 0.0
        %vm1547 = vcmp.ge.f32.partialorder %v1533, 0.0
        %vm1548 = vcmp.ge.f32.partialorder %v1538, 0.0
        %vm1549 = vcmp.ge.f32.partialorder %v1543, 0.0
        %v1550 = vmul.f32 %v1528, 0.01
        %v1551 = vmul.f32 %v1533, 0.01
        %v1552 = vmul.f32 %v1538, 0.01
        %v1553 = vmul.f32 %v1543, 0.01
        %v1554 = vsel %vm1546, %v1528, %v1550
        %v1555 = vsel %vm1547, %v1533, %v1551
        %v1556 = vsel %vm1548, %v1538, %v1552
        %v1557 = vsel %vm1549, %v1543, %v1553
        %v1559 = vsel %vm883, %v1554, 0
        %v1562 = vsel %vm883, %v1555, 0
        %v1565 = vsel %vm883, %v1556, 0
        %v1568 = vsel %vm883, %v1557, 0
        %1570 = vmatprep.subr.mxu0 0.0
        %1571 = vmatpush1.msra.mxu0 %v868
        %1572 = vmatprep.subr.mxu0 0.0
        %1573 = vmatpush1.msra.mxu0 %v869
        %1574 = vmatprep.subr.mxu0 0.0
        %1575 = vmatpush1.msra.mxu0 %v870
        %1576 = vmatprep.subr.mxu0 0.0
        %1577 = vmatpush1.msra.mxu0 %v871
        %1578 = vmatprep.subr.mxu0 0.0
        %1579 = vmatpush1.msra.mxu0 %v872
        %1580 = vmatprep.subr.mxu0 0.0
        %1581 = vmatpush1.msra.mxu0 %v873
        %1582 = vmatprep.subr.mxu0 0.0
        %1583 = vmatpush1.msra.mxu0 %v874
        %1584 = vmatprep.subr.mxu0 0.0
        %1585 = vmatpush1.msra.mxu0 %v875
        %1586 = vmatprep.subr.mxu0 0.0
        %1587 = vmatpush1.msra.mxu0 0.0
        %1588 = vmatprep.subr.mxu0 0.0
        %1589 = vmatpush1.msra.mxu0 0.0
        %1590 = vmatprep.subr.mxu0 0.0
        %1591 = vmatpush1.msra.mxu0 0.0
        %1592 = vmatprep.subr.mxu0 0.0
        %1593 = vmatpush1.msra.mxu0 0.0
        %1594 = vmatprep.subr.mxu0 0.0
        %1595 = vmatpush1.msra.mxu0 0.0
        %1596 = vmatprep.subr.mxu0 0.0
        %1597 = vmatpush1.msra.mxu0 0.0
        %1598 = vmatprep.subr.mxu0 0.0
        %1599 = vmatpush1.msra.mxu0 0.0
        %1600 = vmatprep.subr.mxu0 0.0
        %1601 = vmatpush1.msra.mxu0 0.0
        %1602 = vmatprep.subr.mxu0 0.0
        %1603 = vmatpush1.msra.mxu0 0.0
        %1604 = vmatprep.subr.mxu0 0.0
        %1605 = vmatpush1.msra.mxu0 0.0
        %1606 = vmatprep.subr.mxu0 0.0
        %1607 = vmatpush1.msra.mxu0 0.0
        %1608 = vmatprep.subr.mxu0 0.0
        %1609 = vmatpush1.msra.mxu0 0.0
        %1610 = vmatprep.subr.mxu0 0.0
        %1611 = vmatpush1.msra.mxu0 0.0
        %1612 = vmatprep.subr.mxu0 0.0
        %1613 = vmatpush1.msra.mxu0 0.0
        %1614 = vmatprep.subr.mxu0 0.0
        %1615 = vmatpush1.msra.mxu0 0.0
        %1616 = vmatprep.subr.mxu0 0.0
        %1617 = vmatpush1.msra.mxu0 0.0
        %1618 = vmatprep.subr.mxu0 0.0
        %1619 = vmatpush1.msra.mxu0 0.0
        %1620 = vmatprep.subr.mxu0 0.0
        %1621 = vmatpush1.msra.mxu0 0.0
        %1622 = vmatprep.subr.mxu0 0.0
        %1623 = vmatpush1.msra.mxu0 0.0
        %1624 = vmatprep.subr.mxu0 0.0
        %1625 = vmatpush1.msra.mxu0 0.0
        %1626 = vmatprep.subr.mxu0 0.0
        %1627 = vmatpush1.msra.mxu0 0.0
        %1628 = vmatprep.subr.mxu0 0.0
        %1629 = vmatpush1.msra.mxu0 0.0
        %1630 = vmatprep.subr.mxu0 0.0
        %1631 = vmatpush1.msra.mxu0 0.0
        %1632 = vmatprep.subr.mxu0 0.0
        %1633 = vmatpush1.msra.mxu0 0.0
        %1634 = vmatprep.mubr.f32.mxu0 0.0
        %1635 = vmatmul.mubr.f32.gmra.mrb[0].mxu0 %v1559
        %v1636 = vpop.f32.mrb[0].mxu0
        %v1637 = vadd.f32 %v881, %v1636
        %v1638 = vpop.f32.mrb[0].mxu0
        %1639 = vmatprep.mubr.f32.mxu0 0.0
        %1640 = vmatmul.mubr.f32.gmra.mrb[0].mxu0 %v1562
        %v1641 = vpop.f32.mrb[0].mxu0
        %v1642 = vadd.f32 %v881, %v1641
        %v1643 = vpop.f32.mrb[0].mxu0
        %1644 = vmatprep.mubr.f32.mxu0 0.0
        %1645 = vmatmul.mubr.f32.gmra.mrb[0].mxu0 %v1565
        %v1646 = vpop.f32.mrb[0].mxu0
        %v1647 = vadd.f32 %v881, %v1646
        %v1648 = vpop.f32.mrb[0].mxu0
        %1649 = vmatprep.mubr.f32.mxu0 0.0
        %1650 = vmatmul.mubr.f32.gmra.mrb[0].mxu0 %v1568
        %v1651 = vpop.f32.mrb[0].mxu0
        %v1652 = vadd.f32 %v881, %v1651
        %v1653 = vpop.f32.mrb[0].mxu0
        %1654 = vdwg.mxu0
        %v1655 = vmul.f32 %v1437, %v1637
        %v1656 = vmul.f32 %v1438, %v1642
        %v1657 = vmul.f32 %v1441, %v1647
        %v1658 = vmul.f32 %v1442, %v1652
        %1663 = vrot.lane.b32.xlu0 %v1637, 64
        %v1664 = vpop.permute.xlu0 %1663
        %1665 = vrot.lane.b32.xlu0 %v1642, 64
        %v1666 = vpop.permute.xlu0 %1665
        %1667 = vrot.lane.b32.xlu0 %v1647, 64
        %v1668 = vpop.permute.xlu0 %1667
        %1669 = vrot.lane.b32.xlu0 %v1652, 64
        %v1670 = vpop.permute.xlu0 %1669
        %v1675 = vadd.f32 %v1655, %v1664
        %v1676 = vadd.f32 %v1656, %v1666
        %v1677 = vadd.f32 %v1657, %v1668
        %v1678 = vadd.f32 %v1658, %v1670
        %v1679 = vmax.f32 %v1675, 0.0
        %v1680 = vmax.f32 %v1676, 0.0
        %v1681 = vmax.f32 %v1677, 0.0
        %v1682 = vmax.f32 %v1678, 0.0
        %p1683 = scmp.gt.s32.totalorder %s27, 0
        %s1684 = scalar_select %p1683, 1, 0
        %s1685 = scvt.s32.f32 %s1684
        %v1686 = vstv %s1685
        %v1687 = vmul.f32 %v1679, %v1686
        %v1688 = vmul.f32 %v1680, %v1686
        %p1689 = scmp.lt.s32.totalorder %s27, 0
        %s1690 = scalar_select %p1689, 1, 0
        %s1691 = scvt.s32.f32 %s1690
        %v1692 = vstv %s1691
        %v1693 = vmul.f32 %v1681, %v1692
        %v1694 = vmul.f32 %v1682, %v1692
        %vm1695 = vcmask 516096
        %1696 = vst.msk [vmem:[#allocation2] sm:$0x1] %vm1695, 0.0
        %1697 = vst.msk [vmem:[#allocation2 + $0x18] sm:$0x1] %vm1695, 0.0
        %1698 = vst.msk [vmem:[#allocation2 + $0x30] sm:$0x1] %vm1695, 0.0
        %1699 = vst.msk [vmem:[#allocation2 + $0x48] sm:$0x1] %vm1695, 0.0
        %1700 = vst.msk [vmem:[#allocation2 + $0x60] sm:$0x1] %vm1695, 0.0
        %1701 = vst.msk [vmem:[#allocation2 + $0x78] sm:$0x1] %vm1695, 0.0
        %1702 = vst.msk [vmem:[#allocation2 + $0x90] sm:$0x1] %vm1695, 0.0
        %1703 = vst.msk [vmem:[#allocation2 + $0xa8] sm:$0x1] %vm1695, 0.0
        %1704 = vst.msk [vmem:[#allocation2 + $0xc0] sm:$0x1] %vm1695, 0.0
        %1705 = vst.msk [vmem:[#allocation2 + $0xd8] sm:$0x1] %vm1695, 0.0
        %1706 = vst.msk [vmem:[#allocation2 + $0xf0] sm:$0x1] %vm1695, 0.0
        %1707 = vst.msk [vmem:[#allocation2 + $0x108] sm:$0x1] %vm1695, 0.0
        %1708 = vst.msk [vmem:[#allocation2 + $0x120] sm:$0x1] %vm1695, 0.0
        %1709 = vst.msk [vmem:[#allocation2 + $0x138] sm:$0x1] %vm1695, 0.0
        %1710 = vst.msk [vmem:[#allocation2 + $0x150] sm:$0x1] %vm1695, 0.0
        %1711 = vst.msk [vmem:[#allocation2 + $0x168] sm:$0x1] %vm1695, 0.0
        %1712 = vst.msk [vmem:[#allocation2 + $0x180] sm:$0x1] %vm1695, 0.0
        %1713 = vst.msk [vmem:[#allocation2 + $0x198] sm:$0x1] %vm1695, 0.0
        %1714 = vst.msk [vmem:[#allocation2 + $0x11] sm:$0x1] %vm1695, 0.0
        %1715 = vst.msk [vmem:[#allocation2 + $0x29] sm:$0x1] %vm1695, 0.0
        %1716 = vst.msk [vmem:[#allocation2 + $0x41] sm:$0x1] %vm1695, 0.0
        %1717 = vst.msk [vmem:[#allocation2 + $0x59] sm:$0x1] %vm1695, 0.0
        %1718 = vst.msk [vmem:[#allocation2 + $0x71] sm:$0x1] %vm1695, 0.0
        %1719 = vst.msk [vmem:[#allocation2 + $0x89] sm:$0x1] %vm1695, 0.0
        %1720 = vst.msk [vmem:[#allocation2 + $0xa1] sm:$0x1] %vm1695, 0.0
        %1721 = vst.msk [vmem:[#allocation2 + $0xb9] sm:$0x1] %vm1695, 0.0
        %1722 = vst.msk [vmem:[#allocation2 + $0xd1] sm:$0x1] %vm1695, 0.0
        %1723 = vst.msk [vmem:[#allocation2 + $0xe9] sm:$0x1] %vm1695, 0.0
        %1724 = vst.msk [vmem:[#allocation2 + $0x101] sm:$0x1] %vm1695, 0.0
        %1725 = vst.msk [vmem:[#allocation2 + $0x119] sm:$0x1] %vm1695, 0.0
        %1726 = vst.msk [vmem:[#allocation2 + $0x131] sm:$0x1] %vm1695, 0.0
        %1727 = vst.msk [vmem:[#allocation2 + $0x149] sm:$0x1] %vm1695, 0.0
        %1728 = vst.msk [vmem:[#allocation2 + $0x161] sm:$0x1] %vm1695, 0.0
        %1729 = vst.msk [vmem:[#allocation2 + $0x179] sm:$0x1] %vm1695, 0.0
        %1730 = vst.msk [vmem:[#allocation2 + $0x191] sm:$0x1] %vm1695, 0.0
        %1731 = vst.msk [vmem:[#allocation2 + $0x1a9] sm:$0x1] %vm1695, 0.0
        %1732 = vst.msk [vmem:[#allocation2 + $0x1] sm:$0xff] %vm883, %v1687
        %1733 = vst.msk [vmem:[#allocation2 + $0x9] sm:$0xff] %vm883, %v1688
        %s1734 = scalar_lea.vmem [#allocation2], 408
        %1735 = vst.msk [vmem:[%s1734 + $0x1] sm:$0xff] %vm883, %v1693
        %1736 = vst.msk [vmem:[%s1734 + $0x9] sm:$0xff] %vm883, %v1694
        %s1737 = scalar_lea.vmem [#allocation2], 24
        %1738 = vst.msk [vmem:[%s1737 + $0x1] sm:$0xff] %vm883, %v1397
        %1739 = vst.msk [vmem:[%s1737 + $0x9] sm:$0xff] %vm883, %v1398
        %1740 = vst.msk [vmem:[%s1737 + $0x19] sm:$0xff] %vm883, %v1399
        %1741 = vst.msk [vmem:[%s1737 + $0x21] sm:$0xff] %vm883, %v1400
        %1742 = vst.msk [vmem:[%s1737 + $0x31] sm:$0xff] %vm883, %v1401
        %1743 = vst.msk [vmem:[%s1737 + $0x39] sm:$0xff] %vm883, %v1402
        %1744 = vst.msk [vmem:[%s1737 + $0x49] sm:$0xff] %vm883, %v1403
        %1745 = vst.msk [vmem:[%s1737 + $0x51] sm:$0xff] %vm883, %v1404
        %1746 = vst.msk [vmem:[%s1737 + $0x61] sm:$0xff] %vm883, %v1405
        %1747 = vst.msk [vmem:[%s1737 + $0x69] sm:$0xff] %vm883, %v1406
        %1748 = vst.msk [vmem:[%s1737 + $0x79] sm:$0xff] %vm883, %v1407
        %1749 = vst.msk [vmem:[%s1737 + $0x81] sm:$0xff] %vm883, %v1408
        %1750 = vst.msk [vmem:[%s1737 + $0x91] sm:$0xff] %vm883, %v1409
        %1751 = vst.msk [vmem:[%s1737 + $0x99] sm:$0xff] %vm883, %v1410
        %1752 = vst.msk [vmem:[%s1737 + $0xa9] sm:$0xff] %vm883, %v1411
        %1753 = vst.msk [vmem:[%s1737 + $0xb1] sm:$0xff] %vm883, %v1412
        %1754 = vst.msk [vmem:[%s1737 + $0xc1] sm:$0xff] %vm883, %v1413
        %1755 = vst.msk [vmem:[%s1737 + $0xc9] sm:$0xff] %vm883, %v1414
        %1756 = vst.msk [vmem:[%s1737 + $0xd9] sm:$0xff] %vm883, %v1415
        %1757 = vst.msk [vmem:[%s1737 + $0xe1] sm:$0xff] %vm883, %v1416
        %1758 = vst.msk [vmem:[%s1737 + $0xf1] sm:$0xff] %vm883, %v1417
        %1759 = vst.msk [vmem:[%s1737 + $0xf9] sm:$0xff] %vm883, %v1418
        %1760 = vst.msk [vmem:[%s1737 + $0x109] sm:$0xff] %vm883, %v1419
        %1761 = vst.msk [vmem:[%s1737 + $0x111] sm:$0xff] %vm883, %v1420
        %1762 = vst.msk [vmem:[%s1737 + $0x121] sm:$0xff] %vm883, %v1421
        %1763 = vst.msk [vmem:[%s1737 + $0x129] sm:$0xff] %vm883, %v1422
        %1764 = vst.msk [vmem:[%s1737 + $0x139] sm:$0xff] %vm883, %v1423
        %1765 = vst.msk [vmem:[%s1737 + $0x141] sm:$0xff] %vm883, %v1424
        %1766 = vst.msk [vmem:[%s1737 + $0x151] sm:$0xff] %vm883, %v1425
        %1767 = vst.msk [vmem:[%s1737 + $0x159] sm:$0xff] %vm883, %v1426
        %1768 = vst.msk [vmem:[%s1737 + $0x169] sm:$0xff] %vm883, %v1427
        %1769 = vst.msk [vmem:[%s1737 + $0x171] sm:$0xff] %vm883, %v1428
        %v1770 = vld [vmem:[#allocation2] sm:$0xff]
        %v1771 = vld [vmem:[#allocation2 + $0x8] sm:$0xff]
        %v1772 = vld [vmem:[#allocation2 + $0x18] sm:$0xff]
        %v1773 = vld [vmem:[#allocation2 + $0x20] sm:$0xff]
        %v1774 = vld [vmem:[#allocation2 + $0x30] sm:$0xff]
        %v1775 = vld [vmem:[#allocation2 + $0x38] sm:$0xff]
        %v1776 = vld [vmem:[#allocation2 + $0x48] sm:$0xff]
        %v1777 = vld [vmem:[#allocation2 + $0x50] sm:$0xff]
        %v1778 = vld [vmem:[#allocation2 + $0x60] sm:$0xff]
        %v1779 = vld [vmem:[#allocation2 + $0x68] sm:$0xff]
        %v1780 = vld [vmem:[#allocation2 + $0x78] sm:$0xff]
        %v1781 = vld [vmem:[#allocation2 + $0x80] sm:$0xff]
        %v1782 = vld [vmem:[#allocation2 + $0x90] sm:$0xff]
        %v1783 = vld [vmem:[#allocation2 + $0x98] sm:$0xff]
        %v1784 = vld [vmem:[#allocation2 + $0xa8] sm:$0xff]
        %v1785 = vld [vmem:[#allocation2 + $0xb0] sm:$0xff]
        %v1786 = vld [vmem:[#allocation2 + $0xc0] sm:$0xff]
        %v1787 = vld [vmem:[#allocation2 + $0xc8] sm:$0xff]
        %v1788 = vld [vmem:[#allocation2 + $0xd8] sm:$0xff]
        %v1789 = vld [vmem:[#allocation2 + $0xe0] sm:$0xff]
        %v1790 = vld [vmem:[#allocation2 + $0xf0] sm:$0xff]
        %v1791 = vld [vmem:[#allocation2 + $0xf8] sm:$0xff]
        %v1792 = vld [vmem:[#allocation2 + $0x108] sm:$0xff]
        %v1793 = vld [vmem:[#allocation2 + $0x110] sm:$0xff]
        %v1794 = vld [vmem:[#allocation2 + $0x120] sm:$0xff]
        %v1795 = vld [vmem:[#allocation2 + $0x128] sm:$0xff]
        %v1796 = vld [vmem:[#allocation2 + $0x138] sm:$0xff]
        %v1797 = vld [vmem:[#allocation2 + $0x140] sm:$0xff]
        %v1798 = vld [vmem:[#allocation2 + $0x150] sm:$0xff]
        %v1799 = vld [vmem:[#allocation2 + $0x158] sm:$0xff]
        %v1800 = vld [vmem:[#allocation2 + $0x168] sm:$0xff]
        %v1801 = vld [vmem:[#allocation2 + $0x170] sm:$0xff]
        %v1802 = vld [vmem:[#allocation2 + $0x1] sm:$0xff]
        %v1803 = vld [vmem:[#allocation2 + $0x9] sm:$0xff]
        %v1804 = vld [vmem:[#allocation2 + $0x19] sm:$0xff]
        %v1805 = vld [vmem:[#allocation2 + $0x21] sm:$0xff]
        %v1806 = vld [vmem:[#allocation2 + $0x31] sm:$0xff]
        %v1807 = vld [vmem:[#allocation2 + $0x39] sm:$0xff]
        %v1808 = vld [vmem:[#allocation2 + $0x49] sm:$0xff]
        %v1809 = vld [vmem:[#allocation2 + $0x51] sm:$0xff]
        %v1810 = vld [vmem:[#allocation2 + $0x61] sm:$0xff]
        %v1811 = vld [vmem:[#allocation2 + $0x69] sm:$0xff]
        %v1812 = vld [vmem:[#allocation2 + $0x79] sm:$0xff]
        %v1813 = vld [vmem:[#allocation2 + $0x81] sm:$0xff]
        %v1814 = vld [vmem:[#allocation2 + $0x91] sm:$0xff]
        %v1815 = vld [vmem:[#allocation2 + $0x99] sm:$0xff]
        %v1816 = vld [vmem:[#allocation2 + $0xa9] sm:$0xff]
        %v1817 = vld [vmem:[#allocation2 + $0xb1] sm:$0xff]
        %v1818 = vld [vmem:[#allocation2 + $0xc1] sm:$0xff]
        %v1819 = vld [vmem:[#allocation2 + $0xc9] sm:$0xff]
        %v1820 = vld [vmem:[#allocation2 + $0xd9] sm:$0xff]
        %v1821 = vld [vmem:[#allocation2 + $0xe1] sm:$0xff]
        %v1822 = vld [vmem:[#allocation2 + $0xf1] sm:$0xff]
        %v1823 = vld [vmem:[#allocation2 + $0xf9] sm:$0xff]
        %v1824 = vld [vmem:[#allocation2 + $0x109] sm:$0xff]
        %v1825 = vld [vmem:[#allocation2 + $0x111] sm:$0xff]
        %v1826 = vld [vmem:[#allocation2 + $0x121] sm:$0xff]
        %v1827 = vld [vmem:[#allocation2 + $0x129] sm:$0xff]
        %v1828 = vld [vmem:[#allocation2 + $0x139] sm:$0xff]
        %v1829 = vld [vmem:[#allocation2 + $0x141] sm:$0xff]
        %v1830 = vld [vmem:[#allocation2 + $0x151] sm:$0xff]
        %v1831 = vld [vmem:[#allocation2 + $0x159] sm:$0xff]
        %v1832 = vld [vmem:[#allocation2 + $0x169] sm:$0xff]
        %v1833 = vld [vmem:[#allocation2 + $0x171] sm:$0xff]
        %v1834 = vld [vmem:[#allocation2 + $0x2] sm:$0xff]
        %v1835 = vld [vmem:[#allocation2 + $0xa] sm:$0xff]
        %v1836 = vld [vmem:[#allocation2 + $0x1a] sm:$0xff]
        %v1837 = vld [vmem:[#allocation2 + $0x22] sm:$0xff]
        %v1838 = vld [vmem:[#allocation2 + $0x32] sm:$0xff]
        %v1839 = vld [vmem:[#allocation2 + $0x3a] sm:$0xff]
        %v1840 = vld [vmem:[#allocation2 + $0x4a] sm:$0xff]
        %v1841 = vld [vmem:[#allocation2 + $0x52] sm:$0xff]
        %v1842 = vld [vmem:[#allocation2 + $0x62] sm:$0xff]
        %v1843 = vld [vmem:[#allocation2 + $0x6a] sm:$0xff]
        %v1844 = vld [vmem:[#allocation2 + $0x7a] sm:$0xff]
        %v1845 = vld [vmem:[#allocation2 + $0x82] sm:$0xff]
        %v1846 = vld [vmem:[#allocation2 + $0x92] sm:$0xff]
        %v1847 = vld [vmem:[#allocation2 + $0x9a] sm:$0xff]
        %v1848 = vld [vmem:[#allocation2 + $0xaa] sm:$0xff]
        %v1849 = vld [vmem:[#allocation2 + $0xb2] sm:$0xff]
        %v1850 = vld [vmem:[#allocation2 + $0xc2] sm:$0xff]
        %v1851 = vld [vmem:[#allocation2 + $0xca] sm:$0xff]
        %v1852 = vld [vmem:[#allocation2 + $0xda] sm:$0xff]
        %v1853 = vld [vmem:[#allocation2 + $0xe2] sm:$0xff]
        %v1854 = vld [vmem:[#allocation2 + $0xf2] sm:$0xff]
        %v1855 = vld [vmem:[#allocation2 + $0xfa] sm:$0xff]
        %v1856 = vld [vmem:[#allocation2 + $0x10a] sm:$0xff]
        %v1857 = vld [vmem:[#allocation2 + $0x112] sm:$0xff]
        %v1858 = vld [vmem:[#allocation2 + $0x122] sm:$0xff]
        %v1859 = vld [vmem:[#allocation2 + $0x12a] sm:$0xff]
        %v1860 = vld [vmem:[#allocation2 + $0x13a] sm:$0xff]
        %v1861 = vld [vmem:[#allocation2 + $0x142] sm:$0xff]
        %v1862 = vld [vmem:[#allocation2 + $0x152] sm:$0xff]
        %v1863 = vld [vmem:[#allocation2 + $0x15a] sm:$0xff]
        %v1864 = vld [vmem:[#allocation2 + $0x16a] sm:$0xff]
        %v1865 = vld [vmem:[#allocation2 + $0x172] sm:$0xff]
        %v1866 = vld [vmem:[%s1737] sm:$0xff]
        %v1867 = vld [vmem:[%s1737 + $0x8] sm:$0xff]
        %v1868 = vld [vmem:[%s1737 + $0x18] sm:$0xff]
        %v1869 = vld [vmem:[%s1737 + $0x20] sm:$0xff]
        %v1870 = vld [vmem:[%s1737 + $0x30] sm:$0xff]
        %v1871 = vld [vmem:[%s1737 + $0x38] sm:$0xff]
        %v1872 = vld [vmem:[%s1737 + $0x48] sm:$0xff]
        %v1873 = vld [vmem:[%s1737 + $0x50] sm:$0xff]
        %v1874 = vld [vmem:[%s1737 + $0x60] sm:$0xff]
        %v1875 = vld [vmem:[%s1737 + $0x68] sm:$0xff]
        %v1876 = vld [vmem:[%s1737 + $0x78] sm:$0xff]
        %v1877 = vld [vmem:[%s1737 + $0x80] sm:$0xff]
        %v1878 = vld [vmem:[%s1737 + $0x90] sm:$0xff]
        %v1879 = vld [vmem:[%s1737 + $0x98] sm:$0xff]
        %v1880 = vld [vmem:[%s1737 + $0xa8] sm:$0xff]
        %v1881 = vld [vmem:[%s1737 + $0xb0] sm:$0xff]
        %v1882 = vld [vmem:[%s1737 + $0xc0] sm:$0xff]
        %v1883 = vld [vmem:[%s1737 + $0xc8] sm:$0xff]
        %v1884 = vld [vmem:[%s1737 + $0xd8] sm:$0xff]
        %v1885 = vld [vmem:[%s1737 + $0xe0] sm:$0xff]
        %v1886 = vld [vmem:[%s1737 + $0xf0] sm:$0xff]
        %v1887 = vld [vmem:[%s1737 + $0xf8] sm:$0xff]
        %v1888 = vld [vmem:[%s1737 + $0x108] sm:$0xff]
        %v1889 = vld [vmem:[%s1737 + $0x110] sm:$0xff]
        %v1890 = vld [vmem:[%s1737 + $0x120] sm:$0xff]
        %v1891 = vld [vmem:[%s1737 + $0x128] sm:$0xff]
        %v1892 = vld [vmem:[%s1737 + $0x138] sm:$0xff]
        %v1893 = vld [vmem:[%s1737 + $0x140] sm:$0xff]
        %v1894 = vld [vmem:[%s1737 + $0x150] sm:$0xff]
        %v1895 = vld [vmem:[%s1737 + $0x158] sm:$0xff]
        %v1896 = vld [vmem:[%s1737 + $0x168] sm:$0xff]
        %v1897 = vld [vmem:[%s1737 + $0x170] sm:$0xff]
        %v1898 = vld [vmem:[%s1737 + $0x1] sm:$0xff]
        %v1899 = vld [vmem:[%s1737 + $0x9] sm:$0xff]
        %v1900 = vld [vmem:[%s1737 + $0x19] sm:$0xff]
        %v1901 = vld [vmem:[%s1737 + $0x21] sm:$0xff]
        %v1902 = vld [vmem:[%s1737 + $0x31] sm:$0xff]
        %v1903 = vld [vmem:[%s1737 + $0x39] sm:$0xff]
        %v1904 = vld [vmem:[%s1737 + $0x49] sm:$0xff]
        %v1905 = vld [vmem:[%s1737 + $0x51] sm:$0xff]
        %v1906 = vld [vmem:[%s1737 + $0x61] sm:$0xff]
        %v1907 = vld [vmem:[%s1737 + $0x69] sm:$0xff]
        %v1908 = vld [vmem:[%s1737 + $0x79] sm:$0xff]
        %v1909 = vld [vmem:[%s1737 + $0x81] sm:$0xff]
        %v1910 = vld [vmem:[%s1737 + $0x91] sm:$0xff]
        %v1911 = vld [vmem:[%s1737 + $0x99] sm:$0xff]
        %v1912 = vld [vmem:[%s1737 + $0xa9] sm:$0xff]
        %v1913 = vld [vmem:[%s1737 + $0xb1] sm:$0xff]
        %v1914 = vld [vmem:[%s1737 + $0xc1] sm:$0xff]
        %v1915 = vld [vmem:[%s1737 + $0xc9] sm:$0xff]
        %v1916 = vld [vmem:[%s1737 + $0xd9] sm:$0xff]
        %v1917 = vld [vmem:[%s1737 + $0xe1] sm:$0xff]
        %v1918 = vld [vmem:[%s1737 + $0xf1] sm:$0xff]
        %v1919 = vld [vmem:[%s1737 + $0xf9] sm:$0xff]
        %v1920 = vld [vmem:[%s1737 + $0x109] sm:$0xff]
        %v1921 = vld [vmem:[%s1737 + $0x111] sm:$0xff]
        %v1922 = vld [vmem:[%s1737 + $0x121] sm:$0xff]
        %v1923 = vld [vmem:[%s1737 + $0x129] sm:$0xff]
        %v1924 = vld [vmem:[%s1737 + $0x139] sm:$0xff]
        %v1925 = vld [vmem:[%s1737 + $0x141] sm:$0xff]
        %v1926 = vld [vmem:[%s1737 + $0x151] sm:$0xff]
        %v1927 = vld [vmem:[%s1737 + $0x159] sm:$0xff]
        %v1928 = vld [vmem:[%s1737 + $0x169] sm:$0xff]
        %v1929 = vld [vmem:[%s1737 + $0x171] sm:$0xff]
        %v1930 = vld [vmem:[%s1737 + $0x2] sm:$0xff]
        %v1931 = vld [vmem:[%s1737 + $0xa] sm:$0xff]
        %v1932 = vld [vmem:[%s1737 + $0x1a] sm:$0xff]
        %v1933 = vld [vmem:[%s1737 + $0x22] sm:$0xff]
        %v1934 = vld [vmem:[%s1737 + $0x32] sm:$0xff]
        %v1935 = vld [vmem:[%s1737 + $0x3a] sm:$0xff]
        %v1936 = vld [vmem:[%s1737 + $0x4a] sm:$0xff]
        %v1937 = vld [vmem:[%s1737 + $0x52] sm:$0xff]
        %v1938 = vld [vmem:[%s1737 + $0x62] sm:$0xff]
        %v1939 = vld [vmem:[%s1737 + $0x6a] sm:$0xff]
        %v1940 = vld [vmem:[%s1737 + $0x7a] sm:$0xff]
        %v1941 = vld [vmem:[%s1737 + $0x82] sm:$0xff]
        %v1942 = vld [vmem:[%s1737 + $0x92] sm:$0xff]
        %v1943 = vld [vmem:[%s1737 + $0x9a] sm:$0xff]
        %v1944 = vld [vmem:[%s1737 + $0xaa] sm:$0xff]
        %v1945 = vld [vmem:[%s1737 + $0xb2] sm:$0xff]
        %v1946 = vld [vmem:[%s1737 + $0xc2] sm:$0xff]
        %v1947 = vld [vmem:[%s1737 + $0xca] sm:$0xff]
        %v1948 = vld [vmem:[%s1737 + $0xda] sm:$0xff]
        %v1949 = vld [vmem:[%s1737 + $0xe2] sm:$0xff]
        %v1950 = vld [vmem:[%s1737 + $0xf2] sm:$0xff]
        %v1951 = vld [vmem:[%s1737 + $0xfa] sm:$0xff]
        %v1952 = vld [vmem:[%s1737 + $0x10a] sm:$0xff]
        %v1953 = vld [vmem:[%s1737 + $0x112] sm:$0xff]
        %v1954 = vld [vmem:[%s1737 + $0x122] sm:$0xff]
        %v1955 = vld [vmem:[%s1737 + $0x12a] sm:$0xff]
        %v1956 = vld [vmem:[%s1737 + $0x13a] sm:$0xff]
        %v1957 = vld [vmem:[%s1737 + $0x142] sm:$0xff]
        %v1958 = vld [vmem:[%s1737 + $0x152] sm:$0xff]
        %v1959 = vld [vmem:[%s1737 + $0x15a] sm:$0xff]
        %v1960 = vld [vmem:[%s1737 + $0x16a] sm:$0xff]
        %v1961 = vld [vmem:[%s1737 + $0x172] sm:$0xff]
        %s1962 = scalar_lea.vmem [#allocation2], 48
        %v1963 = vld [vmem:[%s1962] sm:$0xff]
        %v1964 = vld [vmem:[%s1962 + $0x8] sm:$0xff]
        %v1965 = vld [vmem:[%s1962 + $0x18] sm:$0xff]
        %v1966 = vld [vmem:[%s1962 + $0x20] sm:$0xff]
        %v1967 = vld [vmem:[%s1962 + $0x30] sm:$0xff]
        %v1968 = vld [vmem:[%s1962 + $0x38] sm:$0xff]
        %v1969 = vld [vmem:[%s1962 + $0x48] sm:$0xff]
        %v1970 = vld [vmem:[%s1962 + $0x50] sm:$0xff]
        %v1971 = vld [vmem:[%s1962 + $0x60] sm:$0xff]
        %v1972 = vld [vmem:[%s1962 + $0x68] sm:$0xff]
        %v1973 = vld [vmem:[%s1962 + $0x78] sm:$0xff]
        %v1974 = vld [vmem:[%s1962 + $0x80] sm:$0xff]
        %v1975 = vld [vmem:[%s1962 + $0x90] sm:$0xff]
        %v1976 = vld [vmem:[%s1962 + $0x98] sm:$0xff]
        %v1977 = vld [vmem:[%s1962 + $0xa8] sm:$0xff]
        %v1978 = vld [vmem:[%s1962 + $0xb0] sm:$0xff]
        %v1979 = vld [vmem:[%s1962 + $0xc0] sm:$0xff]
        %v1980 = vld [vmem:[%s1962 + $0xc8] sm:$0xff]
        %v1981 = vld [vmem:[%s1962 + $0xd8] sm:$0xff]
        %v1982 = vld [vmem:[%s1962 + $0xe0] sm:$0xff]
        %v1983 = vld [vmem:[%s1962 + $0xf0] sm:$0xff]
        %v1984 = vld [vmem:[%s1962 + $0xf8] sm:$0xff]
        %v1985 = vld [vmem:[%s1962 + $0x108] sm:$0xff]
        %v1986 = vld [vmem:[%s1962 + $0x110] sm:$0xff]
        %v1987 = vld [vmem:[%s1962 + $0x120] sm:$0xff]
        %v1988 = vld [vmem:[%s1962 + $0x128] sm:$0xff]
        %v1989 = vld [vmem:[%s1962 + $0x138] sm:$0xff]
        %v1990 = vld [vmem:[%s1962 + $0x140] sm:$0xff]
        %v1991 = vld [vmem:[%s1962 + $0x150] sm:$0xff]
        %v1992 = vld [vmem:[%s1962 + $0x158] sm:$0xff]
        %v1993 = vld [vmem:[%s1962 + $0x168] sm:$0xff]
        %v1994 = vld [vmem:[%s1962 + $0x170] sm:$0xff]
        %v1995 = vld [vmem:[%s1962 + $0x1] sm:$0xff]
        %v1996 = vld [vmem:[%s1962 + $0x9] sm:$0xff]
        %v1997 = vld [vmem:[%s1962 + $0x19] sm:$0xff]
        %v1998 = vld [vmem:[%s1962 + $0x21] sm:$0xff]
        %v1999 = vld [vmem:[%s1962 + $0x31] sm:$0xff]
        %v2000 = vld [vmem:[%s1962 + $0x39] sm:$0xff]
        %v2001 = vld [vmem:[%s1962 + $0x49] sm:$0xff]
        %v2002 = vld [vmem:[%s1962 + $0x51] sm:$0xff]
        %v2003 = vld [vmem:[%s1962 + $0x61] sm:$0xff]
        %v2004 = vld [vmem:[%s1962 + $0x69] sm:$0xff]
        %v2005 = vld [vmem:[%s1962 + $0x79] sm:$0xff]
        %v2006 = vld [vmem:[%s1962 + $0x81] sm:$0xff]
        %v2007 = vld [vmem:[%s1962 + $0x91] sm:$0xff]
        %v2008 = vld [vmem:[%s1962 + $0x99] sm:$0xff]
        %v2009 = vld [vmem:[%s1962 + $0xa9] sm:$0xff]
        %v2010 = vld [vmem:[%s1962 + $0xb1] sm:$0xff]
        %v2011 = vld [vmem:[%s1962 + $0xc1] sm:$0xff]
        %v2012 = vld [vmem:[%s1962 + $0xc9] sm:$0xff]
        %v2013 = vld [vmem:[%s1962 + $0xd9] sm:$0xff]
        %v2014 = vld [vmem:[%s1962 + $0xe1] sm:$0xff]
        %v2015 = vld [vmem:[%s1962 + $0xf1] sm:$0xff]
        %v2016 = vld [vmem:[%s1962 + $0xf9] sm:$0xff]
        %v2017 = vld [vmem:[%s1962 + $0x109] sm:$0xff]
        %v2018 = vld [vmem:[%s1962 + $0x111] sm:$0xff]
        %v2019 = vld [vmem:[%s1962 + $0x121] sm:$0xff]
        %v2020 = vld [vmem:[%s1962 + $0x129] sm:$0xff]
        %v2021 = vld [vmem:[%s1962 + $0x139] sm:$0xff]
        %v2022 = vld [vmem:[%s1962 + $0x141] sm:$0xff]
        %v2023 = vld [vmem:[%s1962 + $0x151] sm:$0xff]
        %v2024 = vld [vmem:[%s1962 + $0x159] sm:$0xff]
        %v2025 = vld [vmem:[%s1962 + $0x169] sm:$0xff]
        %v2026 = vld [vmem:[%s1962 + $0x171] sm:$0xff]
        %v2027 = vld [vmem:[%s1962 + $0x2] sm:$0xff]
        %v2028 = vld [vmem:[%s1962 + $0xa] sm:$0xff]
        %v2029 = vld [vmem:[%s1962 + $0x1a] sm:$0xff]
        %v2030 = vld [vmem:[%s1962 + $0x22] sm:$0xff]
        %v2031 = vld [vmem:[%s1962 + $0x32] sm:$0xff]
        %v2032 = vld [vmem:[%s1962 + $0x3a] sm:$0xff]
        %v2033 = vld [vmem:[%s1962 + $0x4a] sm:$0xff]
        %v2034 = vld [vmem:[%s1962 + $0x52] sm:$0xff]
        %v2035 = vld [vmem:[%s1962 + $0x62] sm:$0xff]
        %v2036 = vld [vmem:[%s1962 + $0x6a] sm:$0xff]
        %v2037 = vld [vmem:[%s1962 + $0x7a] sm:$0xff]
        %v2038 = vld [vmem:[%s1962 + $0x82] sm:$0xff]
        %v2039 = vld [vmem:[%s1962 + $0x92] sm:$0xff]
        %v2040 = vld [vmem:[%s1962 + $0x9a] sm:$0xff]
        %v2041 = vld [vmem:[%s1962 + $0xaa] sm:$0xff]
        %v2042 = vld [vmem:[%s1962 + $0xb2] sm:$0xff]
        %v2043 = vld [vmem:[%s1962 + $0xc2] sm:$0xff]
        %v2044 = vld [vmem:[%s1962 + $0xca] sm:$0xff]
        %v2045 = vld [vmem:[%s1962 + $0xda] sm:$0xff]
        %v2046 = vld [vmem:[%s1962 + $0xe2] sm:$0xff]
        %v2047 = vld [vmem:[%s1962 + $0xf2] sm:$0xff]
        %v2048 = vld [vmem:[%s1962 + $0xfa] sm:$0xff]
        %v2049 = vld [vmem:[%s1962 + $0x10a] sm:$0xff]
        %v2050 = vld [vmem:[%s1962 + $0x112] sm:$0xff]
        %v2051 = vld [vmem:[%s1962 + $0x122] sm:$0xff]
        %v2052 = vld [vmem:[%s1962 + $0x12a] sm:$0xff]
        %v2053 = vld [vmem:[%s1962 + $0x13a] sm:$0xff]
        %v2054 = vld [vmem:[%s1962 + $0x142] sm:$0xff]
        %v2055 = vld [vmem:[%s1962 + $0x152] sm:$0xff]
        %v2056 = vld [vmem:[%s1962 + $0x15a] sm:$0xff]
        %v2057 = vld [vmem:[%s1962 + $0x16a] sm:$0xff]
        %v2058 = vld [vmem:[%s1962 + $0x172] sm:$0xff]
        %2091 = vrot.lane.b32.xlu0 %v1802, 64
        %v2092 = vpop.permute.xlu0 %2091
        %2093 = vrot.lane.b32.xlu0 %v1803, 64
        %v2094 = vpop.permute.xlu0 %2093
        %2095 = vrot.lane.b32.xlu0 %v1804, 64
        %v2096 = vpop.permute.xlu0 %2095
        %2097 = vrot.lane.b32.xlu0 %v1805, 64
        %v2098 = vpop.permute.xlu0 %2097
        %2099 = vrot.lane.b32.xlu0 %v1806, 64
        %v2100 = vpop.permute.xlu0 %2099
        %2101 = vrot.lane.b32.xlu0 %v1807, 64
        %v2102 = vpop.permute.xlu0 %2101
        %2103 = vrot.lane.b32.xlu0 %v1808, 64
        %v2104 = vpop.permute.xlu0 %2103
        %2105 = vrot.lane.b32.xlu0 %v1809, 64
        %v2106 = vpop.permute.xlu0 %2105
        %2107 = vrot.lane.b32.xlu0 %v1810, 64
        %v2108 = vpop.permute.xlu0 %2107
        %2109 = vrot.lane.b32.xlu0 %v1811, 64
        %v2110 = vpop.permute.xlu0 %2109
        %2111 = vrot.lane.b32.xlu0 %v1812, 64
        %v2112 = vpop.permute.xlu0 %2111
        %2113 = vrot.lane.b32.xlu0 %v1813, 64
        %v2114 = vpop.permute.xlu0 %2113
        %2115 = vrot.lane.b32.xlu0 %v1814, 64
        %v2116 = vpop.permute.xlu0 %2115
        %2117 = vrot.lane.b32.xlu0 %v1815, 64
        %v2118 = vpop.permute.xlu0 %2117
        %2119 = vrot.lane.b32.xlu0 %v1816, 64
        %v2120 = vpop.permute.xlu0 %2119
        %2121 = vrot.lane.b32.xlu0 %v1817, 64
        %v2122 = vpop.permute.xlu0 %2121
        %2123 = vrot.lane.b32.xlu0 %v1818, 64
        %v2124 = vpop.permute.xlu0 %2123
        %2125 = vrot.lane.b32.xlu0 %v1819, 64
        %v2126 = vpop.permute.xlu0 %2125
        %2127 = vrot.lane.b32.xlu0 %v1820, 64
        %v2128 = vpop.permute.xlu0 %2127
        %2129 = vrot.lane.b32.xlu0 %v1821, 64
        %v2130 = vpop.permute.xlu0 %2129
        %2131 = vrot.lane.b32.xlu0 %v1822, 64
        %v2132 = vpop.permute.xlu0 %2131
        %2133 = vrot.lane.b32.xlu0 %v1823, 64
        %v2134 = vpop.permute.xlu0 %2133
        %2135 = vrot.lane.b32.xlu0 %v1824, 64
        %v2136 = vpop.permute.xlu0 %2135
        %2137 = vrot.lane.b32.xlu0 %v1825, 64
        %v2138 = vpop.permute.xlu0 %2137
        %2139 = vrot.lane.b32.xlu0 %v1826, 64
        %v2140 = vpop.permute.xlu0 %2139
        %2141 = vrot.lane.b32.xlu0 %v1827, 64
        %v2142 = vpop.permute.xlu0 %2141
        %2143 = vrot.lane.b32.xlu0 %v1828, 64
        %v2144 = vpop.permute.xlu0 %2143
        %2145 = vrot.lane.b32.xlu0 %v1829, 64
        %v2146 = vpop.permute.xlu0 %2145
        %2147 = vrot.lane.b32.xlu0 %v1830, 64
        %v2148 = vpop.permute.xlu0 %2147
        %2149 = vrot.lane.b32.xlu0 %v1831, 64
        %v2150 = vpop.permute.xlu0 %2149
        %2151 = vrot.lane.b32.xlu0 %v1832, 64
        %v2152 = vpop.permute.xlu0 %2151
        %2153 = vrot.lane.b32.xlu0 %v1833, 64
        %v2154 = vpop.permute.xlu0 %2153
        %2219 = vrot.lane.b32.xlu0 %v1866, 64
        %v2220 = vpop.permute.xlu0 %2219
        %2221 = vrot.lane.b32.xlu0 %v1867, 64
        %v2222 = vpop.permute.xlu0 %2221
        %2223 = vrot.lane.b32.xlu0 %v1868, 64
        %v2224 = vpop.permute.xlu0 %2223
        %2225 = vrot.lane.b32.xlu0 %v1869, 64
        %v2226 = vpop.permute.xlu0 %2225
        %2227 = vrot.lane.b32.xlu0 %v1870, 64
        %v2228 = vpop.permute.xlu0 %2227
        %2229 = vrot.lane.b32.xlu0 %v1871, 64
        %v2230 = vpop.permute.xlu0 %2229
        %2231 = vrot.lane.b32.xlu0 %v1872, 64
        %v2232 = vpop.permute.xlu0 %2231
        %2233 = vrot.lane.b32.xlu0 %v1873, 64
        %v2234 = vpop.permute.xlu0 %2233
        %2235 = vrot.lane.b32.xlu0 %v1874, 64
        %v2236 = vpop.permute.xlu0 %2235
        %2237 = vrot.lane.b32.xlu0 %v1875, 64
        %v2238 = vpop.permute.xlu0 %2237
        %2239 = vrot.lane.b32.xlu0 %v1876, 64
        %v2240 = vpop.permute.xlu0 %2239
        %2241 = vrot.lane.b32.xlu0 %v1877, 64
        %v2242 = vpop.permute.xlu0 %2241
        %2243 = vrot.lane.b32.xlu0 %v1878, 64
        %v2244 = vpop.permute.xlu0 %2243
        %2245 = vrot.lane.b32.xlu0 %v1879, 64
        %v2246 = vpop.permute.xlu0 %2245
        %2247 = vrot.lane.b32.xlu0 %v1880, 64
        %v2248 = vpop.permute.xlu0 %2247
        %2249 = vrot.lane.b32.xlu0 %v1881, 64
        %v2250 = vpop.permute.xlu0 %2249
        %2251 = vrot.lane.b32.xlu0 %v1882, 64
        %v2252 = vpop.permute.xlu0 %2251
        %2253 = vrot.lane.b32.xlu0 %v1883, 64
        %v2254 = vpop.permute.xlu0 %2253
        %2255 = vrot.lane.b32.xlu0 %v1884, 64
        %v2256 = vpop.permute.xlu0 %2255
        %2257 = vrot.lane.b32.xlu0 %v1885, 64
        %v2258 = vpop.permute.xlu0 %2257
        %2259 = vrot.lane.b32.xlu0 %v1886, 64
        %v2260 = vpop.permute.xlu0 %2259
        %2261 = vrot.lane.b32.xlu0 %v1887, 64
        %v2262 = vpop.permute.xlu0 %2261
        %2263 = vrot.lane.b32.xlu0 %v1888, 64
        %v2264 = vpop.permute.xlu0 %2263
        %2265 = vrot.lane.b32.xlu0 %v1889, 64
        %v2266 = vpop.permute.xlu0 %2265
        %2267 = vrot.lane.b32.xlu0 %v1890, 64
        %v2268 = vpop.permute.xlu0 %2267
        %2269 = vrot.lane.b32.xlu0 %v1891, 64
        %v2270 = vpop.permute.xlu0 %2269
        %2271 = vrot.lane.b32.xlu0 %v1892, 64
        %v2272 = vpop.permute.xlu0 %2271
        %2273 = vrot.lane.b32.xlu0 %v1893, 64
        %v2274 = vpop.permute.xlu0 %2273
        %2275 = vrot.lane.b32.xlu0 %v1894, 64
        %v2276 = vpop.permute.xlu0 %2275
        %2277 = vrot.lane.b32.xlu0 %v1895, 64
        %v2278 = vpop.permute.xlu0 %2277
        %2279 = vrot.lane.b32.xlu0 %v1896, 64
        %v2280 = vpop.permute.xlu0 %2279
        %2281 = vrot.lane.b32.xlu0 %v1897, 64
        %v2282 = vpop.permute.xlu0 %2281
        %2347 = vrot.lane.b32.xlu0 %v1930, 64
        %v2348 = vpop.permute.xlu0 %2347
        %2349 = vrot.lane.b32.xlu0 %v1931, 64
        %v2350 = vpop.permute.xlu0 %2349
        %2351 = vrot.lane.b32.xlu0 %v1932, 64
        %v2352 = vpop.permute.xlu0 %2351
        %2353 = vrot.lane.b32.xlu0 %v1933, 64
        %v2354 = vpop.permute.xlu0 %2353
        %2355 = vrot.lane.b32.xlu0 %v1934, 64
        %v2356 = vpop.permute.xlu0 %2355
        %2357 = vrot.lane.b32.xlu0 %v1935, 64
        %v2358 = vpop.permute.xlu0 %2357
        %2359 = vrot.lane.b32.xlu0 %v1936, 64
        %v2360 = vpop.permute.xlu0 %2359
        %2361 = vrot.lane.b32.xlu0 %v1937, 64
        %v2362 = vpop.permute.xlu0 %2361
        %2363 = vrot.lane.b32.xlu0 %v1938, 64
        %v2364 = vpop.permute.xlu0 %2363
        %2365 = vrot.lane.b32.xlu0 %v1939, 64
        %v2366 = vpop.permute.xlu0 %2365
        %2367 = vrot.lane.b32.xlu0 %v1940, 64
        %v2368 = vpop.permute.xlu0 %2367
        %2369 = vrot.lane.b32.xlu0 %v1941, 64
        %v2370 = vpop.permute.xlu0 %2369
        %2371 = vrot.lane.b32.xlu0 %v1942, 64
        %v2372 = vpop.permute.xlu0 %2371
        %2373 = vrot.lane.b32.xlu0 %v1943, 64
        %v2374 = vpop.permute.xlu0 %2373
        %2375 = vrot.lane.b32.xlu0 %v1944, 64
        %v2376 = vpop.permute.xlu0 %2375
        %2377 = vrot.lane.b32.xlu0 %v1945, 64
        %v2378 = vpop.permute.xlu0 %2377
        %2379 = vrot.lane.b32.xlu0 %v1946, 64
        %v2380 = vpop.permute.xlu0 %2379
        %2381 = vrot.lane.b32.xlu0 %v1947, 64
        %v2382 = vpop.permute.xlu0 %2381
        %2383 = vrot.lane.b32.xlu0 %v1948, 64
        %v2384 = vpop.permute.xlu0 %2383
        %2385 = vrot.lane.b32.xlu0 %v1949, 64
        %v2386 = vpop.permute.xlu0 %2385
        %2387 = vrot.lane.b32.xlu0 %v1950, 64
        %v2388 = vpop.permute.xlu0 %2387
        %2389 = vrot.lane.b32.xlu0 %v1951, 64
        %v2390 = vpop.permute.xlu0 %2389
        %2391 = vrot.lane.b32.xlu0 %v1952, 64
        %v2392 = vpop.permute.xlu0 %2391
        %2393 = vrot.lane.b32.xlu0 %v1953, 64
        %v2394 = vpop.permute.xlu0 %2393
        %2395 = vrot.lane.b32.xlu0 %v1954, 64
        %v2396 = vpop.permute.xlu0 %2395
        %2397 = vrot.lane.b32.xlu0 %v1955, 64
        %v2398 = vpop.permute.xlu0 %2397
        %2399 = vrot.lane.b32.xlu0 %v1956, 64
        %v2400 = vpop.permute.xlu0 %2399
        %2401 = vrot.lane.b32.xlu0 %v1957, 64
        %v2402 = vpop.permute.xlu0 %2401
        %2403 = vrot.lane.b32.xlu0 %v1958, 64
        %v2404 = vpop.permute.xlu0 %2403
        %2405 = vrot.lane.b32.xlu0 %v1959, 64
        %v2406 = vpop.permute.xlu0 %2405
        %2407 = vrot.lane.b32.xlu0 %v1960, 64
        %v2408 = vpop.permute.xlu0 %2407
        %2409 = vrot.lane.b32.xlu0 %v1961, 64
        %v2410 = vpop.permute.xlu0 %2409
        %2475 = vrot.lane.b32.xlu0 %v1995, 64
        %v2476 = vpop.permute.xlu0 %2475
        %2477 = vrot.lane.b32.xlu0 %v1996, 64
        %v2478 = vpop.permute.xlu0 %2477
        %2479 = vrot.lane.b32.xlu0 %v1997, 64
        %v2480 = vpop.permute.xlu0 %2479
        %2481 = vrot.lane.b32.xlu0 %v1998, 64
        %v2482 = vpop.permute.xlu0 %2481
        %2483 = vrot.lane.b32.xlu0 %v1999, 64
        %v2484 = vpop.permute.xlu0 %2483
        %2485 = vrot.lane.b32.xlu0 %v2000, 64
        %v2486 = vpop.permute.xlu0 %2485
        %2487 = vrot.lane.b32.xlu0 %v2001, 64
        %v2488 = vpop.permute.xlu0 %2487
        %2489 = vrot.lane.b32.xlu0 %v2002, 64
        %v2490 = vpop.permute.xlu0 %2489
        %2491 = vrot.lane.b32.xlu0 %v2003, 64
        %v2492 = vpop.permute.xlu0 %2491
        %2493 = vrot.lane.b32.xlu0 %v2004, 64
        %v2494 = vpop.permute.xlu0 %2493
        %2495 = vrot.lane.b32.xlu0 %v2005, 64
        %v2496 = vpop.permute.xlu0 %2495
        %2497 = vrot.lane.b32.xlu0 %v2006, 64
        %v2498 = vpop.permute.xlu0 %2497
        %2499 = vrot.lane.b32.xlu0 %v2007, 64
        %v2500 = vpop.permute.xlu0 %2499
        %2501 = vrot.lane.b32.xlu0 %v2008, 64
        %v2502 = vpop.permute.xlu0 %2501
        %2503 = vrot.lane.b32.xlu0 %v2009, 64
        %v2504 = vpop.permute.xlu0 %2503
        %2505 = vrot.lane.b32.xlu0 %v2010, 64
        %v2506 = vpop.permute.xlu0 %2505
        %2507 = vrot.lane.b32.xlu0 %v2011, 64
        %v2508 = vpop.permute.xlu0 %2507
        %2509 = vrot.lane.b32.xlu0 %v2012, 64
        %v2510 = vpop.permute.xlu0 %2509
        %2511 = vrot.lane.b32.xlu0 %v2013, 64
        %v2512 = vpop.permute.xlu0 %2511
        %2513 = vrot.lane.b32.xlu0 %v2014, 64
        %v2514 = vpop.permute.xlu0 %2513
        %2515 = vrot.lane.b32.xlu0 %v2015, 64
        %v2516 = vpop.permute.xlu0 %2515
        %2517 = vrot.lane.b32.xlu0 %v2016, 64
        %v2518 = vpop.permute.xlu0 %2517
        %2519 = vrot.lane.b32.xlu0 %v2017, 64
        %v2520 = vpop.permute.xlu0 %2519
        %2521 = vrot.lane.b32.xlu0 %v2018, 64
        %v2522 = vpop.permute.xlu0 %2521
        %2523 = vrot.lane.b32.xlu0 %v2019, 64
        %v2524 = vpop.permute.xlu0 %2523
        %2525 = vrot.lane.b32.xlu0 %v2020, 64
        %v2526 = vpop.permute.xlu0 %2525
        %2527 = vrot.lane.b32.xlu0 %v2021, 64
        %v2528 = vpop.permute.xlu0 %2527
        %2529 = vrot.lane.b32.xlu0 %v2022, 64
        %v2530 = vpop.permute.xlu0 %2529
        %2531 = vrot.lane.b32.xlu0 %v2023, 64
        %v2532 = vpop.permute.xlu0 %2531
        %2533 = vrot.lane.b32.xlu0 %v2024, 64
        %v2534 = vpop.permute.xlu0 %2533
        %2535 = vrot.lane.b32.xlu0 %v2025, 64
        %v2536 = vpop.permute.xlu0 %2535
        %2537 = vrot.lane.b32.xlu0 %v2026, 64
        %v2538 = vpop.permute.xlu0 %2537
        %v2571 = vsel %vm883, %v1770, %v2092
        %v2572 = vsel %vm883, %v1771, %v2094
        %v2573 = vsel %vm883, %v1772, %v2096
        %v2574 = vsel %vm883, %v1773, %v2098
        %v2575 = vsel %vm883, %v1774, %v2100
        %v2576 = vsel %vm883, %v1775, %v2102
        %v2577 = vsel %vm883, %v1776, %v2104
        %v2578 = vsel %vm883, %v1777, %v2106
        %v2579 = vsel %vm883, %v1778, %v2108
        %v2580 = vsel %vm883, %v1779, %v2110
        %v2581 = vsel %vm883, %v1780, %v2112
        %v2582 = vsel %vm883, %v1781, %v2114
        %v2583 = vsel %vm883, %v1782, %v2116
        %v2584 = vsel %vm883, %v1783, %v2118
        %v2585 = vsel %vm883, %v1784, %v2120
        %v2586 = vsel %vm883, %v1785, %v2122
        %v2587 = vsel %vm883, %v1786, %v2124
        %v2588 = vsel %vm883, %v1787, %v2126
        %v2589 = vsel %vm883, %v1788, %v2128
        %v2590 = vsel %vm883, %v1789, %v2130
        %v2591 = vsel %vm883, %v1790, %v2132
        %v2592 = vsel %vm883, %v1791, %v2134
        %v2593 = vsel %vm883, %v1792, %v2136
        %v2594 = vsel %vm883, %v1793, %v2138
        %v2595 = vsel %vm883, %v1794, %v2140
        %v2596 = vsel %vm883, %v1795, %v2142
        %v2597 = vsel %vm883, %v1796, %v2144
        %v2598 = vsel %vm883, %v1797, %v2146
        %v2599 = vsel %vm883, %v1798, %v2148
        %v2600 = vsel %vm883, %v1799, %v2150
        %v2601 = vsel %vm883, %v1800, %v2152
        %v2602 = vsel %vm883, %v1801, %v2154
        %v2603 = vsel %vm883, %v1834, %v2220
        %v2604 = vsel %vm883, %v1835, %v2222
        %v2605 = vsel %vm883, %v1836, %v2224
        %v2606 = vsel %vm883, %v1837, %v2226
        %v2607 = vsel %vm883, %v1838, %v2228
        %v2608 = vsel %vm883, %v1839, %v2230
        %v2609 = vsel %vm883, %v1840, %v2232
        %v2610 = vsel %vm883, %v1841, %v2234
        %v2611 = vsel %vm883, %v1842, %v2236
        %v2612 = vsel %vm883, %v1843, %v2238
        %v2613 = vsel %vm883, %v1844, %v2240
        %v2614 = vsel %vm883, %v1845, %v2242
        %v2615 = vsel %vm883, %v1846, %v2244
        %v2616 = vsel %vm883, %v1847, %v2246
        %v2617 = vsel %vm883, %v1848, %v2248
        %v2618 = vsel %vm883, %v1849, %v2250
        %v2619 = vsel %vm883, %v1850, %v2252
        %v2620 = vsel %vm883, %v1851, %v2254
        %v2621 = vsel %vm883, %v1852, %v2256
        %v2622 = vsel %vm883, %v1853, %v2258
        %v2623 = vsel %vm883, %v1854, %v2260
        %v2624 = vsel %vm883, %v1855, %v2262
        %v2625 = vsel %vm883, %v1856, %v2264
        %v2626 = vsel %vm883, %v1857, %v2266
        %v2627 = vsel %vm883, %v1858, %v2268
        %v2628 = vsel %vm883, %v1859, %v2270
        %v2629 = vsel %vm883, %v1860, %v2272
        %v2630 = vsel %vm883, %v1861, %v2274
        %v2631 = vsel %vm883, %v1862, %v2276
        %v2632 = vsel %vm883, %v1863, %v2278
        %v2633 = vsel %vm883, %v1864, %v2280
        %v2634 = vsel %vm883, %v1865, %v2282
        %v2635 = vsel %vm883, %v1898, %v2348
        %v2636 = vsel %vm883, %v1899, %v2350
        %v2637 = vsel %vm883, %v1900, %v2352
        %v2638 = vsel %vm883, %v1901, %v2354
        %v2639 = vsel %vm883, %v1902, %v2356
        %v2640 = vsel %vm883, %v1903, %v2358
        %v2641 = vsel %vm883, %v1904, %v2360
        %v2642 = vsel %vm883, %v1905, %v2362
        %v2643 = vsel %vm883, %v1906, %v2364
        %v2644 = vsel %vm883, %v1907, %v2366
        %v2645 = vsel %vm883, %v1908, %v2368
        %v2646 = vsel %vm883, %v1909, %v2370
        %v2647 = vsel %vm883, %v1910, %v2372
        %v2648 = vsel %vm883, %v1911, %v2374
        %v2649 = vsel %vm883, %v1912, %v2376
        %v2650 = vsel %vm883, %v1913, %v2378
        %v2651 = vsel %vm883, %v1914, %v2380
        %v2652 = vsel %vm883, %v1915, %v2382
        %v2653 = vsel %vm883, %v1916, %v2384
        %v2654 = vsel %vm883, %v1917, %v2386
        %v2655 = vsel %vm883, %v1918, %v2388
        %v2656 = vsel %vm883, %v1919, %v2390
        %v2657 = vsel %vm883, %v1920, %v2392
        %v2658 = vsel %vm883, %v1921, %v2394
        %v2659 = vsel %vm883, %v1922, %v2396
        %v2660 = vsel %vm883, %v1923, %v2398
        %v2661 = vsel %vm883, %v1924, %v2400
        %v2662 = vsel %vm883, %v1925, %v2402
        %v2663 = vsel %vm883, %v1926, %v2404
        %v2664 = vsel %vm883, %v1927, %v2406
        %v2665 = vsel %vm883, %v1928, %v2408
        %v2666 = vsel %vm883, %v1929, %v2410
        %v2667 = vsel %vm883, %v1963, %v2476
        %v2668 = vsel %vm883, %v1964, %v2478
        %v2669 = vsel %vm883, %v1965, %v2480
        %v2670 = vsel %vm883, %v1966, %v2482
        %v2671 = vsel %vm883, %v1967, %v2484
        %v2672 = vsel %vm883, %v1968, %v2486
        %v2673 = vsel %vm883, %v1969, %v2488
        %v2674 = vsel %vm883, %v1970, %v2490
        %v2675 = vsel %vm883, %v1971, %v2492
        %v2676 = vsel %vm883, %v1972, %v2494
        %v2677 = vsel %vm883, %v1973, %v2496
        %v2678 = vsel %vm883, %v1974, %v2498
        %v2679 = vsel %vm883, %v1975, %v2500
        %v2680 = vsel %vm883, %v1976, %v2502
        %v2681 = vsel %vm883, %v1977, %v2504
        %v2682 = vsel %vm883, %v1978, %v2506
        %v2683 = vsel %vm883, %v1979, %v2508
        %v2684 = vsel %vm883, %v1980, %v2510
        %v2685 = vsel %vm883, %v1981, %v2512
        %v2686 = vsel %vm883, %v1982, %v2514
        %v2687 = vsel %vm883, %v1983, %v2516
        %v2688 = vsel %vm883, %v1984, %v2518
        %v2689 = vsel %vm883, %v1985, %v2520
        %v2690 = vsel %vm883, %v1986, %v2522
        %v2691 = vsel %vm883, %v1987, %v2524
        %v2692 = vsel %vm883, %v1988, %v2526
        %v2693 = vsel %vm883, %v1989, %v2528
        %v2694 = vsel %vm883, %v1990, %v2530
        %v2695 = vsel %vm883, %v1991, %v2532
        %v2696 = vsel %vm883, %v1992, %v2534
        %v2697 = vsel %vm883, %v1993, %v2536
        %v2698 = vsel %vm883, %v1994, %v2538
        %v2699 = vld [vmem:[%s6] sm:$0xff]
        %v2700 = vld [vmem:[%s6 + $0x8] sm:$0xff]
        %v2701 = vld [vmem:[%s6 + $0x10] sm:$0xff]
        %v2702 = vld [vmem:[%s6 + $0x18] sm:$0xff]
        %v2703 = vld [vmem:[%s6 + $0x20] sm:$0xff]
        %v2704 = vld [vmem:[%s6 + $0x28] sm:$0xff]
        %v2705 = vld [vmem:[%s6 + $0x30] sm:$0xff]
        %v2706 = vld [vmem:[%s6 + $0x38] sm:$0xff]
        %v2707 = vld [vmem:[%s6 + $0x40] sm:$0xff]
        %v2708 = vld [vmem:[%s6 + $0x48] sm:$0xff]
        %v2709 = vld [vmem:[%s6 + $0x50] sm:$0xff]
        %v2710 = vld [vmem:[%s6 + $0x58] sm:$0xff]
        %v2711 = vld [vmem:[%s6 + $0x60] sm:$0xff]
        %v2712 = vld [vmem:[%s6 + $0x68] sm:$0xff]
        %v2713 = vld [vmem:[%s6 + $0x70] sm:$0xff]
        %v2714 = vld [vmem:[%s6 + $0x78] sm:$0xff]
        %v2715 = vld [vmem:[%s6 + $0x80] sm:$0xff]
        %v2716 = vld [vmem:[%s6 + $0x88] sm:$0xff]
        %v2717 = vld [vmem:[%s6 + $0x90] sm:$0xff]
        %v2718 = vld [vmem:[%s6 + $0x98] sm:$0xff]
        %v2719 = vld [vmem:[%s6 + $0xa0] sm:$0xff]
        %v2720 = vld [vmem:[%s6 + $0xa8] sm:$0xff]
        %v2721 = vld [vmem:[%s6 + $0xb0] sm:$0xff]
        %v2722 = vld [vmem:[%s6 + $0xb8] sm:$0xff]
        %v2723 = vld [vmem:[%s6 + $0xc0] sm:$0xff]
        %v2724 = vld [vmem:[%s6 + $0xc8] sm:$0xff]
        %v2725 = vld [vmem:[%s6 + $0xd0] sm:$0xff]
        %v2726 = vld [vmem:[%s6 + $0xd8] sm:$0xff]
        %v2727 = vld [vmem:[%s6 + $0xe0] sm:$0xff]
        %v2728 = vld [vmem:[%s6 + $0xe8] sm:$0xff]
        %v2729 = vld [vmem:[%s6 + $0xf0] sm:$0xff]
        %v2730 = vld [vmem:[%s6 + $0xf8] sm:$0xff]
        %v2731 = vld [vmem:[%s6 + $0x100] sm:$0xff]
        %v2732 = vld [vmem:[%s6 + $0x108] sm:$0xff]
        %v2733 = vld [vmem:[%s6 + $0x110] sm:$0xff]
        %v2734 = vld [vmem:[%s6 + $0x118] sm:$0xff]
        %v2735 = vld [vmem:[%s6 + $0x120] sm:$0xff]
        %v2736 = vld [vmem:[%s6 + $0x128] sm:$0xff]
        %v2737 = vld [vmem:[%s6 + $0x130] sm:$0xff]
        %v2738 = vld [vmem:[%s6 + $0x138] sm:$0xff]
        %v2739 = vld [vmem:[%s6 + $0x140] sm:$0xff]
        %v2740 = vld [vmem:[%s6 + $0x148] sm:$0xff]
        %v2741 = vld [vmem:[%s6 + $0x150] sm:$0xff]
        %v2742 = vld [vmem:[%s6 + $0x158] sm:$0xff]
        %v2743 = vld [vmem:[%s6 + $0x160] sm:$0xff]
        %v2744 = vld [vmem:[%s6 + $0x168] sm:$0xff]
        %v2745 = vld [vmem:[%s6 + $0x170] sm:$0xff]
        %v2746 = vld [vmem:[%s6 + $0x178] sm:$0xff]
        %v2747 = vld [vmem:[%s6 + $0x180] sm:$0xff]
        %v2748 = vld [vmem:[%s6 + $0x188] sm:$0xff]
        %v2749 = vld [vmem:[%s6 + $0x190] sm:$0xff]
        %v2750 = vld [vmem:[%s6 + $0x198] sm:$0xff]
        %v2751 = vld [vmem:[%s6 + $0x1a0] sm:$0xff]
        %v2752 = vld [vmem:[%s6 + $0x1a8] sm:$0xff]
        %v2753 = vld [vmem:[%s6 + $0x1b0] sm:$0xff]
        %v2754 = vld [vmem:[%s6 + $0x1b8] sm:$0xff]
        %v2755 = vld [vmem:[%s6 + $0x1c0] sm:$0xff]
        %v2756 = vld [vmem:[%s6 + $0x1c8] sm:$0xff]
        %v2757 = vld [vmem:[%s6 + $0x1d0] sm:$0xff]
        %v2758 = vld [vmem:[%s6 + $0x1d8] sm:$0xff]
        %v2759 = vld [vmem:[%s6 + $0x1e0] sm:$0xff]
        %v2760 = vld [vmem:[%s6 + $0x1e8] sm:$0xff]
        %v2761 = vld [vmem:[%s6 + $0x1f0] sm:$0xff]
        %v2762 = vld [vmem:[%s6 + $0x1f8] sm:$0xff]
        %v2763 = vld [vmem:[%s6 + $0x200] sm:$0xff]
        %v2764 = vld [vmem:[%s6 + $0x208] sm:$0xff]
        %v2765 = vld [vmem:[%s6 + $0x210] sm:$0xff]
        %v2766 = vld [vmem:[%s6 + $0x218] sm:$0xff]
        %v2767 = vld [vmem:[%s6 + $0x220] sm:$0xff]
        %v2768 = vld [vmem:[%s6 + $0x228] sm:$0xff]
        %v2769 = vld [vmem:[%s6 + $0x230] sm:$0xff]
        %v2770 = vld [vmem:[%s6 + $0x238] sm:$0xff]
        %v2771 = vld [vmem:[%s7] sm:$0x1]
        %v2773 = vlaneseq
        %v2774 = vshrl.u32 %v2773, 7
        %v2775 = vsub.s32 0, %v2774
        %v2776 = vrot.slane %v2771, %v2775
        %v2779 = vsel %vm883, %v2027, 0
        %v2782 = vsel %vm883, %v2028, 0
        %v2785 = vsel %vm883, %v2029, 0
        %v2788 = vsel %vm883, %v2030, 0
        %v2791 = vsel %vm883, %v2031, 0
        %v2794 = vsel %vm883, %v2032, 0
        %v2797 = vsel %vm883, %v2033, 0
        %v2800 = vsel %vm883, %v2034, 0
        %v2803 = vsel %vm883, %v2035, 0
        %v2806 = vsel %vm883, %v2036, 0
        %v2809 = vsel %vm883, %v2037, 0
        %v2812 = vsel %vm883, %v2038, 0
        %v2815 = vsel %vm883, %v2039, 0
        %v2818 = vsel %vm883, %v2040, 0
        %v2821 = vsel %vm883, %v2041, 0
        %v2824 = vsel %vm883, %v2042, 0
        %v2827 = vsel %vm883, %v2043, 0
        %v2830 = vsel %vm883, %v2044, 0
        %v2833 = vsel %vm883, %v2045, 0
        %v2836 = vsel %vm883, %v2046, 0
        %v2839 = vsel %vm883, %v2047, 0
        %v2842 = vsel %vm883, %v2048, 0
        %v2845 = vsel %vm883, %v2049, 0
        %v2848 = vsel %vm883, %v2050, 0
        %v2851 = vsel %vm883, %v2051, 0
        %v2854 = vsel %vm883, %v2052, 0
        %v2857 = vsel %vm883, %v2053, 0
        %v2860 = vsel %vm883, %v2054, 0
        %v2863 = vsel %vm883, %v2055, 0
        %v2866 = vsel %vm883, %v2056, 0
        %v2869 = vsel %vm883, %v2057, 0
        %v2872 = vsel %vm883, %v2058, 0
        %2874 = vmatprep.subr.mxu0 0.0
        %2875 = vmatpush1.msra.mxu0 %v2699
        %2876 = vmatprep.subr.mxu0 0.0
        %2877 = vmatpush1.msra.mxu0 %v2700
        %2878 = vmatprep.subr.mxu0 0.0
        %2879 = vmatpush1.msra.mxu0 %v2701
        %2880 = vmatprep.subr.mxu0 0.0
        %2881 = vmatpush1.msra.mxu0 %v2702
        %2882 = vmatprep.subr.mxu0 0.0
        %2883 = vmatpush1.msra.mxu0 %v2703
        %2884 = vmatprep.subr.mxu0 0.0
        %2885 = vmatpush1.msra.mxu0 %v2704
        %2886 = vmatprep.subr.mxu0 0.0
        %2887 = vmatpush1.msra.mxu0 %v2705
        %2888 = vmatprep.subr.mxu0 0.0
        %2889 = vmatpush1.msra.mxu0 %v2706
        %2890 = vmatprep.subr.mxu0 0.0
        %2891 = vmatpush1.msra.mxu0 %v2707
        %2892 = vmatprep.subr.mxu0 0.0
        %2893 = vmatpush1.msra.mxu0 %v2708
        %2894 = vmatprep.subr.mxu0 0.0
        %2895 = vmatpush1.msra.mxu0 %v2709
        %2896 = vmatprep.subr.mxu0 0.0
        %2897 = vmatpush1.msra.mxu0 %v2710
        %2898 = vmatprep.subr.mxu0 0.0
        %2899 = vmatpush1.msra.mxu0 %v2711
        %2900 = vmatprep.subr.mxu0 0.0
        %2901 = vmatpush1.msra.mxu0 %v2712
        %2902 = vmatprep.subr.mxu0 0.0
        %2903 = vmatpush1.msra.mxu0 %v2713
        %2904 = vmatprep.subr.mxu0 0.0
        %2905 = vmatpush1.msra.mxu0 %v2714
        %2906 = vmatprep.subr.mxu0 0.0
        %2907 = vmatpush1.msra.mxu0 %v2715
        %2908 = vmatprep.subr.mxu0 0.0
        %2909 = vmatpush1.msra.mxu0 %v2716
        %2910 = vmatprep.subr.mxu0 0.0
        %2911 = vmatpush1.msra.mxu0 %v2717
        %2912 = vmatprep.subr.mxu0 0.0
        %2913 = vmatpush1.msra.mxu0 %v2718
        %2914 = vmatprep.subr.mxu0 0.0
        %2915 = vmatpush1.msra.mxu0 %v2719
        %2916 = vmatprep.subr.mxu0 0.0
        %2917 = vmatpush1.msra.mxu0 %v2720
        %2918 = vmatprep.subr.mxu0 0.0
        %2919 = vmatpush1.msra.mxu0 %v2721
        %2920 = vmatprep.subr.mxu0 0.0
        %2921 = vmatpush1.msra.mxu0 %v2722
        %2922 = vmatprep.subr.mxu0 0.0
        %2923 = vmatpush1.msra.mxu0 %v2723
        %2924 = vmatprep.subr.mxu0 0.0
        %2925 = vmatpush1.msra.mxu0 %v2724
        %2926 = vmatprep.subr.mxu0 0.0
        %2927 = vmatpush1.msra.mxu0 %v2725
        %2928 = vmatprep.subr.mxu0 0.0
        %2929 = vmatpush1.msra.mxu0 %v2726
        %2930 = vmatprep.subr.mxu0 0.0
        %2931 = vmatpush1.msra.mxu0 %v2727
        %2932 = vmatprep.subr.mxu0 0.0
        %2933 = vmatpush1.msra.mxu0 %v2728
        %2934 = vmatprep.subr.mxu0 0.0
        %2935 = vmatpush1.msra.mxu0 %v2729
        %2936 = vmatprep.subr.mxu0 0.0
        %2937 = vmatpush1.msra.mxu0 %v2730
        %2938 = vmatprep.mubr.f32.mxu0 %v2603
        %2939 = vmatmul.mubr.f32.gmra.mrb[0].mxu0 %v2571
        %v2940 = vpop.f32.mrb[0].mxu0
        %v2941 = vadd.f32 %v2776, %v2940
        %v2942 = vpop.f32.mrb[0].mxu0
        %2943 = vmatprep.mubr.f32.mxu0 %v2604
        %2944 = vmatmul.mubr.f32.gmra.mrb[0].mxu0 %v2572
        %v2945 = vpop.f32.mrb[0].mxu0
        %v2946 = vadd.f32 %v2776, %v2945
        %v2947 = vpop.f32.mrb[0].mxu0
        %2948 = vmatprep.mubr.f32.mxu0 %v2605
        %2949 = vmatmul.mubr.f32.gmra.mrb[0].mxu0 %v2573
        %v2950 = vpop.f32.mrb[0].mxu0
        %v2951 = vadd.f32 %v2776, %v2950
        %v2952 = vpop.f32.mrb[0].mxu0
        %2953 = vmatprep.mubr.f32.mxu0 %v2606
        %2954 = vmatmul.mubr.f32.gmra.mrb[0].mxu0 %v2574
        %v2955 = vpop.f32.mrb[0].mxu0
        %v2956 = vadd.f32 %v2776, %v2955
        %v2957 = vpop.f32.mrb[0].mxu0
        %2958 = vmatprep.mubr.f32.mxu0 %v2607
        %2959 = vmatmul.mubr.f32.gmra.mrb[0].mxu0 %v2575
        %v2960 = vpop.f32.mrb[0].mxu0
        %v2961 = vadd.f32 %v2776, %v2960
        %v2962 = vpop.f32.mrb[0].mxu0
        %2963 = vmatprep.mubr.f32.mxu0 %v2608
        %2964 = vmatmul.mubr.f32.gmra.mrb[0].mxu0 %v2576
        %v2965 = vpop.f32.mrb[0].mxu0
        %v2966 = vadd.f32 %v2776, %v2965
        %v2967 = vpop.f32.mrb[0].mxu0
        %2968 = vmatprep.mubr.f32.mxu0 %v2609
        %2969 = vmatmul.mubr.f32.gmra.mrb[0].mxu0 %v2577
        %v2970 = vpop.f32.mrb[0].mxu0
        %v2971 = vadd.f32 %v2776, %v2970
        %v2972 = vpop.f32.mrb[0].mxu0
        %2973 = vmatprep.mubr.f32.mxu0 %v2610
        %2974 = vmatmul.mubr.f32.gmra.mrb[0].mxu0 %v2578
        %v2975 = vpop.f32.mrb[0].mxu0
        %v2976 = vadd.f32 %v2776, %v2975
        %v2977 = vpop.f32.mrb[0].mxu0
        %2978 = vmatprep.mubr.f32.mxu0 %v2611
        %2979 = vmatmul.mubr.f32.gmra.mrb[0].mxu0 %v2579
        %v2980 = vpop.f32.mrb[0].mxu0
        %v2981 = vadd.f32 %v2776, %v2980
        %v2982 = vpop.f32.mrb[0].mxu0
        %2983 = vmatprep.mubr.f32.mxu0 %v2612
        %2984 = vmatmul.mubr.f32.gmra.mrb[0].mxu0 %v2580
        %v2985 = vpop.f32.mrb[0].mxu0
        %v2986 = vadd.f32 %v2776, %v2985
        %v2987 = vpop.f32.mrb[0].mxu0
        %2988 = vmatprep.mubr.f32.mxu0 %v2613
        %2989 = vmatmul.mubr.f32.gmra.mrb[0].mxu0 %v2581
        %v2990 = vpop.f32.mrb[0].mxu0
        %v2991 = vadd.f32 %v2776, %v2990
        %v2992 = vpop.f32.mrb[0].mxu0
        %2993 = vmatprep.mubr.f32.mxu0 %v2614
        %2994 = vmatmul.mubr.f32.gmra.mrb[0].mxu0 %v2582
        %v2995 = vpop.f32.mrb[0].mxu0
        %v2996 = vadd.f32 %v2776, %v2995
        %v2997 = vpop.f32.mrb[0].mxu0
        %2998 = vmatprep.mubr.f32.mxu0 %v2615
        %2999 = vmatmul.mubr.f32.gmra.mrb[0].mxu0 %v2583
        %v3000 = vpop.f32.mrb[0].mxu0
        %v3001 = vadd.f32 %v2776, %v3000
        %v3002 = vpop.f32.mrb[0].mxu0
        %3003 = vmatprep.mubr.f32.mxu0 %v2616
        %3004 = vmatmul.mubr.f32.gmra.mrb[0].mxu0 %v2584
        %v3005 = vpop.f32.mrb[0].mxu0
        %v3006 = vadd.f32 %v2776, %v3005
        %v3007 = vpop.f32.mrb[0].mxu0
        %3008 = vmatprep.mubr.f32.mxu0 %v2617
        %3009 = vmatmul.mubr.f32.gmra.mrb[0].mxu0 %v2585
        %v3010 = vpop.f32.mrb[0].mxu0
        %v3011 = vadd.f32 %v2776, %v3010
        %v3012 = vpop.f32.mrb[0].mxu0
        %3013 = vmatprep.mubr.f32.mxu0 %v2618
        %3014 = vmatmul.mubr.f32.gmra.mrb[0].mxu0 %v2586
        %v3015 = vpop.f32.mrb[0].mxu0
        %v3016 = vadd.f32 %v2776, %v3015
        %v3017 = vpop.f32.mrb[0].mxu0
        %3018 = vmatprep.mubr.f32.mxu0 %v2619
        %3019 = vmatmul.mubr.f32.gmra.mrb[0].mxu0 %v2587
        %v3020 = vpop.f32.mrb[0].mxu0
        %v3021 = vadd.f32 %v2776, %v3020
        %v3022 = vpop.f32.mrb[0].mxu0
        %3023 = vmatprep.mubr.f32.mxu0 %v2620
        %3024 = vmatmul.mubr.f32.gmra.mrb[0].mxu0 %v2588
        %v3025 = vpop.f32.mrb[0].mxu0
        %v3026 = vadd.f32 %v2776, %v3025
        %v3027 = vpop.f32.mrb[0].mxu0
        %3028 = vmatprep.mubr.f32.mxu0 %v2621
        %3029 = vmatmul.mubr.f32.gmra.mrb[0].mxu0 %v2589
        %v3030 = vpop.f32.mrb[0].mxu0
        %v3031 = vadd.f32 %v2776, %v3030
        %v3032 = vpop.f32.mrb[0].mxu0
        %3033 = vmatprep.mubr.f32.mxu0 %v2622
        %3034 = vmatmul.mubr.f32.gmra.mrb[0].mxu0 %v2590
        %v3035 = vpop.f32.mrb[0].mxu0
        %v3036 = vadd.f32 %v2776, %v3035
        %v3037 = vpop.f32.mrb[0].mxu0
        %3038 = vmatprep.mubr.f32.mxu0 %v2623
        %3039 = vmatmul.mubr.f32.gmra.mrb[0].mxu0 %v2591
        %v3040 = vpop.f32.mrb[0].mxu0
        %v3041 = vadd.f32 %v2776, %v3040
        %v3042 = vpop.f32.mrb[0].mxu0
        %3043 = vmatprep.mubr.f32.mxu0 %v2624
        %3044 = vmatmul.mubr.f32.gmra.mrb[0].mxu0 %v2592
        %v3045 = vpop.f32.mrb[0].mxu0
        %v3046 = vadd.f32 %v2776, %v3045
        %v3047 = vpop.f32.mrb[0].mxu0
        %3048 = vmatprep.mubr.f32.mxu0 %v2625
        %3049 = vmatmul.mubr.f32.gmra.mrb[0].mxu0 %v2593
        %v3050 = vpop.f32.mrb[0].mxu0
        %v3051 = vadd.f32 %v2776, %v3050
        %v3052 = vpop.f32.mrb[0].mxu0
        %3053 = vmatprep.mubr.f32.mxu0 %v2626
        %3054 = vmatmul.mubr.f32.gmra.mrb[0].mxu0 %v2594
        %v3055 = vpop.f32.mrb[0].mxu0
        %v3056 = vadd.f32 %v2776, %v3055
        %v3057 = vpop.f32.mrb[0].mxu0
        %3058 = vmatprep.mubr.f32.mxu0 %v2627
        %3059 = vmatmul.mubr.f32.gmra.mrb[0].mxu0 %v2595
        %v3060 = vpop.f32.mrb[0].mxu0
        %v3061 = vadd.f32 %v2776, %v3060
        %v3062 = vpop.f32.mrb[0].mxu0
        %3063 = vmatprep.mubr.f32.mxu0 %v2628
        %3064 = vmatmul.mubr.f32.gmra.mrb[0].mxu0 %v2596
        %v3065 = vpop.f32.mrb[0].mxu0
        %v3066 = vadd.f32 %v2776, %v3065
        %v3067 = vpop.f32.mrb[0].mxu0
        %3068 = vmatprep.mubr.f32.mxu0 %v2629
        %3069 = vmatmul.mubr.f32.gmra.mrb[0].mxu0 %v2597
        %v3070 = vpop.f32.mrb[0].mxu0
        %v3071 = vadd.f32 %v2776, %v3070
        %v3072 = vpop.f32.mrb[0].mxu0
        %3073 = vmatprep.mubr.f32.mxu0 %v2630
        %3074 = vmatmul.mubr.f32.gmra.mrb[0].mxu0 %v2598
        %v3075 = vpop.f32.mrb[0].mxu0
        %v3076 = vadd.f32 %v2776, %v3075
        %v3077 = vpop.f32.mrb[0].mxu0
        %3078 = vmatprep.mubr.f32.mxu0 %v2631
        %3079 = vmatmul.mubr.f32.gmra.mrb[0].mxu0 %v2599
        %v3080 = vpop.f32.mrb[0].mxu0
        %v3081 = vadd.f32 %v2776, %v3080
        %v3082 = vpop.f32.mrb[0].mxu0
        %3083 = vmatprep.mubr.f32.mxu0 %v2632
        %3084 = vmatmul.mubr.f32.gmra.mrb[0].mxu0 %v2600
        %v3085 = vpop.f32.mrb[0].mxu0
        %v3086 = vadd.f32 %v2776, %v3085
        %v3087 = vpop.f32.mrb[0].mxu0
        %3088 = vmatprep.mubr.f32.mxu0 %v2633
        %3089 = vmatmul.mubr.f32.gmra.mrb[0].mxu0 %v2601
        %v3090 = vpop.f32.mrb[0].mxu0
        %v3091 = vadd.f32 %v2776, %v3090
        %v3092 = vpop.f32.mrb[0].mxu0
        %3093 = vmatprep.mubr.f32.mxu0 %v2634
        %3094 = vmatmul.mubr.f32.gmra.mrb[0].mxu0 %v2602
        %v3095 = vpop.f32.mrb[0].mxu0
        %v3096 = vadd.f32 %v2776, %v3095
        %v3097 = vpop.f32.mrb[0].mxu0
        %3098 = vdwg.mxu0
        %3099 = vmatprep.subr.mxu0 0.0
        %3100 = vmatpush1.msra.mxu0 %v2731
        %3101 = vmatprep.subr.mxu0 0.0
        %3102 = vmatpush1.msra.mxu0 %v2732
        %3103 = vmatprep.subr.mxu0 0.0
        %3104 = vmatpush1.msra.mxu0 %v2733
        %3105 = vmatprep.subr.mxu0 0.0
        %3106 = vmatpush1.msra.mxu0 %v2734
        %3107 = vmatprep.subr.mxu0 0.0
        %3108 = vmatpush1.msra.mxu0 %v2735
        %3109 = vmatprep.subr.mxu0 0.0
        %3110 = vmatpush1.msra.mxu0 %v2736
        %3111 = vmatprep.subr.mxu0 0.0
        %3112 = vmatpush1.msra.mxu0 %v2737
        %3113 = vmatprep.subr.mxu0 0.0
        %3114 = vmatpush1.msra.mxu0 %v2738
        %3115 = vmatprep.subr.mxu0 0.0
        %3116 = vmatpush1.msra.mxu0 %v2739
        %3117 = vmatprep.subr.mxu0 0.0
        %3118 = vmatpush1.msra.mxu0 %v2740
        %3119 = vmatprep.subr.mxu0 0.0
        %3120 = vmatpush1.msra.mxu0 %v2741
        %3121 = vmatprep.subr.mxu0 0.0
        %3122 = vmatpush1.msra.mxu0 %v2742
        %3123 = vmatprep.subr.mxu0 0.0
        %3124 = vmatpush1.msra.mxu0 %v2743
        %3125 = vmatprep.subr.mxu0 0.0
        %3126 = vmatpush1.msra.mxu0 %v2744
        %3127 = vmatprep.subr.mxu0 0.0
        %3128 = vmatpush1.msra.mxu0 %v2745
        %3129 = vmatprep.subr.mxu0 0.0
        %3130 = vmatpush1.msra.mxu0 %v2746
        %3131 = vmatprep.subr.mxu0 0.0
        %3132 = vmatpush1.msra.mxu0 %v2747
        %3133 = vmatprep.subr.mxu0 0.0
        %3134 = vmatpush1.msra.mxu0 %v2748
        %3135 = vmatprep.subr.mxu0 0.0
        %3136 = vmatpush1.msra.mxu0 %v2749
        %3137 = vmatprep.subr.mxu0 0.0
        %3138 = vmatpush1.msra.mxu0 %v2750
        %3139 = vmatprep.subr.mxu0 0.0
        %3140 = vmatpush1.msra.mxu0 %v2751
        %3141 = vmatprep.subr.mxu0 0.0
        %3142 = vmatpush1.msra.mxu0 %v2752
        %3143 = vmatprep.subr.mxu0 0.0
        %3144 = vmatpush1.msra.mxu0 %v2753
        %3145 = vmatprep.subr.mxu0 0.0
        %3146 = vmatpush1.msra.mxu0 %v2754
        %3147 = vmatprep.subr.mxu0 0.0
        %3148 = vmatpush1.msra.mxu0 %v2755
        %3149 = vmatprep.subr.mxu0 0.0
        %3150 = vmatpush1.msra.mxu0 %v2756
        %3151 = vmatprep.subr.mxu0 0.0
        %3152 = vmatpush1.msra.mxu0 %v2757
        %3153 = vmatprep.subr.mxu0 0.0
        %3154 = vmatpush1.msra.mxu0 %v2758
        %3155 = vmatprep.subr.mxu0 0.0
        %3156 = vmatpush1.msra.mxu0 %v2759
        %3157 = vmatprep.subr.mxu0 0.0
        %3158 = vmatpush1.msra.mxu0 %v2760
        %3159 = vmatprep.subr.mxu0 0.0
        %3160 = vmatpush1.msra.mxu0 %v2761
        %3161 = vmatprep.subr.mxu0 0.0
        %3162 = vmatpush1.msra.mxu0 %v2762
        %3163 = vmatprep.mubr.f32.mxu0 %v2667
        %3164 = vmatmul.mubr.f32.gmra.mrb[0].mxu0 %v2635
        %v3165 = vpop.f32.mrb[0].mxu0
        %v3166 = vadd.f32 %v2941, %v3165
        %v3167 = vpop.f32.mrb[0].mxu0
        %3168 = vmatprep.mubr.f32.mxu0 %v2668
        %3169 = vmatmul.mubr.f32.gmra.mrb[0].mxu0 %v2636
        %v3170 = vpop.f32.mrb[0].mxu0
        %v3171 = vadd.f32 %v2946, %v3170
        %v3172 = vpop.f32.mrb[0].mxu0
        %3173 = vmatprep.mubr.f32.mxu0 %v2669
        %3174 = vmatmul.mubr.f32.gmra.mrb[0].mxu0 %v2637
        %v3175 = vpop.f32.mrb[0].mxu0
        %v3176 = vadd.f32 %v2951, %v3175
        %v3177 = vpop.f32.mrb[0].mxu0
        %3178 = vmatprep.mubr.f32.mxu0 %v2670
        %3179 = vmatmul.mubr.f32.gmra.mrb[0].mxu0 %v2638
        %v3180 = vpop.f32.mrb[0].mxu0
        %v3181 = vadd.f32 %v2956, %v3180
        %v3182 = vpop.f32.mrb[0].mxu0
        %3183 = vmatprep.mubr.f32.mxu0 %v2671
        %3184 = vmatmul.mubr.f32.gmra.mrb[0].mxu0 %v2639
        %v3185 = vpop.f32.mrb[0].mxu0
        %v3186 = vadd.f32 %v2961, %v3185
        %v3187 = vpop.f32.mrb[0].mxu0
        %3188 = vmatprep.mubr.f32.mxu0 %v2672
        %3189 = vmatmul.mubr.f32.gmra.mrb[0].mxu0 %v2640
        %v3190 = vpop.f32.mrb[0].mxu0
        %v3191 = vadd.f32 %v2966, %v3190
        %v3192 = vpop.f32.mrb[0].mxu0
        %3193 = vmatprep.mubr.f32.mxu0 %v2673
        %3194 = vmatmul.mubr.f32.gmra.mrb[0].mxu0 %v2641
        %v3195 = vpop.f32.mrb[0].mxu0
        %v3196 = vadd.f32 %v2971, %v3195
        %v3197 = vpop.f32.mrb[0].mxu0
        %3198 = vmatprep.mubr.f32.mxu0 %v2674
        %3199 = vmatmul.mubr.f32.gmra.mrb[0].mxu0 %v2642
        %v3200 = vpop.f32.mrb[0].mxu0
        %v3201 = vadd.f32 %v2976, %v3200
        %v3202 = vpop.f32.mrb[0].mxu0
        %3203 = vmatprep.mubr.f32.mxu0 %v2675
        %3204 = vmatmul.mubr.f32.gmra.mrb[0].mxu0 %v2643
        %v3205 = vpop.f32.mrb[0].mxu0
        %v3206 = vadd.f32 %v2981, %v3205
        %v3207 = vpop.f32.mrb[0].mxu0
        %3208 = vmatprep.mubr.f32.mxu0 %v2676
        %3209 = vmatmul.mubr.f32.gmra.mrb[0].mxu0 %v2644
        %v3210 = vpop.f32.mrb[0].mxu0
        %v3211 = vadd.f32 %v2986, %v3210
        %v3212 = vpop.f32.mrb[0].mxu0
        %3213 = vmatprep.mubr.f32.mxu0 %v2677
        %3214 = vmatmul.mubr.f32.gmra.mrb[0].mxu0 %v2645
        %v3215 = vpop.f32.mrb[0].mxu0
        %v3216 = vadd.f32 %v2991, %v3215
        %v3217 = vpop.f32.mrb[0].mxu0
        %3218 = vmatprep.mubr.f32.mxu0 %v2678
        %3219 = vmatmul.mubr.f32.gmra.mrb[0].mxu0 %v2646
        %v3220 = vpop.f32.mrb[0].mxu0
        %v3221 = vadd.f32 %v2996, %v3220
        %v3222 = vpop.f32.mrb[0].mxu0
        %3223 = vmatprep.mubr.f32.mxu0 %v2679
        %3224 = vmatmul.mubr.f32.gmra.mrb[0].mxu0 %v2647
        %v3225 = vpop.f32.mrb[0].mxu0
        %v3226 = vadd.f32 %v3001, %v3225
        %v3227 = vpop.f32.mrb[0].mxu0
        %3228 = vmatprep.mubr.f32.mxu0 %v2680
        %3229 = vmatmul.mubr.f32.gmra.mrb[0].mxu0 %v2648
        %v3230 = vpop.f32.mrb[0].mxu0
        %v3231 = vadd.f32 %v3006, %v3230
        %v3232 = vpop.f32.mrb[0].mxu0
        %3233 = vmatprep.mubr.f32.mxu0 %v2681
        %3234 = vmatmul.mubr.f32.gmra.mrb[0].mxu0 %v2649
        %v3235 = vpop.f32.mrb[0].mxu0
        %v3236 = vadd.f32 %v3011, %v3235
        %v3237 = vpop.f32.mrb[0].mxu0
        %3238 = vmatprep.mubr.f32.mxu0 %v2682
        %3239 = vmatmul.mubr.f32.gmra.mrb[0].mxu0 %v2650
        %v3240 = vpop.f32.mrb[0].mxu0
        %v3241 = vadd.f32 %v3016, %v3240
        %v3242 = vpop.f32.mrb[0].mxu0
        %3243 = vmatprep.mubr.f32.mxu0 %v2683
        %3244 = vmatmul.mubr.f32.gmra.mrb[0].mxu0 %v2651
        %v3245 = vpop.f32.mrb[0].mxu0
        %v3246 = vadd.f32 %v3021, %v3245
        %v3247 = vpop.f32.mrb[0].mxu0
        %3248 = vmatprep.mubr.f32.mxu0 %v2684
        %3249 = vmatmul.mubr.f32.gmra.mrb[0].mxu0 %v2652
        %v3250 = vpop.f32.mrb[0].mxu0
        %v3251 = vadd.f32 %v3026, %v3250
        %v3252 = vpop.f32.mrb[0].mxu0
        %3253 = vmatprep.mubr.f32.mxu0 %v2685
        %3254 = vmatmul.mubr.f32.gmra.mrb[0].mxu0 %v2653
        %v3255 = vpop.f32.mrb[0].mxu0
        %v3256 = vadd.f32 %v3031, %v3255
        %v3257 = vpop.f32.mrb[0].mxu0
        %3258 = vmatprep.mubr.f32.mxu0 %v2686
        %3259 = vmatmul.mubr.f32.gmra.mrb[0].mxu0 %v2654
        %v3260 = vpop.f32.mrb[0].mxu0
        %v3261 = vadd.f32 %v3036, %v3260
        %v3262 = vpop.f32.mrb[0].mxu0
        %3263 = vmatprep.mubr.f32.mxu0 %v2687
        %3264 = vmatmul.mubr.f32.gmra.mrb[0].mxu0 %v2655
        %v3265 = vpop.f32.mrb[0].mxu0
        %v3266 = vadd.f32 %v3041, %v3265
        %v3267 = vpop.f32.mrb[0].mxu0
        %3268 = vmatprep.mubr.f32.mxu0 %v2688
        %3269 = vmatmul.mubr.f32.gmra.mrb[0].mxu0 %v2656
        %v3270 = vpop.f32.mrb[0].mxu0
        %v3271 = vadd.f32 %v3046, %v3270
        %v3272 = vpop.f32.mrb[0].mxu0
        %3273 = vmatprep.mubr.f32.mxu0 %v2689
        %3274 = vmatmul.mubr.f32.gmra.mrb[0].mxu0 %v2657
        %v3275 = vpop.f32.mrb[0].mxu0
        %v3276 = vadd.f32 %v3051, %v3275
        %v3277 = vpop.f32.mrb[0].mxu0
        %3278 = vmatprep.mubr.f32.mxu0 %v2690
        %3279 = vmatmul.mubr.f32.gmra.mrb[0].mxu0 %v2658
        %v3280 = vpop.f32.mrb[0].mxu0
        %v3281 = vadd.f32 %v3056, %v3280
        %v3282 = vpop.f32.mrb[0].mxu0
        %3283 = vmatprep.mubr.f32.mxu0 %v2691
        %3284 = vmatmul.mubr.f32.gmra.mrb[0].mxu0 %v2659
        %v3285 = vpop.f32.mrb[0].mxu0
        %v3286 = vadd.f32 %v3061, %v3285
        %v3287 = vpop.f32.mrb[0].mxu0
        %3288 = vmatprep.mubr.f32.mxu0 %v2692
        %3289 = vmatmul.mubr.f32.gmra.mrb[0].mxu0 %v2660
        %v3290 = vpop.f32.mrb[0].mxu0
        %v3291 = vadd.f32 %v3066, %v3290
        %v3292 = vpop.f32.mrb[0].mxu0
        %3293 = vmatprep.mubr.f32.mxu0 %v2693
        %3294 = vmatmul.mubr.f32.gmra.mrb[0].mxu0 %v2661
        %v3295 = vpop.f32.mrb[0].mxu0
        %v3296 = vadd.f32 %v3071, %v3295
        %v3297 = vpop.f32.mrb[0].mxu0
        %3298 = vmatprep.mubr.f32.mxu0 %v2694
        %3299 = vmatmul.mubr.f32.gmra.mrb[0].mxu0 %v2662
        %v3300 = vpop.f32.mrb[0].mxu0
        %v3301 = vadd.f32 %v3076, %v3300
        %v3302 = vpop.f32.mrb[0].mxu0
        %3303 = vmatprep.mubr.f32.mxu0 %v2695
        %3304 = vmatmul.mubr.f32.gmra.mrb[0].mxu0 %v2663
        %v3305 = vpop.f32.mrb[0].mxu0
        %v3306 = vadd.f32 %v3081, %v3305
        %v3307 = vpop.f32.mrb[0].mxu0
        %3308 = vmatprep.mubr.f32.mxu0 %v2696
        %3309 = vmatmul.mubr.f32.gmra.mrb[0].mxu0 %v2664
        %v3310 = vpop.f32.mrb[0].mxu0
        %v3311 = vadd.f32 %v3086, %v3310
        %v3312 = vpop.f32.mrb[0].mxu0
        %3313 = vmatprep.mubr.f32.mxu0 %v2697
        %3314 = vmatmul.mubr.f32.gmra.mrb[0].mxu0 %v2665
        %v3315 = vpop.f32.mrb[0].mxu0
        %v3316 = vadd.f32 %v3091, %v3315
        %v3317 = vpop.f32.mrb[0].mxu0
        %3318 = vmatprep.mubr.f32.mxu0 %v2698
        %3319 = vmatmul.mubr.f32.gmra.mrb[0].mxu0 %v2666
        %v3320 = vpop.f32.mrb[0].mxu0
        %v3321 = vadd.f32 %v3096, %v3320
        %v3322 = vpop.f32.mrb[0].mxu0
        %3323 = vdwg.mxu0
        %3324 = vmatprep.subr.mxu0 0.0
        %3325 = vmatpush1.msra.mxu0 %v2763
        %3326 = vmatprep.subr.mxu0 0.0
        %3327 = vmatpush1.msra.mxu0 %v2764
        %3328 = vmatprep.subr.mxu0 0.0
        %3329 = vmatpush1.msra.mxu0 %v2765
        %3330 = vmatprep.subr.mxu0 0.0
        %3331 = vmatpush1.msra.mxu0 %v2766
        %3332 = vmatprep.subr.mxu0 0.0
        %3333 = vmatpush1.msra.mxu0 %v2767
        %3334 = vmatprep.subr.mxu0 0.0
        %3335 = vmatpush1.msra.mxu0 %v2768
        %3336 = vmatprep.subr.mxu0 0.0
        %3337 = vmatpush1.msra.mxu0 %v2769
        %3338 = vmatprep.subr.mxu0 0.0
        %3339 = vmatpush1.msra.mxu0 %v2770
        %3340 = vmatprep.subr.mxu0 0.0
        %3341 = vmatpush1.msra.mxu0 0.0
        %3342 = vmatprep.subr.mxu0 0.0
        %3343 = vmatpush1.msra.mxu0 0.0
        %3344 = vmatprep.subr.mxu0 0.0
        %3345 = vmatpush1.msra.mxu0 0.0
        %3346 = vmatprep.subr.mxu0 0.0
        %3347 = vmatpush1.msra.mxu0 0.0
        %3348 = vmatprep.subr.mxu0 0.0
        %3349 = vmatpush1.msra.mxu0 0.0
        %3350 = vmatprep.subr.mxu0 0.0
        %3351 = vmatpush1.msra.mxu0 0.0
        %3352 = vmatprep.subr.mxu0 0.0
        %3353 = vmatpush1.msra.mxu0 0.0
        %3354 = vmatprep.subr.mxu0 0.0
        %3355 = vmatpush1.msra.mxu0 0.0
        %3356 = vmatprep.subr.mxu0 0.0
        %3357 = vmatpush1.msra.mxu0 0.0
        %3358 = vmatprep.subr.mxu0 0.0
        %3359 = vmatpush1.msra.mxu0 0.0
        %3360 = vmatprep.subr.mxu0 0.0
        %3361 = vmatpush1.msra.mxu0 0.0
        %3362 = vmatprep.subr.mxu0 0.0
        %3363 = vmatpush1.msra.mxu0 0.0
        %3364 = vmatprep.subr.mxu0 0.0
        %3365 = vmatpush1.msra.mxu0 0.0
        %3366 = vmatprep.subr.mxu0 0.0
        %3367 = vmatpush1.msra.mxu0 0.0
        %3368 = vmatprep.subr.mxu0 0.0
        %3369 = vmatpush1.msra.mxu0 0.0
        %3370 = vmatprep.subr.mxu0 0.0
        %3371 = vmatpush1.msra.mxu0 0.0
        %3372 = vmatprep.subr.mxu0 0.0
        %3373 = vmatpush1.msra.mxu0 0.0
        %3374 = vmatprep.subr.mxu0 0.0
        %3375 = vmatpush1.msra.mxu0 0.0
        %3376 = vmatprep.subr.mxu0 0.0
        %3377 = vmatpush1.msra.mxu0 0.0
        %3378 = vmatprep.subr.mxu0 0.0
        %3379 = vmatpush1.msra.mxu0 0.0
        %3380 = vmatprep.subr.mxu0 0.0
        %3381 = vmatpush1.msra.mxu0 0.0
        %3382 = vmatprep.subr.mxu0 0.0
        %3383 = vmatpush1.msra.mxu0 0.0
        %3384 = vmatprep.subr.mxu0 0.0
        %3385 = vmatpush1.msra.mxu0 0.0
        %3386 = vmatprep.subr.mxu0 0.0
        %3387 = vmatpush1.msra.mxu0 0.0
        %3388 = vmatprep.mubr.f32.mxu0 0.0
        %3389 = vmatmul.mubr.f32.gmra.mrb[0].mxu0 %v2779
        %v3390 = vpop.f32.mrb[0].mxu0
        %v3391 = vadd.f32 %v3166, %v3390
        %v3392 = vpop.f32.mrb[0].mxu0
        %3393 = vmatprep.mubr.f32.mxu0 0.0
        %3394 = vmatmul.mubr.f32.gmra.mrb[0].mxu0 %v2782
        %v3395 = vpop.f32.mrb[0].mxu0
        %v3396 = vadd.f32 %v3171, %v3395
        %v3397 = vpop.f32.mrb[0].mxu0
        %3398 = vmatprep.mubr.f32.mxu0 0.0
        %3399 = vmatmul.mubr.f32.gmra.mrb[0].mxu0 %v2785
        %v3400 = vpop.f32.mrb[0].mxu0
        %v3401 = vadd.f32 %v3176, %v3400
        %v3402 = vpop.f32.mrb[0].mxu0
        %3403 = vmatprep.mubr.f32.mxu0 0.0
        %3404 = vmatmul.mubr.f32.gmra.mrb[0].mxu0 %v2788
        %v3405 = vpop.f32.mrb[0].mxu0
        %v3406 = vadd.f32 %v3181, %v3405
        %v3407 = vpop.f32.mrb[0].mxu0
        %3408 = vmatprep.mubr.f32.mxu0 0.0
        %3409 = vmatmul.mubr.f32.gmra.mrb[0].mxu0 %v2791
        %v3410 = vpop.f32.mrb[0].mxu0
        %v3411 = vadd.f32 %v3186, %v3410
        %v3412 = vpop.f32.mrb[0].mxu0
        %3413 = vmatprep.mubr.f32.mxu0 0.0
        %3414 = vmatmul.mubr.f32.gmra.mrb[0].mxu0 %v2794
        %v3415 = vpop.f32.mrb[0].mxu0
        %v3416 = vadd.f32 %v3191, %v3415
        %v3417 = vpop.f32.mrb[0].mxu0
        %3418 = vmatprep.mubr.f32.mxu0 0.0
        %3419 = vmatmul.mubr.f32.gmra.mrb[0].mxu0 %v2797
        %v3420 = vpop.f32.mrb[0].mxu0
        %v3421 = vadd.f32 %v3196, %v3420
        %v3422 = vpop.f32.mrb[0].mxu0
        %3423 = vmatprep.mubr.f32.mxu0 0.0
        %3424 = vmatmul.mubr.f32.gmra.mrb[0].mxu0 %v2800
        %v3425 = vpop.f32.mrb[0].mxu0
        %v3426 = vadd.f32 %v3201, %v3425
        %v3427 = vpop.f32.mrb[0].mxu0
        %3428 = vmatprep.mubr.f32.mxu0 0.0
        %3429 = vmatmul.mubr.f32.gmra.mrb[0].mxu0 %v2803
        %v3430 = vpop.f32.mrb[0].mxu0
        %v3431 = vadd.f32 %v3206, %v3430
        %v3432 = vpop.f32.mrb[0].mxu0
        %3433 = vmatprep.mubr.f32.mxu0 0.0
        %3434 = vmatmul.mubr.f32.gmra.mrb[0].mxu0 %v2806
        %v3435 = vpop.f32.mrb[0].mxu0
        %v3436 = vadd.f32 %v3211, %v3435
        %v3437 = vpop.f32.mrb[0].mxu0
        %3438 = vmatprep.mubr.f32.mxu0 0.0
        %3439 = vmatmul.mubr.f32.gmra.mrb[0].mxu0 %v2809
        %v3440 = vpop.f32.mrb[0].mxu0
        %v3441 = vadd.f32 %v3216, %v3440
        %v3442 = vpop.f32.mrb[0].mxu0
        %3443 = vmatprep.mubr.f32.mxu0 0.0
        %3444 = vmatmul.mubr.f32.gmra.mrb[0].mxu0 %v2812
        %v3445 = vpop.f32.mrb[0].mxu0
        %v3446 = vadd.f32 %v3221, %v3445
        %v3447 = vpop.f32.mrb[0].mxu0
        %3448 = vmatprep.mubr.f32.mxu0 0.0
        %3449 = vmatmul.mubr.f32.gmra.mrb[0].mxu0 %v2815
        %v3450 = vpop.f32.mrb[0].mxu0
        %v3451 = vadd.f32 %v3226, %v3450
        %v3452 = vpop.f32.mrb[0].mxu0
        %3453 = vmatprep.mubr.f32.mxu0 0.0
        %3454 = vmatmul.mubr.f32.gmra.mrb[0].mxu0 %v2818
        %v3455 = vpop.f32.mrb[0].mxu0
        %v3456 = vadd.f32 %v3231, %v3455
        %v3457 = vpop.f32.mrb[0].mxu0
        %3458 = vmatprep.mubr.f32.mxu0 0.0
        %3459 = vmatmul.mubr.f32.gmra.mrb[0].mxu0 %v2821
        %v3460 = vpop.f32.mrb[0].mxu0
        %v3461 = vadd.f32 %v3236, %v3460
        %v3462 = vpop.f32.mrb[0].mxu0
        %3463 = vmatprep.mubr.f32.mxu0 0.0
        %3464 = vmatmul.mubr.f32.gmra.mrb[0].mxu0 %v2824
        %v3465 = vpop.f32.mrb[0].mxu0
        %v3466 = vadd.f32 %v3241, %v3465
        %v3467 = vpop.f32.mrb[0].mxu0
        %3468 = vmatprep.mubr.f32.mxu0 0.0
        %3469 = vmatmul.mubr.f32.gmra.mrb[0].mxu0 %v2827
        %v3470 = vpop.f32.mrb[0].mxu0
        %v3471 = vadd.f32 %v3246, %v3470
        %v3472 = vpop.f32.mrb[0].mxu0
        %3473 = vmatprep.mubr.f32.mxu0 0.0
        %3474 = vmatmul.mubr.f32.gmra.mrb[0].mxu0 %v2830
        %v3475 = vpop.f32.mrb[0].mxu0
        %v3476 = vadd.f32 %v3251, %v3475
        %v3477 = vpop.f32.mrb[0].mxu0
        %3478 = vmatprep.mubr.f32.mxu0 0.0
        %3479 = vmatmul.mubr.f32.gmra.mrb[0].mxu0 %v2833
        %v3480 = vpop.f32.mrb[0].mxu0
        %v3481 = vadd.f32 %v3256, %v3480
        %v3482 = vpop.f32.mrb[0].mxu0
        %3483 = vmatprep.mubr.f32.mxu0 0.0
        %3484 = vmatmul.mubr.f32.gmra.mrb[0].mxu0 %v2836
        %v3485 = vpop.f32.mrb[0].mxu0
        %v3486 = vadd.f32 %v3261, %v3485
        %v3487 = vpop.f32.mrb[0].mxu0
        %3488 = vmatprep.mubr.f32.mxu0 0.0
        %3489 = vmatmul.mubr.f32.gmra.mrb[0].mxu0 %v2839
        %v3490 = vpop.f32.mrb[0].mxu0
        %v3491 = vadd.f32 %v3266, %v3490
        %v3492 = vpop.f32.mrb[0].mxu0
        %3493 = vmatprep.mubr.f32.mxu0 0.0
        %3494 = vmatmul.mubr.f32.gmra.mrb[0].mxu0 %v2842
        %v3495 = vpop.f32.mrb[0].mxu0
        %v3496 = vadd.f32 %v3271, %v3495
        %v3497 = vpop.f32.mrb[0].mxu0
        %3498 = vmatprep.mubr.f32.mxu0 0.0
        %3499 = vmatmul.mubr.f32.gmra.mrb[0].mxu0 %v2845
        %v3500 = vpop.f32.mrb[0].mxu0
        %v3501 = vadd.f32 %v3276, %v3500
        %v3502 = vpop.f32.mrb[0].mxu0
        %3503 = vmatprep.mubr.f32.mxu0 0.0
        %3504 = vmatmul.mubr.f32.gmra.mrb[0].mxu0 %v2848
        %v3505 = vpop.f32.mrb[0].mxu0
        %v3506 = vadd.f32 %v3281, %v3505
        %v3507 = vpop.f32.mrb[0].mxu0
        %3508 = vmatprep.mubr.f32.mxu0 0.0
        %3509 = vmatmul.mubr.f32.gmra.mrb[0].mxu0 %v2851
        %v3510 = vpop.f32.mrb[0].mxu0
        %v3511 = vadd.f32 %v3286, %v3510
        %v3512 = vpop.f32.mrb[0].mxu0
        %3513 = vmatprep.mubr.f32.mxu0 0.0
        %3514 = vmatmul.mubr.f32.gmra.mrb[0].mxu0 %v2854
        %v3515 = vpop.f32.mrb[0].mxu0
        %v3516 = vadd.f32 %v3291, %v3515
        %v3517 = vpop.f32.mrb[0].mxu0
        %3518 = vmatprep.mubr.f32.mxu0 0.0
        %3519 = vmatmul.mubr.f32.gmra.mrb[0].mxu0 %v2857
        %v3520 = vpop.f32.mrb[0].mxu0
        %v3521 = vadd.f32 %v3296, %v3520
        %v3522 = vpop.f32.mrb[0].mxu0
        %3523 = vmatprep.mubr.f32.mxu0 0.0
        %3524 = vmatmul.mubr.f32.gmra.mrb[0].mxu0 %v2860
        %v3525 = vpop.f32.mrb[0].mxu0
        %v3526 = vadd.f32 %v3301, %v3525
        %v3527 = vpop.f32.mrb[0].mxu0
        %3528 = vmatprep.mubr.f32.mxu0 0.0
        %3529 = vmatmul.mubr.f32.gmra.mrb[0].mxu0 %v2863
        %v3530 = vpop.f32.mrb[0].mxu0
        %v3531 = vadd.f32 %v3306, %v3530
        %v3532 = vpop.f32.mrb[0].mxu0
        %3533 = vmatprep.mubr.f32.mxu0 0.0
        %3534 = vmatmul.mubr.f32.gmra.mrb[0].mxu0 %v2866
        %v3535 = vpop.f32.mrb[0].mxu0
        %v3536 = vadd.f32 %v3311, %v3535
        %v3537 = vpop.f32.mrb[0].mxu0
        %3538 = vmatprep.mubr.f32.mxu0 0.0
        %3539 = vmatmul.mubr.f32.gmra.mrb[0].mxu0 %v2869
        %v3540 = vpop.f32.mrb[0].mxu0
        %v3541 = vadd.f32 %v3316, %v3540
        %v3542 = vpop.f32.mrb[0].mxu0
        %3543 = vmatprep.mubr.f32.mxu0 0.0
        %3544 = vmatmul.mubr.f32.gmra.mrb[0].mxu0 %v2872
        %v3545 = vpop.f32.mrb[0].mxu0
        %v3546 = vadd.f32 %v3321, %v3545
        %v3547 = vpop.f32.mrb[0].mxu0
        %3548 = vdwg.mxu0
        %3549 = vst.msk [vmem:[%s369] sm:$0xff] %vm883, %v3391
        %3550 = vst.msk [vmem:[%s369 + $0x8] sm:$0xff] %vm883, %v3396
        %3551 = vst.msk [vmem:[%s369 + $0x10] sm:$0xff] %vm883, %v3401
        %3552 = vst.msk [vmem:[%s369 + $0x18] sm:$0xff] %vm883, %v3406
        %3553 = vst.msk [vmem:[%s369 + $0x20] sm:$0xff] %vm883, %v3411
        %3554 = vst.msk [vmem:[%s369 + $0x28] sm:$0xff] %vm883, %v3416
        %3555 = vst.msk [vmem:[%s369 + $0x30] sm:$0xff] %vm883, %v3421
        %3556 = vst.msk [vmem:[%s369 + $0x38] sm:$0xff] %vm883, %v3426
        %3557 = vst.msk [vmem:[%s369 + $0x40] sm:$0xff] %vm883, %v3431
        %3558 = vst.msk [vmem:[%s369 + $0x48] sm:$0xff] %vm883, %v3436
        %3559 = vst.msk [vmem:[%s369 + $0x50] sm:$0xff] %vm883, %v3441
        %3560 = vst.msk [vmem:[%s369 + $0x58] sm:$0xff] %vm883, %v3446
        %3561 = vst.msk [vmem:[%s369 + $0x60] sm:$0xff] %vm883, %v3451
        %3562 = vst.msk [vmem:[%s369 + $0x68] sm:$0xff] %vm883, %v3456
        %3563 = vst.msk [vmem:[%s369 + $0x70] sm:$0xff] %vm883, %v3461
        %3564 = vst.msk [vmem:[%s369 + $0x78] sm:$0xff] %vm883, %v3466
        %3565 = vst.msk [vmem:[%s369 + $0x80] sm:$0xff] %vm883, %v3471
        %3566 = vst.msk [vmem:[%s369 + $0x88] sm:$0xff] %vm883, %v3476
        %3567 = vst.msk [vmem:[%s369 + $0x90] sm:$0xff] %vm883, %v3481
        %3568 = vst.msk [vmem:[%s369 + $0x98] sm:$0xff] %vm883, %v3486
        %3569 = vst.msk [vmem:[%s369 + $0xa0] sm:$0xff] %vm883, %v3491
        %3570 = vst.msk [vmem:[%s369 + $0xa8] sm:$0xff] %vm883, %v3496
        %3571 = vst.msk [vmem:[%s369 + $0xb0] sm:$0xff] %vm883, %v3501
        %3572 = vst.msk [vmem:[%s369 + $0xb8] sm:$0xff] %vm883, %v3506
        %3573 = vst.msk [vmem:[%s369 + $0xc0] sm:$0xff] %vm883, %v3511
        %3574 = vst.msk [vmem:[%s369 + $0xc8] sm:$0xff] %vm883, %v3516
        %3575 = vst.msk [vmem:[%s369 + $0xd0] sm:$0xff] %vm883, %v3521
        %3576 = vst.msk [vmem:[%s369 + $0xd8] sm:$0xff] %vm883, %v3526
        %3577 = vst.msk [vmem:[%s369 + $0xe0] sm:$0xff] %vm883, %v3531
        %3578 = vst.msk [vmem:[%s369 + $0xe8] sm:$0xff] %vm883, %v3536
        %3579 = vst.msk [vmem:[%s369 + $0xf0] sm:$0xff] %vm883, %v3541
        %3580 = vst.msk [vmem:[%s369 + $0xf8] sm:$0xff] %vm883, %v3546
        %s3581 = smul.u32 16, %s27
        %p3582 = scmp.lt.s32.totalorder %s26, 1
        %s3583 = scalar_select %p3582, %s26, 1
        %p3584 = scmp.lt.s32.totalorder %s3581, 15
        %s3585 = scalar_select %p3584, %s3581, 15
        %s3586 = smul.addr %s3585, 2
        %s3587 = smul.addr %s3583, 32
        %s3588 = sadd.s32 %s3586, %s3587
        %s3589 = smul.addr %s3588, 8
        %s3590 = scalar_lea.vmem %s8, %s3589
        // Predicated region
        $region57: #{_lambda_.2} parent=51 // pred_check
          %p3591 = pneg %p232
        $region58: #{_lambda_.2} parent=51 // pred_check_branch
          %3593 = sbr.rel (%p3591) target = $region60
        $region59: #{_lambda_.2} parent=51 // pred_region
          %s3594 = smul.u32 16, %s27
        $region60: #{_lambda_.2} parent=51 // pred_fallthru
          _
      $region52: #{_lambda_.2} parent=5 // pred_fallthru
        _
      %p3595 = scmp.le.s32.totalorder 2, %s17
      // Predicated region
      $region61: #{_lambda_.2} parent=5 // pred_check
        %p3596 = pneg %p3595
      $region62: #{_lambda_.2} parent=5 // pred_check_branch
        %3598 = sbr.rel (%p3596) target = $region64
      $region63: #{_lambda_.2} parent=5 // pred_region
        %s3599 = ssub.s32 %s17, 2
        // Predicated region
        $region65: #{_lambda_.2} parent=63 // pred_check
          %p3600 = pneg %p238
        $region66: #{_lambda_.2} parent=63 // pred_check_branch
          %3602 = sbr.rel (%p3600) target = $region68
        $region67: #{_lambda_.2} parent=63 // pred_region
          %s3603 = smul.u32 16, %s29
          %p3604 = scmp.lt.s32.totalorder %s28, 1
          %s3605 = scalar_select %p3604, %s28, 1
          %p3606 = scmp.lt.s32.totalorder %s3603, 15
          %s3607 = scalar_select %p3606, %s3603, 15
          %s3608 = smul.addr %s3607, 2
          %s3609 = smul.addr %s3605, 32
          %s3610 = sadd.s32 %s3608, %s3609
          %s3611 = smul.addr %s3610, 8
          %s3612 = scalar_lea.vmem %s8, %s3611
        $region68: #{_lambda_.2} parent=63 // pred_fallthru
          _
      $region64: #{_lambda_.2} parent=5 // pred_fallthru
        _
    $region6: #{_lambda_.2} parent=1 // loop_footer
      %s21 = sadd.s32 1, %s17
    $region7: #{_lambda_.2} parent=1 // loop_footer_branch
      %16 = sbr.rel target = $region3
    $region8: #{_lambda_.2} parent=1 // loop_exit
      _
    %3613 = vsyncpa [#allocation4], 1
    %s3614 = scalar_lea.sflag [#allocation4], 1
    %3615 = vsyncpa %s3614, 1

</llo_original>
